<compile_context>
chip_gen: v7x
topology: tpu7x:2x2x1
jax: 0.10.0
libtpu: 0.0.40
codegen_flags: <defaults>
</compile_context>

<pallas_src>
import functools

import jax
import jax.numpy as jnp
from jax import lax
from jax.experimental import pallas as pl
from jax.experimental.pallas import tpu as pltpu

BF16 = jnp.bfloat16

# Union of tap offsets (relative to a shared (2,2) zero-pad of the conv05
# output) used by conv01 (3x3 d1 p1), conv02a (1x3 d2 p(0,2)),
# conv03a (3x1 d2 p(2,0)) and conv04 (3x3 d2 p2).
STAGE1_OFFSETS = (
    (0, 0), (0, 2), (0, 4),
    (1, 1), (1, 2), (1, 3),
    (2, 0), (2, 1), (2, 2), (2, 3), (2, 4),
    (3, 1), (3, 2), (3, 3),
    (4, 0), (4, 2), (4, 4),
)
STAGE1_COL_OFFSETS = (0, 1, 2, 3, 4)


# ----------------------------------------------------------------------------
# VMEM-aware tiling
# ----------------------------------------------------------------------------
def _vmem_caps():
    """(vmem_limit_bytes, tile_budget_bytes) derived from the local chip."""
    try:
        cap = int(pltpu.get_tpu_info().vmem_capacity_bytes)
    except Exception:
        cap = 64 * 1024 * 1024                       # assume v7x-like worst case
    if cap <= 64 * 1024 * 1024:                      # v7x: 64 MiB per TC
        limit = 32 * 1024 * 1024
    else:                                            # v5e / v6e: 128 MiB
        limit = 64 * 1024 * 1024
    return limit, int(limit * 0.7)


def _stage_vmem_bytes(th, W, Cin, C, q):
    """Rough per-tile VMEM footprint; max over the four kernels."""
    def s1():
        win = (th + 4) * (W + 4) * C * 2
        patch = th * W * 17 * C * 2
        acc = th * W * 4 * q * 4
        outs = 2 * (2 * th * W * 2 * q * 2)
        wgt = 2 * 17 * C * 4 * q * 2
        return 3 * win + patch + acc + outs + wgt

    def s2():
        win = (th + 12) * (W + 12) * 2 * q * 2
        patch = th * W * 14 * q * 2
        acc = th * W * 2 * q * 4
        outs = 2 * th * W * 2 * q * 2
        return 3 * win + patch + acc + outs

    def c05():
        win = (th + 2) * (W + 2) * Cin * 2
        patch = th * W * 9 * Cin * 2
        acc = th * W * 4 * q * 4
        outs = 2 * th * W * 4 * q * 2
        return 3 * win + patch + acc + outs

    def gate():
        return 3 * (2 * th * W * 2 * q * 2) + 2 * th * W * 4 * q * 4

    return max(s1(), s2(), c05(), gate())


def _pick_th(H, W, Cin, C, q, budget, force_th=None):
    if force_th is not None:
        return force_th
    divs = sorted((d for d in range(1, H + 1) if H % d == 0), reverse=True)
    for th in divs:
        if _stage_vmem_bytes(th, W, Cin, C, q) <= budget:
            return th
    return divs[-1]
    # TODO(synk): add a W grid axis (pl.cdiv grid + edge masking) for images
    #             whose full-W rows do not fit the per-tile budget.


# ----------------------------------------------------------------------------
# Input plumbing: halo windows without any host-side tile materialization
# ----------------------------------------------------------------------------
def _input_plumbing(compute_fn, xp, halo, th, nH, manual):
    """Return (kernel, activation in_spec, scratch_shapes).

    nH == 1 : plain Blocked BlockSpec over the whole padded image (auto DMA).
    nH  > 1 : activation stays in HBM (pl.ANY); each grid step DMAs its halo'd
              (th + 2*halo) row window into a double-buffered VMEM scratch and
              prefetches the next window of the same batch element.
    """
    _, Hp, Wp, C = xp.shape
    rows = th + 2 * halo

    if not manual:
        def kernel(x_ref, *io_refs):
            compute_fn(x_ref[0], *io_refs)
        spec = pl.BlockSpec((1, rows, Wp, C), lambda b, h: (b, 0, 0, 0))
        return kernel, spec, []

    def kernel(x_hbm, *args):
        *io_refs, buf, sem = args
        b = pl.program_id(0)
        h = pl.program_id(1)

        def cp(hh, slot):
            start = hh * th
            if th % 8 == 0:
                start = pl.multiple_of(start, 8)
            return pltpu.make_async_copy(
                x_hbm.at[b, pl.ds(start, rows)], buf.at[slot], sem.at[slot])

        slot = h % 2

        @pl.when(h == 0)
        def _():                                   # first window of this batch
            cp(h, slot).start()

        cp(h, slot).wait()

        @pl.when(h + 1 < nH)
        def _():                                   # prefetch next H window
            cp(h + 1, (h + 1) % 2).start()

        compute_fn(buf[slot], *io_refs)

    spec = pl.BlockSpec(memory_space=pl.ANY)
    scratch = [pltpu.VMEM((2, rows, Wp, C), xp.dtype),
               pltpu.SemaphoreType.DMA((2,))]
    return kernel, spec, scratch


# ----------------------------------------------------------------------------
# Kernel compute bodies (operate on a halo'd window array)
# ----------------------------------------------------------------------------
def _conv05_compute(win, w_ref, b_ref, o_ref, *, th, W):
    """3x3 Conv + folded BN + ReLU; one im2col matmul per tile."""
    C = win.shape[-1]
    rt = win.shape[0]                              # th + 2
    slabs = [win[:, c:c + W, :].reshape(rt * W, C) for c in range(3)]
    cols = [slabs[kw][kh * W:(kh + th) * W]
            for kh in range(3) for kw in range(3)]
    patch = jnp.concatenate(cols, axis=-1)         # (th*W, 9C)
    acc = jnp.dot(patch, w_ref[...], preferred_element_type=jnp.float32)
    acc = jnp.maximum(acc + b_ref[...], 0.0)
    o_ref[...] = acc.reshape(1, th, W, o_ref.shape[-1]).astype(o_ref.dtype)


def _stage1_compute(win, w_ref, b_ref, o_main_ref, o_mid_ref, stat_ref,
                    *, th, W, q):
    """conv01/conv04/conv02a/conv03a fused: one matmul, packed channels.

    Weight columns are packed [x1 | x4 | x2a | x3a], so:
      o_main = acc[:, :2q] = [x1 | x4]   (final branches)
      o_mid  = acc[:, 2q:] = [x2a | x3a] (feeds stage 2)
    Per-tile (sum, max) over [x1 | x4] channels is emitted for the attention.
    """
    C = win.shape[-1]
    rt = win.shape[0]                              # th + 4
    slabs = {c: win[:, c:c + W, :].reshape(rt * W, C)
             for c in STAGE1_COL_OFFSETS}          # 5 slabs, built once
    cols = [slabs[c][r * W:(r + th) * W] for (r, c) in STAGE1_OFFSETS]
    patch = jnp.concatenate(cols, axis=-1)         # (th*W, 17C)
    acc = jnp.dot(patch, w_ref[...], preferred_element_type=jnp.float32)
    acc = jnp.maximum(acc + b_ref[...], 0.0)       # (th*W, 4q) f32
    main = acc[:, :2 * q]
    mid = acc[:, 2 * q:]
    o_main_ref[...] = main.reshape(1, th, W, 2 * q).astype(o_main_ref.dtype)
    o_mid_ref[...] = mid.reshape(1, th, W, 2 * q).astype(o_mid_ref.dtype)
    s = jnp.sum(main, axis=0, keepdims=True)
    m = jnp.max(main, axis=0, keepdims=True)
    stat_ref[...] = jnp.concatenate([s, m], axis=0).reshape(1, 1, 2, 2 * q)


def _stage2_compute(win, w_ref, b_ref, o_ref, stat_ref, *, th, W, q):
    """conv02b (7x1 d2) and conv03b (1x7 d2) as ONE block-diagonal matmul."""
    rt = win.shape[0]                              # th + 12
    # x2a half: column offset fixed at 6, 7 row offsets -> one slab.
    s2 = win[:, 6:6 + W, :q].reshape(rt * W, q)
    cols = [s2[2 * k * W:(2 * k + th) * W] for k in range(7)]
    # x3a half: row offset fixed at 6, 7 column offsets.
    s3 = win[6:6 + th, :, q:]                      # (th, W+12, q)
    cols += [s3[:, 2 * k:2 * k + W, :].reshape(th * W, q) for k in range(7)]
    patch = jnp.concatenate(cols, axis=-1)         # (th*W, 14q)
    y = jnp.dot(patch, w_ref[...], preferred_element_type=jnp.float32)
    y = jnp.maximum(y + b_ref[...], 0.0)           # (th*W, 2q) = [x2 | x3]
    o_ref[...] = y.reshape(1, th, W, 2 * q).astype(o_ref.dtype)
    s = jnp.sum(y, axis=0, keepdims=True)
    m = jnp.max(y, axis=0, keepdims=True)
    stat_ref[...] = jnp.concatenate([s, m], axis=0).reshape(1, 1, 2, 2 * q)


def _gate_kernel(main_ref, mid_ref, gm_ref, gd_ref, o_ref, *, q):
    """Per-branch channel gating; stores the packed [x1|x4|x2|x3] order
    (no in-kernel lane reorder) in one full-width lane-dense store."""
    gm = gm_ref[...].reshape(1, 1, 1, 2 * q)
    gd = gd_ref[...].reshape(1, 1, 1, 2 * q)
    a = main_ref[...].astype(jnp.float32) * gm     # [x1*a1 | x4*a4]
    b = mid_ref[...].astype(jnp.float32) * gd      # [x2*a2 | x3*a3]
    o_ref[...] = jnp.concatenate([a, b], axis=-1).astype(o_ref.dtype)


# ----------------------------------------------------------------------------
# pallas_call wrappers
# ----------------------------------------------------------------------------
def _conv_params(vmem_limit):
    return pltpu.CompilerParams(
        dimension_semantics=("parallel", "arbitrary"),
        vmem_limit_bytes=vmem_limit)


def _conv05(xp, w, bias, *, H, W, th, nH, vmem_limit):
    B, _, _, Cin = xp.shape
    Cout = w.shape[-1]
    compute = functools.partial(_conv05_compute, th=th, W=W)
    kernel, x_spec, scratch = _input_plumbing(compute, xp, 1, th, nH, nH > 1)
    flops = 2 * B * H * W * 9 * Cin * Cout
    bytes_accessed = xp.size * 2 + w.size * 2 + bias.size * 4 \
        + B * H * W * Cout * 2
    return pl.pallas_call(
        kernel,
        out_shape=jax.ShapeDtypeStruct((B, H, W, Cout), BF16),
        grid_spec=pltpu.PrefetchScalarGridSpec(
            num_scalar_prefetch=0,
            grid=(B, nH),
            in_specs=[x_spec,
                      pl.BlockSpec((9 * Cin, Cout), lambda b, h: (0, 0)),
                      pl.BlockSpec((1, Cout), lambda b, h: (0, 0))],
            out_specs=pl.BlockSpec((1, th, W, Cout), lambda b, h: (b, h, 0, 0)),
            scratch_shapes=scratch),
        compiler_params=_conv_params(vmem_limit),
        cost_estimate=pl.CostEstimate(flops=flops, transcendentals=0,
                                      bytes_accessed=bytes_accessed),
    )(xp, w, bias)


def _stage1(yp, w, bias, *, H, W, q, th, nH, vmem_limit):
    B, _, _, C = yp.shape
    n_off = len(STAGE1_OFFSETS)
    compute = functools.partial(_stage1_compute, th=th, W=W, q=q)
    kernel, x_spec, scratch = _input_plumbing(compute, yp, 2, th, nH, nH > 1)
    omap = lambda b, h: (b, h, 0, 0)
    flops = 2 * B * H * W * n_off * C * 4 * q
    bytes_accessed = yp.size * 2 + w.size * 2 + bias.size * 4 \
        + 2 * B * H * W * 2 * q * 2 + B * nH * 2 * 2 * q * 4
    return pl.pallas_call(
        kernel,
        out_shape=(
            jax.ShapeDtypeStruct((B, H, W, 2 * q), BF16),          # [x1 | x4]
            jax.ShapeDtypeStruct((B, H, W, 2 * q), BF16),          # [x2a | x3a]
            jax.ShapeDtypeStruct((B, nH, 2, 2 * q), jnp.float32),  # pool stats
        ),
        grid_spec=pltpu.PrefetchScalarGridSpec(
            num_scalar_prefetch=0,
            grid=(B, nH),
            in_specs=[x_spec,
                      pl.BlockSpec((n_off * C, 4 * q), lambda b, h: (0, 0)),
                      pl.BlockSpec((1, 4 * q), lambda b, h: (0, 0))],
            out_specs=[pl.BlockSpec((1, th, W, 2 * q), omap),
                       pl.BlockSpec((1, th, W, 2 * q), omap),
                       pl.BlockSpec((1, 1, 2, 2 * q),
                                    lambda b, h: (b, h, 0, 0))],
            scratch_shapes=scratch),
        compiler_params=_conv_params(vmem_limit),
        cost_estimate=pl.CostEstimate(flops=flops, transcendentals=0,
                                      bytes_accessed=bytes_accessed),
    )(yp, w, bias)


def _stage2(mp, w, bias, *, H, W, q, th, nH, vmem_limit):
    B = mp.shape[0]
    compute = functools.partial(_stage2_compute, th=th, W=W, q=q)
    kernel, x_spec, scratch = _input_plumbing(compute, mp, 6, th, nH, nH > 1)
    omap = lambda b, h: (b, h, 0, 0)
    flops = 2 * B * H * W * 14 * q * 2 * q
    bytes_accessed = mp.size * 2 + w.size * 2 + bias.size * 4 \
        + B * H * W * 2 * q * 2 + B * nH * 2 * 2 * q * 4
    return pl.pallas_call(
        kernel,
        out_shape=(
            jax.ShapeDtypeStruct((B, H, W, 2 * q), BF16),          # [x2 | x3]
            jax.ShapeDtypeStruct((B, nH, 2, 2 * q), jnp.float32),  # pool stats
        ),
        grid_spec=pltpu.PrefetchScalarGridSpec(
            num_scalar_prefetch=0,
            grid=(B, nH),
            in_specs=[x_spec,
                      pl.BlockSpec((14 * q, 2 * q), lambda b, h: (0, 0)),
                      pl.BlockSpec((1, 2 * q), lambda b, h: (0, 0))],
            out_specs=[pl.BlockSpec((1, th, W, 2 * q), omap),
                       pl.BlockSpec((1, 1, 2, 2 * q),
                                    lambda b, h: (b, h, 0, 0))],
            scratch_shapes=scratch),
        compiler_params=_conv_params(vmem_limit),
        cost_estimate=pl.CostEstimate(flops=flops, transcendentals=0,
                                      bytes_accessed=bytes_accessed),
    )(mp, w, bias)


def _gate(o_main, o_mid, g_main, g_mid, *, q, th, nH, vmem_limit):
    B, H, W, _ = o_main.shape
    kernel = functools.partial(_gate_kernel, q=q)
    bmap = lambda b, h: (b, h, 0, 0)
    amap = lambda b, h: (b, 0, 0)
    return pl.pallas_call(
        kernel,
        out_shape=jax.ShapeDtypeStruct((B, H, W, 4 * q), jnp.float32),
        grid_spec=pltpu.PrefetchScalarGridSpec(
            num_scalar_prefetch=0,
            grid=(B, nH),
            in_specs=[pl.BlockSpec((1, th, W, 2 * q), bmap),
                      pl.BlockSpec((1, th, W, 2 * q), bmap),
                      pl.BlockSpec((1, 1, 2 * q), amap),
                      pl.BlockSpec((1, 1, 2 * q), amap)],
            out_specs=pl.BlockSpec((1, th, W, 4 * q), bmap)),
        compiler_params=pltpu.CompilerParams(
            dimension_semantics=("parallel", "parallel"),
            vmem_limit_bytes=vmem_limit),
    )(o_main, o_mid, g_main, g_mid)


# ----------------------------------------------------------------------------
# Full forward (Pallas)
# ----------------------------------------------------------------------------
def unet_conv2_xx_forward(x_nchw, p, *, force_th=None):
    q = p["b_s2"].shape[-1] // 2
    x = jnp.transpose(x_nchw, (0, 2, 3, 1)).astype(BF16)   # NCHW -> NHWC
    B, H, W, Cin = x.shape
    C = p["w05"].shape[-1]                                  # out_ch = 4q
    vmem_limit, budget = _vmem_caps()
    th = _pick_th(H, W, Cin, C, q, budget, force_th)
    assert H % th == 0, (H, th)
    nH = H // th

    # conv05 (3x3, BN folded, ReLU).  Single jnp.pad; no tile materialization.
    xp = jnp.pad(x, ((0, 0), (1, 1), (1, 1), (0, 0)))
    y0 = _conv05(xp, p["w05"], p["b05"], H=H, W=W, th=th, nH=nH,
                 vmem_limit=vmem_limit)

    # Stage 1: four first convs fused, shared (2,2) pad of y0.
    yp = jnp.pad(y0, ((0, 0), (2, 2), (2, 2), (0, 0)))
    o_main, o_mid, s1 = _stage1(yp, p["w_s1"], p["b_s1"], H=H, W=W, q=q,
                                th=th, nH=nH, vmem_limit=vmem_limit)

    # Stage 2: conv02b + conv03b, shared (6,6) pad of the packed [x2a|x3a].
    mp = jnp.pad(o_mid, ((0, 0), (6, 6), (6, 6), (0, 0)))
    o_mid2, s2 = _stage2(mp, p["w_s2"], p["b_s2"], H=H, W=W, q=q,
                         th=th, nH=nH, vmem_limit=vmem_limit)

    # Channel attention from fused pooling stats (plain XLA: tiny M=1 matmuls).
    hw = float(H * W)
    sum_main = jnp.sum(s1[:, :, 0, :], axis=1)   # [x1 | x4]
    max_main = jnp.max(s1[:, :, 1, :], axis=1)
    sum_mid = jnp.sum(s2[:, :, 0, :], axis=1)    # [x2 | x3]
    max_mid = jnp.max(s2[:, :, 1, :], axis=1)
    avg = jnp.concatenate(
        [sum_main[:, :q], sum_mid, sum_main[:, q:]], axis=-1) / hw
    mx = jnp.concatenate(
        [max_main[:, :q], max_mid, max_main[:, q:]], axis=-1)

    def mlp(v):
        return jnp.maximum(v @ p["att_w1"], 0.0) @ p["att_w2"]

    att = jax.nn.sigmoid(mlp(avg) + mlp(mx))               # (B, 4q), [1,2,3,4]
    g_main = jnp.concatenate([att[:, :q], att[:, 3 * q:]], axis=-1)[:, None, :]
    g_mid = att[:, q:3 * q][:, None, :]

    # Gate (packed order), then fold the channel permutation into the single
    # NHWC -> NCHW transpose on the XLA side.
    yp_packed = _gate(o_main, o_mid2, g_main, g_mid, q=q, th=th, nH=nH,
                      vmem_limit=vmem_limit)                # [x1|x4|x2|x3]
    ynchw = jnp.transpose(yp_packed, (0, 3, 1, 2))
    return jnp.concatenate(
        [ynchw[:, :q], ynchw[:, 2 * q:], ynchw[:, q:2 * q]], axis=1)


# ----------------------------------------------------------------------------
# Parameter construction (deterministic, synthetic) + BN folding + packing
# ----------------------------------------------------------------------------
def fold_bn(w, b, gamma, beta, mean, var, eps=1e-5):
    scale = gamma / jnp.sqrt(var + eps)
    return w * scale[None, None, None, :], (b - mean) * scale + beta


def make_conv_bn_params(key, kh, kw, cin, cout):
    k1, k2, k3, k4 = jax.random.split(key, 4)
    w = jax.random.normal(k1, (kh, kw, cin, cout), jnp.float32) * 0.1
    b = jax.random.normal(k2, (cout,), jnp.float32) * 0.05
    gamma = 1.0 + 0.1 * jax.random.normal(k3, (cout,), jnp.float32)
    beta = 0.1 * jax.random.normal(k4, (cout,), jnp.float32)
    mean = jnp.zeros((cout,), jnp.float32)
    var = jnp.ones((cout,), jnp.float32)
    return fold_bn(w, b, gamma, beta, mean, var)


def make_params(key, in_ch, out_ch):
    q = out_ch // 4
    keys = jax.random.split(key, 9)
    p = {}
    p["w05"], p["b05"] = make_conv_bn_params(keys[0], 3, 3, in_ch, out_ch)
    p["w01"], p["b01"] = make_conv_bn_params(keys[1], 3, 3, out_ch, q)
    p["w02a"], p["b02a"] = make_conv_bn_params(keys[2], 1, 3, out_ch, q)
    p["w02b"], p["b02b"] = make_conv_bn_params(keys[3], 7, 1, q, q)
    p["w03a"], p["b03a"] = make_conv_bn_params(keys[4], 3, 1, out_ch, q)
    p["w03b"], p["b03b"] = make_conv_bn_params(keys[5], 1, 7, q, q)
    p["w04"], p["b04"] = make_conv_bn_params(keys[6], 3, 3, out_ch, q)
    hidden = max(1, out_ch // 4)
    # TODO(synk): ChannelAttention1 source not provided; CBAM-style shared-MLP
    #             channel attention (bias-free, ratio 4) is assumed.
    p["att_w1"] = jax.random.normal(keys[7], (out_ch, hidden), jnp.float32) * 0.2
    p["att_w2"] = jax.random.normal(keys[8], (hidden, out_ch), jnp.float32) * 0.2
    return p


def pack_kernel_params(p, in_ch, out_ch):
    """Fold per-branch weights into im2col / combined layouts, cast to bf16."""
    q = out_ch // 4
    kp = {}
    kp["w05"] = p["w05"].astype(BF16).reshape(9 * in_ch, out_ch)
    kp["b05"] = p["b05"].reshape(1, out_ch)

    # Stage-1 combined weight; column order [x1 | x4 | x2a | x3a] so the
    # kernel's two outputs are contiguous lane slices (no in-kernel concat).
    # TODO(synk): for v5e, split into a d1 (9-tap) and a d2 (9-tap) matmul to
    #             avoid the zero-padded tap/branch pairs.
    n_off = len(STAGE1_OFFSETS)
    off_idx = {o: i for i, o in enumerate(STAGE1_OFFSETS)}
    wc = jnp.zeros((n_off, out_ch, 4 * q), jnp.float32)

    def put(wc, w, taps, lo):
        for off, (kh, kw) in taps:
            wc = wc.at[off_idx[off], :, lo:lo + q].set(w[kh, kw])
        return wc

    wc = put(wc, p["w01"], [((1 + kh, 1 + kw), (kh, kw))
                            for kh in range(3) for kw in range(3)], 0)
    wc = put(wc, p["w04"], [((2 * kh, 2 * kw), (kh, kw))
                            for kh in range(3) for kw in range(3)], q)
    wc = put(wc, p["w02a"], [((2, 2 * kw), (0, kw)) for kw in range(3)], 2 * q)
    wc = put(wc, p["w03a"], [((2 * kh, 2), (kh, 0)) for kh in range(3)], 3 * q)
    kp["w_s1"] = wc.reshape(n_off * out_ch, 4 * q).astype(BF16)
    kp["b_s1"] = jnp.concatenate(
        [p["b01"], p["b04"], p["b02a"], p["b03a"]]).reshape(1, 4 * q)

    # Stage-2 block-diagonal weight: one (14q, 2q) matmul producing [x2 | x3].
    w2 = p["w02b"].reshape(7 * q, q)
    w3 = p["w03b"].reshape(7 * q, q)
    wbd = jnp.zeros((14 * q, 2 * q), jnp.float32)
    wbd = wbd.at[:7 * q, :q].set(w2)
    wbd = wbd.at[7 * q:, q:].set(w3)
    kp["w_s2"] = wbd.astype(BF16)
    kp["b_s2"] = jnp.concatenate([p["b02b"], p["b03b"]]).reshape(1, 2 * q)

    kp["att_w1"] = p["att_w1"]
    kp["att_w2"] = p["att_w2"]
    return kp


# ----------------------------------------------------------------------------
# Pure-JAX reference (same bf16 quantization points as the kernel path)
# ----------------------------------------------------------------------------
def _ref_conv(x_bf, w_bf, b, pad, dil):
    y = lax.conv_general_dilated(
        x_bf, w_bf, window_strides=(1, 1),
        padding=[(pad[0], pad[0]), (pad[1], pad[1])],
        rhs_dilation=dil,
        dimension_numbers=("NHWC", "HWIO", "NHWC"),
        preferred_element_type=jnp.float32)
    return jnp.maximum(y + b, 0.0)


def ref_forward(x_nchw, p):
    bf = BF16
    x = jnp.transpose(x_nchw, (0, 2, 3, 1)).astype(bf)
    y0f = _ref_conv(x, p["w05"].astype(bf), p["b05"], (1, 1), (1, 1))
    y0 = y0f.astype(bf)
    x1f = _ref_conv(y0, p["w01"].astype(bf), p["b01"], (1, 1), (1, 1))
    x2af = _ref_conv(y0, p["w02a"].astype(bf), p["b02a"], (0, 2), (2, 2))
    x3af = _ref_conv(y0, p["w03a"].astype(bf), p["b03a"], (2, 0), (2, 2))
    x4f = _ref_conv(y0, p["w04"].astype(bf), p["b04"], (2, 2), (2, 2))
    x2f = _ref_conv(x2af.astype(bf), p["w02b"].astype(bf), p["b02b"],
                    (6, 0), (2, 2))
    x3f = _ref_conv(x3af.astype(bf), p["w03b"].astype(bf), p["b03b"],
                    (0, 6), (2, 2))

    xcat = jnp.concatenate([x1f, x2f, x3f, x4f], axis=-1)
    avg = jnp.mean(xcat, axis=(1, 2))
    mx = jnp.max(xcat, axis=(1, 2))

    def mlp(v):
        return jnp.maximum(v @ p["att_w1"], 0.0) @ p["att_w2"]

    att = jax.nn.sigmoid(mlp(avg) + mlp(mx))                     # (B, 4q)
    q = x1f.shape[-1]
    xs = [t.astype(bf).astype(jnp.float32) for t in (x1f, x2f, x3f, x4f)]
    gates = [att[:, i * q:(i + 1) * q][:, None, None, :] for i in range(4)]
    y = jnp.concatenate([xs[i] * gates[i] for i in range(4)], axis=-1)
    return jnp.transpose(y, (0, 3, 1, 2))


if __name__ == "__main__":
    B, in_ch, out_ch, H, W = 2, 4, 8, 16, 16
    key = jax.random.PRNGKey(0)
    kx, kparam = jax.random.split(key)
    x = jax.random.normal(kx, (B, in_ch, H, W), jnp.float32)   # NCHW, torch-like
    p_raw = make_params(kparam, in_ch, out_ch)
    p_kernel = pack_kernel_params(p_raw, in_ch, out_ch)

    y_ref = jax.block_until_ready(ref_forward(x, p_raw))

    # Default path (whole-image H tile, auto-pipelined BlockSpecs).
    fwd = jax.jit(unet_conv2_xx_forward)
    y = jax.block_until_ready(fwd(x, p_kernel))
    assert y.shape == (B, out_ch, H, W), y.shape
    if not bool(jnp.allclose(y, y_ref, rtol=2e-2, atol=2e-2)):
        err = float(jnp.max(jnp.abs(y - y_ref)))
        raise AssertionError(f"Pallas output mismatch (max abs err {err:.4e})")

    # Also exercise the H-tiled path (halo windows via manual double-buffered
    # pltpu.make_async_copy from HBM, no host-side tile materialization).
    fwd_tiled = jax.jit(functools.partial(unet_conv2_xx_forward, force_th=8))
    y_t = jax.block_until_ready(fwd_tiled(x, p_kernel))
    if not bool(jnp.allclose(y_t, y_ref, rtol=2e-2, atol=2e-2)):
        err = float(jnp.max(jnp.abs(y_t - y_ref)))
        raise AssertionError(f"Tiled-path mismatch (max abs err {err:.4e})")

    print("KERNEL_OK")
</pallas_src>

<mosaic_0001>
module attributes {stable_mosaic.version = 11 : i64} {
  func.func @kernel(%arg0: i32, %arg1: i32, %arg2: memref<1x18x18x4xbf16, #tpu.memory_space<vmem>>, %arg3: memref<36x8xbf16, #tpu.memory_space<vmem>>, %arg4: memref<1x8xf32, #tpu.memory_space<vmem>>, %arg5: memref<1x16x16x8xbf16, #tpu.memory_space<vmem>>) attributes {dimension_semantics = [#tpu.dimension_semantics<parallel>, #tpu.dimension_semantics<arbitrary>], iteration_bounds = array<i64: 2, 1>, scalar_prefetch = 0 : i64, scratch_operands = 0 : i64, tpu.core_type = #tpu.core_type<tc>, window_params = [{transform_indices = @transform_0, window_bounds = array<i64: 1, 18, 18, 4>}, {pipeline_mode = #tpu.pipeline_mode<synchronous>, transform_indices = @transform_1, window_bounds = array<i64: 36, 8>}, {pipeline_mode = #tpu.pipeline_mode<synchronous>, transform_indices = @transform_2, window_bounds = array<i64: 1, 8>}, {transform_indices = @transform_3, window_bounds = array<i64: 1, 16, 16, 8>}]} {
    %c0 = arith.constant 0 : index
    %c0_0 = arith.constant 0 : index
    %c0_1 = arith.constant 0 : index
    %c0_2 = arith.constant 0 : index
    %0 = vector.load %arg2[%c0, %c0_0, %c0_1, %c0_2] : memref<1x18x18x4xbf16, #tpu.memory_space<vmem>>, vector<1x18x18x4xbf16>
    %1 = vector.shape_cast %0 : vector<1x18x18x4xbf16> to vector<18x18x4xbf16>
    %2 = vector.extract_strided_slice %1 {offsets = [0, 0, 0], sizes = [18, 16, 4], strides = [1, 1, 1]} : vector<18x18x4xbf16> to vector<18x16x4xbf16>
    %3 = vector.shape_cast %2 : vector<18x16x4xbf16> to vector<288x4xbf16>
    %4 = vector.extract_strided_slice %1 {offsets = [0, 1, 0], sizes = [18, 16, 4], strides = [1, 1, 1]} : vector<18x18x4xbf16> to vector<18x16x4xbf16>
    %5 = vector.shape_cast %4 : vector<18x16x4xbf16> to vector<288x4xbf16>
    %6 = vector.extract_strided_slice %1 {offsets = [0, 2, 0], sizes = [18, 16, 4], strides = [1, 1, 1]} : vector<18x18x4xbf16> to vector<18x16x4xbf16>
    %7 = vector.shape_cast %6 : vector<18x16x4xbf16> to vector<288x4xbf16>
    %8 = vector.extract_strided_slice %3 {offsets = [0, 0], sizes = [256, 4], strides = [1, 1]} : vector<288x4xbf16> to vector<256x4xbf16>
    %9 = vector.extract_strided_slice %5 {offsets = [0, 0], sizes = [256, 4], strides = [1, 1]} : vector<288x4xbf16> to vector<256x4xbf16>
    %10 = vector.extract_strided_slice %7 {offsets = [0, 0], sizes = [256, 4], strides = [1, 1]} : vector<288x4xbf16> to vector<256x4xbf16>
    %11 = vector.extract_strided_slice %3 {offsets = [16, 0], sizes = [256, 4], strides = [1, 1]} : vector<288x4xbf16> to vector<256x4xbf16>
    %12 = vector.extract_strided_slice %5 {offsets = [16, 0], sizes = [256, 4], strides = [1, 1]} : vector<288x4xbf16> to vector<256x4xbf16>
    %13 = vector.extract_strided_slice %7 {offsets = [16, 0], sizes = [256, 4], strides = [1, 1]} : vector<288x4xbf16> to vector<256x4xbf16>
    %14 = vector.extract_strided_slice %3 {offsets = [32, 0], sizes = [256, 4], strides = [1, 1]} : vector<288x4xbf16> to vector<256x4xbf16>
    %15 = vector.extract_strided_slice %5 {offsets = [32, 0], sizes = [256, 4], strides = [1, 1]} : vector<288x4xbf16> to vector<256x4xbf16>
    %16 = vector.extract_strided_slice %7 {offsets = [32, 0], sizes = [256, 4], strides = [1, 1]} : vector<288x4xbf16> to vector<256x4xbf16>
    %17 = tpu.concatenate %8, %9, %10, %11, %12, %13, %14, %15, %16 in 1 : vector<256x4xbf16>, vector<256x4xbf16>, vector<256x4xbf16>, vector<256x4xbf16>, vector<256x4xbf16>, vector<256x4xbf16>, vector<256x4xbf16>, vector<256x4xbf16>, vector<256x4xbf16> -> vector<256x36xbf16>
    %c0_3 = arith.constant 0 : index
    %c0_4 = arith.constant 0 : index
    %18 = vector.load %arg3[%c0_3, %c0_4] : memref<36x8xbf16, #tpu.memory_space<vmem>>, vector<36x8xbf16>
    %cst = arith.constant dense<0.000000e+00> : vector<256x8xf32>
    %19 = tpu.matmul %17, %18, %cst {dimension_numbers = #tpu.dot_dimension_numbers<[1], [0], [0], [1], [0, 0, 1, 1], [], []>} : vector<256x36xbf16>, vector<36x8xbf16>, vector<256x8xf32> -> vector<256x8xf32>
    %c0_5 = arith.constant 0 : index
    %c0_6 = arith.constant 0 : index
    %20 = vector.load %arg4[%c0_5, %c0_6] : memref<1x8xf32, #tpu.memory_space<vmem>>, vector<1x8xf32>
    %21 = vector.broadcast %20 : vector<1x8xf32> to vector<256x8xf32>
    %22 = arith.addf %19, %21 : vector<256x8xf32>
    %cst_7 = arith.constant 0.000000e+00 : f32
    %23 = vector.broadcast %cst_7 : f32 to vector<256x8xf32>
    %24 = arith.maximumf %22, %23 : vector<256x8xf32>
    %25 = vector.shape_cast %24 : vector<256x8xf32> to vector<1x16x16x8xf32>
    %26 = arith.truncf %25 : vector<1x16x16x8xf32> to vector<1x16x16x8xbf16>
    %c0_8 = arith.constant 0 : index
    %c0_9 = arith.constant 0 : index
    %c0_10 = arith.constant 0 : index
    %c0_11 = arith.constant 0 : index
    %27 = vector.load %arg5[%c0_8, %c0_9, %c0_10, %c0_11] : memref<1x16x16x8xbf16, #tpu.memory_space<vmem>>, vector<1x16x16x8xbf16>
    tpu.vector_store %arg5[%c0_8, %c0_9, %c0_10, %c0_11], %26 {strides = array<i32>} : memref<1x16x16x8xbf16, #tpu.memory_space<vmem>>, vector<1x16x16x8xbf16>,
    return
  }
  func.func @transform_0(%arg0: i32, %arg1: i32) -> (i32, i32, i32, i32) {
    %c0_i32 = arith.constant 0 : i32
    %c0_i32_0 = arith.constant 0 : i32
    %c0_i32_1 = arith.constant 0 : i32
    %c0_i32_2 = arith.constant 0 : i32
    return %arg0, %c0_i32, %c0_i32_0, %c0_i32_1 : i32, i32, i32, i32
  }
  func.func @transform_1(%arg0: i32, %arg1: i32) -> (i32, i32) {
    %c0_i32 = arith.constant 0 : i32
    %c0_i32_0 = arith.constant 0 : i32
    %c0_i32_1 = arith.constant 0 : i32
    return %c0_i32, %c0_i32_0 : i32, i32
  }
  func.func @transform_2(%arg0: i32, %arg1: i32) -> (i32, i32) {
    %c0_i32 = arith.constant 0 : i32
    %c0_i32_0 = arith.constant 0 : i32
    %c0_i32_1 = arith.constant 0 : i32
    return %c0_i32, %c0_i32_0 : i32, i32
  }
  func.func @transform_3(%arg0: i32, %arg1: i32) -> (i32, i32, i32, i32) {
    %c0_i32 = arith.constant 0 : i32
    %c0_i32_0 = arith.constant 0 : i32
    %c0_i32_1 = arith.constant 0 : i32
    return %arg0, %arg1, %c0_i32, %c0_i32_0 : i32, i32, i32, i32
  }
}

module attributes {stable_mosaic.version = 11 : i64} {
  func.func @kernel(%arg0: i32, %arg1: i32, %arg2: memref<1x20x20x8xbf16, #tpu.memory_space<vmem>>, %arg3: memref<136x8xbf16, #tpu.memory_space<vmem>>, %arg4: memref<1x8xf32, #tpu.memory_space<vmem>>, %arg5: memref<1x16x16x4xbf16, #tpu.memory_space<vmem>>, %arg6: memref<1x16x16x4xbf16, #tpu.memory_space<vmem>>, %arg7: memref<1x1x2x4xf32, #tpu.memory_space<vmem>>) attributes {dimension_semantics = [#tpu.dimension_semantics<parallel>, #tpu.dimension_semantics<arbitrary>], iteration_bounds = array<i64: 2, 1>, scalar_prefetch = 0 : i64, scratch_operands = 0 : i64, tpu.core_type = #tpu.core_type<tc>, window_params = [{transform_indices = @transform_0, window_bounds = array<i64: 1, 20, 20, 8>}, {pipeline_mode = #tpu.pipeline_mode<synchronous>, transform_indices = @transform_1, window_bounds = array<i64: 136, 8>}, {pipeline_mode = #tpu.pipeline_mode<synchronous>, transform_indices = @transform_2, window_bounds = array<i64: 1, 8>}, {transform_indices = @transform_3, window_bounds = array<i64: 1, 16, 16, 4>}, {transform_indices = @transform_4, window_bounds = array<i64: 1, 16, 16, 4>}, {transform_indices = @transform_5, window_bounds = array<i64: 1, 1, 2, 4>}]} {
    %c0 = arith.constant 0 : index
    %c0_0 = arith.constant 0 : index
    %c0_1 = arith.constant 0 : index
    %c0_2 = arith.constant 0 : index
    %0 = vector.load %arg2[%c0, %c0_0, %c0_1, %c0_2] : memref<1x20x20x8xbf16, #tpu.memory_space<vmem>>, vector<1x20x20x8xbf16>
    %1 = vector.shape_cast %0 : vector<1x20x20x8xbf16> to vector<20x20x8xbf16>
    %2 = vector.extract_strided_slice %1 {offsets = [0, 0, 0], sizes = [20, 16, 8], strides = [1, 1, 1]} : vector<20x20x8xbf16> to vector<20x16x8xbf16>
    %3 = vector.shape_cast %2 : vector<20x16x8xbf16> to vector<320x8xbf16>
    %4 = vector.extract_strided_slice %1 {offsets = [0, 1, 0], sizes = [20, 16, 8], strides = [1, 1, 1]} : vector<20x20x8xbf16> to vector<20x16x8xbf16>
    %5 = vector.shape_cast %4 : vector<20x16x8xbf16> to vector<320x8xbf16>
    %6 = vector.extract_strided_slice %1 {offsets = [0, 2, 0], sizes = [20, 16, 8], strides = [1, 1, 1]} : vector<20x20x8xbf16> to vector<20x16x8xbf16>
    %7 = vector.shape_cast %6 : vector<20x16x8xbf16> to vector<320x8xbf16>
    %8 = vector.extract_strided_slice %1 {offsets = [0, 3, 0], sizes = [20, 16, 8], strides = [1, 1, 1]} : vector<20x20x8xbf16> to vector<20x16x8xbf16>
    %9 = vector.shape_cast %8 : vector<20x16x8xbf16> to vector<320x8xbf16>
    %10 = vector.extract_strided_slice %1 {offsets = [0, 4, 0], sizes = [20, 16, 8], strides = [1, 1, 1]} : vector<20x20x8xbf16> to vector<20x16x8xbf16>
    %11 = vector.shape_cast %10 : vector<20x16x8xbf16> to vector<320x8xbf16>
    %12 = vector.extract_strided_slice %3 {offsets = [0, 0], sizes = [256, 8], strides = [1, 1]} : vector<320x8xbf16> to vector<256x8xbf16>
    %13 = vector.extract_strided_slice %7 {offsets = [0, 0], sizes = [256, 8], strides = [1, 1]} : vector<320x8xbf16> to vector<256x8xbf16>
    %14 = vector.extract_strided_slice %11 {offsets = [0, 0], sizes = [256, 8], strides = [1, 1]} : vector<320x8xbf16> to vector<256x8xbf16>
    %15 = vector.extract_strided_slice %5 {offsets = [16, 0], sizes = [256, 8], strides = [1, 1]} : vector<320x8xbf16> to vector<256x8xbf16>
    %16 = vector.extract_strided_slice %7 {offsets = [16, 0], sizes = [256, 8], strides = [1, 1]} : vector<320x8xbf16> to vector<256x8xbf16>
    %17 = vector.extract_strided_slice %9 {offsets = [16, 0], sizes = [256, 8], strides = [1, 1]} : vector<320x8xbf16> to vector<256x8xbf16>
    %18 = vector.extract_strided_slice %3 {offsets = [32, 0], sizes = [256, 8], strides = [1, 1]} : vector<320x8xbf16> to vector<256x8xbf16>
    %19 = vector.extract_strided_slice %5 {offsets = [32, 0], sizes = [256, 8], strides = [1, 1]} : vector<320x8xbf16> to vector<256x8xbf16>
    %20 = vector.extract_strided_slice %7 {offsets = [32, 0], sizes = [256, 8], strides = [1, 1]} : vector<320x8xbf16> to vector<256x8xbf16>
    %21 = vector.extract_strided_slice %9 {offsets = [32, 0], sizes = [256, 8], strides = [1, 1]} : vector<320x8xbf16> to vector<256x8xbf16>
    %22 = vector.extract_strided_slice %11 {offsets = [32, 0], sizes = [256, 8], strides = [1, 1]} : vector<320x8xbf16> to vector<256x8xbf16>
    %23 = vector.extract_strided_slice %5 {offsets = [48, 0], sizes = [256, 8], strides = [1, 1]} : vector<320x8xbf16> to vector<256x8xbf16>
    %24 = vector.extract_strided_slice %7 {offsets = [48, 0], sizes = [256, 8], strides = [1, 1]} : vector<320x8xbf16> to vector<256x8xbf16>
    %25 = vector.extract_strided_slice %9 {offsets = [48, 0], sizes = [256, 8], strides = [1, 1]} : vector<320x8xbf16> to vector<256x8xbf16>
    %26 = vector.extract_strided_slice %3 {offsets = [64, 0], sizes = [256, 8], strides = [1, 1]} : vector<320x8xbf16> to vector<256x8xbf16>
    %27 = vector.extract_strided_slice %7 {offsets = [64, 0], sizes = [256, 8], strides = [1, 1]} : vector<320x8xbf16> to vector<256x8xbf16>
    %28 = vector.extract_strided_slice %11 {offsets = [64, 0], sizes = [256, 8], strides = [1, 1]} : vector<320x8xbf16> to vector<256x8xbf16>
    %29 = tpu.concatenate %12, %13, %14, %15, %16, %17, %18, %19, %20, %21, %22, %23, %24, %25, %26, %27 in 1 : vector<256x8xbf16>, vector<256x8xbf16>, vector<256x8xbf16>, vector<256x8xbf16>, vector<256x8xbf16>, vector<256x8xbf16>, vector<256x8xbf16>, vector<256x8xbf16>, vector<256x8xbf16>, vector<256x8xbf16>, vector<256x8xbf16>, vector<256x8xbf16>, vector<256x8xbf16>, vector<256x8xbf16>, vector<256x8xbf16>, vector<256x8xbf16> -> vector<256x128xbf16>
    %30 = tpu.concatenate %29, %28 in 1 : vector<256x128xbf16>, vector<256x8xbf16> -> vector<256x136xbf16>
    %c0_3 = arith.constant 0 : index
    %c0_4 = arith.constant 0 : index
    %31 = vector.load %arg3[%c0_3, %c0_4] : memref<136x8xbf16, #tpu.memory_space<vmem>>, vector<136x8xbf16>
    %cst = arith.constant dense<0.000000e+00> : vector<256x8xf32>
    %32 = tpu.matmul %30, %31, %cst {dimension_numbers = #tpu.dot_dimension_numbers<[1], [0], [0], [1], [0, 0, 1, 1], [], []>} : vector<256x136xbf16>, vector<136x8xbf16>, vector<256x8xf32> -> vector<256x8xf32>
    %c0_5 = arith.constant 0 : index
    %c0_6 = arith.constant 0 : index
    %33 = vector.load %arg4[%c0_5, %c0_6] : memref<1x8xf32, #tpu.memory_space<vmem>>, vector<1x8xf32>
    %34 = vector.broadcast %33 : vector<1x8xf32> to vector<256x8xf32>
    %35 = arith.addf %32, %34 : vector<256x8xf32>
    %cst_7 = arith.constant 0.000000e+00 : f32
    %36 = vector.broadcast %cst_7 : f32 to vector<256x8xf32>
    %37 = arith.maximumf %35, %36 : vector<256x8xf32>
    %38 = vector.extract_strided_slice %37 {offsets = [0, 0], sizes = [256, 4], strides = [1, 1]} : vector<256x8xf32> to vector<256x4xf32>
    %39 = vector.extract_strided_slice %37 {offsets = [0, 4], sizes = [256, 4], strides = [1, 1]} : vector<256x8xf32> to vector<256x4xf32>
    %40 = vector.shape_cast %38 : vector<256x4xf32> to vector<1x16x16x4xf32>
    %41 = arith.truncf %40 : vector<1x16x16x4xf32> to vector<1x16x16x4xbf16>
    %c0_8 = arith.constant 0 : index
    %c0_9 = arith.constant 0 : index
    %c0_10 = arith.constant 0 : index
    %c0_11 = arith.constant 0 : index
    %42 = vector.load %arg5[%c0_8, %c0_9, %c0_10, %c0_11] : memref<1x16x16x4xbf16, #tpu.memory_space<vmem>>, vector<1x16x16x4xbf16>
    tpu.vector_store %arg5[%c0_8, %c0_9, %c0_10, %c0_11], %41 {strides = array<i32>} : memref<1x16x16x4xbf16, #tpu.memory_space<vmem>>, vector<1x16x16x4xbf16>,
    %43 = vector.shape_cast %39 : vector<256x4xf32> to vector<1x16x16x4xf32>
    %44 = arith.truncf %43 : vector<1x16x16x4xf32> to vector<1x16x16x4xbf16>
    %c0_12 = arith.constant 0 : index
    %c0_13 = arith.constant 0 : index
    %c0_14 = arith.constant 0 : index
    %c0_15 = arith.constant 0 : index
    %45 = vector.load %arg6[%c0_12, %c0_13, %c0_14, %c0_15] : memref<1x16x16x4xbf16, #tpu.memory_space<vmem>>, vector<1x16x16x4xbf16>
    tpu.vector_store %arg6[%c0_12, %c0_13, %c0_14, %c0_15], %44 {strides = array<i32>} : memref<1x16x16x4xbf16, #tpu.memory_space<vmem>>, vector<1x16x16x4xbf16>,
    %cst_16 = arith.constant dense<0.000000e+00> : vector<4xf32>
    %46 = vector.multi_reduction <add>, %38, %cst_16 [0] : vector<256x4xf32> to vector<4xf32>
    %47 = vector.shape_cast %46 : vector<4xf32> to vector<1x4xf32>
    %cst_17 = arith.constant dense<0xFF800000> : vector<4xf32>
    %48 = vector.multi_reduction <maximumf>, %38, %cst_17 [0] : vector<256x4xf32> to vector<4xf32>
    %49 = vector.shape_cast %48 : vector<4xf32> to vector<1x4xf32>
    %50 = tpu.concatenate %47, %49 in 0 : vector<1x4xf32>, vector<1x4xf32> -> vector<2x4xf32>
    %51 = vector.shape_cast %50 : vector<2x4xf32> to vector<1x1x2x4xf32>
    %c0_18 = arith.constant 0 : index
    %c0_19 = arith.constant 0 : index
    %c0_20 = arith.constant 0 : index
    %c0_21 = arith.constant 0 : index
    %52 = vector.load %arg7[%c0_18, %c0_19, %c0_20, %c0_21] : memref<1x1x2x4xf32, #tpu.memory_space<vmem>>, vector<1x1x2x4xf32>
    tpu.vector_store %arg7[%c0_18, %c0_19, %c0_20, %c0_21], %51 {strides = array<i32>} : memref<1x1x2x4xf32, #tpu.memory_space<vmem>>, vector<1x1x2x4xf32>,
    return
  }
  func.func @transform_0(%arg0: i32, %arg1: i32) -> (i32, i32, i32, i32) {
    %c0_i32 = arith.constant 0 : i32
    %c0_i32_0 = arith.constant 0 : i32
    %c0_i32_1 = arith.constant 0 : i32
    %c0_i32_2 = arith.constant 0 : i32
    return %arg0, %c0_i32, %c0_i32_0, %c0_i32_1 : i32, i32, i32, i32
  }
  func.func @transform_1(%arg0: i32, %arg1: i32) -> (i32, i32) {
    %c0_i32 = arith.constant 0 : i32
    %c0_i32_0 = arith.constant 0 : i32
    %c0_i32_1 = arith.constant 0 : i32
    return %c0_i32, %c0_i32_0 : i32, i32
  }
  func.func @transform_2(%arg0: i32, %arg1: i32) -> (i32, i32) {
    %c0_i32 = arith.constant 0 : i32
    %c0_i32_0 = arith.constant 0 : i32
    %c0_i32_1 = arith.constant 0 : i32
    return %c0_i32, %c0_i32_0 : i32, i32
  }
  func.func @transform_3(%arg0: i32, %arg1: i32) -> (i32, i32, i32, i32) {
    %c0_i32 = arith.constant 0 : i32
    %c0_i32_0 = arith.constant 0 : i32
    %c0_i32_1 = arith.constant 0 : i32
    return %arg0, %arg1, %c0_i32, %c0_i32_0 : i32, i32, i32, i32
  }
  func.func @transform_4(%arg0: i32, %arg1: i32) -> (i32, i32, i32, i32) {
    %c0_i32 = arith.constant 0 : i32
    %c0_i32_0 = arith.constant 0 : i32
    %c0_i32_1 = arith.constant 0 : i32
    return %arg0, %arg1, %c0_i32, %c0_i32_0 : i32, i32, i32, i32
  }
  func.func @transform_5(%arg0: i32, %arg1: i32) -> (i32, i32, i32, i32) {
    %c0_i32 = arith.constant 0 : i32
    %c0_i32_0 = arith.constant 0 : i32
    %c0_i32_1 = arith.constant 0 : i32
    return %arg0, %arg1, %c0_i32, %c0_i32_0 : i32, i32, i32, i32
  }
}

module attributes {stable_mosaic.version = 11 : i64} {
  func.func @kernel(%arg0: i32, %arg1: i32, %arg2: memref<1x28x28x4xbf16, #tpu.memory_space<vmem>>, %arg3: memref<28x4xbf16, #tpu.memory_space<vmem>>, %arg4: memref<1x4xf32, #tpu.memory_space<vmem>>, %arg5: memref<1x16x16x4xbf16, #tpu.memory_space<vmem>>, %arg6: memref<1x1x2x4xf32, #tpu.memory_space<vmem>>) attributes {dimension_semantics = [#tpu.dimension_semantics<parallel>, #tpu.dimension_semantics<arbitrary>], iteration_bounds = array<i64: 2, 1>, scalar_prefetch = 0 : i64, scratch_operands = 0 : i64, tpu.core_type = #tpu.core_type<tc>, window_params = [{transform_indices = @transform_0, window_bounds = array<i64: 1, 28, 28, 4>}, {pipeline_mode = #tpu.pipeline_mode<synchronous>, transform_indices = @transform_1, window_bounds = array<i64: 28, 4>}, {pipeline_mode = #tpu.pipeline_mode<synchronous>, transform_indices = @transform_2, window_bounds = array<i64: 1, 4>}, {transform_indices = @transform_3, window_bounds = array<i64: 1, 16, 16, 4>}, {transform_indices = @transform_4, window_bounds = array<i64: 1, 1, 2, 4>}]} {
    %c0 = arith.constant 0 : index
    %c0_0 = arith.constant 0 : index
    %c0_1 = arith.constant 0 : index
    %c0_2 = arith.constant 0 : index
    %0 = vector.load %arg2[%c0, %c0_0, %c0_1, %c0_2] : memref<1x28x28x4xbf16, #tpu.memory_space<vmem>>, vector<1x28x28x4xbf16>
    %1 = vector.shape_cast %0 : vector<1x28x28x4xbf16> to vector<28x28x4xbf16>
    %2 = vector.extract_strided_slice %1 {offsets = [0, 6, 0], sizes = [28, 16, 2], strides = [1, 1, 1]} : vector<28x28x4xbf16> to vector<28x16x2xbf16>
    %3 = vector.shape_cast %2 : vector<28x16x2xbf16> to vector<448x2xbf16>
    %4 = vector.extract_strided_slice %3 {offsets = [0, 0], sizes = [256, 2], strides = [1, 1]} : vector<448x2xbf16> to vector<256x2xbf16>
    %5 = vector.extract_strided_slice %3 {offsets = [32, 0], sizes = [256, 2], strides = [1, 1]} : vector<448x2xbf16> to vector<256x2xbf16>
    %6 = vector.extract_strided_slice %3 {offsets = [64, 0], sizes = [256, 2], strides = [1, 1]} : vector<448x2xbf16> to vector<256x2xbf16>
    %7 = vector.extract_strided_slice %3 {offsets = [96, 0], sizes = [256, 2], strides = [1, 1]} : vector<448x2xbf16> to vector<256x2xbf16>
    %8 = vector.extract_strided_slice %3 {offsets = [128, 0], sizes = [256, 2], strides = [1, 1]} : vector<448x2xbf16> to vector<256x2xbf16>
    %9 = vector.extract_strided_slice %3 {offsets = [160, 0], sizes = [256, 2], strides = [1, 1]} : vector<448x2xbf16> to vector<256x2xbf16>
    %10 = vector.extract_strided_slice %3 {offsets = [192, 0], sizes = [256, 2], strides = [1, 1]} : vector<448x2xbf16> to vector<256x2xbf16>
    %11 = vector.extract_strided_slice %1 {offsets = [6, 0, 2], sizes = [16, 28, 2], strides = [1, 1, 1]} : vector<28x28x4xbf16> to vector<16x28x2xbf16>
    %12 = vector.extract_strided_slice %11 {offsets = [0, 0, 0], sizes = [16, 16, 2], strides = [1, 1, 1]} : vector<16x28x2xbf16> to vector<16x16x2xbf16>
    %13 = vector.shape_cast %12 : vector<16x16x2xbf16> to vector<256x2xbf16>
    %14 = vector.extract_strided_slice %11 {offsets = [0, 2, 0], sizes = [16, 16, 2], strides = [1, 1, 1]} : vector<16x28x2xbf16> to vector<16x16x2xbf16>
    %15 = vector.shape_cast %14 : vector<16x16x2xbf16> to vector<256x2xbf16>
    %16 = vector.extract_strided_slice %11 {offsets = [0, 4, 0], sizes = [16, 16, 2], strides = [1, 1, 1]} : vector<16x28x2xbf16> to vector<16x16x2xbf16>
    %17 = vector.shape_cast %16 : vector<16x16x2xbf16> to vector<256x2xbf16>
    %18 = vector.extract_strided_slice %11 {offsets = [0, 6, 0], sizes = [16, 16, 2], strides = [1, 1, 1]} : vector<16x28x2xbf16> to vector<16x16x2xbf16>
    %19 = vector.shape_cast %18 : vector<16x16x2xbf16> to vector<256x2xbf16>
    %20 = vector.extract_strided_slice %11 {offsets = [0, 8, 0], sizes = [16, 16, 2], strides = [1, 1, 1]} : vector<16x28x2xbf16> to vector<16x16x2xbf16>
    %21 = vector.shape_cast %20 : vector<16x16x2xbf16> to vector<256x2xbf16>
    %22 = vector.extract_strided_slice %11 {offsets = [0, 10, 0], sizes = [16, 16, 2], strides = [1, 1, 1]} : vector<16x28x2xbf16> to vector<16x16x2xbf16>
    %23 = vector.shape_cast %22 : vector<16x16x2xbf16> to vector<256x2xbf16>
    %24 = vector.extract_strided_slice %11 {offsets = [0, 12, 0], sizes = [16, 16, 2], strides = [1, 1, 1]} : vector<16x28x2xbf16> to vector<16x16x2xbf16>
    %25 = vector.shape_cast %24 : vector<16x16x2xbf16> to vector<256x2xbf16>
    %26 = tpu.concatenate %4, %5, %6, %7, %8, %9, %10, %13, %15, %17, %19, %21, %23, %25 in 1 : vector<256x2xbf16>, vector<256x2xbf16>, vector<256x2xbf16>, vector<256x2xbf16>, vector<256x2xbf16>, vector<256x2xbf16>, vector<256x2xbf16>, vector<256x2xbf16>, vector<256x2xbf16>, vector<256x2xbf16>, vector<256x2xbf16>, vector<256x2xbf16>, vector<256x2xbf16>, vector<256x2xbf16> -> vector<256x28xbf16>
    %c0_3 = arith.constant 0 : index
    %c0_4 = arith.constant 0 : index
    %27 = vector.load %arg3[%c0_3, %c0_4] : memref<28x4xbf16, #tpu.memory_space<vmem>>, vector<28x4xbf16>
    %cst = arith.constant dense<0.000000e+00> : vector<256x4xf32>
    %28 = tpu.matmul %26, %27, %cst {dimension_numbers = #tpu.dot_dimension_numbers<[1], [0], [0], [1], [0, 0, 1, 1], [], []>} : vector<256x28xbf16>, vector<28x4xbf16>, vector<256x4xf32> -> vector<256x4xf32>
    %c0_5 = arith.constant 0 : index
    %c0_6 = arith.constant 0 : index
    %29 = vector.load %arg4[%c0_5, %c0_6] : memref<1x4xf32, #tpu.memory_space<vmem>>, vector<1x4xf32>
    %30 = vector.broadcast %29 : vector<1x4xf32> to vector<256x4xf32>
    %31 = arith.addf %28, %30 : vector<256x4xf32>
    %cst_7 = arith.constant 0.000000e+00 : f32
    %32 = vector.broadcast %cst_7 : f32 to vector<256x4xf32>
    %33 = arith.maximumf %31, %32 : vector<256x4xf32>
    %34 = vector.shape_cast %33 : vector<256x4xf32> to vector<1x16x16x4xf32>
    %35 = arith.truncf %34 : vector<1x16x16x4xf32> to vector<1x16x16x4xbf16>
    %c0_8 = arith.constant 0 : index
    %c0_9 = arith.constant 0 : index
    %c0_10 = arith.constant 0 : index
    %c0_11 = arith.constant 0 : index
    %36 = vector.load %arg5[%c0_8, %c0_9, %c0_10, %c0_11] : memref<1x16x16x4xbf16, #tpu.memory_space<vmem>>, vector<1x16x16x4xbf16>
    tpu.vector_store %arg5[%c0_8, %c0_9, %c0_10, %c0_11], %35 {strides = array<i32>} : memref<1x16x16x4xbf16, #tpu.memory_space<vmem>>, vector<1x16x16x4xbf16>,
    %cst_12 = arith.constant dense<0.000000e+00> : vector<4xf32>
    %37 = vector.multi_reduction <add>, %33, %cst_12 [0] : vector<256x4xf32> to vector<4xf32>
    %38 = vector.shape_cast %37 : vector<4xf32> to vector<1x4xf32>
    %cst_13 = arith.constant dense<0xFF800000> : vector<4xf32>
    %39 = vector.multi_reduction <maximumf>, %33, %cst_13 [0] : vector<256x4xf32> to vector<4xf32>
    %40 = vector.shape_cast %39 : vector<4xf32> to vector<1x4xf32>
    %41 = tpu.concatenate %38, %40 in 0 : vector<1x4xf32>, vector<1x4xf32> -> vector<2x4xf32>
    %42 = vector.shape_cast %41 : vector<2x4xf32> to vector<1x1x2x4xf32>
    %c0_14 = arith.constant 0 : index
    %c0_15 = arith.constant 0 : index
    %c0_16 = arith.constant 0 : index
    %c0_17 = arith.constant 0 : index
    %43 = vector.load %arg6[%c0_14, %c0_15, %c0_16, %c0_17] : memref<1x1x2x4xf32, #tpu.memory_space<vmem>>, vector<1x1x2x4xf32>
    tpu.vector_store %arg6[%c0_14, %c0_15, %c0_16, %c0_17], %42 {strides = array<i32>} : memref<1x1x2x4xf32, #tpu.memory_space<vmem>>, vector<1x1x2x4xf32>,
    return
  }
  func.func @transform_0(%arg0: i32, %arg1: i32) -> (i32, i32, i32, i32) {
    %c0_i32 = arith.constant 0 : i32
    %c0_i32_0 = arith.constant 0 : i32
    %c0_i32_1 = arith.constant 0 : i32
    %c0_i32_2 = arith.constant 0 : i32
    return %arg0, %c0_i32, %c0_i32_0, %c0_i32_1 : i32, i32, i32, i32
  }
  func.func @transform_1(%arg0: i32, %arg1: i32) -> (i32, i32) {
    %c0_i32 = arith.constant 0 : i32
    %c0_i32_0 = arith.constant 0 : i32
    %c0_i32_1 = arith.constant 0 : i32
    return %c0_i32, %c0_i32_0 : i32, i32
  }
  func.func @transform_2(%arg0: i32, %arg1: i32) -> (i32, i32) {
    %c0_i32 = arith.constant 0 : i32
    %c0_i32_0 = arith.constant 0 : i32
    %c0_i32_1 = arith.constant 0 : i32
    return %c0_i32, %c0_i32_0 : i32, i32
  }
  func.func @transform_3(%arg0: i32, %arg1: i32) -> (i32, i32, i32, i32) {
    %c0_i32 = arith.constant 0 : i32
    %c0_i32_0 = arith.constant 0 : i32
    %c0_i32_1 = arith.constant 0 : i32
    return %arg0, %arg1, %c0_i32, %c0_i32_0 : i32, i32, i32, i32
  }
  func.func @transform_4(%arg0: i32, %arg1: i32) -> (i32, i32, i32, i32) {
    %c0_i32 = arith.constant 0 : i32
    %c0_i32_0 = arith.constant 0 : i32
    %c0_i32_1 = arith.constant 0 : i32
    return %arg0, %arg1, %c0_i32, %c0_i32_0 : i32, i32, i32, i32
  }
}

module attributes {stable_mosaic.version = 11 : i64} {
  func.func @_gate_kernel(%arg0: i32, %arg1: i32, %arg2: memref<1x16x16x4xbf16, #tpu.memory_space<vmem>>, %arg3: memref<1x16x16x4xbf16, #tpu.memory_space<vmem>>, %arg4: memref<1x1x4xf32, #tpu.memory_space<vmem>>, %arg5: memref<1x1x4xf32, #tpu.memory_space<vmem>>, %arg6: memref<1x16x16x8xf32, #tpu.memory_space<vmem>>) attributes {dimension_semantics = [#tpu.dimension_semantics<parallel>, #tpu.dimension_semantics<parallel>], iteration_bounds = array<i64: 2, 1>, scalar_prefetch = 0 : i64, scratch_operands = 0 : i64, tpu.core_type = #tpu.core_type<tc>, window_params = [{transform_indices = @transform_0, window_bounds = array<i64: 1, 16, 16, 4>}, {transform_indices = @transform_1, window_bounds = array<i64: 1, 16, 16, 4>}, {transform_indices = @transform_2, window_bounds = array<i64: 1, 1, 4>}, {transform_indices = @transform_3, window_bounds = array<i64: 1, 1, 4>}, {transform_indices = @transform_4, window_bounds = array<i64: 1, 16, 16, 8>}]} {
    %c0 = arith.constant 0 : index
    %c0_0 = arith.constant 0 : index
    %c0_1 = arith.constant 0 : index
    %0 = vector.load %arg4[%c0, %c0_0, %c0_1] : memref<1x1x4xf32, #tpu.memory_space<vmem>>, vector<1x1x4xf32>
    %1 = vector.shape_cast %0 : vector<1x1x4xf32> to vector<1x1x1x4xf32>
    %c0_2 = arith.constant 0 : index
    %c0_3 = arith.constant 0 : index
    %c0_4 = arith.constant 0 : index
    %2 = vector.load %arg5[%c0_2, %c0_3, %c0_4] : memref<1x1x4xf32, #tpu.memory_space<vmem>>, vector<1x1x4xf32>
    %3 = vector.shape_cast %2 : vector<1x1x4xf32> to vector<1x1x1x4xf32>
    %c0_5 = arith.constant 0 : index
    %c0_6 = arith.constant 0 : index
    %c0_7 = arith.constant 0 : index
    %c0_8 = arith.constant 0 : index
    %4 = vector.load %arg2[%c0_5, %c0_6, %c0_7, %c0_8] : memref<1x16x16x4xbf16, #tpu.memory_space<vmem>>, vector<1x16x16x4xbf16>
    %5 = arith.extf %4 : vector<1x16x16x4xbf16> to vector<1x16x16x4xf32>
    %6 = vector.broadcast %1 : vector<1x1x1x4xf32> to vector<1x16x16x4xf32>
    %7 = arith.mulf %5, %6 : vector<1x16x16x4xf32>
    %c0_9 = arith.constant 0 : index
    %c0_10 = arith.constant 0 : index
    %c0_11 = arith.constant 0 : index
    %c0_12 = arith.constant 0 : index
    %8 = vector.load %arg3[%c0_9, %c0_10, %c0_11, %c0_12] : memref<1x16x16x4xbf16, #tpu.memory_space<vmem>>, vector<1x16x16x4xbf16>
    %9 = arith.extf %8 : vector<1x16x16x4xbf16> to vector<1x16x16x4xf32>
    %10 = vector.broadcast %3 : vector<1x1x1x4xf32> to vector<1x16x16x4xf32>
    %11 = arith.mulf %9, %10 : vector<1x16x16x4xf32>
    %12 = tpu.concatenate %7, %11 in 3 : vector<1x16x16x4xf32>, vector<1x16x16x4xf32> -> vector<1x16x16x8xf32>
    %c0_13 = arith.constant 0 : index
    %c0_14 = arith.constant 0 : index
    %c0_15 = arith.constant 0 : index
    %c0_16 = arith.constant 0 : index
    %13 = vector.load %arg6[%c0_13, %c0_14, %c0_15, %c0_16] : memref<1x16x16x8xf32, #tpu.memory_space<vmem>>, vector<1x16x16x8xf32>
    tpu.vector_store %arg6[%c0_13, %c0_14, %c0_15, %c0_16], %12 {strides = array<i32>} : memref<1x16x16x8xf32, #tpu.memory_space<vmem>>, vector<1x16x16x8xf32>,
    return
  }
  func.func @transform_0(%arg0: i32, %arg1: i32) -> (i32, i32, i32, i32) {
    %c0_i32 = arith.constant 0 : i32
    %c0_i32_0 = arith.constant 0 : i32
    %c0_i32_1 = arith.constant 0 : i32
    return %arg0, %arg1, %c0_i32, %c0_i32_0 : i32, i32, i32, i32
  }
  func.func @transform_1(%arg0: i32, %arg1: i32) -> (i32, i32, i32, i32) {
    %c0_i32 = arith.constant 0 : i32
    %c0_i32_0 = arith.constant 0 : i32
    %c0_i32_1 = arith.constant 0 : i32
    return %arg0, %arg1, %c0_i32, %c0_i32_0 : i32, i32, i32, i32
  }
  func.func @transform_2(%arg0: i32, %arg1: i32) -> (i32, i32, i32) {
    %c0_i32 = arith.constant 0 : i32
    %c0_i32_0 = arith.constant 0 : i32
    %c0_i32_1 = arith.constant 0 : i32
    return %arg0, %c0_i32, %c0_i32_0 : i32, i32, i32
  }
  func.func @transform_3(%arg0: i32, %arg1: i32) -> (i32, i32, i32) {
    %c0_i32 = arith.constant 0 : i32
    %c0_i32_0 = arith.constant 0 : i32
    %c0_i32_1 = arith.constant 0 : i32
    return %arg0, %c0_i32, %c0_i32_0 : i32, i32, i32
  }
  func.func @transform_4(%arg0: i32, %arg1: i32) -> (i32, i32, i32, i32) {
    %c0_i32 = arith.constant 0 : i32
    %c0_i32_0 = arith.constant 0 : i32
    %c0_i32_1 = arith.constant 0 : i32
    return %arg0, %arg1, %c0_i32, %c0_i32_0 : i32, i32, i32, i32
  }
}

</mosaic_0001>

<llo_original>
// kernel: unet_conv2_xx_forward.4
$region0: #{unet_conv2_xx_forward.4}
  #allocation0 [shape = 'u32[]', space=smem, size = 0x4, offset = 0x4, fixed_abs, tag = 'smem constant byte address 0x4 - core index']
  #allocation1 [shape = 'u32[144,128]{1,0:T(1,128)}', space=vmem, size = 0x12000, scoped, tag = 'internal scratch']
  %s0 = inlined_call_operand.vmem [shape: bf16[2,18,18,4], index: 0, kind: input, shape index: {}]
  %s1 = inlined_call_operand.vmem [shape: bf16[36,8], index: 1, kind: input, shape index: {}]
  %s2 = inlined_call_operand.vmem [shape: f32[1,8], index: 2, kind: input, shape index: {}]
  %s3 = inlined_call_operand.vmem [shape: bf16[2,16,16,8], index: 3, kind: output, shape index: {}]
  %s4 = sld [smem:[#allocation0]]
  $region45: #{unet_conv2_xx_forward.4} parent=0
    _
  %s6 = ssub.s32 1, %s4
  %s7 = scalar_select 0, %s6, %s4
  loop: start=0, step=1, limit=4
  $region2: #{unet_conv2_xx_forward.4} parent=0 // loop_pre_header
    _
  $region3: #{unet_conv2_xx_forward.4} parent=0 // loop_header
    %s9 = sphi 0, %s13
    %p10 = scmp.ge.s32.totalorder %s9, 4
    %s16 = sphi 0, %s28
    %s17 = sphi 0, %s24
    %s18 = sphi 0, %s16
    %s19 = sphi 0, %s17
    %s20 = sphi 0, %s18
    %s21 = sphi 0, %s19
    %s31 = sphi 0, %s33
    %s34 = sphi 0, %s31
    %s35 = sphi 0, %s34
    %s51 = sphi 0, %s35
    %s55 = sphi 0, %s55
    %s57 = sphi 0, %s55
    %s58 = sphi 0, %s57
    %s72 = sphi 0, %s58
    %s76 = sphi 0, %s76
    %s78 = sphi 0, %s76
    %s79 = sphi 0, %s78
    %s93 = sphi 0, %s79
    %s101 = sphi 0, %s103
    %s104 = sphi 0, %s101
    %s105 = sphi 0, %s104
    %s121 = sphi 0, %s105
  $region4: #{unet_conv2_xx_forward.4} parent=0 // loop_header_branch
    %12 = sbr.rel (%p10) target = $region8
  $region5: #{unet_conv2_xx_forward.4} parent=0 // loop_body
    %s14 = ssub.s32 %s9, 1
    %s15 = ssub.s32 %s9, 2
    %s22 = sadd.s32 1, %s17
    %p23 = scmp.ge.s32.totalorder %s22, 1
    %s24 = scalar_select %p23, 0, %s22
    %s25 = sadd.s32 1, %s16
    %s26 = scalar_select %p23, %s25, %s16
    %p27 = scmp.ge.s32.totalorder %s26, 2
    %s28 = scalar_select %p27, 0, %s26
    %s29 = ssub.s32 %s16, %s28
    %p30 = scmp.eq.s32.totalorder %s29, 0
    %s32 = sadd.s32 %s31, 1
    %s33 = scalar_select %p30, %s31, %s32
    %p36 = pneg %p30
    %p37 = scmp.eq.s32.totalorder %s9, 1
    %p38 = por %p36, %p37
    %p39 = scmp.ne.s32.totalorder %s31, %s34
    %p40 = scmp.eq.s32.totalorder %s9, 0
    %p41 = por %p39, %p40
    %p42 = scmp.ne.s32.totalorder %s31, %s34
    %p43 = scmp.eq.s32.totalorder %s14, 1
    %p44 = por %p42, %p43
    %p45 = scmp.ne.s32.totalorder %s34, %s35
    %p46 = scmp.eq.s32.totalorder %s14, 0
    %p47 = por %p45, %p46
    %p48 = scmp.ne.s32.totalorder %s34, %s35
    %p49 = scmp.eq.s32.totalorder %s15, 1
    %p50 = por %p48, %p49
    %p52 = scmp.ne.s32.totalorder %s35, %s51
    %p53 = scmp.eq.s32.totalorder %s15, 0
    %p54 = por %p52, %p53
    %s56 = sadd.s32 %s55, 1
    %p59 = scmp.eq.s32.totalorder %s9, 1
    %p60 = scmp.ne.s32.totalorder %s55, %s57
    %p61 = scmp.eq.s32.totalorder %s9, 0
    %p62 = por %p60, %p61
    %p63 = scmp.ne.s32.totalorder %s55, %s57
    %p64 = scmp.eq.s32.totalorder %s14, 1
    %p65 = por %p63, %p64
    %p66 = scmp.ne.s32.totalorder %s57, %s58
    %p67 = scmp.eq.s32.totalorder %s14, 0
    %p68 = por %p66, %p67
    %p69 = scmp.ne.s32.totalorder %s57, %s58
    %p70 = scmp.eq.s32.totalorder %s15, 1
    %p71 = por %p69, %p70
    %p73 = scmp.ne.s32.totalorder %s58, %s72
    %p74 = scmp.eq.s32.totalorder %s15, 0
    %p75 = por %p73, %p74
    %s77 = sadd.s32 %s76, 1
    %p80 = scmp.eq.s32.totalorder %s9, 1
    %p81 = scmp.ne.s32.totalorder %s76, %s78
    %p82 = scmp.eq.s32.totalorder %s9, 0
    %p83 = por %p81, %p82
    %p84 = scmp.ne.s32.totalorder %s76, %s78
    %p85 = scmp.eq.s32.totalorder %s14, 1
    %p86 = por %p84, %p85
    %p87 = scmp.ne.s32.totalorder %s78, %s79
    %p88 = scmp.eq.s32.totalorder %s14, 0
    %p89 = por %p87, %p88
    %p90 = scmp.ne.s32.totalorder %s78, %s79
    %p91 = scmp.eq.s32.totalorder %s15, 1
    %p92 = por %p90, %p91
    %p94 = scmp.ne.s32.totalorder %s79, %s93
    %p95 = scmp.eq.s32.totalorder %s15, 0
    %p96 = por %p94, %p95
    %s97 = ssub.s32 %s16, %s28
    %s98 = ssub.s32 %s17, %s24
    %s99 = sor.u32 %s97, %s98
    %p100 = scmp.eq.s32.totalorder %s99, 0
    %s102 = sadd.s32 %s101, 1
    %s103 = scalar_select %p100, %s101, %s102
    %p106 = pneg %p100
    %p107 = scmp.eq.s32.totalorder %s9, 1
    %p108 = por %p106, %p107
    %p109 = scmp.ne.s32.totalorder %s101, %s104
    %p110 = scmp.eq.s32.totalorder %s9, 0
    %p111 = por %p109, %p110
    %p112 = scmp.ne.s32.totalorder %s101, %s104
    %p113 = scmp.eq.s32.totalorder %s14, 1
    %p114 = por %p112, %p113
    %p115 = scmp.ne.s32.totalorder %s104, %s105
    %p116 = scmp.eq.s32.totalorder %s14, 0
    %p117 = por %p115, %p116
    %p118 = scmp.ne.s32.totalorder %s104, %s105
    %p119 = scmp.eq.s32.totalorder %s15, 1
    %p120 = por %p118, %p119
    %p122 = scmp.ne.s32.totalorder %s105, %s121
    %p123 = scmp.eq.s32.totalorder %s15, 0
    %p124 = por %p122, %p123
    %p125 = scmp.le.s32.totalorder 1, %s9
    %p126 = scmp.lt.s32.totalorder %s9, 3
    %p127 = pnand %p125, %p126
    %p128 = pneg %p127
    // Predicated region
    $region9: #{unet_conv2_xx_forward.4} parent=5 // pred_check
      _
    $region10: #{unet_conv2_xx_forward.4} parent=5 // pred_check_branch
      %130 = sbr.rel (%p127) target = $region12
    $region11: #{unet_conv2_xx_forward.4} parent=5 // pred_region
      %s131 = ssub.s32 %s9, 1
      // Predicated region
      $region13: #{unet_conv2_xx_forward.4} parent=11 // pred_check
        %p132 = pneg %p68
      $region14: #{unet_conv2_xx_forward.4} parent=11 // pred_check_branch
        %134 = sbr.rel (%p132) target = $region16
      $region15: #{unet_conv2_xx_forward.4} parent=11 // pred_region
        _
      $region16: #{unet_conv2_xx_forward.4} parent=11 // pred_fallthru
        _
      // Predicated region
      $region17: #{unet_conv2_xx_forward.4} parent=11 // pred_check
        %p135 = pneg %p89
      $region18: #{unet_conv2_xx_forward.4} parent=11 // pred_check_branch
        %137 = sbr.rel (%p135) target = $region20
      $region19: #{unet_conv2_xx_forward.4} parent=11 // pred_region
        _
      $region20: #{unet_conv2_xx_forward.4} parent=11 // pred_fallthru
        _
    $region12: #{unet_conv2_xx_forward.4} parent=5 // pred_fallthru
      _
    %p138 = scmp.lt.s32.totalorder %s9, 2
    // Predicated region
    $region21: #{unet_conv2_xx_forward.4} parent=5 // pred_check
      %p139 = pneg %p138
    $region22: #{unet_conv2_xx_forward.4} parent=5 // pred_check_branch
      %141 = sbr.rel (%p139) target = $region24
    $region23: #{unet_conv2_xx_forward.4} parent=5 // pred_region
      // Predicated region
      $region25: #{unet_conv2_xx_forward.4} parent=23 // pred_check
        %p142 = pneg %p41
      $region26: #{unet_conv2_xx_forward.4} parent=23 // pred_check_branch
        %144 = sbr.rel (%p142) target = $region28
      $region27: #{unet_conv2_xx_forward.4} parent=23 // pred_region
        %p145 = scmp.lt.s32.totalorder %s16, 1
        %s146 = scalar_select %p145, %s16, 1
        %s147 = smul.addr %s146, 54
        %s148 = smul.addr %s147, 4
        %s149 = scalar_lea.vmem %s0, %s148
      $region28: #{unet_conv2_xx_forward.4} parent=23 // pred_fallthru
        _
    $region24: #{unet_conv2_xx_forward.4} parent=5 // pred_fallthru
      _
    %p150 = scmp.le.s32.totalorder 1, %s9
    %p151 = scmp.lt.s32.totalorder %s9, 3
    %p152 = pnand %p150, %p151
    %p153 = pneg %p152
    // Predicated region
    $region29: #{unet_conv2_xx_forward.4} parent=5 // pred_check
      _
    $region30: #{unet_conv2_xx_forward.4} parent=5 // pred_check_branch
      %155 = sbr.rel (%p152) target = $region32
    $region31: #{unet_conv2_xx_forward.4} parent=5 // pred_region
      %s156 = ssub.s32 %s9, 1
      %p157 = scmp.lt.s32.totalorder %s18, 1
      %s158 = scalar_select %p157, %s18, 1
      %s159 = smul.addr %s158, 54
      %s160 = smul.addr %s159, 4
      %s161 = scalar_lea.vmem %s0, %s160
      %p162 = pneg %p47
      %p163 = pneg %p44
      %p164 = pneg %p68
      %p165 = pneg %p65
      %p166 = pneg %p89
      %p167 = pneg %p86
      %p168 = pneg %p117
      %p169 = pneg %p114
      %s170 = smul.u32 16, %s19
      %p171 = scmp.lt.s32.totalorder %s18, 1
      %s172 = scalar_select %p171, %s18, 1
      %p173 = scmp.lt.s32.totalorder %s170, 15
      %s174 = scalar_select %p173, %s170, 15
      %s175 = smul.addr %s174, 2
      %s176 = smul.addr %s172, 32
      %s177 = sadd.s32 %s175, %s176
      %s178 = smul.addr %s177, 4
      %s179 = scalar_lea.vmem %s3, %s178
      %p180 = scmp.lt.s32.totalorder %s18, 1
      %s181 = scalar_select %p180, %s18, 1
      %s182 = smul.addr %s181, 54
      %s183 = smul.addr %s182, 4
      %s184 = scalar_lea.vmem %s0, %s183
      %s185 = smul.u32 16, %s19
      %p186 = scmp.lt.s32.totalorder %s18, 1
      %s187 = scalar_select %p186, %s18, 1
      %p188 = scmp.lt.s32.totalorder %s185, 15
      %s189 = scalar_select %p188, %s185, 15
      %s190 = smul.addr %s189, 2
      %s191 = smul.addr %s187, 32
      %s192 = sadd.s32 %s190, %s191
      %s193 = smul.addr %s192, 4
      %s194 = scalar_lea.vmem %s3, %s193
      %s195 = smul.u32 16, %s19
      %v197 = vld [vmem:[%s184] sm:$0xf]
      %v198 = vld [vmem:[%s184 + $0x4] sm:$0xf]
      %v199 = vld [vmem:[%s184 + $0x8] sm:$0x1]
      %v200 = vld [vmem:[%s184 + $0xc] sm:$0xf]
      %v201 = vld [vmem:[%s184 + $0x10] sm:$0xf]
      %v202 = vld [vmem:[%s184 + $0x14] sm:$0x1]
      %v203 = vld [vmem:[%s184 + $0x18] sm:$0xf]
      %v204 = vld [vmem:[%s184 + $0x1c] sm:$0xf]
      %v205 = vld [vmem:[%s184 + $0x20] sm:$0x1]
      %v206 = vld [vmem:[%s184 + $0x24] sm:$0xf]
      %v207 = vld [vmem:[%s184 + $0x28] sm:$0xf]
      %v208 = vld [vmem:[%s184 + $0x2c] sm:$0x1]
      %v209 = vld [vmem:[%s184 + $0x30] sm:$0xf]
      %v210 = vld [vmem:[%s184 + $0x34] sm:$0xf]
      %v211 = vld [vmem:[%s184 + $0x38] sm:$0x1]
      %v212 = vld [vmem:[%s184 + $0x3c] sm:$0xf]
      %v213 = vld [vmem:[%s184 + $0x40] sm:$0xf]
      %v214 = vld [vmem:[%s184 + $0x44] sm:$0x1]
      %v215 = vld [vmem:[%s184 + $0x48] sm:$0xf]
      %v216 = vld [vmem:[%s184 + $0x4c] sm:$0xf]
      %v217 = vld [vmem:[%s184 + $0x50] sm:$0x1]
      %v218 = vld [vmem:[%s184 + $0x54] sm:$0xf]
      %v219 = vld [vmem:[%s184 + $0x58] sm:$0xf]
      %v220 = vld [vmem:[%s184 + $0x5c] sm:$0x1]
      %v221 = vld [vmem:[%s184 + $0x60] sm:$0xf]
      %v222 = vld [vmem:[%s184 + $0x64] sm:$0xf]
      %v223 = vld [vmem:[%s184 + $0x68] sm:$0x1]
      %v224 = vld [vmem:[%s184 + $0x6c] sm:$0xf]
      %v225 = vld [vmem:[%s184 + $0x70] sm:$0xf]
      %v226 = vld [vmem:[%s184 + $0x74] sm:$0x1]
      %v227 = vld [vmem:[%s184 + $0x78] sm:$0xf]
      %v228 = vld [vmem:[%s184 + $0x7c] sm:$0xf]
      %v229 = vld [vmem:[%s184 + $0x80] sm:$0x1]
      %v230 = vld [vmem:[%s184 + $0x84] sm:$0xf]
      %v231 = vld [vmem:[%s184 + $0x88] sm:$0xf]
      %v232 = vld [vmem:[%s184 + $0x8c] sm:$0x1]
      %v233 = vld [vmem:[%s184 + $0x90] sm:$0xf]
      %v234 = vld [vmem:[%s184 + $0x94] sm:$0xf]
      %v235 = vld [vmem:[%s184 + $0x98] sm:$0x1]
      %v236 = vld [vmem:[%s184 + $0x9c] sm:$0xf]
      %v237 = vld [vmem:[%s184 + $0xa0] sm:$0xf]
      %v238 = vld [vmem:[%s184 + $0xa4] sm:$0x1]
      %v239 = vld [vmem:[%s184 + $0xa8] sm:$0xf]
      %v240 = vld [vmem:[%s184 + $0xac] sm:$0xf]
      %v241 = vld [vmem:[%s184 + $0xb0] sm:$0x1]
      %v242 = vld [vmem:[%s184 + $0xb4] sm:$0xf]
      %v243 = vld [vmem:[%s184 + $0xb8] sm:$0xf]
      %v244 = vld [vmem:[%s184 + $0xbc] sm:$0x1]
      %v245 = vld [vmem:[%s184 + $0xc0] sm:$0xf]
      %v246 = vld [vmem:[%s184 + $0xc4] sm:$0xf]
      %v247 = vld [vmem:[%s184 + $0xc8] sm:$0x1]
      %v248 = vld [vmem:[%s184 + $0xcc] sm:$0xf]
      %v249 = vld [vmem:[%s184 + $0xd0] sm:$0xf]
      %v250 = vld [vmem:[%s184 + $0xd4] sm:$0x1]
      %vm251 = vsmask.f32 3328
      %vm252 = vsmask.f32 7440
      %vm253 = vmor %vm251, %vm252
      %v255 = vshrl.u32 %v197, 16
      %v257 = vrot.slane %v255, 4
      %v258 = vshll.u32 %v197, 16
      %v260 = vrot.slane %v258, 5
      %v261 = vor.u32 %v257, %v260
      %v262 = vrot.slane %v261, 4
      %v264 = vshll.u32 %v198, 16
      %v266 = vrot.slane %v264, 5
      %v267 = vsel %vm253, %v262, %v266
      %v268 = vshrl.u32 %v198, 16
      %v270 = vrot.slane %v268, 4
      %v271 = vor.u32 %v270, %v266
      %v272 = vrot.slane %v271, 4
      %v274 = vshll.u32 %v199, 16
      %v276 = vrot.slane %v274, 5
      %v277 = vsel %vm253, %v272, %v276
      %v279 = vshrl.u32 %v200, 16
      %v281 = vrot.slane %v279, 4
      %v282 = vshll.u32 %v200, 16
      %v284 = vrot.slane %v282, 5
      %v285 = vor.u32 %v281, %v284
      %v286 = vrot.slane %v285, 4
      %v288 = vshll.u32 %v201, 16
      %v290 = vrot.slane %v288, 5
      %v291 = vsel %vm253, %v286, %v290
      %v292 = vshrl.u32 %v201, 16
      %v294 = vrot.slane %v292, 4
      %v295 = vor.u32 %v294, %v290
      %v296 = vrot.slane %v295, 4
      %v298 = vshll.u32 %v202, 16
      %v300 = vrot.slane %v298, 5
      %v301 = vsel %vm253, %v296, %v300
      %v303 = vshrl.u32 %v203, 16
      %v305 = vrot.slane %v303, 4
      %v306 = vshll.u32 %v203, 16
      %v308 = vrot.slane %v306, 5
      %v309 = vor.u32 %v305, %v308
      %v310 = vrot.slane %v309, 4
      %v312 = vshll.u32 %v204, 16
      %v314 = vrot.slane %v312, 5
      %v315 = vsel %vm253, %v310, %v314
      %v316 = vshrl.u32 %v204, 16
      %v318 = vrot.slane %v316, 4
      %v319 = vor.u32 %v318, %v314
      %v320 = vrot.slane %v319, 4
      %v322 = vshll.u32 %v205, 16
      %v324 = vrot.slane %v322, 5
      %v325 = vsel %vm253, %v320, %v324
      %v327 = vshrl.u32 %v206, 16
      %v329 = vrot.slane %v327, 4
      %v330 = vshll.u32 %v206, 16
      %v332 = vrot.slane %v330, 5
      %v333 = vor.u32 %v329, %v332
      %v334 = vrot.slane %v333, 4
      %v336 = vshll.u32 %v207, 16
      %v338 = vrot.slane %v336, 5
      %v339 = vsel %vm253, %v334, %v338
      %v340 = vshrl.u32 %v207, 16
      %v342 = vrot.slane %v340, 4
      %v343 = vor.u32 %v342, %v338
      %v344 = vrot.slane %v343, 4
      %v346 = vshll.u32 %v208, 16
      %v348 = vrot.slane %v346, 5
      %v349 = vsel %vm253, %v344, %v348
      %v351 = vshrl.u32 %v209, 16
      %v353 = vrot.slane %v351, 4
      %v354 = vshll.u32 %v209, 16
      %v356 = vrot.slane %v354, 5
      %v357 = vor.u32 %v353, %v356
      %v358 = vrot.slane %v357, 4
      %v360 = vshll.u32 %v210, 16
      %v362 = vrot.slane %v360, 5
      %v363 = vsel %vm253, %v358, %v362
      %v364 = vshrl.u32 %v210, 16
      %v366 = vrot.slane %v364, 4
      %v367 = vor.u32 %v366, %v362
      %v368 = vrot.slane %v367, 4
      %v370 = vshll.u32 %v211, 16
      %v372 = vrot.slane %v370, 5
      %v373 = vsel %vm253, %v368, %v372
      %v375 = vshrl.u32 %v212, 16
      %v377 = vrot.slane %v375, 4
      %v378 = vshll.u32 %v212, 16
      %v380 = vrot.slane %v378, 5
      %v381 = vor.u32 %v377, %v380
      %v382 = vrot.slane %v381, 4
      %v384 = vshll.u32 %v213, 16
      %v386 = vrot.slane %v384, 5
      %v387 = vsel %vm253, %v382, %v386
      %v388 = vshrl.u32 %v213, 16
      %v390 = vrot.slane %v388, 4
      %v391 = vor.u32 %v390, %v386
      %v392 = vrot.slane %v391, 4
      %v394 = vshll.u32 %v214, 16
      %v396 = vrot.slane %v394, 5
      %v397 = vsel %vm253, %v392, %v396
      %v399 = vshrl.u32 %v215, 16
      %v401 = vrot.slane %v399, 4
      %v402 = vshll.u32 %v215, 16
      %v404 = vrot.slane %v402, 5
      %v405 = vor.u32 %v401, %v404
      %v406 = vrot.slane %v405, 4
      %v408 = vshll.u32 %v216, 16
      %v410 = vrot.slane %v408, 5
      %v411 = vsel %vm253, %v406, %v410
      %v412 = vshrl.u32 %v216, 16
      %v414 = vrot.slane %v412, 4
      %v415 = vor.u32 %v414, %v410
      %v416 = vrot.slane %v415, 4
      %v418 = vshll.u32 %v217, 16
      %v420 = vrot.slane %v418, 5
      %v421 = vsel %vm253, %v416, %v420
      %v423 = vshrl.u32 %v218, 16
      %v425 = vrot.slane %v423, 4
      %v426 = vshll.u32 %v218, 16
      %v428 = vrot.slane %v426, 5
      %v429 = vor.u32 %v425, %v428
      %v430 = vrot.slane %v429, 4
      %v432 = vshll.u32 %v219, 16
      %v434 = vrot.slane %v432, 5
      %v435 = vsel %vm253, %v430, %v434
      %v436 = vshrl.u32 %v219, 16
      %v438 = vrot.slane %v436, 4
      %v439 = vor.u32 %v438, %v434
      %v440 = vrot.slane %v439, 4
      %v442 = vshll.u32 %v220, 16
      %v444 = vrot.slane %v442, 5
      %v445 = vsel %vm253, %v440, %v444
      %v447 = vshrl.u32 %v221, 16
      %v449 = vrot.slane %v447, 4
      %v450 = vshll.u32 %v221, 16
      %v452 = vrot.slane %v450, 5
      %v453 = vor.u32 %v449, %v452
      %v454 = vrot.slane %v453, 4
      %v456 = vshll.u32 %v222, 16
      %v458 = vrot.slane %v456, 5
      %v459 = vsel %vm253, %v454, %v458
      %v460 = vshrl.u32 %v222, 16
      %v462 = vrot.slane %v460, 4
      %v463 = vor.u32 %v462, %v458
      %v464 = vrot.slane %v463, 4
      %v466 = vshll.u32 %v223, 16
      %v468 = vrot.slane %v466, 5
      %v469 = vsel %vm253, %v464, %v468
      %v471 = vshrl.u32 %v224, 16
      %v473 = vrot.slane %v471, 4
      %v474 = vshll.u32 %v224, 16
      %v476 = vrot.slane %v474, 5
      %v477 = vor.u32 %v473, %v476
      %v478 = vrot.slane %v477, 4
      %v480 = vshll.u32 %v225, 16
      %v482 = vrot.slane %v480, 5
      %v483 = vsel %vm253, %v478, %v482
      %v484 = vshrl.u32 %v225, 16
      %v486 = vrot.slane %v484, 4
      %v487 = vor.u32 %v486, %v482
      %v488 = vrot.slane %v487, 4
      %v490 = vshll.u32 %v226, 16
      %v492 = vrot.slane %v490, 5
      %v493 = vsel %vm253, %v488, %v492
      %v495 = vshrl.u32 %v227, 16
      %v497 = vrot.slane %v495, 4
      %v498 = vshll.u32 %v227, 16
      %v500 = vrot.slane %v498, 5
      %v501 = vor.u32 %v497, %v500
      %v502 = vrot.slane %v501, 4
      %v504 = vshll.u32 %v228, 16
      %v506 = vrot.slane %v504, 5
      %v507 = vsel %vm253, %v502, %v506
      %v508 = vshrl.u32 %v228, 16
      %v510 = vrot.slane %v508, 4
      %v511 = vor.u32 %v510, %v506
      %v512 = vrot.slane %v511, 4
      %v514 = vshll.u32 %v229, 16
      %v516 = vrot.slane %v514, 5
      %v517 = vsel %vm253, %v512, %v516
      %v519 = vshrl.u32 %v230, 16
      %v521 = vrot.slane %v519, 4
      %v522 = vshll.u32 %v230, 16
      %v524 = vrot.slane %v522, 5
      %v525 = vor.u32 %v521, %v524
      %v526 = vrot.slane %v525, 4
      %v528 = vshll.u32 %v231, 16
      %v530 = vrot.slane %v528, 5
      %v531 = vsel %vm253, %v526, %v530
      %v532 = vshrl.u32 %v231, 16
      %v534 = vrot.slane %v532, 4
      %v535 = vor.u32 %v534, %v530
      %v536 = vrot.slane %v535, 4
      %v538 = vshll.u32 %v232, 16
      %v540 = vrot.slane %v538, 5
      %v541 = vsel %vm253, %v536, %v540
      %v543 = vshrl.u32 %v233, 16
      %v545 = vrot.slane %v543, 4
      %v546 = vshll.u32 %v233, 16
      %v548 = vrot.slane %v546, 5
      %v549 = vor.u32 %v545, %v548
      %v550 = vrot.slane %v549, 4
      %v552 = vshll.u32 %v234, 16
      %v554 = vrot.slane %v552, 5
      %v555 = vsel %vm253, %v550, %v554
      %v556 = vshrl.u32 %v234, 16
      %v558 = vrot.slane %v556, 4
      %v559 = vor.u32 %v558, %v554
      %v560 = vrot.slane %v559, 4
      %v562 = vshll.u32 %v235, 16
      %v564 = vrot.slane %v562, 5
      %v565 = vsel %vm253, %v560, %v564
      %v567 = vshrl.u32 %v236, 16
      %v569 = vrot.slane %v567, 4
      %v570 = vshll.u32 %v236, 16
      %v572 = vrot.slane %v570, 5
      %v573 = vor.u32 %v569, %v572
      %v574 = vrot.slane %v573, 4
      %v576 = vshll.u32 %v237, 16
      %v578 = vrot.slane %v576, 5
      %v579 = vsel %vm253, %v574, %v578
      %v580 = vshrl.u32 %v237, 16
      %v582 = vrot.slane %v580, 4
      %v583 = vor.u32 %v582, %v578
      %v584 = vrot.slane %v583, 4
      %v586 = vshll.u32 %v238, 16
      %v588 = vrot.slane %v586, 5
      %v589 = vsel %vm253, %v584, %v588
      %v591 = vshrl.u32 %v239, 16
      %v593 = vrot.slane %v591, 4
      %v594 = vshll.u32 %v239, 16
      %v596 = vrot.slane %v594, 5
      %v597 = vor.u32 %v593, %v596
      %v598 = vrot.slane %v597, 4
      %v600 = vshll.u32 %v240, 16
      %v602 = vrot.slane %v600, 5
      %v603 = vsel %vm253, %v598, %v602
      %v604 = vshrl.u32 %v240, 16
      %v606 = vrot.slane %v604, 4
      %v607 = vor.u32 %v606, %v602
      %v608 = vrot.slane %v607, 4
      %v610 = vshll.u32 %v241, 16
      %v612 = vrot.slane %v610, 5
      %v613 = vsel %vm253, %v608, %v612
      %v615 = vshrl.u32 %v242, 16
      %v617 = vrot.slane %v615, 4
      %v618 = vshll.u32 %v242, 16
      %v620 = vrot.slane %v618, 5
      %v621 = vor.u32 %v617, %v620
      %v622 = vrot.slane %v621, 4
      %v624 = vshll.u32 %v243, 16
      %v626 = vrot.slane %v624, 5
      %v627 = vsel %vm253, %v622, %v626
      %v628 = vshrl.u32 %v243, 16
      %v630 = vrot.slane %v628, 4
      %v631 = vor.u32 %v630, %v626
      %v632 = vrot.slane %v631, 4
      %v634 = vshll.u32 %v244, 16
      %v636 = vrot.slane %v634, 5
      %v637 = vsel %vm253, %v632, %v636
      %v639 = vshrl.u32 %v245, 16
      %v641 = vrot.slane %v639, 4
      %v642 = vshll.u32 %v245, 16
      %v644 = vrot.slane %v642, 5
      %v645 = vor.u32 %v641, %v644
      %v646 = vrot.slane %v645, 4
      %v648 = vshll.u32 %v246, 16
      %v650 = vrot.slane %v648, 5
      %v651 = vsel %vm253, %v646, %v650
      %v652 = vshrl.u32 %v246, 16
      %v654 = vrot.slane %v652, 4
      %v655 = vor.u32 %v654, %v650
      %v656 = vrot.slane %v655, 4
      %v658 = vshll.u32 %v247, 16
      %v660 = vrot.slane %v658, 5
      %v661 = vsel %vm253, %v656, %v660
      %v663 = vshrl.u32 %v248, 16
      %v665 = vrot.slane %v663, 4
      %v666 = vshll.u32 %v248, 16
      %v668 = vrot.slane %v666, 5
      %v669 = vor.u32 %v665, %v668
      %v670 = vrot.slane %v669, 4
      %v672 = vshll.u32 %v249, 16
      %v674 = vrot.slane %v672, 5
      %v675 = vsel %vm253, %v670, %v674
      %v676 = vshrl.u32 %v249, 16
      %v678 = vrot.slane %v676, 4
      %v679 = vor.u32 %v678, %v674
      %v680 = vrot.slane %v679, 4
      %v682 = vshll.u32 %v250, 16
      %v684 = vrot.slane %v682, 5
      %v685 = vsel %vm253, %v680, %v684
      %vm740 = vcmask 1042432
      %vm741 = vcmask 1046532
      %vm742 = vmor %vm740, %vm741
      %v743 = vrot.slane %v197, 5
      %v744 = vrot.slane %v743, 4
      %v745 = vrot.slane %v198, 5
      %v746 = vsel %vm742, %v744, %v745
      %v747 = vrot.slane %v745, 4
      %v748 = vrot.slane %v199, 5
      %v749 = vsel %vm742, %v747, %v748
      %v750 = vrot.slane %v200, 5
      %v751 = vrot.slane %v750, 4
      %v752 = vrot.slane %v201, 5
      %v753 = vsel %vm742, %v751, %v752
      %v754 = vrot.slane %v752, 4
      %v755 = vrot.slane %v202, 5
      %v756 = vsel %vm742, %v754, %v755
      %v757 = vrot.slane %v203, 5
      %v758 = vrot.slane %v757, 4
      %v759 = vrot.slane %v204, 5
      %v760 = vsel %vm742, %v758, %v759
      %v761 = vrot.slane %v759, 4
      %v762 = vrot.slane %v205, 5
      %v763 = vsel %vm742, %v761, %v762
      %v764 = vrot.slane %v206, 5
      %v765 = vrot.slane %v764, 4
      %v766 = vrot.slane %v207, 5
      %v767 = vsel %vm742, %v765, %v766
      %v768 = vrot.slane %v766, 4
      %v769 = vrot.slane %v208, 5
      %v770 = vsel %vm742, %v768, %v769
      %v771 = vrot.slane %v209, 5
      %v772 = vrot.slane %v771, 4
      %v773 = vrot.slane %v210, 5
      %v774 = vsel %vm742, %v772, %v773
      %v775 = vrot.slane %v773, 4
      %v776 = vrot.slane %v211, 5
      %v777 = vsel %vm742, %v775, %v776
      %v778 = vrot.slane %v212, 5
      %v779 = vrot.slane %v778, 4
      %v780 = vrot.slane %v213, 5
      %v781 = vsel %vm742, %v779, %v780
      %v782 = vrot.slane %v780, 4
      %v783 = vrot.slane %v214, 5
      %v784 = vsel %vm742, %v782, %v783
      %v785 = vrot.slane %v215, 5
      %v786 = vrot.slane %v785, 4
      %v787 = vrot.slane %v216, 5
      %v788 = vsel %vm742, %v786, %v787
      %v789 = vrot.slane %v787, 4
      %v790 = vrot.slane %v217, 5
      %v791 = vsel %vm742, %v789, %v790
      %v792 = vrot.slane %v218, 5
      %v793 = vrot.slane %v792, 4
      %v794 = vrot.slane %v219, 5
      %v795 = vsel %vm742, %v793, %v794
      %v796 = vrot.slane %v794, 4
      %v797 = vrot.slane %v220, 5
      %v798 = vsel %vm742, %v796, %v797
      %v799 = vrot.slane %v221, 5
      %v800 = vrot.slane %v799, 4
      %v801 = vrot.slane %v222, 5
      %v802 = vsel %vm742, %v800, %v801
      %v803 = vrot.slane %v801, 4
      %v804 = vrot.slane %v223, 5
      %v805 = vsel %vm742, %v803, %v804
      %v806 = vrot.slane %v224, 5
      %v807 = vrot.slane %v806, 4
      %v808 = vrot.slane %v225, 5
      %v809 = vsel %vm742, %v807, %v808
      %v810 = vrot.slane %v808, 4
      %v811 = vrot.slane %v226, 5
      %v812 = vsel %vm742, %v810, %v811
      %v813 = vrot.slane %v227, 5
      %v814 = vrot.slane %v813, 4
      %v815 = vrot.slane %v228, 5
      %v816 = vsel %vm742, %v814, %v815
      %v817 = vrot.slane %v815, 4
      %v818 = vrot.slane %v229, 5
      %v819 = vsel %vm742, %v817, %v818
      %v820 = vrot.slane %v230, 5
      %v821 = vrot.slane %v820, 4
      %v822 = vrot.slane %v231, 5
      %v823 = vsel %vm742, %v821, %v822
      %v824 = vrot.slane %v822, 4
      %v825 = vrot.slane %v232, 5
      %v826 = vsel %vm742, %v824, %v825
      %v827 = vrot.slane %v233, 5
      %v828 = vrot.slane %v827, 4
      %v829 = vrot.slane %v234, 5
      %v830 = vsel %vm742, %v828, %v829
      %v831 = vrot.slane %v829, 4
      %v832 = vrot.slane %v235, 5
      %v833 = vsel %vm742, %v831, %v832
      %v834 = vrot.slane %v236, 5
      %v835 = vrot.slane %v834, 4
      %v836 = vrot.slane %v237, 5
      %v837 = vsel %vm742, %v835, %v836
      %v838 = vrot.slane %v836, 4
      %v839 = vrot.slane %v238, 5
      %v840 = vsel %vm742, %v838, %v839
      %v841 = vrot.slane %v239, 5
      %v842 = vrot.slane %v841, 4
      %v843 = vrot.slane %v240, 5
      %v844 = vsel %vm742, %v842, %v843
      %v845 = vrot.slane %v843, 4
      %v846 = vrot.slane %v241, 5
      %v847 = vsel %vm742, %v845, %v846
      %v848 = vrot.slane %v242, 5
      %v849 = vrot.slane %v848, 4
      %v850 = vrot.slane %v243, 5
      %v851 = vsel %vm742, %v849, %v850
      %v852 = vrot.slane %v850, 4
      %v853 = vrot.slane %v244, 5
      %v854 = vsel %vm742, %v852, %v853
      %v855 = vrot.slane %v245, 5
      %v856 = vrot.slane %v855, 4
      %v857 = vrot.slane %v246, 5
      %v858 = vsel %vm742, %v856, %v857
      %v859 = vrot.slane %v857, 4
      %v860 = vrot.slane %v247, 5
      %v861 = vsel %vm742, %v859, %v860
      %v862 = vrot.slane %v248, 5
      %v863 = vrot.slane %v862, 4
      %v864 = vrot.slane %v249, 5
      %v865 = vsel %vm742, %v863, %v864
      %v866 = vrot.slane %v864, 4
      %v867 = vrot.slane %v250, 5
      %v868 = vsel %vm742, %v866, %v867
      %v869 = vunpack.c.l.b16 %v197
      %v870 = vunpack.c.l.b16 %v198
      %v871 = vunpack.c.l.b16 %v200
      %v872 = vunpack.c.l.b16 %v201
      %v873 = vunpack.c.l.b16 %v203
      %v874 = vunpack.c.l.b16 %v204
      %v875 = vunpack.c.l.b16 %v206
      %v876 = vunpack.c.l.b16 %v207
      %v877 = vunpack.c.l.b16 %v209
      %v878 = vunpack.c.l.b16 %v210
      %v879 = vunpack.c.l.b16 %v212
      %v880 = vunpack.c.l.b16 %v213
      %v881 = vunpack.c.l.b16 %v215
      %v882 = vunpack.c.l.b16 %v216
      %v883 = vunpack.c.l.b16 %v218
      %v884 = vunpack.c.l.b16 %v219
      %v885 = vunpack.c.l.b16 %v221
      %v886 = vunpack.c.l.b16 %v222
      %v887 = vunpack.c.l.b16 %v224
      %v888 = vunpack.c.l.b16 %v225
      %v889 = vunpack.c.l.b16 %v227
      %v890 = vunpack.c.l.b16 %v228
      %v891 = vunpack.c.l.b16 %v230
      %v892 = vunpack.c.l.b16 %v231
      %v893 = vunpack.c.l.b16 %v233
      %v894 = vunpack.c.l.b16 %v234
      %v895 = vunpack.c.l.b16 %v236
      %v896 = vunpack.c.l.b16 %v237
      %v897 = vunpack.c.l.b16 %v239
      %v898 = vunpack.c.l.b16 %v240
      %v899 = vunpack.c.l.b16 %v242
      %v900 = vunpack.c.l.b16 %v243
      %v901 = vpack.c.b16 %v870, %v869
      %v902 = vpack.c.b16 %v872, %v871
      %v903 = vpack.c.b16 %v874, %v873
      %v904 = vpack.c.b16 %v876, %v875
      %v905 = vpack.c.b16 %v878, %v877
      %v906 = vpack.c.b16 %v880, %v879
      %v907 = vpack.c.b16 %v882, %v881
      %v908 = vpack.c.b16 %v884, %v883
      %v909 = vpack.c.b16 %v886, %v885
      %v910 = vpack.c.b16 %v888, %v887
      %v911 = vpack.c.b16 %v890, %v889
      %v912 = vpack.c.b16 %v892, %v891
      %v913 = vpack.c.b16 %v894, %v893
      %v914 = vpack.c.b16 %v896, %v895
      %v915 = vpack.c.b16 %v898, %v897
      %v916 = vpack.c.b16 %v900, %v899
      %v917 = vunpack.c.l.b16 %v267
      %v918 = vunpack.c.l.b16 %v277
      %v919 = vunpack.c.l.b16 %v291
      %v920 = vunpack.c.l.b16 %v301
      %v921 = vunpack.c.l.b16 %v315
      %v922 = vunpack.c.l.b16 %v325
      %v923 = vunpack.c.l.b16 %v339
      %v924 = vunpack.c.l.b16 %v349
      %v925 = vunpack.c.l.b16 %v363
      %v926 = vunpack.c.l.b16 %v373
      %v927 = vunpack.c.l.b16 %v387
      %v928 = vunpack.c.l.b16 %v397
      %v929 = vunpack.c.l.b16 %v411
      %v930 = vunpack.c.l.b16 %v421
      %v931 = vunpack.c.l.b16 %v435
      %v932 = vunpack.c.l.b16 %v445
      %v933 = vunpack.c.l.b16 %v459
      %v934 = vunpack.c.l.b16 %v469
      %v935 = vunpack.c.l.b16 %v483
      %v936 = vunpack.c.l.b16 %v493
      %v937 = vunpack.c.l.b16 %v507
      %v938 = vunpack.c.l.b16 %v517
      %v939 = vunpack.c.l.b16 %v531
      %v940 = vunpack.c.l.b16 %v541
      %v941 = vunpack.c.l.b16 %v555
      %v942 = vunpack.c.l.b16 %v565
      %v943 = vunpack.c.l.b16 %v579
      %v944 = vunpack.c.l.b16 %v589
      %v945 = vunpack.c.l.b16 %v603
      %v946 = vunpack.c.l.b16 %v613
      %v947 = vunpack.c.l.b16 %v627
      %v948 = vunpack.c.l.b16 %v637
      %v949 = vpack.c.b16 %v918, %v917
      %v950 = vpack.c.b16 %v920, %v919
      %v951 = vpack.c.b16 %v922, %v921
      %v952 = vpack.c.b16 %v924, %v923
      %v953 = vpack.c.b16 %v926, %v925
      %v954 = vpack.c.b16 %v928, %v927
      %v955 = vpack.c.b16 %v930, %v929
      %v956 = vpack.c.b16 %v932, %v931
      %v957 = vpack.c.b16 %v934, %v933
      %v958 = vpack.c.b16 %v936, %v935
      %v959 = vpack.c.b16 %v938, %v937
      %v960 = vpack.c.b16 %v940, %v939
      %v961 = vpack.c.b16 %v942, %v941
      %v962 = vpack.c.b16 %v944, %v943
      %v963 = vpack.c.b16 %v946, %v945
      %v964 = vpack.c.b16 %v948, %v947
      %965 = vrot.lane.b32.xlu0 %v949, 4
      %v966 = vpop.permute.xlu0 %965
      %967 = vrot.lane.b32.xlu0 %v950, 4
      %v968 = vpop.permute.xlu0 %967
      %969 = vrot.lane.b32.xlu0 %v951, 4
      %v970 = vpop.permute.xlu0 %969
      %971 = vrot.lane.b32.xlu0 %v952, 4
      %v972 = vpop.permute.xlu0 %971
      %973 = vrot.lane.b32.xlu0 %v953, 4
      %v974 = vpop.permute.xlu0 %973
      %975 = vrot.lane.b32.xlu0 %v954, 4
      %v976 = vpop.permute.xlu0 %975
      %977 = vrot.lane.b32.xlu0 %v955, 4
      %v978 = vpop.permute.xlu0 %977
      %979 = vrot.lane.b32.xlu0 %v956, 4
      %v980 = vpop.permute.xlu0 %979
      %981 = vrot.lane.b32.xlu0 %v957, 4
      %v982 = vpop.permute.xlu0 %981
      %983 = vrot.lane.b32.xlu0 %v958, 4
      %v984 = vpop.permute.xlu0 %983
      %985 = vrot.lane.b32.xlu0 %v959, 4
      %v986 = vpop.permute.xlu0 %985
      %987 = vrot.lane.b32.xlu0 %v960, 4
      %v988 = vpop.permute.xlu0 %987
      %989 = vrot.lane.b32.xlu0 %v961, 4
      %v990 = vpop.permute.xlu0 %989
      %991 = vrot.lane.b32.xlu0 %v962, 4
      %v992 = vpop.permute.xlu0 %991
      %993 = vrot.lane.b32.xlu0 %v963, 4
      %v994 = vpop.permute.xlu0 %993
      %995 = vrot.lane.b32.xlu0 %v964, 4
      %v996 = vpop.permute.xlu0 %995
      %v997 = vunpack.c.l.b16 %v746
      %v998 = vunpack.c.l.b16 %v749
      %v999 = vunpack.c.l.b16 %v753
      %v1000 = vunpack.c.l.b16 %v756
      %v1001 = vunpack.c.l.b16 %v760
      %v1002 = vunpack.c.l.b16 %v763
      %v1003 = vunpack.c.l.b16 %v767
      %v1004 = vunpack.c.l.b16 %v770
      %v1005 = vunpack.c.l.b16 %v774
      %v1006 = vunpack.c.l.b16 %v777
      %v1007 = vunpack.c.l.b16 %v781
      %v1008 = vunpack.c.l.b16 %v784
      %v1009 = vunpack.c.l.b16 %v788
      %v1010 = vunpack.c.l.b16 %v791
      %v1011 = vunpack.c.l.b16 %v795
      %v1012 = vunpack.c.l.b16 %v798
      %v1013 = vunpack.c.l.b16 %v802
      %v1014 = vunpack.c.l.b16 %v805
      %v1015 = vunpack.c.l.b16 %v809
      %v1016 = vunpack.c.l.b16 %v812
      %v1017 = vunpack.c.l.b16 %v816
      %v1018 = vunpack.c.l.b16 %v819
      %v1019 = vunpack.c.l.b16 %v823
      %v1020 = vunpack.c.l.b16 %v826
      %v1021 = vunpack.c.l.b16 %v830
      %v1022 = vunpack.c.l.b16 %v833
      %v1023 = vunpack.c.l.b16 %v837
      %v1024 = vunpack.c.l.b16 %v840
      %v1025 = vunpack.c.l.b16 %v844
      %v1026 = vunpack.c.l.b16 %v847
      %v1027 = vunpack.c.l.b16 %v851
      %v1028 = vunpack.c.l.b16 %v854
      %v1029 = vpack.c.b16 %v998, %v997
      %v1030 = vpack.c.b16 %v1000, %v999
      %v1031 = vpack.c.b16 %v1002, %v1001
      %v1032 = vpack.c.b16 %v1004, %v1003
      %v1033 = vpack.c.b16 %v1006, %v1005
      %v1034 = vpack.c.b16 %v1008, %v1007
      %v1035 = vpack.c.b16 %v1010, %v1009
      %v1036 = vpack.c.b16 %v1012, %v1011
      %v1037 = vpack.c.b16 %v1014, %v1013
      %v1038 = vpack.c.b16 %v1016, %v1015
      %v1039 = vpack.c.b16 %v1018, %v1017
      %v1040 = vpack.c.b16 %v1020, %v1019
      %v1041 = vpack.c.b16 %v1022, %v1021
      %v1042 = vpack.c.b16 %v1024, %v1023
      %v1043 = vpack.c.b16 %v1026, %v1025
      %v1044 = vpack.c.b16 %v1028, %v1027
      %1045 = vrot.lane.b32.xlu0 %v1029, 8
      %v1046 = vpop.permute.xlu0 %1045
      %1047 = vrot.lane.b32.xlu0 %v1030, 8
      %v1048 = vpop.permute.xlu0 %1047
      %1049 = vrot.lane.b32.xlu0 %v1031, 8
      %v1050 = vpop.permute.xlu0 %1049
      %1051 = vrot.lane.b32.xlu0 %v1032, 8
      %v1052 = vpop.permute.xlu0 %1051
      %1053 = vrot.lane.b32.xlu0 %v1033, 8
      %v1054 = vpop.permute.xlu0 %1053
      %1055 = vrot.lane.b32.xlu0 %v1034, 8
      %v1056 = vpop.permute.xlu0 %1055
      %1057 = vrot.lane.b32.xlu0 %v1035, 8
      %v1058 = vpop.permute.xlu0 %1057
      %1059 = vrot.lane.b32.xlu0 %v1036, 8
      %v1060 = vpop.permute.xlu0 %1059
      %1061 = vrot.lane.b32.xlu0 %v1037, 8
      %v1062 = vpop.permute.xlu0 %1061
      %1063 = vrot.lane.b32.xlu0 %v1038, 8
      %v1064 = vpop.permute.xlu0 %1063
      %1065 = vrot.lane.b32.xlu0 %v1039, 8
      %v1066 = vpop.permute.xlu0 %1065
      %1067 = vrot.lane.b32.xlu0 %v1040, 8
      %v1068 = vpop.permute.xlu0 %1067
      %1069 = vrot.lane.b32.xlu0 %v1041, 8
      %v1070 = vpop.permute.xlu0 %1069
      %1071 = vrot.lane.b32.xlu0 %v1042, 8
      %v1072 = vpop.permute.xlu0 %1071
      %1073 = vrot.lane.b32.xlu0 %v1043, 8
      %v1074 = vpop.permute.xlu0 %1073
      %1075 = vrot.lane.b32.xlu0 %v1044, 8
      %v1076 = vpop.permute.xlu0 %1075
      %v1077 = vunpack.c.l.b16 %v245
      %v1078 = vunpack.c.l.b16 %v246
      %v1079 = vpack.c.b16 %v1078, %v1077
      %1080 = vrot.lane.b32.xlu0 %v902, 12
      %v1081 = vpop.permute.xlu0 %1080
      %1082 = vrot.lane.b32.xlu0 %v903, 12
      %v1083 = vpop.permute.xlu0 %1082
      %1084 = vrot.lane.b32.xlu0 %v904, 12
      %v1085 = vpop.permute.xlu0 %1084
      %1086 = vrot.lane.b32.xlu0 %v905, 12
      %v1087 = vpop.permute.xlu0 %1086
      %1088 = vrot.lane.b32.xlu0 %v906, 12
      %v1089 = vpop.permute.xlu0 %1088
      %1090 = vrot.lane.b32.xlu0 %v907, 12
      %v1091 = vpop.permute.xlu0 %1090
      %1092 = vrot.lane.b32.xlu0 %v908, 12
      %v1093 = vpop.permute.xlu0 %1092
      %1094 = vrot.lane.b32.xlu0 %v909, 12
      %v1095 = vpop.permute.xlu0 %1094
      %1096 = vrot.lane.b32.xlu0 %v910, 12
      %v1097 = vpop.permute.xlu0 %1096
      %1098 = vrot.lane.b32.xlu0 %v911, 12
      %v1099 = vpop.permute.xlu0 %1098
      %1100 = vrot.lane.b32.xlu0 %v912, 12
      %v1101 = vpop.permute.xlu0 %1100
      %1102 = vrot.lane.b32.xlu0 %v913, 12
      %v1103 = vpop.permute.xlu0 %1102
      %1104 = vrot.lane.b32.xlu0 %v914, 12
      %v1105 = vpop.permute.xlu0 %1104
      %1106 = vrot.lane.b32.xlu0 %v915, 12
      %v1107 = vpop.permute.xlu0 %1106
      %1108 = vrot.lane.b32.xlu0 %v916, 12
      %v1109 = vpop.permute.xlu0 %1108
      %1110 = vrot.lane.b32.xlu0 %v1079, 12
      %v1111 = vpop.permute.xlu0 %1110
      %v1112 = vunpack.c.l.b16 %v651
      %v1113 = vunpack.c.l.b16 %v661
      %v1114 = vpack.c.b16 %v1113, %v1112
      %1115 = vrot.lane.b32.xlu0 %v950, 16
      %v1116 = vpop.permute.xlu0 %1115
      %1117 = vrot.lane.b32.xlu0 %v951, 16
      %v1118 = vpop.permute.xlu0 %1117
      %1119 = vrot.lane.b32.xlu0 %v952, 16
      %v1120 = vpop.permute.xlu0 %1119
      %1121 = vrot.lane.b32.xlu0 %v953, 16
      %v1122 = vpop.permute.xlu0 %1121
      %1123 = vrot.lane.b32.xlu0 %v954, 16
      %v1124 = vpop.permute.xlu0 %1123
      %1125 = vrot.lane.b32.xlu0 %v955, 16
      %v1126 = vpop.permute.xlu0 %1125
      %1127 = vrot.lane.b32.xlu0 %v956, 16
      %v1128 = vpop.permute.xlu0 %1127
      %1129 = vrot.lane.b32.xlu0 %v957, 16
      %v1130 = vpop.permute.xlu0 %1129
      %1131 = vrot.lane.b32.xlu0 %v958, 16
      %v1132 = vpop.permute.xlu0 %1131
      %1133 = vrot.lane.b32.xlu0 %v959, 16
      %v1134 = vpop.permute.xlu0 %1133
      %1135 = vrot.lane.b32.xlu0 %v960, 16
      %v1136 = vpop.permute.xlu0 %1135
      %1137 = vrot.lane.b32.xlu0 %v961, 16
      %v1138 = vpop.permute.xlu0 %1137
      %1139 = vrot.lane.b32.xlu0 %v962, 16
      %v1140 = vpop.permute.xlu0 %1139
      %1141 = vrot.lane.b32.xlu0 %v963, 16
      %v1142 = vpop.permute.xlu0 %1141
      %1143 = vrot.lane.b32.xlu0 %v964, 16
      %v1144 = vpop.permute.xlu0 %1143
      %1145 = vrot.lane.b32.xlu0 %v1114, 16
      %v1146 = vpop.permute.xlu0 %1145
      %v1147 = vunpack.c.l.b16 %v858
      %v1148 = vunpack.c.l.b16 %v861
      %v1149 = vpack.c.b16 %v1148, %v1147
      %1150 = vrot.lane.b32.xlu0 %v1030, 20
      %v1151 = vpop.permute.xlu0 %1150
      %1152 = vrot.lane.b32.xlu0 %v1031, 20
      %v1153 = vpop.permute.xlu0 %1152
      %1154 = vrot.lane.b32.xlu0 %v1032, 20
      %v1155 = vpop.permute.xlu0 %1154
      %1156 = vrot.lane.b32.xlu0 %v1033, 20
      %v1157 = vpop.permute.xlu0 %1156
      %1158 = vrot.lane.b32.xlu0 %v1034, 20
      %v1159 = vpop.permute.xlu0 %1158
      %1160 = vrot.lane.b32.xlu0 %v1035, 20
      %v1161 = vpop.permute.xlu0 %1160
      %1162 = vrot.lane.b32.xlu0 %v1036, 20
      %v1163 = vpop.permute.xlu0 %1162
      %1164 = vrot.lane.b32.xlu0 %v1037, 20
      %v1165 = vpop.permute.xlu0 %1164
      %1166 = vrot.lane.b32.xlu0 %v1038, 20
      %v1167 = vpop.permute.xlu0 %1166
      %1168 = vrot.lane.b32.xlu0 %v1039, 20
      %v1169 = vpop.permute.xlu0 %1168
      %1170 = vrot.lane.b32.xlu0 %v1040, 20
      %v1171 = vpop.permute.xlu0 %1170
      %1172 = vrot.lane.b32.xlu0 %v1041, 20
      %v1173 = vpop.permute.xlu0 %1172
      %1174 = vrot.lane.b32.xlu0 %v1042, 20
      %v1175 = vpop.permute.xlu0 %1174
      %1176 = vrot.lane.b32.xlu0 %v1043, 20
      %v1177 = vpop.permute.xlu0 %1176
      %1178 = vrot.lane.b32.xlu0 %v1044, 20
      %v1179 = vpop.permute.xlu0 %1178
      %1180 = vrot.lane.b32.xlu0 %v1149, 20
      %v1181 = vpop.permute.xlu0 %1180
      %v1182 = vunpack.c.l.b16 %v248
      %v1183 = vunpack.c.l.b16 %v249
      %v1184 = vpack.c.b16 %v1183, %v1182
      %1185 = vrot.lane.b32.xlu0 %v903, 24
      %v1186 = vpop.permute.xlu0 %1185
      %1187 = vrot.lane.b32.xlu0 %v904, 24
      %v1188 = vpop.permute.xlu0 %1187
      %1189 = vrot.lane.b32.xlu0 %v905, 24
      %v1190 = vpop.permute.xlu0 %1189
      %1191 = vrot.lane.b32.xlu0 %v906, 24
      %v1192 = vpop.permute.xlu0 %1191
      %1193 = vrot.lane.b32.xlu0 %v907, 24
      %v1194 = vpop.permute.xlu0 %1193
      %1195 = vrot.lane.b32.xlu0 %v908, 24
      %v1196 = vpop.permute.xlu0 %1195
      %1197 = vrot.lane.b32.xlu0 %v909, 24
      %v1198 = vpop.permute.xlu0 %1197
      %1199 = vrot.lane.b32.xlu0 %v910, 24
      %v1200 = vpop.permute.xlu0 %1199
      %1201 = vrot.lane.b32.xlu0 %v911, 24
      %v1202 = vpop.permute.xlu0 %1201
      %1203 = vrot.lane.b32.xlu0 %v912, 24
      %v1204 = vpop.permute.xlu0 %1203
      %1205 = vrot.lane.b32.xlu0 %v913, 24
      %v1206 = vpop.permute.xlu0 %1205
      %1207 = vrot.lane.b32.xlu0 %v914, 24
      %v1208 = vpop.permute.xlu0 %1207
      %1209 = vrot.lane.b32.xlu0 %v915, 24
      %v1210 = vpop.permute.xlu0 %1209
      %1211 = vrot.lane.b32.xlu0 %v916, 24
      %v1212 = vpop.permute.xlu0 %1211
      %1213 = vrot.lane.b32.xlu0 %v1079, 24
      %v1214 = vpop.permute.xlu0 %1213
      %1215 = vrot.lane.b32.xlu0 %v1184, 24
      %v1216 = vpop.permute.xlu0 %1215
      %v1217 = vunpack.c.l.b16 %v675
      %v1218 = vunpack.c.l.b16 %v685
      %v1219 = vpack.c.b16 %v1218, %v1217
      %1220 = vrot.lane.b32.xlu0 %v951, 28
      %v1221 = vpop.permute.xlu0 %1220
      %1222 = vrot.lane.b32.xlu0 %v952, 28
      %v1223 = vpop.permute.xlu0 %1222
      %1224 = vrot.lane.b32.xlu0 %v953, 28
      %v1225 = vpop.permute.xlu0 %1224
      %1226 = vrot.lane.b32.xlu0 %v954, 28
      %v1227 = vpop.permute.xlu0 %1226
      %1228 = vrot.lane.b32.xlu0 %v955, 28
      %v1229 = vpop.permute.xlu0 %1228
      %1230 = vrot.lane.b32.xlu0 %v956, 28
      %v1231 = vpop.permute.xlu0 %1230
      %1232 = vrot.lane.b32.xlu0 %v957, 28
      %v1233 = vpop.permute.xlu0 %1232
      %1234 = vrot.lane.b32.xlu0 %v958, 28
      %v1235 = vpop.permute.xlu0 %1234
      %1236 = vrot.lane.b32.xlu0 %v959, 28
      %v1237 = vpop.permute.xlu0 %1236
      %1238 = vrot.lane.b32.xlu0 %v960, 28
      %v1239 = vpop.permute.xlu0 %1238
      %1240 = vrot.lane.b32.xlu0 %v961, 28
      %v1241 = vpop.permute.xlu0 %1240
      %1242 = vrot.lane.b32.xlu0 %v962, 28
      %v1243 = vpop.permute.xlu0 %1242
      %1244 = vrot.lane.b32.xlu0 %v963, 28
      %v1245 = vpop.permute.xlu0 %1244
      %1246 = vrot.lane.b32.xlu0 %v964, 28
      %v1247 = vpop.permute.xlu0 %1246
      %1248 = vrot.lane.b32.xlu0 %v1114, 28
      %v1249 = vpop.permute.xlu0 %1248
      %1250 = vrot.lane.b32.xlu0 %v1219, 28
      %v1251 = vpop.permute.xlu0 %1250
      %v1252 = vunpack.c.l.b16 %v865
      %v1253 = vunpack.c.l.b16 %v868
      %v1254 = vpack.c.b16 %v1253, %v1252
      %1255 = vrot.lane.b32.xlu0 %v1031, 32
      %v1256 = vpop.permute.xlu0 %1255
      %1257 = vrot.lane.b32.xlu0 %v1032, 32
      %v1258 = vpop.permute.xlu0 %1257
      %1259 = vrot.lane.b32.xlu0 %v1033, 32
      %v1260 = vpop.permute.xlu0 %1259
      %1261 = vrot.lane.b32.xlu0 %v1034, 32
      %v1262 = vpop.permute.xlu0 %1261
      %1263 = vrot.lane.b32.xlu0 %v1035, 32
      %v1264 = vpop.permute.xlu0 %1263
      %1265 = vrot.lane.b32.xlu0 %v1036, 32
      %v1266 = vpop.permute.xlu0 %1265
      %1267 = vrot.lane.b32.xlu0 %v1037, 32
      %v1268 = vpop.permute.xlu0 %1267
      %1269 = vrot.lane.b32.xlu0 %v1038, 32
      %v1270 = vpop.permute.xlu0 %1269
      %1271 = vrot.lane.b32.xlu0 %v1039, 32
      %v1272 = vpop.permute.xlu0 %1271
      %1273 = vrot.lane.b32.xlu0 %v1040, 32
      %v1274 = vpop.permute.xlu0 %1273
      %1275 = vrot.lane.b32.xlu0 %v1041, 32
      %v1276 = vpop.permute.xlu0 %1275
      %1277 = vrot.lane.b32.xlu0 %v1042, 32
      %v1278 = vpop.permute.xlu0 %1277
      %1279 = vrot.lane.b32.xlu0 %v1043, 32
      %v1280 = vpop.permute.xlu0 %1279
      %1281 = vrot.lane.b32.xlu0 %v1044, 32
      %v1282 = vpop.permute.xlu0 %1281
      %1283 = vrot.lane.b32.xlu0 %v1149, 32
      %v1284 = vpop.permute.xlu0 %1283
      %1285 = vrot.lane.b32.xlu0 %v1254, 32
      %v1286 = vpop.permute.xlu0 %1285
      %vm1287 = vcmask 31744
      %v1290 = vsel %vm1287, %v901, %v966
      %v1293 = vsel %vm1287, %v902, %v968
      %v1296 = vsel %vm1287, %v903, %v970
      %v1299 = vsel %vm1287, %v904, %v972
      %v1302 = vsel %vm1287, %v905, %v974
      %v1305 = vsel %vm1287, %v906, %v976
      %v1308 = vsel %vm1287, %v907, %v978
      %v1311 = vsel %vm1287, %v908, %v980
      %v1314 = vsel %vm1287, %v909, %v982
      %v1317 = vsel %vm1287, %v910, %v984
      %v1320 = vsel %vm1287, %v911, %v986
      %v1323 = vsel %vm1287, %v912, %v988
      %v1326 = vsel %vm1287, %v913, %v990
      %v1329 = vsel %vm1287, %v914, %v992
      %v1332 = vsel %vm1287, %v915, %v994
      %v1335 = vsel %vm1287, %v916, %v996
      %vm1336 = vcmask 64512
      %v1338 = vsel %vm1336, %v1290, %v1046
      %v1340 = vsel %vm1336, %v1293, %v1048
      %v1342 = vsel %vm1336, %v1296, %v1050
      %v1344 = vsel %vm1336, %v1299, %v1052
      %v1346 = vsel %vm1336, %v1302, %v1054
      %v1348 = vsel %vm1336, %v1305, %v1056
      %v1350 = vsel %vm1336, %v1308, %v1058
      %v1352 = vsel %vm1336, %v1311, %v1060
      %v1354 = vsel %vm1336, %v1314, %v1062
      %v1356 = vsel %vm1336, %v1317, %v1064
      %v1358 = vsel %vm1336, %v1320, %v1066
      %v1360 = vsel %vm1336, %v1323, %v1068
      %v1362 = vsel %vm1336, %v1326, %v1070
      %v1364 = vsel %vm1336, %v1329, %v1072
      %v1366 = vsel %vm1336, %v1332, %v1074
      %v1368 = vsel %vm1336, %v1335, %v1076
      %vm1369 = vcmask 97280
      %v1371 = vsel %vm1369, %v1338, %v1081
      %v1373 = vsel %vm1369, %v1340, %v1083
      %v1375 = vsel %vm1369, %v1342, %v1085
      %v1377 = vsel %vm1369, %v1344, %v1087
      %v1379 = vsel %vm1369, %v1346, %v1089
      %v1381 = vsel %vm1369, %v1348, %v1091
      %v1383 = vsel %vm1369, %v1350, %v1093
      %v1385 = vsel %vm1369, %v1352, %v1095
      %v1387 = vsel %vm1369, %v1354, %v1097
      %v1389 = vsel %vm1369, %v1356, %v1099
      %v1391 = vsel %vm1369, %v1358, %v1101
      %v1393 = vsel %vm1369, %v1360, %v1103
      %v1395 = vsel %vm1369, %v1362, %v1105
      %v1397 = vsel %vm1369, %v1364, %v1107
      %v1399 = vsel %vm1369, %v1366, %v1109
      %v1401 = vsel %vm1369, %v1368, %v1111
      %vm1402 = vcmask 130048
      %v1404 = vsel %vm1402, %v1371, %v1116
      %v1406 = vsel %vm1402, %v1373, %v1118
      %v1408 = vsel %vm1402, %v1375, %v1120
      %v1410 = vsel %vm1402, %v1377, %v1122
      %v1412 = vsel %vm1402, %v1379, %v1124
      %v1414 = vsel %vm1402, %v1381, %v1126
      %v1416 = vsel %vm1402, %v1383, %v1128
      %v1418 = vsel %vm1402, %v1385, %v1130
      %v1420 = vsel %vm1402, %v1387, %v1132
      %v1422 = vsel %vm1402, %v1389, %v1134
      %v1424 = vsel %vm1402, %v1391, %v1136
      %v1426 = vsel %vm1402, %v1393, %v1138
      %v1428 = vsel %vm1402, %v1395, %v1140
      %v1430 = vsel %vm1402, %v1397, %v1142
      %v1432 = vsel %vm1402, %v1399, %v1144
      %v1434 = vsel %vm1402, %v1401, %v1146
      %vm1435 = vcmask 162816
      %v1437 = vsel %vm1435, %v1404, %v1151
      %v1439 = vsel %vm1435, %v1406, %v1153
      %v1441 = vsel %vm1435, %v1408, %v1155
      %v1443 = vsel %vm1435, %v1410, %v1157
      %v1445 = vsel %vm1435, %v1412, %v1159
      %v1447 = vsel %vm1435, %v1414, %v1161
      %v1449 = vsel %vm1435, %v1416, %v1163
      %v1451 = vsel %vm1435, %v1418, %v1165
      %v1453 = vsel %vm1435, %v1420, %v1167
      %v1455 = vsel %vm1435, %v1422, %v1169
      %v1457 = vsel %vm1435, %v1424, %v1171
      %v1459 = vsel %vm1435, %v1426, %v1173
      %v1461 = vsel %vm1435, %v1428, %v1175
      %v1463 = vsel %vm1435, %v1430, %v1177
      %v1465 = vsel %vm1435, %v1432, %v1179
      %v1467 = vsel %vm1435, %v1434, %v1181
      %vm1468 = vcmask 195584
      %v1470 = vsel %vm1468, %v1437, %v1186
      %v1472 = vsel %vm1468, %v1439, %v1188
      %v1474 = vsel %vm1468, %v1441, %v1190
      %v1476 = vsel %vm1468, %v1443, %v1192
      %v1478 = vsel %vm1468, %v1445, %v1194
      %v1480 = vsel %vm1468, %v1447, %v1196
      %v1482 = vsel %vm1468, %v1449, %v1198
      %v1484 = vsel %vm1468, %v1451, %v1200
      %v1486 = vsel %vm1468, %v1453, %v1202
      %v1488 = vsel %vm1468, %v1455, %v1204
      %v1490 = vsel %vm1468, %v1457, %v1206
      %v1492 = vsel %vm1468, %v1459, %v1208
      %v1494 = vsel %vm1468, %v1461, %v1210
      %v1496 = vsel %vm1468, %v1463, %v1212
      %v1498 = vsel %vm1468, %v1465, %v1214
      %v1500 = vsel %vm1468, %v1467, %v1216
      %vm1501 = vcmask 228352
      %v1503 = vsel %vm1501, %v1470, %v1221
      %v1505 = vsel %vm1501, %v1472, %v1223
      %v1507 = vsel %vm1501, %v1474, %v1225
      %v1509 = vsel %vm1501, %v1476, %v1227
      %v1511 = vsel %vm1501, %v1478, %v1229
      %v1513 = vsel %vm1501, %v1480, %v1231
      %v1515 = vsel %vm1501, %v1482, %v1233
      %v1517 = vsel %vm1501, %v1484, %v1235
      %v1519 = vsel %vm1501, %v1486, %v1237
      %v1521 = vsel %vm1501, %v1488, %v1239
      %v1523 = vsel %vm1501, %v1490, %v1241
      %v1525 = vsel %vm1501, %v1492, %v1243
      %v1527 = vsel %vm1501, %v1494, %v1245
      %v1529 = vsel %vm1501, %v1496, %v1247
      %v1531 = vsel %vm1501, %v1498, %v1249
      %v1533 = vsel %vm1501, %v1500, %v1251
      %vm1534 = vcmask 261120
      %v1536 = vsel %vm1534, %v1503, %v1256
      %v1538 = vsel %vm1534, %v1505, %v1258
      %v1540 = vsel %vm1534, %v1507, %v1260
      %v1542 = vsel %vm1534, %v1509, %v1262
      %v1544 = vsel %vm1534, %v1511, %v1264
      %v1546 = vsel %vm1534, %v1513, %v1266
      %v1548 = vsel %vm1534, %v1515, %v1268
      %v1550 = vsel %vm1534, %v1517, %v1270
      %v1552 = vsel %vm1534, %v1519, %v1272
      %v1554 = vsel %vm1534, %v1521, %v1274
      %v1556 = vsel %vm1534, %v1523, %v1276
      %v1558 = vsel %vm1534, %v1525, %v1278
      %v1560 = vsel %vm1534, %v1527, %v1280
      %v1562 = vsel %vm1534, %v1529, %v1282
      %v1564 = vsel %vm1534, %v1531, %v1284
      %v1566 = vsel %vm1534, %v1533, %v1286
      %v1567 = vld [vmem:[%s1] sm:$0xf]
      %v1568 = vld [vmem:[%s1 + $0x4] sm:$0xf]
      %v1569 = vld [vmem:[%s1 + $0x8] sm:$0xf]
      %v1570 = vld [vmem:[%s1 + $0xc] sm:$0xf]
      %v1571 = vld [vmem:[%s1 + $0x10] sm:$0x3]
      %v1572 = vld [vmem:[%s2] sm:$0x1]
      %v1574 = vlaneseq
      %v1575 = vshrl.u32 %v1574, 7
      %v1576 = vsub.s32 0, %v1575
      %v1577 = vrot.slane %v1572, %v1576
      %v1584 = vunpack.c.l.b16 %v1567
      %v1585 = vunpack.c.l.b16 %v1568
      %v1586 = vunpack.c.l.b16 %v1569
      %v1587 = vunpack.c.l.b16 %v1570
      %v1588 = vunpack.c.l.b16 %v1571
      %v1589 = vpack.c.b16 %v1585, %v1584
      %v1590 = vpack.c.b16 %v1587, %v1586
      %v1591 = vpack.c.b16 %v1588, %v1588
      %vm1594 = vcmask 293888
      %v1595 = vsel %vm1594, %v1536, 0
      %v1597 = vsel %vm1594, %v1538, 0
      %v1599 = vsel %vm1594, %v1540, 0
      %v1601 = vsel %vm1594, %v1542, 0
      %v1603 = vsel %vm1594, %v1544, 0
      %v1605 = vsel %vm1594, %v1546, 0
      %v1607 = vsel %vm1594, %v1548, 0
      %v1609 = vsel %vm1594, %v1550, 0
      %v1611 = vsel %vm1594, %v1552, 0
      %v1613 = vsel %vm1594, %v1554, 0
      %v1615 = vsel %vm1594, %v1556, 0
      %v1617 = vsel %vm1594, %v1558, 0
      %v1619 = vsel %vm1594, %v1560, 0
      %v1621 = vsel %vm1594, %v1562, 0
      %v1623 = vsel %vm1594, %v1564, 0
      %v1625 = vsel %vm1594, %v1566, 0
      %vm1627 = vcmask 1041408
      %v1629 = vsel %vm1627, %v1591, 0
      %1631 = vmatprep.subr.bf16.mxu0 0
      %1632 = vmatpush1.bf16.msra.mxu0 %v1589
      %1633 = vmatprep.subr.bf16.mxu0 0
      %1634 = vmatpush1.bf16.msra.mxu0 %v1590
      %1635 = vmatprep.subr.bf16.mxu0 0
      %1636 = vmatpush1.bf16.msra.mxu0 %v1629
      %1637 = vmatprep.subr.bf16.mxu0 0
      %1638 = vmatpush1.bf16.msra.mxu0 0
      %1639 = vmatprep.subr.bf16.mxu0 0
      %1640 = vmatpush1.bf16.msra.mxu0 0
      %1641 = vmatprep.subr.bf16.mxu0 0
      %1642 = vmatpush1.bf16.msra.mxu0 0
      %1643 = vmatprep.subr.bf16.mxu0 0
      %1644 = vmatpush1.bf16.msra.mxu0 0
      %1645 = vmatprep.subr.bf16.mxu0 0
      %1646 = vmatpush1.bf16.msra.mxu0 0
      %1647 = vmatprep.subr.bf16.mxu0 0
      %1648 = vmatpush1.bf16.msra.mxu0 0
      %1649 = vmatprep.subr.bf16.mxu0 0
      %1650 = vmatpush1.bf16.msra.mxu0 0
      %1651 = vmatprep.subr.bf16.mxu0 0
      %1652 = vmatpush1.bf16.msra.mxu0 0
      %1653 = vmatprep.subr.bf16.mxu0 0
      %1654 = vmatpush1.bf16.msra.mxu0 0
      %1655 = vmatprep.subr.bf16.mxu0 0
      %1656 = vmatpush1.bf16.msra.mxu0 0
      %1657 = vmatprep.subr.bf16.mxu0 0
      %1658 = vmatpush1.bf16.msra.mxu0 0
      %1659 = vmatprep.subr.bf16.mxu0 0
      %1660 = vmatpush1.bf16.msra.mxu0 0
      %1661 = vmatprep.subr.bf16.mxu0 0
      %1662 = vmatpush1.bf16.msra.mxu0 0
      %1663 = vmatprep.mubr.bf16.mxu0 0
      %1664 = vmatmul.mubr.bf16.gmra.mrb[0].mxu0 %v1595
      %v1665 = vpop.f32.mrb[0].mxu0
      %v1666 = vadd.f32 %v1577, %v1665
      %v1667 = vpop.f32.mrb[0].mxu0
      %v1668 = vpop.f32.mrb[0].mxu0
      %v1669 = vadd.f32 %v1577, %v1668
      %v1670 = vpop.f32.mrb[0].mxu0
      %1671 = vmatprep.mubr.bf16.mxu0 0
      %1672 = vmatmul.mubr.bf16.gmra.mrb[0].mxu0 %v1597
      %v1673 = vpop.f32.mrb[0].mxu0
      %v1674 = vadd.f32 %v1577, %v1673
      %v1675 = vpop.f32.mrb[0].mxu0
      %v1676 = vpop.f32.mrb[0].mxu0
      %v1677 = vadd.f32 %v1577, %v1676
      %v1678 = vpop.f32.mrb[0].mxu0
      %1679 = vmatprep.mubr.bf16.mxu0 0
      %1680 = vmatmul.mubr.bf16.gmra.mrb[0].mxu0 %v1599
      %v1681 = vpop.f32.mrb[0].mxu0
      %v1682 = vadd.f32 %v1577, %v1681
      %v1683 = vpop.f32.mrb[0].mxu0
      %v1684 = vpop.f32.mrb[0].mxu0
      %v1685 = vadd.f32 %v1577, %v1684
      %v1686 = vpop.f32.mrb[0].mxu0
      %1687 = vmatprep.mubr.bf16.mxu0 0
      %1688 = vmatmul.mubr.bf16.gmra.mrb[0].mxu0 %v1601
      %v1689 = vpop.f32.mrb[0].mxu0
      %v1690 = vadd.f32 %v1577, %v1689
      %v1691 = vpop.f32.mrb[0].mxu0
      %v1692 = vpop.f32.mrb[0].mxu0
      %v1693 = vadd.f32 %v1577, %v1692
      %v1694 = vpop.f32.mrb[0].mxu0
      %1695 = vmatprep.mubr.bf16.mxu0 0
      %1696 = vmatmul.mubr.bf16.gmra.mrb[0].mxu0 %v1603
      %v1697 = vpop.f32.mrb[0].mxu0
      %v1698 = vadd.f32 %v1577, %v1697
      %v1699 = vpop.f32.mrb[0].mxu0
      %v1700 = vpop.f32.mrb[0].mxu0
      %v1701 = vadd.f32 %v1577, %v1700
      %v1702 = vpop.f32.mrb[0].mxu0
      %1703 = vmatprep.mubr.bf16.mxu0 0
      %1704 = vmatmul.mubr.bf16.gmra.mrb[0].mxu0 %v1605
      %v1705 = vpop.f32.mrb[0].mxu0
      %v1706 = vadd.f32 %v1577, %v1705
      %v1707 = vpop.f32.mrb[0].mxu0
      %v1708 = vpop.f32.mrb[0].mxu0
      %v1709 = vadd.f32 %v1577, %v1708
      %v1710 = vpop.f32.mrb[0].mxu0
      %1711 = vmatprep.mubr.bf16.mxu0 0
      %1712 = vmatmul.mubr.bf16.gmra.mrb[0].mxu0 %v1607
      %v1713 = vpop.f32.mrb[0].mxu0
      %v1714 = vadd.f32 %v1577, %v1713
      %v1715 = vpop.f32.mrb[0].mxu0
      %v1716 = vpop.f32.mrb[0].mxu0
      %v1717 = vadd.f32 %v1577, %v1716
      %v1718 = vpop.f32.mrb[0].mxu0
      %1719 = vmatprep.mubr.bf16.mxu0 0
      %1720 = vmatmul.mubr.bf16.gmra.mrb[0].mxu0 %v1609
      %v1721 = vpop.f32.mrb[0].mxu0
      %v1722 = vadd.f32 %v1577, %v1721
      %v1723 = vpop.f32.mrb[0].mxu0
      %v1724 = vpop.f32.mrb[0].mxu0
      %v1725 = vadd.f32 %v1577, %v1724
      %v1726 = vpop.f32.mrb[0].mxu0
      %1727 = vmatprep.mubr.bf16.mxu0 0
      %1728 = vmatmul.mubr.bf16.gmra.mrb[0].mxu0 %v1611
      %v1729 = vpop.f32.mrb[0].mxu0
      %v1730 = vadd.f32 %v1577, %v1729
      %v1731 = vpop.f32.mrb[0].mxu0
      %v1732 = vpop.f32.mrb[0].mxu0
      %v1733 = vadd.f32 %v1577, %v1732
      %v1734 = vpop.f32.mrb[0].mxu0
      %1735 = vmatprep.mubr.bf16.mxu0 0
      %1736 = vmatmul.mubr.bf16.gmra.mrb[0].mxu0 %v1613
      %v1737 = vpop.f32.mrb[0].mxu0
      %v1738 = vadd.f32 %v1577, %v1737
      %v1739 = vpop.f32.mrb[0].mxu0
      %v1740 = vpop.f32.mrb[0].mxu0
      %v1741 = vadd.f32 %v1577, %v1740
      %v1742 = vpop.f32.mrb[0].mxu0
      %1743 = vmatprep.mubr.bf16.mxu0 0
      %1744 = vmatmul.mubr.bf16.gmra.mrb[0].mxu0 %v1615
      %v1745 = vpop.f32.mrb[0].mxu0
      %v1746 = vadd.f32 %v1577, %v1745
      %v1747 = vpop.f32.mrb[0].mxu0
      %v1748 = vpop.f32.mrb[0].mxu0
      %v1749 = vadd.f32 %v1577, %v1748
      %v1750 = vpop.f32.mrb[0].mxu0
      %1751 = vmatprep.mubr.bf16.mxu0 0
      %1752 = vmatmul.mubr.bf16.gmra.mrb[0].mxu0 %v1617
      %v1753 = vpop.f32.mrb[0].mxu0
      %v1754 = vadd.f32 %v1577, %v1753
      %v1755 = vpop.f32.mrb[0].mxu0
      %v1756 = vpop.f32.mrb[0].mxu0
      %v1757 = vadd.f32 %v1577, %v1756
      %v1758 = vpop.f32.mrb[0].mxu0
      %1759 = vmatprep.mubr.bf16.mxu0 0
      %1760 = vmatmul.mubr.bf16.gmra.mrb[0].mxu0 %v1619
      %v1761 = vpop.f32.mrb[0].mxu0
      %v1762 = vadd.f32 %v1577, %v1761
      %v1763 = vpop.f32.mrb[0].mxu0
      %v1764 = vpop.f32.mrb[0].mxu0
      %v1765 = vadd.f32 %v1577, %v1764
      %v1766 = vpop.f32.mrb[0].mxu0
      %1767 = vmatprep.mubr.bf16.mxu0 0
      %1768 = vmatmul.mubr.bf16.gmra.mrb[0].mxu0 %v1621
      %v1769 = vpop.f32.mrb[0].mxu0
      %v1770 = vadd.f32 %v1577, %v1769
      %v1771 = vpop.f32.mrb[0].mxu0
      %v1772 = vpop.f32.mrb[0].mxu0
      %v1773 = vadd.f32 %v1577, %v1772
      %v1774 = vpop.f32.mrb[0].mxu0
      %1775 = vmatprep.mubr.bf16.mxu0 0
      %1776 = vmatmul.mubr.bf16.gmra.mrb[0].mxu0 %v1623
      %v1777 = vpop.f32.mrb[0].mxu0
      %v1778 = vadd.f32 %v1577, %v1777
      %v1779 = vpop.f32.mrb[0].mxu0
      %v1780 = vpop.f32.mrb[0].mxu0
      %v1781 = vadd.f32 %v1577, %v1780
      %v1782 = vpop.f32.mrb[0].mxu0
      %1783 = vmatprep.mubr.bf16.mxu0 0
      %1784 = vmatmul.mubr.bf16.gmra.mrb[0].mxu0 %v1625
      %v1785 = vpop.f32.mrb[0].mxu0
      %v1786 = vadd.f32 %v1577, %v1785
      %v1787 = vpop.f32.mrb[0].mxu0
      %v1788 = vpop.f32.mrb[0].mxu0
      %v1789 = vadd.f32 %v1577, %v1788
      %v1790 = vpop.f32.mrb[0].mxu0
      %1791 = vdwg.mxu0
      %v1792 = vmax.f32 %v1666, 0.0
      %v1793 = vmax.f32 %v1669, 0.0
      %v1794 = vmax.f32 %v1674, 0.0
      %v1795 = vmax.f32 %v1677, 0.0
      %v1796 = vmax.f32 %v1682, 0.0
      %v1797 = vmax.f32 %v1685, 0.0
      %v1798 = vmax.f32 %v1690, 0.0
      %v1799 = vmax.f32 %v1693, 0.0
      %v1800 = vmax.f32 %v1698, 0.0
      %v1801 = vmax.f32 %v1701, 0.0
      %v1802 = vmax.f32 %v1706, 0.0
      %v1803 = vmax.f32 %v1709, 0.0
      %v1804 = vmax.f32 %v1714, 0.0
      %v1805 = vmax.f32 %v1717, 0.0
      %v1806 = vmax.f32 %v1722, 0.0
      %v1807 = vmax.f32 %v1725, 0.0
      %v1808 = vmax.f32 %v1730, 0.0
      %v1809 = vmax.f32 %v1733, 0.0
      %v1810 = vmax.f32 %v1738, 0.0
      %v1811 = vmax.f32 %v1741, 0.0
      %v1812 = vmax.f32 %v1746, 0.0
      %v1813 = vmax.f32 %v1749, 0.0
      %v1814 = vmax.f32 %v1754, 0.0
      %v1815 = vmax.f32 %v1757, 0.0
      %v1816 = vmax.f32 %v1762, 0.0
      %v1817 = vmax.f32 %v1765, 0.0
      %v1818 = vmax.f32 %v1770, 0.0
      %v1819 = vmax.f32 %v1773, 0.0
      %v1820 = vmax.f32 %v1778, 0.0
      %v1821 = vmax.f32 %v1781, 0.0
      %v1822 = vmax.f32 %v1786, 0.0
      %v1823 = vmax.f32 %v1789, 0.0
      %v1824 = vpack.c.bf16 %v1793, %v1792
      %v1825 = vpack.c.bf16 %v1795, %v1794
      %v1826 = vpack.c.bf16 %v1797, %v1796
      %v1827 = vpack.c.bf16 %v1799, %v1798
      %v1828 = vpack.c.bf16 %v1801, %v1800
      %v1829 = vpack.c.bf16 %v1803, %v1802
      %v1830 = vpack.c.bf16 %v1805, %v1804
      %v1831 = vpack.c.bf16 %v1807, %v1806
      %v1832 = vpack.c.bf16 %v1809, %v1808
      %v1833 = vpack.c.bf16 %v1811, %v1810
      %v1834 = vpack.c.bf16 %v1813, %v1812
      %v1835 = vpack.c.bf16 %v1815, %v1814
      %v1836 = vpack.c.bf16 %v1817, %v1816
      %v1837 = vpack.c.bf16 %v1819, %v1818
      %v1838 = vpack.c.bf16 %v1821, %v1820
      %v1839 = vpack.c.bf16 %v1823, %v1822
      %v1856 = vunpack.c.l.b16 %v1824
      %v1857 = vunpack.c.h.b16 %v1824
      %v1858 = vunpack.c.l.b16 %v1825
      %v1859 = vunpack.c.h.b16 %v1825
      %v1860 = vunpack.c.l.b16 %v1826
      %v1861 = vunpack.c.h.b16 %v1826
      %v1862 = vunpack.c.l.b16 %v1827
      %v1863 = vunpack.c.h.b16 %v1827
      %v1864 = vunpack.c.l.b16 %v1828
      %v1865 = vunpack.c.h.b16 %v1828
      %v1866 = vunpack.c.l.b16 %v1829
      %v1867 = vunpack.c.h.b16 %v1829
      %v1868 = vunpack.c.l.b16 %v1830
      %v1869 = vunpack.c.h.b16 %v1830
      %v1870 = vunpack.c.l.b16 %v1831
      %v1871 = vunpack.c.h.b16 %v1831
      %v1872 = vunpack.c.l.b16 %v1832
      %v1873 = vunpack.c.h.b16 %v1832
      %v1874 = vunpack.c.l.b16 %v1833
      %v1875 = vunpack.c.h.b16 %v1833
      %v1876 = vunpack.c.l.b16 %v1834
      %v1877 = vunpack.c.h.b16 %v1834
      %v1878 = vunpack.c.l.b16 %v1835
      %v1879 = vunpack.c.h.b16 %v1835
      %v1880 = vunpack.c.l.b16 %v1836
      %v1881 = vunpack.c.h.b16 %v1836
      %v1882 = vunpack.c.l.b16 %v1837
      %v1883 = vunpack.c.h.b16 %v1837
      %v1884 = vunpack.c.l.b16 %v1838
      %v1885 = vunpack.c.h.b16 %v1838
      %v1886 = vunpack.c.l.b16 %v1839
      %v1887 = vunpack.c.h.b16 %v1839
      %v1888 = vpack.c.b16 %v1856, %v1856
      %v1889 = vpack.c.b16 %v1857, %v1857
      %v1890 = vpack.c.b16 %v1858, %v1858
      %v1891 = vpack.c.b16 %v1859, %v1859
      %v1892 = vpack.c.b16 %v1860, %v1860
      %v1893 = vpack.c.b16 %v1861, %v1861
      %v1894 = vpack.c.b16 %v1862, %v1862
      %v1895 = vpack.c.b16 %v1863, %v1863
      %v1896 = vpack.c.b16 %v1864, %v1864
      %v1897 = vpack.c.b16 %v1865, %v1865
      %v1898 = vpack.c.b16 %v1866, %v1866
      %v1899 = vpack.c.b16 %v1867, %v1867
      %v1900 = vpack.c.b16 %v1868, %v1868
      %v1901 = vpack.c.b16 %v1869, %v1869
      %v1902 = vpack.c.b16 %v1870, %v1870
      %v1903 = vpack.c.b16 %v1871, %v1871
      %v1904 = vpack.c.b16 %v1872, %v1872
      %v1905 = vpack.c.b16 %v1873, %v1873
      %v1906 = vpack.c.b16 %v1874, %v1874
      %v1907 = vpack.c.b16 %v1875, %v1875
      %v1908 = vpack.c.b16 %v1876, %v1876
      %v1909 = vpack.c.b16 %v1877, %v1877
      %v1910 = vpack.c.b16 %v1878, %v1878
      %v1911 = vpack.c.b16 %v1879, %v1879
      %v1912 = vpack.c.b16 %v1880, %v1880
      %v1913 = vpack.c.b16 %v1881, %v1881
      %v1914 = vpack.c.b16 %v1882, %v1882
      %v1915 = vpack.c.b16 %v1883, %v1883
      %v1916 = vpack.c.b16 %v1884, %v1884
      %v1917 = vpack.c.b16 %v1885, %v1885
      %v1918 = vpack.c.b16 %v1886, %v1886
      %v1919 = vpack.c.b16 %v1887, %v1887
      %vm1952 = vcmask 60416
      %1953 = vst.msk [vmem:[%s194] sm:$0xf] %vm1952, %v1888
      %1954 = vst.msk [vmem:[%s194 + $0x4] sm:$0xf] %vm1952, %v1889
      %1955 = vst.msk [vmem:[%s194 + $0x8] sm:$0xf] %vm1952, %v1890
      %1956 = vst.msk [vmem:[%s194 + $0xc] sm:$0xf] %vm1952, %v1891
      %1957 = vst.msk [vmem:[%s194 + $0x10] sm:$0xf] %vm1952, %v1892
      %1958 = vst.msk [vmem:[%s194 + $0x14] sm:$0xf] %vm1952, %v1893
      %1959 = vst.msk [vmem:[%s194 + $0x18] sm:$0xf] %vm1952, %v1894
      %1960 = vst.msk [vmem:[%s194 + $0x1c] sm:$0xf] %vm1952, %v1895
      %1961 = vst.msk [vmem:[%s194 + $0x20] sm:$0xf] %vm1952, %v1896
      %1962 = vst.msk [vmem:[%s194 + $0x24] sm:$0xf] %vm1952, %v1897
      %1963 = vst.msk [vmem:[%s194 + $0x28] sm:$0xf] %vm1952, %v1898
      %1964 = vst.msk [vmem:[%s194 + $0x2c] sm:$0xf] %vm1952, %v1899
      %1965 = vst.msk [vmem:[%s194 + $0x30] sm:$0xf] %vm1952, %v1900
      %1966 = vst.msk [vmem:[%s194 + $0x34] sm:$0xf] %vm1952, %v1901
      %1967 = vst.msk [vmem:[%s194 + $0x38] sm:$0xf] %vm1952, %v1902
      %1968 = vst.msk [vmem:[%s194 + $0x3c] sm:$0xf] %vm1952, %v1903
      %1969 = vst.msk [vmem:[%s194 + $0x40] sm:$0xf] %vm1952, %v1904
      %1970 = vst.msk [vmem:[%s194 + $0x44] sm:$0xf] %vm1952, %v1905
      %1971 = vst.msk [vmem:[%s194 + $0x48] sm:$0xf] %vm1952, %v1906
      %1972 = vst.msk [vmem:[%s194 + $0x4c] sm:$0xf] %vm1952, %v1907
      %1973 = vst.msk [vmem:[%s194 + $0x50] sm:$0xf] %vm1952, %v1908
      %1974 = vst.msk [vmem:[%s194 + $0x54] sm:$0xf] %vm1952, %v1909
      %1975 = vst.msk [vmem:[%s194 + $0x58] sm:$0xf] %vm1952, %v1910
      %1976 = vst.msk [vmem:[%s194 + $0x5c] sm:$0xf] %vm1952, %v1911
      %1977 = vst.msk [vmem:[%s194 + $0x60] sm:$0xf] %vm1952, %v1912
      %1978 = vst.msk [vmem:[%s194 + $0x64] sm:$0xf] %vm1952, %v1913
      %1979 = vst.msk [vmem:[%s194 + $0x68] sm:$0xf] %vm1952, %v1914
      %1980 = vst.msk [vmem:[%s194 + $0x6c] sm:$0xf] %vm1952, %v1915
      %1981 = vst.msk [vmem:[%s194 + $0x70] sm:$0xf] %vm1952, %v1916
      %1982 = vst.msk [vmem:[%s194 + $0x74] sm:$0xf] %vm1952, %v1917
      %1983 = vst.msk [vmem:[%s194 + $0x78] sm:$0xf] %vm1952, %v1918
      %1984 = vst.msk [vmem:[%s194 + $0x7c] sm:$0xf] %vm1952, %v1919
      %s1985 = smul.u32 16, %s19
      %p1986 = scmp.lt.s32.totalorder %s18, 1
      %s1987 = scalar_select %p1986, %s18, 1
      %p1988 = scmp.lt.s32.totalorder %s1985, 15
      %s1989 = scalar_select %p1988, %s1985, 15
      %s1990 = smul.addr %s1989, 2
      %s1991 = smul.addr %s1987, 32
      %s1992 = sadd.s32 %s1990, %s1991
      %s1993 = smul.addr %s1992, 4
      %s1994 = scalar_lea.vmem %s3, %s1993
      // Predicated region
      $region33: #{unet_conv2_xx_forward.4} parent=31 // pred_check
        %p1995 = pneg %p114
      $region34: #{unet_conv2_xx_forward.4} parent=31 // pred_check_branch
        %1997 = sbr.rel (%p1995) target = $region36
      $region35: #{unet_conv2_xx_forward.4} parent=31 // pred_region
        %s1998 = smul.u32 16, %s19
      $region36: #{unet_conv2_xx_forward.4} parent=31 // pred_fallthru
        _
    $region32: #{unet_conv2_xx_forward.4} parent=5 // pred_fallthru
      _
    %p1999 = scmp.le.s32.totalorder 2, %s9
    // Predicated region
    $region37: #{unet_conv2_xx_forward.4} parent=5 // pred_check
      %p2000 = pneg %p1999
    $region38: #{unet_conv2_xx_forward.4} parent=5 // pred_check_branch
      %2002 = sbr.rel (%p2000) target = $region40
    $region39: #{unet_conv2_xx_forward.4} parent=5 // pred_region
      %s2003 = ssub.s32 %s9, 2
      // Predicated region
      $region41: #{unet_conv2_xx_forward.4} parent=39 // pred_check
        %p2004 = pneg %p120
      $region42: #{unet_conv2_xx_forward.4} parent=39 // pred_check_branch
        %2006 = sbr.rel (%p2004) target = $region44
      $region43: #{unet_conv2_xx_forward.4} parent=39 // pred_region
        %s2007 = smul.u32 16, %s21
        %p2008 = scmp.lt.s32.totalorder %s20, 1
        %s2009 = scalar_select %p2008, %s20, 1
        %p2010 = scmp.lt.s32.totalorder %s2007, 15
        %s2011 = scalar_select %p2010, %s2007, 15
        %s2012 = smul.addr %s2011, 2
        %s2013 = smul.addr %s2009, 32
        %s2014 = sadd.s32 %s2012, %s2013
        %s2015 = smul.addr %s2014, 4
        %s2016 = scalar_lea.vmem %s3, %s2015
      $region44: #{unet_conv2_xx_forward.4} parent=39 // pred_fallthru
        _
    $region40: #{unet_conv2_xx_forward.4} parent=5 // pred_fallthru
      _
  $region6: #{unet_conv2_xx_forward.4} parent=0 // loop_footer
    %s13 = sadd.s32 1, %s9
  $region7: #{unet_conv2_xx_forward.4} parent=0 // loop_footer_branch
    %8 = sbr.rel target = $region3
  $region8: #{unet_conv2_xx_forward.4} parent=0 // loop_exit
    _

// kernel: unet_conv2_xx_forward.7
$region0: #{unet_conv2_xx_forward.7}
  #allocation0 [shape = 'u32[]', space=smem, size = 0x4, offset = 0x4, fixed_abs, tag = 'smem constant byte address 0x4 - core index']
  #allocation1 [shape = 'u32[144,128]{1,0:T(1,128)}', space=vmem, size = 0x12000, scoped, tag = 'internal scratch']
  %s0 = inlined_call_operand.vmem [shape: bf16[2,16,16,4], index: 0, kind: input, shape index: {}]
  %s1 = inlined_call_operand.vmem [shape: bf16[2,16,16,4], index: 1, kind: input, shape index: {}]
  %s2 = inlined_call_operand.vmem [shape: f32[2,1,4], index: 2, kind: input, shape index: {}]
  %s3 = inlined_call_operand.vmem [shape: f32[2,1,4], index: 3, kind: input, shape index: {}]
  %s4 = inlined_call_operand.vmem [shape: f32[2,16,16,8], index: 4, kind: output, shape index: {}]
  %s5 = sld [smem:[#allocation0]]
  $region49: #{unet_conv2_xx_forward.7} parent=0
    _
  %s7 = ssub.s32 1, %s5
  %s8 = scalar_select 0, %s7, %s5
  loop: start=0, step=1, limit=4
  $region2: #{unet_conv2_xx_forward.7} parent=0 // loop_pre_header
    _
  $region3: #{unet_conv2_xx_forward.7} parent=0 // loop_header
    %s10 = sphi 0, %s14
    %p11 = scmp.ge.s32.totalorder %s10, 4
    %s17 = sphi 0, %s29
    %s18 = sphi 0, %s25
    %s19 = sphi 0, %s17
    %s20 = sphi 0, %s18
    %s21 = sphi 0, %s19
    %s22 = sphi 0, %s20
    %s34 = sphi 0, %s36
    %s37 = sphi 0, %s34
    %s38 = sphi 0, %s37
    %s54 = sphi 0, %s38
    %s62 = sphi 0, %s64
    %s65 = sphi 0, %s62
    %s66 = sphi 0, %s65
    %s82 = sphi 0, %s66
    %s88 = sphi 0, %s90
    %s91 = sphi 0, %s88
    %s92 = sphi 0, %s91
    %s108 = sphi 0, %s92
    %s114 = sphi 0, %s116
    %s117 = sphi 0, %s114
    %s118 = sphi 0, %s117
    %s134 = sphi 0, %s118
    %s142 = sphi 0, %s144
    %s145 = sphi 0, %s142
    %s146 = sphi 0, %s145
    %s162 = sphi 0, %s146
  $region4: #{unet_conv2_xx_forward.7} parent=0 // loop_header_branch
    %13 = sbr.rel (%p11) target = $region8
  $region5: #{unet_conv2_xx_forward.7} parent=0 // loop_body
    %s15 = ssub.s32 %s10, 1
    %s16 = ssub.s32 %s10, 2
    %s23 = sadd.s32 1, %s18
    %p24 = scmp.ge.s32.totalorder %s23, 1
    %s25 = scalar_select %p24, 0, %s23
    %s26 = sadd.s32 1, %s17
    %s27 = scalar_select %p24, %s26, %s17
    %p28 = scmp.ge.s32.totalorder %s27, 2
    %s29 = scalar_select %p28, 0, %s27
    %s30 = ssub.s32 %s17, %s29
    %s31 = ssub.s32 %s18, %s25
    %s32 = sor.u32 %s30, %s31
    %p33 = scmp.eq.s32.totalorder %s32, 0
    %s35 = sadd.s32 %s34, 1
    %s36 = scalar_select %p33, %s34, %s35
    %p39 = pneg %p33
    %p40 = scmp.eq.s32.totalorder %s10, 1
    %p41 = por %p39, %p40
    %p42 = scmp.ne.s32.totalorder %s34, %s37
    %p43 = scmp.eq.s32.totalorder %s10, 0
    %p44 = por %p42, %p43
    %p45 = scmp.ne.s32.totalorder %s34, %s37
    %p46 = scmp.eq.s32.totalorder %s15, 1
    %p47 = por %p45, %p46
    %p48 = scmp.ne.s32.totalorder %s37, %s38
    %p49 = scmp.eq.s32.totalorder %s15, 0
    %p50 = por %p48, %p49
    %p51 = scmp.ne.s32.totalorder %s37, %s38
    %p52 = scmp.eq.s32.totalorder %s16, 1
    %p53 = por %p51, %p52
    %p55 = scmp.ne.s32.totalorder %s38, %s54
    %p56 = scmp.eq.s32.totalorder %s16, 0
    %p57 = por %p55, %p56
    %s58 = ssub.s32 %s17, %s29
    %s59 = ssub.s32 %s18, %s25
    %s60 = sor.u32 %s58, %s59
    %p61 = scmp.eq.s32.totalorder %s60, 0
    %s63 = sadd.s32 %s62, 1
    %s64 = scalar_select %p61, %s62, %s63
    %p67 = pneg %p61
    %p68 = scmp.eq.s32.totalorder %s10, 1
    %p69 = por %p67, %p68
    %p70 = scmp.ne.s32.totalorder %s62, %s65
    %p71 = scmp.eq.s32.totalorder %s10, 0
    %p72 = por %p70, %p71
    %p73 = scmp.ne.s32.totalorder %s62, %s65
    %p74 = scmp.eq.s32.totalorder %s15, 1
    %p75 = por %p73, %p74
    %p76 = scmp.ne.s32.totalorder %s65, %s66
    %p77 = scmp.eq.s32.totalorder %s15, 0
    %p78 = por %p76, %p77
    %p79 = scmp.ne.s32.totalorder %s65, %s66
    %p80 = scmp.eq.s32.totalorder %s16, 1
    %p81 = por %p79, %p80
    %p83 = scmp.ne.s32.totalorder %s66, %s82
    %p84 = scmp.eq.s32.totalorder %s16, 0
    %p85 = por %p83, %p84
    %s86 = ssub.s32 %s17, %s29
    %p87 = scmp.eq.s32.totalorder %s86, 0
    %s89 = sadd.s32 %s88, 1
    %s90 = scalar_select %p87, %s88, %s89
    %p93 = pneg %p87
    %p94 = scmp.eq.s32.totalorder %s10, 1
    %p95 = por %p93, %p94
    %p96 = scmp.ne.s32.totalorder %s88, %s91
    %p97 = scmp.eq.s32.totalorder %s10, 0
    %p98 = por %p96, %p97
    %p99 = scmp.ne.s32.totalorder %s88, %s91
    %p100 = scmp.eq.s32.totalorder %s15, 1
    %p101 = por %p99, %p100
    %p102 = scmp.ne.s32.totalorder %s91, %s92
    %p103 = scmp.eq.s32.totalorder %s15, 0
    %p104 = por %p102, %p103
    %p105 = scmp.ne.s32.totalorder %s91, %s92
    %p106 = scmp.eq.s32.totalorder %s16, 1
    %p107 = por %p105, %p106
    %p109 = scmp.ne.s32.totalorder %s92, %s108
    %p110 = scmp.eq.s32.totalorder %s16, 0
    %p111 = por %p109, %p110
    %s112 = ssub.s32 %s17, %s29
    %p113 = scmp.eq.s32.totalorder %s112, 0
    %s115 = sadd.s32 %s114, 1
    %s116 = scalar_select %p113, %s114, %s115
    %p119 = pneg %p113
    %p120 = scmp.eq.s32.totalorder %s10, 1
    %p121 = por %p119, %p120
    %p122 = scmp.ne.s32.totalorder %s114, %s117
    %p123 = scmp.eq.s32.totalorder %s10, 0
    %p124 = por %p122, %p123
    %p125 = scmp.ne.s32.totalorder %s114, %s117
    %p126 = scmp.eq.s32.totalorder %s15, 1
    %p127 = por %p125, %p126
    %p128 = scmp.ne.s32.totalorder %s117, %s118
    %p129 = scmp.eq.s32.totalorder %s15, 0
    %p130 = por %p128, %p129
    %p131 = scmp.ne.s32.totalorder %s117, %s118
    %p132 = scmp.eq.s32.totalorder %s16, 1
    %p133 = por %p131, %p132
    %p135 = scmp.ne.s32.totalorder %s118, %s134
    %p136 = scmp.eq.s32.totalorder %s16, 0
    %p137 = por %p135, %p136
    %s138 = ssub.s32 %s17, %s29
    %s139 = ssub.s32 %s18, %s25
    %s140 = sor.u32 %s138, %s139
    %p141 = scmp.eq.s32.totalorder %s140, 0
    %s143 = sadd.s32 %s142, 1
    %s144 = scalar_select %p141, %s142, %s143
    %p147 = pneg %p141
    %p148 = scmp.eq.s32.totalorder %s10, 1
    %p149 = por %p147, %p148
    %p150 = scmp.ne.s32.totalorder %s142, %s145
    %p151 = scmp.eq.s32.totalorder %s10, 0
    %p152 = por %p150, %p151
    %p153 = scmp.ne.s32.totalorder %s142, %s145
    %p154 = scmp.eq.s32.totalorder %s15, 1
    %p155 = por %p153, %p154
    %p156 = scmp.ne.s32.totalorder %s145, %s146
    %p157 = scmp.eq.s32.totalorder %s15, 0
    %p158 = por %p156, %p157
    %p159 = scmp.ne.s32.totalorder %s145, %s146
    %p160 = scmp.eq.s32.totalorder %s16, 1
    %p161 = por %p159, %p160
    %p163 = scmp.ne.s32.totalorder %s146, %s162
    %p164 = scmp.eq.s32.totalorder %s16, 0
    %p165 = por %p163, %p164
    %p166 = scmp.le.s32.totalorder 1, %s10
    %p167 = scmp.lt.s32.totalorder %s10, 3
    %p168 = pnand %p166, %p167
    %p169 = pneg %p168
    // Predicated region
    $region9: #{unet_conv2_xx_forward.7} parent=5 // pred_check
      _
    $region10: #{unet_conv2_xx_forward.7} parent=5 // pred_check_branch
      %171 = sbr.rel (%p168) target = $region12
    $region11: #{unet_conv2_xx_forward.7} parent=5 // pred_region
      %s172 = ssub.s32 %s10, 1
    $region12: #{unet_conv2_xx_forward.7} parent=5 // pred_fallthru
      _
    %p173 = scmp.lt.s32.totalorder %s10, 2
    // Predicated region
    $region13: #{unet_conv2_xx_forward.7} parent=5 // pred_check
      %p174 = pneg %p173
    $region14: #{unet_conv2_xx_forward.7} parent=5 // pred_check_branch
      %176 = sbr.rel (%p174) target = $region16
    $region15: #{unet_conv2_xx_forward.7} parent=5 // pred_region
      // Predicated region
      $region17: #{unet_conv2_xx_forward.7} parent=15 // pred_check
        %p177 = pneg %p44
      $region18: #{unet_conv2_xx_forward.7} parent=15 // pred_check_branch
        %179 = sbr.rel (%p177) target = $region20
      $region19: #{unet_conv2_xx_forward.7} parent=15 // pred_region
        %s180 = smul.u32 16, %s18
        %p181 = scmp.lt.s32.totalorder %s17, 1
        %s182 = scalar_select %p181, %s17, 1
        %p183 = scmp.lt.s32.totalorder %s180, 15
        %s184 = scalar_select %p183, %s180, 15
        %s185 = smul.addr %s184, 2
        %s186 = smul.addr %s182, 32
        %s187 = sadd.s32 %s185, %s186
        %s188 = smul.addr %s187, 4
        %s189 = scalar_lea.vmem %s0, %s188
        %s190 = smul.u32 16, %s18
      $region20: #{unet_conv2_xx_forward.7} parent=15 // pred_fallthru
        _
      // Predicated region
      $region21: #{unet_conv2_xx_forward.7} parent=15 // pred_check
        %p191 = pneg %p72
      $region22: #{unet_conv2_xx_forward.7} parent=15 // pred_check_branch
        %193 = sbr.rel (%p191) target = $region24
      $region23: #{unet_conv2_xx_forward.7} parent=15 // pred_region
        %s194 = smul.u32 16, %s18
        %p195 = scmp.lt.s32.totalorder %s17, 1
        %s196 = scalar_select %p195, %s17, 1
        %p197 = scmp.lt.s32.totalorder %s194, 15
        %s198 = scalar_select %p197, %s194, 15
        %s199 = smul.addr %s198, 2
        %s200 = smul.addr %s196, 32
        %s201 = sadd.s32 %s199, %s200
        %s202 = smul.addr %s201, 4
        %s203 = scalar_lea.vmem %s1, %s202
        %s204 = smul.u32 16, %s18
      $region24: #{unet_conv2_xx_forward.7} parent=15 // pred_fallthru
        _
      // Predicated region
      $region25: #{unet_conv2_xx_forward.7} parent=15 // pred_check
        %p205 = pneg %p98
      $region26: #{unet_conv2_xx_forward.7} parent=15 // pred_check_branch
        %207 = sbr.rel (%p205) target = $region28
      $region27: #{unet_conv2_xx_forward.7} parent=15 // pred_region
        %p208 = scmp.lt.s32.totalorder %s17, 1
        %s209 = scalar_select %p208, %s17, 1
        %s210 = scalar_lea.vmem %s2, %s209
      $region28: #{unet_conv2_xx_forward.7} parent=15 // pred_fallthru
        _
      // Predicated region
      $region29: #{unet_conv2_xx_forward.7} parent=15 // pred_check
        %p211 = pneg %p124
      $region30: #{unet_conv2_xx_forward.7} parent=15 // pred_check_branch
        %213 = sbr.rel (%p211) target = $region32
      $region31: #{unet_conv2_xx_forward.7} parent=15 // pred_region
        %p214 = scmp.lt.s32.totalorder %s17, 1
        %s215 = scalar_select %p214, %s17, 1
        %s216 = scalar_lea.vmem %s3, %s215
      $region32: #{unet_conv2_xx_forward.7} parent=15 // pred_fallthru
        _
    $region16: #{unet_conv2_xx_forward.7} parent=5 // pred_fallthru
      _
    %p217 = scmp.le.s32.totalorder 1, %s10
    %p218 = scmp.lt.s32.totalorder %s10, 3
    %p219 = pnand %p217, %p218
    %p220 = pneg %p219
    // Predicated region
    $region33: #{unet_conv2_xx_forward.7} parent=5 // pred_check
      _
    $region34: #{unet_conv2_xx_forward.7} parent=5 // pred_check_branch
      %222 = sbr.rel (%p219) target = $region36
    $region35: #{unet_conv2_xx_forward.7} parent=5 // pred_region
      %s223 = ssub.s32 %s10, 1
      %s224 = smul.u32 16, %s20
      %p225 = scmp.lt.s32.totalorder %s19, 1
      %s226 = scalar_select %p225, %s19, 1
      %p227 = scmp.lt.s32.totalorder %s224, 15
      %s228 = scalar_select %p227, %s224, 15
      %s229 = smul.addr %s228, 2
      %s230 = smul.addr %s226, 32
      %s231 = sadd.s32 %s229, %s230
      %s232 = smul.addr %s231, 4
      %s233 = scalar_lea.vmem %s0, %s232
      %p234 = pneg %p50
      %p235 = pneg %p47
      %s236 = smul.u32 16, %s20
      %p237 = scmp.lt.s32.totalorder %s19, 1
      %s238 = scalar_select %p237, %s19, 1
      %p239 = scmp.lt.s32.totalorder %s236, 15
      %s240 = scalar_select %p239, %s236, 15
      %s241 = smul.addr %s240, 2
      %s242 = smul.addr %s238, 32
      %s243 = sadd.s32 %s241, %s242
      %s244 = smul.addr %s243, 4
      %s245 = scalar_lea.vmem %s1, %s244
      %p246 = pneg %p78
      %p247 = pneg %p75
      %p248 = scmp.lt.s32.totalorder %s19, 1
      %s249 = scalar_select %p248, %s19, 1
      %s250 = scalar_lea.vmem %s2, %s249
      %p251 = pneg %p104
      %p252 = pneg %p101
      %p253 = scmp.lt.s32.totalorder %s19, 1
      %s254 = scalar_select %p253, %s19, 1
      %s255 = scalar_lea.vmem %s3, %s254
      %p256 = pneg %p130
      %p257 = pneg %p127
      %p258 = pneg %p158
      %p259 = pneg %p155
      %s260 = smul.u32 16, %s20
      %p261 = scmp.lt.s32.totalorder %s19, 1
      %s262 = scalar_select %p261, %s19, 1
      %p263 = scmp.lt.s32.totalorder %s260, 15
      %s264 = scalar_select %p263, %s260, 15
      %s265 = smul.addr %s264, 2
      %s266 = smul.addr %s262, 32
      %s267 = sadd.s32 %s265, %s266
      %s268 = smul.addr %s267, 8
      %s269 = scalar_lea.vmem %s4, %s268
      %s270 = smul.u32 16, %s20
      %p271 = scmp.lt.s32.totalorder %s19, 1
      %s272 = scalar_select %p271, %s19, 1
      %p273 = scmp.lt.s32.totalorder %s270, 15
      %s274 = scalar_select %p273, %s270, 15
      %s275 = smul.addr %s274, 2
      %s276 = smul.addr %s272, 32
      %s277 = sadd.s32 %s275, %s276
      %s278 = smul.addr %s277, 4
      %s279 = scalar_lea.vmem %s0, %s278
      %s280 = smul.u32 16, %s20
      %s281 = smul.u32 16, %s20
      %p282 = scmp.lt.s32.totalorder %s19, 1
      %s283 = scalar_select %p282, %s19, 1
      %p284 = scmp.lt.s32.totalorder %s281, 15
      %s285 = scalar_select %p284, %s281, 15
      %s286 = smul.addr %s285, 2
      %s287 = smul.addr %s283, 32
      %s288 = sadd.s32 %s286, %s287
      %s289 = smul.addr %s288, 4
      %s290 = scalar_lea.vmem %s1, %s289
      %s291 = smul.u32 16, %s20
      %p292 = scmp.lt.s32.totalorder %s19, 1
      %s293 = scalar_select %p292, %s19, 1
      %s294 = scalar_lea.vmem %s2, %s293
      %p295 = scmp.lt.s32.totalorder %s19, 1
      %s296 = scalar_select %p295, %s19, 1
      %s297 = scalar_lea.vmem %s3, %s296
      %s298 = smul.u32 16, %s20
      %p299 = scmp.lt.s32.totalorder %s19, 1
      %s300 = scalar_select %p299, %s19, 1
      %p301 = scmp.lt.s32.totalorder %s298, 15
      %s302 = scalar_select %p301, %s298, 15
      %s303 = smul.addr %s302, 2
      %s304 = smul.addr %s300, 32
      %s305 = sadd.s32 %s303, %s304
      %s306 = smul.addr %s305, 8
      %s307 = scalar_lea.vmem %s4, %s306
      %s308 = smul.u32 16, %s20
      %v309 = vld [vmem:[%s294] sm:$0x1]
      %v310 = vld [vmem:[%s297] sm:$0x1]
      %v311 = vld [vmem:[%s279] sm:$0xf]
      %v312 = vld [vmem:[%s279 + $0x4] sm:$0xf]
      %v313 = vld [vmem:[%s279 + $0x8] sm:$0xf]
      %v314 = vld [vmem:[%s279 + $0xc] sm:$0xf]
      %v315 = vld [vmem:[%s279 + $0x10] sm:$0xf]
      %v316 = vld [vmem:[%s279 + $0x14] sm:$0xf]
      %v317 = vld [vmem:[%s279 + $0x18] sm:$0xf]
      %v318 = vld [vmem:[%s279 + $0x1c] sm:$0xf]
      %v319 = vld [vmem:[%s279 + $0x20] sm:$0xf]
      %v320 = vld [vmem:[%s279 + $0x24] sm:$0xf]
      %v321 = vld [vmem:[%s279 + $0x28] sm:$0xf]
      %v322 = vld [vmem:[%s279 + $0x2c] sm:$0xf]
      %v323 = vld [vmem:[%s279 + $0x30] sm:$0xf]
      %v324 = vld [vmem:[%s279 + $0x34] sm:$0xf]
      %v325 = vld [vmem:[%s279 + $0x38] sm:$0xf]
      %v326 = vld [vmem:[%s279 + $0x3c] sm:$0xf]
      %v327 = vld [vmem:[%s279 + $0x40] sm:$0xf]
      %v328 = vld [vmem:[%s279 + $0x44] sm:$0xf]
      %v329 = vld [vmem:[%s279 + $0x48] sm:$0xf]
      %v330 = vld [vmem:[%s279 + $0x4c] sm:$0xf]
      %v331 = vld [vmem:[%s279 + $0x50] sm:$0xf]
      %v332 = vld [vmem:[%s279 + $0x54] sm:$0xf]
      %v333 = vld [vmem:[%s279 + $0x58] sm:$0xf]
      %v334 = vld [vmem:[%s279 + $0x5c] sm:$0xf]
      %v335 = vld [vmem:[%s279 + $0x60] sm:$0xf]
      %v336 = vld [vmem:[%s279 + $0x64] sm:$0xf]
      %v337 = vld [vmem:[%s279 + $0x68] sm:$0xf]
      %v338 = vld [vmem:[%s279 + $0x6c] sm:$0xf]
      %v339 = vld [vmem:[%s279 + $0x70] sm:$0xf]
      %v340 = vld [vmem:[%s279 + $0x74] sm:$0xf]
      %v341 = vld [vmem:[%s279 + $0x78] sm:$0xf]
      %v342 = vld [vmem:[%s279 + $0x7c] sm:$0xf]
      %v343 = vunpack.c.l.bf16 %v311
      %v344 = vunpack.c.l.bf16 %v312
      %v345 = vunpack.c.l.bf16 %v313
      %v346 = vunpack.c.l.bf16 %v314
      %v347 = vunpack.c.l.bf16 %v315
      %v348 = vunpack.c.l.bf16 %v316
      %v349 = vunpack.c.l.bf16 %v317
      %v350 = vunpack.c.l.bf16 %v318
      %v351 = vunpack.c.l.bf16 %v319
      %v352 = vunpack.c.l.bf16 %v320
      %v353 = vunpack.c.l.bf16 %v321
      %v354 = vunpack.c.l.bf16 %v322
      %v355 = vunpack.c.l.bf16 %v323
      %v356 = vunpack.c.l.bf16 %v324
      %v357 = vunpack.c.l.bf16 %v325
      %v358 = vunpack.c.l.bf16 %v326
      %v359 = vunpack.c.l.bf16 %v327
      %v360 = vunpack.c.l.bf16 %v328
      %v361 = vunpack.c.l.bf16 %v329
      %v362 = vunpack.c.l.bf16 %v330
      %v363 = vunpack.c.l.bf16 %v331
      %v364 = vunpack.c.l.bf16 %v332
      %v365 = vunpack.c.l.bf16 %v333
      %v366 = vunpack.c.l.bf16 %v334
      %v367 = vunpack.c.l.bf16 %v335
      %v368 = vunpack.c.l.bf16 %v336
      %v369 = vunpack.c.l.bf16 %v337
      %v370 = vunpack.c.l.bf16 %v338
      %v371 = vunpack.c.l.bf16 %v339
      %v372 = vunpack.c.l.bf16 %v340
      %v373 = vunpack.c.l.bf16 %v341
      %v374 = vunpack.c.l.bf16 %v342
      %v376 = vlaneseq
      %v377 = vshrl.u32 %v376, 7
      %v378 = vsub.s32 0, %v377
      %v379 = vrot.slane %v309, %v378
      %v381 = vmul.f32 %v343, %v379
      %v382 = vmul.f32 %v344, %v379
      %v383 = vmul.f32 %v345, %v379
      %v384 = vmul.f32 %v346, %v379
      %v385 = vmul.f32 %v347, %v379
      %v386 = vmul.f32 %v348, %v379
      %v387 = vmul.f32 %v349, %v379
      %v388 = vmul.f32 %v350, %v379
      %v389 = vmul.f32 %v351, %v379
      %v390 = vmul.f32 %v352, %v379
      %v391 = vmul.f32 %v353, %v379
      %v392 = vmul.f32 %v354, %v379
      %v393 = vmul.f32 %v355, %v379
      %v394 = vmul.f32 %v356, %v379
      %v395 = vmul.f32 %v357, %v379
      %v396 = vmul.f32 %v358, %v379
      %v397 = vmul.f32 %v359, %v379
      %v398 = vmul.f32 %v360, %v379
      %v399 = vmul.f32 %v361, %v379
      %v400 = vmul.f32 %v362, %v379
      %v401 = vmul.f32 %v363, %v379
      %v402 = vmul.f32 %v364, %v379
      %v403 = vmul.f32 %v365, %v379
      %v404 = vmul.f32 %v366, %v379
      %v405 = vmul.f32 %v367, %v379
      %v406 = vmul.f32 %v368, %v379
      %v407 = vmul.f32 %v369, %v379
      %v408 = vmul.f32 %v370, %v379
      %v409 = vmul.f32 %v371, %v379
      %v410 = vmul.f32 %v372, %v379
      %v411 = vmul.f32 %v373, %v379
      %v412 = vmul.f32 %v374, %v379
      %v413 = vld [vmem:[%s290] sm:$0xf]
      %v414 = vld [vmem:[%s290 + $0x4] sm:$0xf]
      %v415 = vld [vmem:[%s290 + $0x8] sm:$0xf]
      %v416 = vld [vmem:[%s290 + $0xc] sm:$0xf]
      %v417 = vld [vmem:[%s290 + $0x10] sm:$0xf]
      %v418 = vld [vmem:[%s290 + $0x14] sm:$0xf]
      %v419 = vld [vmem:[%s290 + $0x18] sm:$0xf]
      %v420 = vld [vmem:[%s290 + $0x1c] sm:$0xf]
      %v421 = vld [vmem:[%s290 + $0x20] sm:$0xf]
      %v422 = vld [vmem:[%s290 + $0x24] sm:$0xf]
      %v423 = vld [vmem:[%s290 + $0x28] sm:$0xf]
      %v424 = vld [vmem:[%s290 + $0x2c] sm:$0xf]
      %v425 = vld [vmem:[%s290 + $0x30] sm:$0xf]
      %v426 = vld [vmem:[%s290 + $0x34] sm:$0xf]
      %v427 = vld [vmem:[%s290 + $0x38] sm:$0xf]
      %v428 = vld [vmem:[%s290 + $0x3c] sm:$0xf]
      %v429 = vld [vmem:[%s290 + $0x40] sm:$0xf]
      %v430 = vld [vmem:[%s290 + $0x44] sm:$0xf]
      %v431 = vld [vmem:[%s290 + $0x48] sm:$0xf]
      %v432 = vld [vmem:[%s290 + $0x4c] sm:$0xf]
      %v433 = vld [vmem:[%s290 + $0x50] sm:$0xf]
      %v434 = vld [vmem:[%s290 + $0x54] sm:$0xf]
      %v435 = vld [vmem:[%s290 + $0x58] sm:$0xf]
      %v436 = vld [vmem:[%s290 + $0x5c] sm:$0xf]
      %v437 = vld [vmem:[%s290 + $0x60] sm:$0xf]
      %v438 = vld [vmem:[%s290 + $0x64] sm:$0xf]
      %v439 = vld [vmem:[%s290 + $0x68] sm:$0xf]
      %v440 = vld [vmem:[%s290 + $0x6c] sm:$0xf]
      %v441 = vld [vmem:[%s290 + $0x70] sm:$0xf]
      %v442 = vld [vmem:[%s290 + $0x74] sm:$0xf]
      %v443 = vld [vmem:[%s290 + $0x78] sm:$0xf]
      %v444 = vld [vmem:[%s290 + $0x7c] sm:$0xf]
      %v445 = vunpack.c.l.bf16 %v413
      %v446 = vunpack.c.l.bf16 %v414
      %v447 = vunpack.c.l.bf16 %v415
      %v448 = vunpack.c.l.bf16 %v416
      %v449 = vunpack.c.l.bf16 %v417
      %v450 = vunpack.c.l.bf16 %v418
      %v451 = vunpack.c.l.bf16 %v419
      %v452 = vunpack.c.l.bf16 %v420
      %v453 = vunpack.c.l.bf16 %v421
      %v454 = vunpack.c.l.bf16 %v422
      %v455 = vunpack.c.l.bf16 %v423
      %v456 = vunpack.c.l.bf16 %v424
      %v457 = vunpack.c.l.bf16 %v425
      %v458 = vunpack.c.l.bf16 %v426
      %v459 = vunpack.c.l.bf16 %v427
      %v460 = vunpack.c.l.bf16 %v428
      %v461 = vunpack.c.l.bf16 %v429
      %v462 = vunpack.c.l.bf16 %v430
      %v463 = vunpack.c.l.bf16 %v431
      %v464 = vunpack.c.l.bf16 %v432
      %v465 = vunpack.c.l.bf16 %v433
      %v466 = vunpack.c.l.bf16 %v434
      %v467 = vunpack.c.l.bf16 %v435
      %v468 = vunpack.c.l.bf16 %v436
      %v469 = vunpack.c.l.bf16 %v437
      %v470 = vunpack.c.l.bf16 %v438
      %v471 = vunpack.c.l.bf16 %v439
      %v472 = vunpack.c.l.bf16 %v440
      %v473 = vunpack.c.l.bf16 %v441
      %v474 = vunpack.c.l.bf16 %v442
      %v475 = vunpack.c.l.bf16 %v443
      %v476 = vunpack.c.l.bf16 %v444
      %v478 = vlaneseq
      %v479 = vshrl.u32 %v478, 7
      %v480 = vsub.s32 0, %v479
      %v481 = vrot.slane %v310, %v480
      %v483 = vmul.f32 %v445, %v481
      %v484 = vmul.f32 %v446, %v481
      %v485 = vmul.f32 %v447, %v481
      %v486 = vmul.f32 %v448, %v481
      %v487 = vmul.f32 %v449, %v481
      %v488 = vmul.f32 %v450, %v481
      %v489 = vmul.f32 %v451, %v481
      %v490 = vmul.f32 %v452, %v481
      %v491 = vmul.f32 %v453, %v481
      %v492 = vmul.f32 %v454, %v481
      %v493 = vmul.f32 %v455, %v481
      %v494 = vmul.f32 %v456, %v481
      %v495 = vmul.f32 %v457, %v481
      %v496 = vmul.f32 %v458, %v481
      %v497 = vmul.f32 %v459, %v481
      %v498 = vmul.f32 %v460, %v481
      %v499 = vmul.f32 %v461, %v481
      %v500 = vmul.f32 %v462, %v481
      %v501 = vmul.f32 %v463, %v481
      %v502 = vmul.f32 %v464, %v481
      %v503 = vmul.f32 %v465, %v481
      %v504 = vmul.f32 %v466, %v481
      %v505 = vmul.f32 %v467, %v481
      %v506 = vmul.f32 %v468, %v481
      %v507 = vmul.f32 %v469, %v481
      %v508 = vmul.f32 %v470, %v481
      %v509 = vmul.f32 %v471, %v481
      %v510 = vmul.f32 %v472, %v481
      %v511 = vmul.f32 %v473, %v481
      %v512 = vmul.f32 %v474, %v481
      %v513 = vmul.f32 %v475, %v481
      %v514 = vmul.f32 %v476, %v481
      %547 = vrot.lane.b32.xlu0 %v483, 4
      %v548 = vpop.permute.xlu0 %547
      %549 = vrot.lane.b32.xlu0 %v484, 4
      %v550 = vpop.permute.xlu0 %549
      %551 = vrot.lane.b32.xlu0 %v485, 4
      %v552 = vpop.permute.xlu0 %551
      %553 = vrot.lane.b32.xlu0 %v486, 4
      %v554 = vpop.permute.xlu0 %553
      %555 = vrot.lane.b32.xlu0 %v487, 4
      %v556 = vpop.permute.xlu0 %555
      %557 = vrot.lane.b32.xlu0 %v488, 4
      %v558 = vpop.permute.xlu0 %557
      %559 = vrot.lane.b32.xlu0 %v489, 4
      %v560 = vpop.permute.xlu0 %559
      %561 = vrot.lane.b32.xlu0 %v490, 4
      %v562 = vpop.permute.xlu0 %561
      %563 = vrot.lane.b32.xlu0 %v491, 4
      %v564 = vpop.permute.xlu0 %563
      %565 = vrot.lane.b32.xlu0 %v492, 4
      %v566 = vpop.permute.xlu0 %565
      %567 = vrot.lane.b32.xlu0 %v493, 4
      %v568 = vpop.permute.xlu0 %567
      %569 = vrot.lane.b32.xlu0 %v494, 4
      %v570 = vpop.permute.xlu0 %569
      %571 = vrot.lane.b32.xlu0 %v495, 4
      %v572 = vpop.permute.xlu0 %571
      %573 = vrot.lane.b32.xlu0 %v496, 4
      %v574 = vpop.permute.xlu0 %573
      %575 = vrot.lane.b32.xlu0 %v497, 4
      %v576 = vpop.permute.xlu0 %575
      %577 = vrot.lane.b32.xlu0 %v498, 4
      %v578 = vpop.permute.xlu0 %577
      %579 = vrot.lane.b32.xlu0 %v499, 4
      %v580 = vpop.permute.xlu0 %579
      %581 = vrot.lane.b32.xlu0 %v500, 4
      %v582 = vpop.permute.xlu0 %581
      %583 = vrot.lane.b32.xlu0 %v501, 4
      %v584 = vpop.permute.xlu0 %583
      %585 = vrot.lane.b32.xlu0 %v502, 4
      %v586 = vpop.permute.xlu0 %585
      %587 = vrot.lane.b32.xlu0 %v503, 4
      %v588 = vpop.permute.xlu0 %587
      %589 = vrot.lane.b32.xlu0 %v504, 4
      %v590 = vpop.permute.xlu0 %589
      %591 = vrot.lane.b32.xlu0 %v505, 4
      %v592 = vpop.permute.xlu0 %591
      %593 = vrot.lane.b32.xlu0 %v506, 4
      %v594 = vpop.permute.xlu0 %593
      %595 = vrot.lane.b32.xlu0 %v507, 4
      %v596 = vpop.permute.xlu0 %595
      %597 = vrot.lane.b32.xlu0 %v508, 4
      %v598 = vpop.permute.xlu0 %597
      %599 = vrot.lane.b32.xlu0 %v509, 4
      %v600 = vpop.permute.xlu0 %599
      %601 = vrot.lane.b32.xlu0 %v510, 4
      %v602 = vpop.permute.xlu0 %601
      %603 = vrot.lane.b32.xlu0 %v511, 4
      %v604 = vpop.permute.xlu0 %603
      %605 = vrot.lane.b32.xlu0 %v512, 4
      %v606 = vpop.permute.xlu0 %605
      %607 = vrot.lane.b32.xlu0 %v513, 4
      %v608 = vpop.permute.xlu0 %607
      %609 = vrot.lane.b32.xlu0 %v514, 4
      %v610 = vpop.permute.xlu0 %609
      %vm643 = vcmask 31744
      %v644 = vsel %vm643, %v381, %v548
      %v645 = vsel %vm643, %v382, %v550
      %v646 = vsel %vm643, %v383, %v552
      %v647 = vsel %vm643, %v384, %v554
      %v648 = vsel %vm643, %v385, %v556
      %v649 = vsel %vm643, %v386, %v558
      %v650 = vsel %vm643, %v387, %v560
      %v651 = vsel %vm643, %v388, %v562
      %v652 = vsel %vm643, %v389, %v564
      %v653 = vsel %vm643, %v390, %v566
      %v654 = vsel %vm643, %v391, %v568
      %v655 = vsel %vm643, %v392, %v570
      %v656 = vsel %vm643, %v393, %v572
      %v657 = vsel %vm643, %v394, %v574
      %v658 = vsel %vm643, %v395, %v576
      %v659 = vsel %vm643, %v396, %v578
      %v660 = vsel %vm643, %v397, %v580
      %v661 = vsel %vm643, %v398, %v582
      %v662 = vsel %vm643, %v399, %v584
      %v663 = vsel %vm643, %v400, %v586
      %v664 = vsel %vm643, %v401, %v588
      %v665 = vsel %vm643, %v402, %v590
      %v666 = vsel %vm643, %v403, %v592
      %v667 = vsel %vm643, %v404, %v594
      %v668 = vsel %vm643, %v405, %v596
      %v669 = vsel %vm643, %v406, %v598
      %v670 = vsel %vm643, %v407, %v600
      %v671 = vsel %vm643, %v408, %v602
      %v672 = vsel %vm643, %v409, %v604
      %v673 = vsel %vm643, %v410, %v606
      %v674 = vsel %vm643, %v411, %v608
      %v675 = vsel %vm643, %v412, %v610
      %vm676 = vcmask 64512
      %677 = vst.msk [vmem:[%s307] sm:$0xff] %vm676, %v644
      %678 = vst.msk [vmem:[%s307 + $0x8] sm:$0xff] %vm676, %v645
      %679 = vst.msk [vmem:[%s307 + $0x10] sm:$0xff] %vm676, %v646
      %680 = vst.msk [vmem:[%s307 + $0x18] sm:$0xff] %vm676, %v647
      %681 = vst.msk [vmem:[%s307 + $0x20] sm:$0xff] %vm676, %v648
      %682 = vst.msk [vmem:[%s307 + $0x28] sm:$0xff] %vm676, %v649
      %683 = vst.msk [vmem:[%s307 + $0x30] sm:$0xff] %vm676, %v650
      %684 = vst.msk [vmem:[%s307 + $0x38] sm:$0xff] %vm676, %v651
      %685 = vst.msk [vmem:[%s307 + $0x40] sm:$0xff] %vm676, %v652
      %686 = vst.msk [vmem:[%s307 + $0x48] sm:$0xff] %vm676, %v653
      %687 = vst.msk [vmem:[%s307 + $0x50] sm:$0xff] %vm676, %v654
      %688 = vst.msk [vmem:[%s307 + $0x58] sm:$0xff] %vm676, %v655
      %689 = vst.msk [vmem:[%s307 + $0x60] sm:$0xff] %vm676, %v656
      %690 = vst.msk [vmem:[%s307 + $0x68] sm:$0xff] %vm676, %v657
      %691 = vst.msk [vmem:[%s307 + $0x70] sm:$0xff] %vm676, %v658
      %692 = vst.msk [vmem:[%s307 + $0x78] sm:$0xff] %vm676, %v659
      %693 = vst.msk [vmem:[%s307 + $0x80] sm:$0xff] %vm676, %v660
      %694 = vst.msk [vmem:[%s307 + $0x88] sm:$0xff] %vm676, %v661
      %695 = vst.msk [vmem:[%s307 + $0x90] sm:$0xff] %vm676, %v662
      %696 = vst.msk [vmem:[%s307 + $0x98] sm:$0xff] %vm676, %v663
      %697 = vst.msk [vmem:[%s307 + $0xa0] sm:$0xff] %vm676, %v664
      %698 = vst.msk [vmem:[%s307 + $0xa8] sm:$0xff] %vm676, %v665
      %699 = vst.msk [vmem:[%s307 + $0xb0] sm:$0xff] %vm676, %v666
      %700 = vst.msk [vmem:[%s307 + $0xb8] sm:$0xff] %vm676, %v667
      %701 = vst.msk [vmem:[%s307 + $0xc0] sm:$0xff] %vm676, %v668
      %702 = vst.msk [vmem:[%s307 + $0xc8] sm:$0xff] %vm676, %v669
      %703 = vst.msk [vmem:[%s307 + $0xd0] sm:$0xff] %vm676, %v670
      %704 = vst.msk [vmem:[%s307 + $0xd8] sm:$0xff] %vm676, %v671
      %705 = vst.msk [vmem:[%s307 + $0xe0] sm:$0xff] %vm676, %v672
      %706 = vst.msk [vmem:[%s307 + $0xe8] sm:$0xff] %vm676, %v673
      %707 = vst.msk [vmem:[%s307 + $0xf0] sm:$0xff] %vm676, %v674
      %708 = vst.msk [vmem:[%s307 + $0xf8] sm:$0xff] %vm676, %v675
      %s709 = smul.u32 16, %s20
      %p710 = scmp.lt.s32.totalorder %s19, 1
      %s711 = scalar_select %p710, %s19, 1
      %p712 = scmp.lt.s32.totalorder %s709, 15
      %s713 = scalar_select %p712, %s709, 15
      %s714 = smul.addr %s713, 2
      %s715 = smul.addr %s711, 32
      %s716 = sadd.s32 %s714, %s715
      %s717 = smul.addr %s716, 8
      %s718 = scalar_lea.vmem %s4, %s717
      // Predicated region
      $region37: #{unet_conv2_xx_forward.7} parent=35 // pred_check
        %p719 = pneg %p155
      $region38: #{unet_conv2_xx_forward.7} parent=35 // pred_check_branch
        %721 = sbr.rel (%p719) target = $region40
      $region39: #{unet_conv2_xx_forward.7} parent=35 // pred_region
        %s722 = smul.u32 16, %s20
      $region40: #{unet_conv2_xx_forward.7} parent=35 // pred_fallthru
        _
    $region36: #{unet_conv2_xx_forward.7} parent=5 // pred_fallthru
      _
    %p723 = scmp.le.s32.totalorder 2, %s10
    // Predicated region
    $region41: #{unet_conv2_xx_forward.7} parent=5 // pred_check
      %p724 = pneg %p723
    $region42: #{unet_conv2_xx_forward.7} parent=5 // pred_check_branch
      %726 = sbr.rel (%p724) target = $region44
    $region43: #{unet_conv2_xx_forward.7} parent=5 // pred_region
      %s727 = ssub.s32 %s10, 2
      // Predicated region
      $region45: #{unet_conv2_xx_forward.7} parent=43 // pred_check
        %p728 = pneg %p161
      $region46: #{unet_conv2_xx_forward.7} parent=43 // pred_check_branch
        %730 = sbr.rel (%p728) target = $region48
      $region47: #{unet_conv2_xx_forward.7} parent=43 // pred_region
        %s731 = smul.u32 16, %s22
        %p732 = scmp.lt.s32.totalorder %s21, 1
        %s733 = scalar_select %p732, %s21, 1
        %p734 = scmp.lt.s32.totalorder %s731, 15
        %s735 = scalar_select %p734, %s731, 15
        %s736 = smul.addr %s735, 2
        %s737 = smul.addr %s733, 32
        %s738 = sadd.s32 %s736, %s737
        %s739 = smul.addr %s738, 8
        %s740 = scalar_lea.vmem %s4, %s739
      $region48: #{unet_conv2_xx_forward.7} parent=43 // pred_fallthru
        _
    $region44: #{unet_conv2_xx_forward.7} parent=5 // pred_fallthru
      _
  $region6: #{unet_conv2_xx_forward.7} parent=0 // loop_footer
    %s14 = sadd.s32 1, %s10
  $region7: #{unet_conv2_xx_forward.7} parent=0 // loop_footer_branch
    %9 = sbr.rel target = $region3
  $region8: #{unet_conv2_xx_forward.7} parent=0 // loop_exit
    _

// kernel: unet_conv2_xx_forward.6
$region0: #{unet_conv2_xx_forward.6}
  #allocation0 [shape = 'u32[]', space=smem, size = 0x4, offset = 0x4, fixed_abs, tag = 'smem constant byte address 0x4 - core index']
  #allocation1 [shape = 'u32[144,128]{1,0:T(1,128)}', space=vmem, size = 0x12000, scoped, tag = 'internal scratch']
  %s0 = inlined_call_operand.vmem [shape: bf16[2,28,28,4], index: 0, kind: input, shape index: {}]
  %s1 = inlined_call_operand.vmem [shape: bf16[28,4], index: 1, kind: input, shape index: {}]
  %s2 = inlined_call_operand.vmem [shape: f32[1,4], index: 2, kind: input, shape index: {}]
  %s3 = inlined_call_operand.vmem [shape: bf16[2,16,16,4], index: 3, kind: output, shape index: {0}]
  %s4 = inlined_call_operand.vmem [shape: f32[2,1,2,4], index: 4, kind: output, shape index: {1}]
  %5 = xla_tuple %s3, %s4
  %s6 = sld [smem:[#allocation0]]
  $region53: #{unet_conv2_xx_forward.6} parent=0
    _
  %s8 = ssub.s32 1, %s6
  %s9 = scalar_select 0, %s8, %s6
  loop: start=0, step=1, limit=4
  $region2: #{unet_conv2_xx_forward.6} parent=0 // loop_pre_header
    _
  $region3: #{unet_conv2_xx_forward.6} parent=0 // loop_header
    %s11 = sphi 0, %s15
    %p12 = scmp.ge.s32.totalorder %s11, 4
    %s18 = sphi 0, %s30
    %s19 = sphi 0, %s26
    %s20 = sphi 0, %s18
    %s21 = sphi 0, %s19
    %s22 = sphi 0, %s20
    %s23 = sphi 0, %s21
    %s33 = sphi 0, %s35
    %s36 = sphi 0, %s33
    %s37 = sphi 0, %s36
    %s53 = sphi 0, %s37
    %s57 = sphi 0, %s57
    %s59 = sphi 0, %s57
    %s60 = sphi 0, %s59
    %s74 = sphi 0, %s60
    %s78 = sphi 0, %s78
    %s80 = sphi 0, %s78
    %s81 = sphi 0, %s80
    %s95 = sphi 0, %s81
    %s103 = sphi 0, %s105
    %s106 = sphi 0, %s103
    %s107 = sphi 0, %s106
    %s123 = sphi 0, %s107
    %s131 = sphi 0, %s133
    %s134 = sphi 0, %s131
    %s135 = sphi 0, %s134
    %s151 = sphi 0, %s135
  $region4: #{unet_conv2_xx_forward.6} parent=0 // loop_header_branch
    %14 = sbr.rel (%p12) target = $region8
  $region5: #{unet_conv2_xx_forward.6} parent=0 // loop_body
    %s16 = ssub.s32 %s11, 1
    %s17 = ssub.s32 %s11, 2
    %s24 = sadd.s32 1, %s19
    %p25 = scmp.ge.s32.totalorder %s24, 1
    %s26 = scalar_select %p25, 0, %s24
    %s27 = sadd.s32 1, %s18
    %s28 = scalar_select %p25, %s27, %s18
    %p29 = scmp.ge.s32.totalorder %s28, 2
    %s30 = scalar_select %p29, 0, %s28
    %s31 = ssub.s32 %s18, %s30
    %p32 = scmp.eq.s32.totalorder %s31, 0
    %s34 = sadd.s32 %s33, 1
    %s35 = scalar_select %p32, %s33, %s34
    %p38 = pneg %p32
    %p39 = scmp.eq.s32.totalorder %s11, 1
    %p40 = por %p38, %p39
    %p41 = scmp.ne.s32.totalorder %s33, %s36
    %p42 = scmp.eq.s32.totalorder %s11, 0
    %p43 = por %p41, %p42
    %p44 = scmp.ne.s32.totalorder %s33, %s36
    %p45 = scmp.eq.s32.totalorder %s16, 1
    %p46 = por %p44, %p45
    %p47 = scmp.ne.s32.totalorder %s36, %s37
    %p48 = scmp.eq.s32.totalorder %s16, 0
    %p49 = por %p47, %p48
    %p50 = scmp.ne.s32.totalorder %s36, %s37
    %p51 = scmp.eq.s32.totalorder %s17, 1
    %p52 = por %p50, %p51
    %p54 = scmp.ne.s32.totalorder %s37, %s53
    %p55 = scmp.eq.s32.totalorder %s17, 0
    %p56 = por %p54, %p55
    %s58 = sadd.s32 %s57, 1
    %p61 = scmp.eq.s32.totalorder %s11, 1
    %p62 = scmp.ne.s32.totalorder %s57, %s59
    %p63 = scmp.eq.s32.totalorder %s11, 0
    %p64 = por %p62, %p63
    %p65 = scmp.ne.s32.totalorder %s57, %s59
    %p66 = scmp.eq.s32.totalorder %s16, 1
    %p67 = por %p65, %p66
    %p68 = scmp.ne.s32.totalorder %s59, %s60
    %p69 = scmp.eq.s32.totalorder %s16, 0
    %p70 = por %p68, %p69
    %p71 = scmp.ne.s32.totalorder %s59, %s60
    %p72 = scmp.eq.s32.totalorder %s17, 1
    %p73 = por %p71, %p72
    %p75 = scmp.ne.s32.totalorder %s60, %s74
    %p76 = scmp.eq.s32.totalorder %s17, 0
    %p77 = por %p75, %p76
    %s79 = sadd.s32 %s78, 1
    %p82 = scmp.eq.s32.totalorder %s11, 1
    %p83 = scmp.ne.s32.totalorder %s78, %s80
    %p84 = scmp.eq.s32.totalorder %s11, 0
    %p85 = por %p83, %p84
    %p86 = scmp.ne.s32.totalorder %s78, %s80
    %p87 = scmp.eq.s32.totalorder %s16, 1
    %p88 = por %p86, %p87
    %p89 = scmp.ne.s32.totalorder %s80, %s81
    %p90 = scmp.eq.s32.totalorder %s16, 0
    %p91 = por %p89, %p90
    %p92 = scmp.ne.s32.totalorder %s80, %s81
    %p93 = scmp.eq.s32.totalorder %s17, 1
    %p94 = por %p92, %p93
    %p96 = scmp.ne.s32.totalorder %s81, %s95
    %p97 = scmp.eq.s32.totalorder %s17, 0
    %p98 = por %p96, %p97
    %s99 = ssub.s32 %s18, %s30
    %s100 = ssub.s32 %s19, %s26
    %s101 = sor.u32 %s99, %s100
    %p102 = scmp.eq.s32.totalorder %s101, 0
    %s104 = sadd.s32 %s103, 1
    %s105 = scalar_select %p102, %s103, %s104
    %p108 = pneg %p102
    %p109 = scmp.eq.s32.totalorder %s11, 1
    %p110 = por %p108, %p109
    %p111 = scmp.ne.s32.totalorder %s103, %s106
    %p112 = scmp.eq.s32.totalorder %s11, 0
    %p113 = por %p111, %p112
    %p114 = scmp.ne.s32.totalorder %s103, %s106
    %p115 = scmp.eq.s32.totalorder %s16, 1
    %p116 = por %p114, %p115
    %p117 = scmp.ne.s32.totalorder %s106, %s107
    %p118 = scmp.eq.s32.totalorder %s16, 0
    %p119 = por %p117, %p118
    %p120 = scmp.ne.s32.totalorder %s106, %s107
    %p121 = scmp.eq.s32.totalorder %s17, 1
    %p122 = por %p120, %p121
    %p124 = scmp.ne.s32.totalorder %s107, %s123
    %p125 = scmp.eq.s32.totalorder %s17, 0
    %p126 = por %p124, %p125
    %s127 = ssub.s32 %s18, %s30
    %s128 = ssub.s32 %s19, %s26
    %s129 = sor.u32 %s127, %s128
    %p130 = scmp.eq.s32.totalorder %s129, 0
    %s132 = sadd.s32 %s131, 1
    %s133 = scalar_select %p130, %s131, %s132
    %p136 = pneg %p130
    %p137 = scmp.eq.s32.totalorder %s11, 1
    %p138 = por %p136, %p137
    %p139 = scmp.ne.s32.totalorder %s131, %s134
    %p140 = scmp.eq.s32.totalorder %s11, 0
    %p141 = por %p139, %p140
    %p142 = scmp.ne.s32.totalorder %s131, %s134
    %p143 = scmp.eq.s32.totalorder %s16, 1
    %p144 = por %p142, %p143
    %p145 = scmp.ne.s32.totalorder %s134, %s135
    %p146 = scmp.eq.s32.totalorder %s16, 0
    %p147 = por %p145, %p146
    %p148 = scmp.ne.s32.totalorder %s134, %s135
    %p149 = scmp.eq.s32.totalorder %s17, 1
    %p150 = por %p148, %p149
    %p152 = scmp.ne.s32.totalorder %s135, %s151
    %p153 = scmp.eq.s32.totalorder %s17, 0
    %p154 = por %p152, %p153
    %p155 = scmp.le.s32.totalorder 1, %s11
    %p156 = scmp.lt.s32.totalorder %s11, 3
    %p157 = pnand %p155, %p156
    %p158 = pneg %p157
    // Predicated region
    $region9: #{unet_conv2_xx_forward.6} parent=5 // pred_check
      _
    $region10: #{unet_conv2_xx_forward.6} parent=5 // pred_check_branch
      %160 = sbr.rel (%p157) target = $region12
    $region11: #{unet_conv2_xx_forward.6} parent=5 // pred_region
      %s161 = ssub.s32 %s11, 1
      // Predicated region
      $region13: #{unet_conv2_xx_forward.6} parent=11 // pred_check
        %p162 = pneg %p70
      $region14: #{unet_conv2_xx_forward.6} parent=11 // pred_check_branch
        %164 = sbr.rel (%p162) target = $region16
      $region15: #{unet_conv2_xx_forward.6} parent=11 // pred_region
        _
      $region16: #{unet_conv2_xx_forward.6} parent=11 // pred_fallthru
        _
      // Predicated region
      $region17: #{unet_conv2_xx_forward.6} parent=11 // pred_check
        %p165 = pneg %p91
      $region18: #{unet_conv2_xx_forward.6} parent=11 // pred_check_branch
        %167 = sbr.rel (%p165) target = $region20
      $region19: #{unet_conv2_xx_forward.6} parent=11 // pred_region
        _
      $region20: #{unet_conv2_xx_forward.6} parent=11 // pred_fallthru
        _
    $region12: #{unet_conv2_xx_forward.6} parent=5 // pred_fallthru
      _
    %p168 = scmp.lt.s32.totalorder %s11, 2
    // Predicated region
    $region21: #{unet_conv2_xx_forward.6} parent=5 // pred_check
      %p169 = pneg %p168
    $region22: #{unet_conv2_xx_forward.6} parent=5 // pred_check_branch
      %171 = sbr.rel (%p169) target = $region24
    $region23: #{unet_conv2_xx_forward.6} parent=5 // pred_region
      // Predicated region
      $region25: #{unet_conv2_xx_forward.6} parent=23 // pred_check
        %p172 = pneg %p43
      $region26: #{unet_conv2_xx_forward.6} parent=23 // pred_check_branch
        %174 = sbr.rel (%p172) target = $region28
      $region27: #{unet_conv2_xx_forward.6} parent=23 // pred_region
        %p175 = scmp.lt.s32.totalorder %s18, 1
        %s176 = scalar_select %p175, %s18, 1
        %s177 = smul.addr %s176, 112
        %s178 = smul.addr %s177, 4
        %s179 = scalar_lea.vmem %s0, %s178
      $region28: #{unet_conv2_xx_forward.6} parent=23 // pred_fallthru
        _
    $region24: #{unet_conv2_xx_forward.6} parent=5 // pred_fallthru
      _
    %p180 = scmp.le.s32.totalorder 1, %s11
    %p181 = scmp.lt.s32.totalorder %s11, 3
    %p182 = pnand %p180, %p181
    %p183 = pneg %p182
    // Predicated region
    $region29: #{unet_conv2_xx_forward.6} parent=5 // pred_check
      _
    $region30: #{unet_conv2_xx_forward.6} parent=5 // pred_check_branch
      %185 = sbr.rel (%p182) target = $region32
    $region31: #{unet_conv2_xx_forward.6} parent=5 // pred_region
      %s186 = ssub.s32 %s11, 1
      %p187 = scmp.lt.s32.totalorder %s20, 1
      %s188 = scalar_select %p187, %s20, 1
      %s189 = smul.addr %s188, 112
      %s190 = smul.addr %s189, 4
      %s191 = scalar_lea.vmem %s0, %s190
      %p192 = pneg %p49
      %p193 = pneg %p46
      %p194 = pneg %p70
      %p195 = pneg %p67
      %p196 = pneg %p91
      %p197 = pneg %p88
      %p198 = pneg %p119
      %p199 = pneg %p116
      %s200 = smul.u32 16, %s21
      %p201 = scmp.lt.s32.totalorder %s20, 1
      %s202 = scalar_select %p201, %s20, 1
      %p203 = scmp.lt.s32.totalorder %s200, 15
      %s204 = scalar_select %p203, %s200, 15
      %s205 = smul.addr %s204, 2
      %s206 = smul.addr %s202, 32
      %s207 = sadd.s32 %s205, %s206
      %s208 = smul.addr %s207, 4
      %s209 = scalar_lea.vmem %s3, %s208
      %p210 = pneg %p147
      %p211 = pneg %p144
      %p212 = scmp.lt.s32.totalorder %s20, 1
      %s213 = scalar_select %p212, %s20, 1
      %p214 = scmp.lt.s32.totalorder %s21, 0
      %s215 = scalar_select %p214, %s21, 0
      %s216 = sadd.s32 %s215, %s213
      %s217 = smul.addr %s216, 2
      %s218 = scalar_lea.vmem %s4, %s217
      %p219 = scmp.lt.s32.totalorder %s20, 1
      %s220 = scalar_select %p219, %s20, 1
      %s221 = smul.addr %s220, 112
      %s222 = smul.addr %s221, 4
      %s223 = scalar_lea.vmem %s0, %s222
      %s224 = smul.u32 16, %s21
      %p225 = scmp.lt.s32.totalorder %s20, 1
      %s226 = scalar_select %p225, %s20, 1
      %p227 = scmp.lt.s32.totalorder %s224, 15
      %s228 = scalar_select %p227, %s224, 15
      %s229 = smul.addr %s228, 2
      %s230 = smul.addr %s226, 32
      %s231 = sadd.s32 %s229, %s230
      %s232 = smul.addr %s231, 4
      %s233 = scalar_lea.vmem %s3, %s232
      %s234 = smul.u32 16, %s21
      %p235 = scmp.lt.s32.totalorder %s20, 1
      %s236 = scalar_select %p235, %s20, 1
      %p237 = scmp.lt.s32.totalorder %s21, 0
      %s238 = scalar_select %p237, %s21, 0
      %s239 = sadd.s32 %s238, %s236
      %s240 = smul.addr %s239, 2
      %s241 = scalar_lea.vmem %s4, %s240
      %v243 = vld [vmem:[%s223] sm:$0xf]
      %v244 = vld [vmem:[%s223 + $0x4] sm:$0xf]
      %v245 = vld [vmem:[%s223 + $0x8] sm:$0xf]
      %v246 = vld [vmem:[%s223 + $0x10] sm:$0xf]
      %v247 = vld [vmem:[%s223 + $0x14] sm:$0xf]
      %v248 = vld [vmem:[%s223 + $0x18] sm:$0xf]
      %v249 = vld [vmem:[%s223 + $0x20] sm:$0xf]
      %v250 = vld [vmem:[%s223 + $0x24] sm:$0xf]
      %v251 = vld [vmem:[%s223 + $0x28] sm:$0xf]
      %v252 = vld [vmem:[%s223 + $0x30] sm:$0xf]
      %v253 = vld [vmem:[%s223 + $0x34] sm:$0xf]
      %v254 = vld [vmem:[%s223 + $0x38] sm:$0xf]
      %v255 = vld [vmem:[%s223 + $0x40] sm:$0xf]
      %v256 = vld [vmem:[%s223 + $0x44] sm:$0xf]
      %v257 = vld [vmem:[%s223 + $0x48] sm:$0xf]
      %v258 = vld [vmem:[%s223 + $0x50] sm:$0xf]
      %v259 = vld [vmem:[%s223 + $0x54] sm:$0xf]
      %v260 = vld [vmem:[%s223 + $0x58] sm:$0xf]
      %v261 = vld [vmem:[%s223 + $0x60] sm:$0xf]
      %v262 = vld [vmem:[%s223 + $0x64] sm:$0xf]
      %v263 = vld [vmem:[%s223 + $0x68] sm:$0xf]
      %v264 = vld [vmem:[%s223 + $0x6c] sm:$0x3]
      %v265 = vld [vmem:[%s223 + $0x70] sm:$0xf]
      %v266 = vld [vmem:[%s223 + $0x74] sm:$0xf]
      %v267 = vld [vmem:[%s223 + $0x78] sm:$0xf]
      %v268 = vld [vmem:[%s223 + $0x7c] sm:$0x3]
      %v269 = vld [vmem:[%s223 + $0x80] sm:$0xf]
      %v270 = vld [vmem:[%s223 + $0x84] sm:$0xf]
      %v271 = vld [vmem:[%s223 + $0x88] sm:$0xf]
      %v272 = vld [vmem:[%s223 + $0x8c] sm:$0x3]
      %v273 = vld [vmem:[%s223 + $0x90] sm:$0xf]
      %v274 = vld [vmem:[%s223 + $0x94] sm:$0xf]
      %v275 = vld [vmem:[%s223 + $0x98] sm:$0xf]
      %v276 = vld [vmem:[%s223 + $0x9c] sm:$0x3]
      %v277 = vld [vmem:[%s223 + $0xa0] sm:$0xf]
      %v278 = vld [vmem:[%s223 + $0xa4] sm:$0xf]
      %v279 = vld [vmem:[%s223 + $0xa8] sm:$0xf]
      %v280 = vld [vmem:[%s223 + $0xac] sm:$0x3]
      %v281 = vld [vmem:[%s223 + $0xb0] sm:$0xf]
      %v282 = vld [vmem:[%s223 + $0xb4] sm:$0xf]
      %v283 = vld [vmem:[%s223 + $0xb8] sm:$0xf]
      %v284 = vld [vmem:[%s223 + $0xbc] sm:$0x3]
      %v285 = vld [vmem:[%s223 + $0xc0] sm:$0xf]
      %v286 = vld [vmem:[%s223 + $0xc4] sm:$0xf]
      %v287 = vld [vmem:[%s223 + $0xc8] sm:$0xf]
      %v288 = vld [vmem:[%s223 + $0xcc] sm:$0x3]
      %v289 = vld [vmem:[%s223 + $0xd0] sm:$0xf]
      %v290 = vld [vmem:[%s223 + $0xd4] sm:$0xf]
      %v291 = vld [vmem:[%s223 + $0xd8] sm:$0xf]
      %v292 = vld [vmem:[%s223 + $0xdc] sm:$0x3]
      %v293 = vld [vmem:[%s223 + $0xe0] sm:$0xf]
      %v294 = vld [vmem:[%s223 + $0xe4] sm:$0xf]
      %v295 = vld [vmem:[%s223 + $0xe8] sm:$0xf]
      %v296 = vld [vmem:[%s223 + $0xec] sm:$0x3]
      %v297 = vld [vmem:[%s223 + $0xf0] sm:$0xf]
      %v298 = vld [vmem:[%s223 + $0xf4] sm:$0xf]
      %v299 = vld [vmem:[%s223 + $0xf8] sm:$0xf]
      %v300 = vld [vmem:[%s223 + $0xfc] sm:$0x3]
      %v301 = vld [vmem:[%s223 + $0x100] sm:$0xf]
      %v302 = vld [vmem:[%s223 + $0x104] sm:$0xf]
      %v303 = vld [vmem:[%s223 + $0x108] sm:$0xf]
      %v304 = vld [vmem:[%s223 + $0x10c] sm:$0x3]
      %v305 = vld [vmem:[%s223 + $0x110] sm:$0xf]
      %v306 = vld [vmem:[%s223 + $0x114] sm:$0xf]
      %v307 = vld [vmem:[%s223 + $0x118] sm:$0xf]
      %v308 = vld [vmem:[%s223 + $0x11c] sm:$0x3]
      %v309 = vld [vmem:[%s223 + $0x120] sm:$0xf]
      %v310 = vld [vmem:[%s223 + $0x124] sm:$0xf]
      %v311 = vld [vmem:[%s223 + $0x128] sm:$0xf]
      %v312 = vld [vmem:[%s223 + $0x12c] sm:$0x3]
      %v313 = vld [vmem:[%s223 + $0x130] sm:$0xf]
      %v314 = vld [vmem:[%s223 + $0x134] sm:$0xf]
      %v315 = vld [vmem:[%s223 + $0x138] sm:$0xf]
      %v316 = vld [vmem:[%s223 + $0x13c] sm:$0x3]
      %v317 = vld [vmem:[%s223 + $0x140] sm:$0xf]
      %v318 = vld [vmem:[%s223 + $0x144] sm:$0xf]
      %v319 = vld [vmem:[%s223 + $0x148] sm:$0xf]
      %v320 = vld [vmem:[%s223 + $0x14c] sm:$0x3]
      %v321 = vld [vmem:[%s223 + $0x150] sm:$0xf]
      %v322 = vld [vmem:[%s223 + $0x154] sm:$0xf]
      %v323 = vld [vmem:[%s223 + $0x158] sm:$0xf]
      %v324 = vld [vmem:[%s223 + $0x15c] sm:$0x3]
      %v325 = vld [vmem:[%s223 + $0x160] sm:$0xf]
      %v326 = vld [vmem:[%s223 + $0x164] sm:$0xf]
      %v327 = vld [vmem:[%s223 + $0x168] sm:$0xf]
      %v328 = vld [vmem:[%s223 + $0x170] sm:$0xf]
      %v329 = vld [vmem:[%s223 + $0x174] sm:$0xf]
      %v330 = vld [vmem:[%s223 + $0x178] sm:$0xf]
      %v331 = vld [vmem:[%s223 + $0x180] sm:$0xf]
      %v332 = vld [vmem:[%s223 + $0x184] sm:$0xf]
      %v333 = vld [vmem:[%s223 + $0x188] sm:$0xf]
      %v334 = vld [vmem:[%s223 + $0x190] sm:$0xf]
      %v335 = vld [vmem:[%s223 + $0x194] sm:$0xf]
      %v336 = vld [vmem:[%s223 + $0x198] sm:$0xf]
      %v337 = vld [vmem:[%s223 + $0x1a0] sm:$0xf]
      %v338 = vld [vmem:[%s223 + $0x1a4] sm:$0xf]
      %v339 = vld [vmem:[%s223 + $0x1a8] sm:$0xf]
      %v340 = vld [vmem:[%s223 + $0x1b0] sm:$0xf]
      %v341 = vld [vmem:[%s223 + $0x1b4] sm:$0xf]
      %v342 = vld [vmem:[%s223 + $0x1b8] sm:$0xf]
      %vm427 = vcmask 1040384
      %vm428 = vcmask 1044484
      %vm429 = vmor %vm427, %vm428
      %v430 = vrot.slane %v243, 7
      %v431 = vrot.slane %v430, 4
      %v432 = vrot.slane %v244, 7
      %v433 = vsel %vm429, %v431, %v432
      %v434 = vrot.slane %v432, 4
      %v435 = vrot.slane %v245, 7
      %v436 = vsel %vm429, %v434, %v435
      %v437 = vrot.slane %v246, 7
      %v438 = vrot.slane %v437, 4
      %v439 = vrot.slane %v247, 7
      %v440 = vsel %vm429, %v438, %v439
      %v441 = vrot.slane %v439, 4
      %v442 = vrot.slane %v248, 7
      %v443 = vsel %vm429, %v441, %v442
      %v444 = vrot.slane %v249, 7
      %v445 = vrot.slane %v444, 4
      %v446 = vrot.slane %v250, 7
      %v447 = vsel %vm429, %v445, %v446
      %v448 = vrot.slane %v446, 4
      %v449 = vrot.slane %v251, 7
      %v450 = vsel %vm429, %v448, %v449
      %v451 = vrot.slane %v252, 7
      %v452 = vrot.slane %v451, 4
      %v453 = vrot.slane %v253, 7
      %v454 = vsel %vm429, %v452, %v453
      %v455 = vrot.slane %v453, 4
      %v456 = vrot.slane %v254, 7
      %v457 = vsel %vm429, %v455, %v456
      %v458 = vrot.slane %v255, 7
      %v459 = vrot.slane %v458, 4
      %v460 = vrot.slane %v256, 7
      %v461 = vsel %vm429, %v459, %v460
      %v462 = vrot.slane %v460, 4
      %v463 = vrot.slane %v257, 7
      %v464 = vsel %vm429, %v462, %v463
      %v465 = vrot.slane %v258, 7
      %v466 = vrot.slane %v465, 4
      %v467 = vrot.slane %v259, 7
      %v468 = vsel %vm429, %v466, %v467
      %v469 = vrot.slane %v467, 4
      %v470 = vrot.slane %v260, 7
      %v471 = vsel %vm429, %v469, %v470
      %v472 = vrot.slane %v261, 7
      %v473 = vrot.slane %v472, 4
      %v474 = vrot.slane %v262, 7
      %v475 = vsel %vm429, %v473, %v474
      %v476 = vrot.slane %v474, 4
      %v477 = vrot.slane %v263, 7
      %v478 = vsel %vm429, %v476, %v477
      %v479 = vrot.slane %v265, 7
      %v480 = vrot.slane %v479, 4
      %v481 = vrot.slane %v266, 7
      %v482 = vsel %vm429, %v480, %v481
      %v483 = vrot.slane %v481, 4
      %v484 = vrot.slane %v267, 7
      %v485 = vsel %vm429, %v483, %v484
      %v486 = vrot.slane %v269, 7
      %v487 = vrot.slane %v486, 4
      %v488 = vrot.slane %v270, 7
      %v489 = vsel %vm429, %v487, %v488
      %v490 = vrot.slane %v488, 4
      %v491 = vrot.slane %v271, 7
      %v492 = vsel %vm429, %v490, %v491
      %v493 = vrot.slane %v273, 7
      %v494 = vrot.slane %v493, 4
      %v495 = vrot.slane %v274, 7
      %v496 = vsel %vm429, %v494, %v495
      %v497 = vrot.slane %v495, 4
      %v498 = vrot.slane %v275, 7
      %v499 = vsel %vm429, %v497, %v498
      %v500 = vrot.slane %v277, 7
      %v501 = vrot.slane %v500, 4
      %v502 = vrot.slane %v278, 7
      %v503 = vsel %vm429, %v501, %v502
      %v504 = vrot.slane %v502, 4
      %v505 = vrot.slane %v279, 7
      %v506 = vsel %vm429, %v504, %v505
      %v507 = vrot.slane %v281, 7
      %v508 = vrot.slane %v507, 4
      %v509 = vrot.slane %v282, 7
      %v510 = vsel %vm429, %v508, %v509
      %v511 = vrot.slane %v509, 4
      %v512 = vrot.slane %v283, 7
      %v513 = vsel %vm429, %v511, %v512
      %v514 = vrot.slane %v285, 7
      %v515 = vrot.slane %v514, 4
      %v516 = vrot.slane %v286, 7
      %v517 = vsel %vm429, %v515, %v516
      %v518 = vrot.slane %v516, 4
      %v519 = vrot.slane %v287, 7
      %v520 = vsel %vm429, %v518, %v519
      %v521 = vrot.slane %v289, 7
      %v522 = vrot.slane %v521, 4
      %v523 = vrot.slane %v290, 7
      %v524 = vsel %vm429, %v522, %v523
      %v525 = vrot.slane %v523, 4
      %v526 = vrot.slane %v291, 7
      %v527 = vsel %vm429, %v525, %v526
      %v528 = vrot.slane %v293, 7
      %v529 = vrot.slane %v528, 4
      %v530 = vrot.slane %v294, 7
      %v531 = vsel %vm429, %v529, %v530
      %v532 = vrot.slane %v530, 4
      %v533 = vrot.slane %v295, 7
      %v534 = vsel %vm429, %v532, %v533
      %v535 = vrot.slane %v297, 7
      %v536 = vrot.slane %v535, 4
      %v537 = vrot.slane %v298, 7
      %v538 = vsel %vm429, %v536, %v537
      %v539 = vrot.slane %v537, 4
      %v540 = vrot.slane %v299, 7
      %v541 = vsel %vm429, %v539, %v540
      %v542 = vrot.slane %v301, 7
      %v543 = vrot.slane %v542, 4
      %v544 = vrot.slane %v302, 7
      %v545 = vsel %vm429, %v543, %v544
      %v546 = vrot.slane %v544, 4
      %v547 = vrot.slane %v303, 7
      %v548 = vsel %vm429, %v546, %v547
      %v549 = vrot.slane %v305, 7
      %v550 = vrot.slane %v549, 4
      %v551 = vrot.slane %v306, 7
      %v552 = vsel %vm429, %v550, %v551
      %v553 = vrot.slane %v551, 4
      %v554 = vrot.slane %v307, 7
      %v555 = vsel %vm429, %v553, %v554
      %v556 = vrot.slane %v309, 7
      %v557 = vrot.slane %v556, 4
      %v558 = vrot.slane %v310, 7
      %v559 = vsel %vm429, %v557, %v558
      %v560 = vrot.slane %v558, 4
      %v561 = vrot.slane %v311, 7
      %v562 = vsel %vm429, %v560, %v561
      %v563 = vrot.slane %v313, 7
      %v564 = vrot.slane %v563, 4
      %v565 = vrot.slane %v314, 7
      %v566 = vsel %vm429, %v564, %v565
      %v567 = vrot.slane %v565, 4
      %v568 = vrot.slane %v315, 7
      %v569 = vsel %vm429, %v567, %v568
      %v570 = vrot.slane %v317, 7
      %v571 = vrot.slane %v570, 4
      %v572 = vrot.slane %v318, 7
      %v573 = vsel %vm429, %v571, %v572
      %v574 = vrot.slane %v572, 4
      %v575 = vrot.slane %v319, 7
      %v576 = vsel %vm429, %v574, %v575
      %v577 = vrot.slane %v321, 7
      %v578 = vrot.slane %v577, 4
      %v579 = vrot.slane %v322, 7
      %v580 = vsel %vm429, %v578, %v579
      %v581 = vrot.slane %v579, 4
      %v582 = vrot.slane %v323, 7
      %v583 = vsel %vm429, %v581, %v582
      %v584 = vrot.slane %v325, 7
      %v585 = vrot.slane %v584, 4
      %v586 = vrot.slane %v326, 7
      %v587 = vsel %vm429, %v585, %v586
      %v588 = vrot.slane %v586, 4
      %v589 = vrot.slane %v327, 7
      %v590 = vsel %vm429, %v588, %v589
      %v591 = vrot.slane %v328, 7
      %v592 = vrot.slane %v591, 4
      %v593 = vrot.slane %v329, 7
      %v594 = vsel %vm429, %v592, %v593
      %v595 = vrot.slane %v593, 4
      %v596 = vrot.slane %v330, 7
      %v597 = vsel %vm429, %v595, %v596
      %v598 = vrot.slane %v331, 7
      %v599 = vrot.slane %v598, 4
      %v600 = vrot.slane %v332, 7
      %v601 = vsel %vm429, %v599, %v600
      %v602 = vrot.slane %v600, 4
      %v603 = vrot.slane %v333, 7
      %v604 = vsel %vm429, %v602, %v603
      %v605 = vrot.slane %v334, 7
      %v606 = vrot.slane %v605, 4
      %v607 = vrot.slane %v335, 7
      %v608 = vsel %vm429, %v606, %v607
      %v609 = vrot.slane %v607, 4
      %v610 = vrot.slane %v336, 7
      %v611 = vsel %vm429, %v609, %v610
      %v612 = vrot.slane %v337, 7
      %v613 = vrot.slane %v612, 4
      %v614 = vrot.slane %v338, 7
      %v615 = vsel %vm429, %v613, %v614
      %v616 = vrot.slane %v614, 4
      %v617 = vrot.slane %v339, 7
      %v618 = vsel %vm429, %v616, %v617
      %v619 = vrot.slane %v340, 7
      %v620 = vrot.slane %v619, 4
      %v621 = vrot.slane %v341, 7
      %v622 = vsel %vm429, %v620, %v621
      %v623 = vrot.slane %v621, 4
      %v624 = vrot.slane %v342, 7
      %v625 = vsel %vm429, %v623, %v624
      %vm626 = vcmask 1042432
      %vm627 = vcmask 1046532
      %vm628 = vmor %vm626, %vm627
      %v629 = vrot.slane %v261, 5
      %v630 = vrot.slane %v629, 4
      %v631 = vrot.slane %v262, 5
      %v632 = vsel %vm628, %v630, %v631
      %v633 = vrot.slane %v631, 4
      %v634 = vrot.slane %v263, 5
      %v635 = vsel %vm628, %v633, %v634
      %v636 = vrot.slane %v265, 5
      %v637 = vrot.slane %v636, 4
      %v638 = vrot.slane %v266, 5
      %v639 = vsel %vm628, %v637, %v638
      %v640 = vrot.slane %v638, 4
      %v641 = vrot.slane %v267, 5
      %v642 = vsel %vm628, %v640, %v641
      %v643 = vrot.slane %v269, 5
      %v644 = vrot.slane %v643, 4
      %v645 = vrot.slane %v270, 5
      %v646 = vsel %vm628, %v644, %v645
      %v647 = vrot.slane %v645, 4
      %v648 = vrot.slane %v271, 5
      %v649 = vsel %vm628, %v647, %v648
      %v650 = vrot.slane %v273, 5
      %v651 = vrot.slane %v650, 4
      %v652 = vrot.slane %v274, 5
      %v653 = vsel %vm628, %v651, %v652
      %v654 = vrot.slane %v652, 4
      %v655 = vrot.slane %v275, 5
      %v656 = vsel %vm628, %v654, %v655
      %v657 = vrot.slane %v277, 5
      %v658 = vrot.slane %v657, 4
      %v659 = vrot.slane %v278, 5
      %v660 = vsel %vm628, %v658, %v659
      %v661 = vrot.slane %v659, 4
      %v662 = vrot.slane %v279, 5
      %v663 = vsel %vm628, %v661, %v662
      %v664 = vrot.slane %v281, 5
      %v665 = vrot.slane %v664, 4
      %v666 = vrot.slane %v282, 5
      %v667 = vsel %vm628, %v665, %v666
      %v668 = vrot.slane %v666, 4
      %v669 = vrot.slane %v283, 5
      %v670 = vsel %vm628, %v668, %v669
      %v671 = vrot.slane %v285, 5
      %v672 = vrot.slane %v671, 4
      %v673 = vrot.slane %v286, 5
      %v674 = vsel %vm628, %v672, %v673
      %v675 = vrot.slane %v673, 4
      %v676 = vrot.slane %v287, 5
      %v677 = vsel %vm628, %v675, %v676
      %v678 = vrot.slane %v289, 5
      %v679 = vrot.slane %v678, 4
      %v680 = vrot.slane %v290, 5
      %v681 = vsel %vm628, %v679, %v680
      %v682 = vrot.slane %v680, 4
      %v683 = vrot.slane %v291, 5
      %v684 = vsel %vm628, %v682, %v683
      %v685 = vrot.slane %v293, 5
      %v686 = vrot.slane %v685, 4
      %v687 = vrot.slane %v294, 5
      %v688 = vsel %vm628, %v686, %v687
      %v689 = vrot.slane %v687, 4
      %v690 = vrot.slane %v295, 5
      %v691 = vsel %vm628, %v689, %v690
      %v692 = vrot.slane %v297, 5
      %v693 = vrot.slane %v692, 4
      %v694 = vrot.slane %v298, 5
      %v695 = vsel %vm628, %v693, %v694
      %v696 = vrot.slane %v694, 4
      %v697 = vrot.slane %v299, 5
      %v698 = vsel %vm628, %v696, %v697
      %v699 = vrot.slane %v301, 5
      %v700 = vrot.slane %v699, 4
      %v701 = vrot.slane %v302, 5
      %v702 = vsel %vm628, %v700, %v701
      %v703 = vrot.slane %v701, 4
      %v704 = vrot.slane %v303, 5
      %v705 = vsel %vm628, %v703, %v704
      %v706 = vrot.slane %v305, 5
      %v707 = vrot.slane %v706, 4
      %v708 = vrot.slane %v306, 5
      %v709 = vsel %vm628, %v707, %v708
      %v710 = vrot.slane %v708, 4
      %v711 = vrot.slane %v307, 5
      %v712 = vsel %vm628, %v710, %v711
      %v713 = vrot.slane %v309, 5
      %v714 = vrot.slane %v713, 4
      %v715 = vrot.slane %v310, 5
      %v716 = vsel %vm628, %v714, %v715
      %v717 = vrot.slane %v715, 4
      %v718 = vrot.slane %v311, 5
      %v719 = vsel %vm628, %v717, %v718
      %v720 = vrot.slane %v313, 5
      %v721 = vrot.slane %v720, 4
      %v722 = vrot.slane %v314, 5
      %v723 = vsel %vm628, %v721, %v722
      %v724 = vrot.slane %v722, 4
      %v725 = vrot.slane %v315, 5
      %v726 = vsel %vm628, %v724, %v725
      %v727 = vrot.slane %v317, 5
      %v728 = vrot.slane %v727, 4
      %v729 = vrot.slane %v318, 5
      %v730 = vsel %vm628, %v728, %v729
      %v731 = vrot.slane %v729, 4
      %v732 = vrot.slane %v319, 5
      %v733 = vsel %vm628, %v731, %v732
      %v734 = vrot.slane %v321, 5
      %v735 = vrot.slane %v734, 4
      %v736 = vrot.slane %v322, 5
      %v737 = vsel %vm628, %v735, %v736
      %v738 = vrot.slane %v736, 4
      %v739 = vrot.slane %v323, 5
      %v740 = vsel %vm628, %v738, %v739
      %vm741 = vcmask 1041408
      %vm742 = vcmask 1045508
      %vm743 = vmor %vm741, %vm742
      %v744 = vrot.slane %v261, 6
      %v745 = vrot.slane %v744, 4
      %v746 = vrot.slane %v262, 6
      %v747 = vsel %vm743, %v745, %v746
      %v748 = vrot.slane %v746, 4
      %v749 = vrot.slane %v263, 6
      %v750 = vsel %vm743, %v748, %v749
      %v751 = vrot.slane %v265, 6
      %v752 = vrot.slane %v751, 4
      %v753 = vrot.slane %v266, 6
      %v754 = vsel %vm743, %v752, %v753
      %v755 = vrot.slane %v753, 4
      %v756 = vrot.slane %v267, 6
      %v757 = vsel %vm743, %v755, %v756
      %v758 = vrot.slane %v269, 6
      %v759 = vrot.slane %v758, 4
      %v760 = vrot.slane %v270, 6
      %v761 = vsel %vm743, %v759, %v760
      %v762 = vrot.slane %v760, 4
      %v763 = vrot.slane %v271, 6
      %v764 = vsel %vm743, %v762, %v763
      %v765 = vrot.slane %v273, 6
      %v766 = vrot.slane %v765, 4
      %v767 = vrot.slane %v274, 6
      %v768 = vsel %vm743, %v766, %v767
      %v769 = vrot.slane %v767, 4
      %v770 = vrot.slane %v275, 6
      %v771 = vsel %vm743, %v769, %v770
      %v772 = vrot.slane %v277, 6
      %v773 = vrot.slane %v772, 4
      %v774 = vrot.slane %v278, 6
      %v775 = vsel %vm743, %v773, %v774
      %v776 = vrot.slane %v774, 4
      %v777 = vrot.slane %v279, 6
      %v778 = vsel %vm743, %v776, %v777
      %v779 = vrot.slane %v281, 6
      %v780 = vrot.slane %v779, 4
      %v781 = vrot.slane %v282, 6
      %v782 = vsel %vm743, %v780, %v781
      %v783 = vrot.slane %v781, 4
      %v784 = vrot.slane %v283, 6
      %v785 = vsel %vm743, %v783, %v784
      %v786 = vrot.slane %v285, 6
      %v787 = vrot.slane %v786, 4
      %v788 = vrot.slane %v286, 6
      %v789 = vsel %vm743, %v787, %v788
      %v790 = vrot.slane %v788, 4
      %v791 = vrot.slane %v287, 6
      %v792 = vsel %vm743, %v790, %v791
      %v793 = vrot.slane %v289, 6
      %v794 = vrot.slane %v793, 4
      %v795 = vrot.slane %v290, 6
      %v796 = vsel %vm743, %v794, %v795
      %v797 = vrot.slane %v795, 4
      %v798 = vrot.slane %v291, 6
      %v799 = vsel %vm743, %v797, %v798
      %v800 = vrot.slane %v293, 6
      %v801 = vrot.slane %v800, 4
      %v802 = vrot.slane %v294, 6
      %v803 = vsel %vm743, %v801, %v802
      %v804 = vrot.slane %v802, 4
      %v805 = vrot.slane %v295, 6
      %v806 = vsel %vm743, %v804, %v805
      %v807 = vrot.slane %v297, 6
      %v808 = vrot.slane %v807, 4
      %v809 = vrot.slane %v298, 6
      %v810 = vsel %vm743, %v808, %v809
      %v811 = vrot.slane %v809, 4
      %v812 = vrot.slane %v299, 6
      %v813 = vsel %vm743, %v811, %v812
      %v814 = vrot.slane %v301, 6
      %v815 = vrot.slane %v814, 4
      %v816 = vrot.slane %v302, 6
      %v817 = vsel %vm743, %v815, %v816
      %v818 = vrot.slane %v816, 4
      %v819 = vrot.slane %v303, 6
      %v820 = vsel %vm743, %v818, %v819
      %v821 = vrot.slane %v305, 6
      %v822 = vrot.slane %v821, 4
      %v823 = vrot.slane %v306, 6
      %v824 = vsel %vm743, %v822, %v823
      %v825 = vrot.slane %v823, 4
      %v826 = vrot.slane %v307, 6
      %v827 = vsel %vm743, %v825, %v826
      %v828 = vrot.slane %v309, 6
      %v829 = vrot.slane %v828, 4
      %v830 = vrot.slane %v310, 6
      %v831 = vsel %vm743, %v829, %v830
      %v832 = vrot.slane %v830, 4
      %v833 = vrot.slane %v311, 6
      %v834 = vsel %vm743, %v832, %v833
      %v835 = vrot.slane %v313, 6
      %v836 = vrot.slane %v835, 4
      %v837 = vrot.slane %v314, 6
      %v838 = vsel %vm743, %v836, %v837
      %v839 = vrot.slane %v837, 4
      %v840 = vrot.slane %v315, 6
      %v841 = vsel %vm743, %v839, %v840
      %v842 = vrot.slane %v317, 6
      %v843 = vrot.slane %v842, 4
      %v844 = vrot.slane %v318, 6
      %v845 = vsel %vm743, %v843, %v844
      %v846 = vrot.slane %v844, 4
      %v847 = vrot.slane %v319, 6
      %v848 = vsel %vm743, %v846, %v847
      %v849 = vrot.slane %v321, 6
      %v850 = vrot.slane %v849, 4
      %v851 = vrot.slane %v322, 6
      %v852 = vsel %vm743, %v850, %v851
      %v853 = vrot.slane %v851, 4
      %v854 = vrot.slane %v323, 6
      %v855 = vsel %vm743, %v853, %v854
      %v872 = vrot.slane %v634, 4
      %v873 = vrot.slane %v264, 5
      %v874 = vsel %vm628, %v872, %v873
      %v875 = vrot.slane %v641, 4
      %v876 = vrot.slane %v268, 5
      %v877 = vsel %vm628, %v875, %v876
      %v878 = vrot.slane %v648, 4
      %v879 = vrot.slane %v272, 5
      %v880 = vsel %vm628, %v878, %v879
      %v881 = vrot.slane %v655, 4
      %v882 = vrot.slane %v276, 5
      %v883 = vsel %vm628, %v881, %v882
      %v884 = vrot.slane %v662, 4
      %v885 = vrot.slane %v280, 5
      %v886 = vsel %vm628, %v884, %v885
      %v887 = vrot.slane %v669, 4
      %v888 = vrot.slane %v284, 5
      %v889 = vsel %vm628, %v887, %v888
      %v890 = vrot.slane %v676, 4
      %v891 = vrot.slane %v288, 5
      %v892 = vsel %vm628, %v890, %v891
      %v893 = vrot.slane %v683, 4
      %v894 = vrot.slane %v292, 5
      %v895 = vsel %vm628, %v893, %v894
      %v896 = vrot.slane %v690, 4
      %v897 = vrot.slane %v296, 5
      %v898 = vsel %vm628, %v896, %v897
      %v899 = vrot.slane %v697, 4
      %v900 = vrot.slane %v300, 5
      %v901 = vsel %vm628, %v899, %v900
      %v902 = vrot.slane %v704, 4
      %v903 = vrot.slane %v304, 5
      %v904 = vsel %vm628, %v902, %v903
      %v905 = vrot.slane %v711, 4
      %v906 = vrot.slane %v308, 5
      %v907 = vsel %vm628, %v905, %v906
      %v908 = vrot.slane %v718, 4
      %v909 = vrot.slane %v312, 5
      %v910 = vsel %vm628, %v908, %v909
      %v911 = vrot.slane %v725, 4
      %v912 = vrot.slane %v316, 5
      %v913 = vsel %vm628, %v911, %v912
      %v914 = vrot.slane %v732, 4
      %v915 = vrot.slane %v320, 5
      %v916 = vsel %vm628, %v914, %v915
      %v917 = vrot.slane %v739, 4
      %v918 = vrot.slane %v324, 5
      %v919 = vsel %vm628, %v917, %v918
      %v920 = vrot.slane %v749, 4
      %v921 = vrot.slane %v264, 6
      %v922 = vsel %vm743, %v920, %v921
      %v923 = vrot.slane %v756, 4
      %v924 = vrot.slane %v268, 6
      %v925 = vsel %vm743, %v923, %v924
      %v926 = vrot.slane %v763, 4
      %v927 = vrot.slane %v272, 6
      %v928 = vsel %vm743, %v926, %v927
      %v929 = vrot.slane %v770, 4
      %v930 = vrot.slane %v276, 6
      %v931 = vsel %vm743, %v929, %v930
      %v932 = vrot.slane %v777, 4
      %v933 = vrot.slane %v280, 6
      %v934 = vsel %vm743, %v932, %v933
      %v935 = vrot.slane %v784, 4
      %v936 = vrot.slane %v284, 6
      %v937 = vsel %vm743, %v935, %v936
      %v938 = vrot.slane %v791, 4
      %v939 = vrot.slane %v288, 6
      %v940 = vsel %vm743, %v938, %v939
      %v941 = vrot.slane %v798, 4
      %v942 = vrot.slane %v292, 6
      %v943 = vsel %vm743, %v941, %v942
      %v944 = vrot.slane %v805, 4
      %v945 = vrot.slane %v296, 6
      %v946 = vsel %vm743, %v944, %v945
      %v947 = vrot.slane %v812, 4
      %v948 = vrot.slane %v300, 6
      %v949 = vsel %vm743, %v947, %v948
      %v950 = vrot.slane %v819, 4
      %v951 = vrot.slane %v304, 6
      %v952 = vsel %vm743, %v950, %v951
      %v953 = vrot.slane %v826, 4
      %v954 = vrot.slane %v308, 6
      %v955 = vsel %vm743, %v953, %v954
      %v956 = vrot.slane %v833, 4
      %v957 = vrot.slane %v312, 6
      %v958 = vsel %vm743, %v956, %v957
      %v959 = vrot.slane %v840, 4
      %v960 = vrot.slane %v316, 6
      %v961 = vsel %vm743, %v959, %v960
      %v962 = vrot.slane %v847, 4
      %v963 = vrot.slane %v320, 6
      %v964 = vsel %vm743, %v962, %v963
      %v965 = vrot.slane %v854, 4
      %v966 = vrot.slane %v324, 6
      %v967 = vsel %vm743, %v965, %v966
      %v968 = vunpack.c.l.b16 %v433
      %v969 = vunpack.c.l.b16 %v436
      %v970 = vunpack.c.l.b16 %v440
      %v971 = vunpack.c.l.b16 %v443
      %v972 = vunpack.c.l.b16 %v447
      %v973 = vunpack.c.l.b16 %v450
      %v974 = vunpack.c.l.b16 %v454
      %v975 = vunpack.c.l.b16 %v457
      %v976 = vunpack.c.l.b16 %v461
      %v977 = vunpack.c.l.b16 %v464
      %v978 = vunpack.c.l.b16 %v468
      %v979 = vunpack.c.l.b16 %v471
      %v980 = vunpack.c.l.b16 %v475
      %v981 = vunpack.c.l.b16 %v478
      %v982 = vunpack.c.l.b16 %v482
      %v983 = vunpack.c.l.b16 %v485
      %v984 = vunpack.c.l.b16 %v489
      %v985 = vunpack.c.l.b16 %v492
      %v986 = vunpack.c.l.b16 %v496
      %v987 = vunpack.c.l.b16 %v499
      %v988 = vunpack.c.l.b16 %v503
      %v989 = vunpack.c.l.b16 %v506
      %v990 = vunpack.c.l.b16 %v510
      %v991 = vunpack.c.l.b16 %v513
      %v992 = vunpack.c.l.b16 %v517
      %v993 = vunpack.c.l.b16 %v520
      %v994 = vunpack.c.l.b16 %v524
      %v995 = vunpack.c.l.b16 %v527
      %v996 = vunpack.c.l.b16 %v531
      %v997 = vunpack.c.l.b16 %v534
      %v998 = vunpack.c.l.b16 %v538
      %v999 = vunpack.c.l.b16 %v541
      %v1000 = vpack.c.b16 %v969, %v968
      %v1001 = vpack.c.b16 %v971, %v970
      %v1002 = vpack.c.b16 %v973, %v972
      %v1003 = vpack.c.b16 %v975, %v974
      %v1004 = vpack.c.b16 %v977, %v976
      %v1005 = vpack.c.b16 %v979, %v978
      %v1006 = vpack.c.b16 %v981, %v980
      %v1007 = vpack.c.b16 %v983, %v982
      %v1008 = vpack.c.b16 %v985, %v984
      %v1009 = vpack.c.b16 %v987, %v986
      %v1010 = vpack.c.b16 %v989, %v988
      %v1011 = vpack.c.b16 %v991, %v990
      %v1012 = vpack.c.b16 %v993, %v992
      %v1013 = vpack.c.b16 %v995, %v994
      %v1014 = vpack.c.b16 %v997, %v996
      %v1015 = vpack.c.b16 %v999, %v998
      %v1016 = vunpack.c.l.b16 %v545
      %v1017 = vunpack.c.l.b16 %v548
      %v1018 = vunpack.c.l.b16 %v552
      %v1019 = vunpack.c.l.b16 %v555
      %v1020 = vpack.c.b16 %v1017, %v1016
      %v1021 = vpack.c.b16 %v1019, %v1018
      %1022 = vrot.lane.b32.xlu0 %v1002, 2
      %v1023 = vpop.permute.xlu0 %1022
      %1024 = vrot.lane.b32.xlu0 %v1003, 2
      %v1025 = vpop.permute.xlu0 %1024
      %1026 = vrot.lane.b32.xlu0 %v1004, 2
      %v1027 = vpop.permute.xlu0 %1026
      %1028 = vrot.lane.b32.xlu0 %v1005, 2
      %v1029 = vpop.permute.xlu0 %1028
      %1030 = vrot.lane.b32.xlu0 %v1006, 2
      %v1031 = vpop.permute.xlu0 %1030
      %1032 = vrot.lane.b32.xlu0 %v1007, 2
      %v1033 = vpop.permute.xlu0 %1032
      %1034 = vrot.lane.b32.xlu0 %v1008, 2
      %v1035 = vpop.permute.xlu0 %1034
      %1036 = vrot.lane.b32.xlu0 %v1009, 2
      %v1037 = vpop.permute.xlu0 %1036
      %1038 = vrot.lane.b32.xlu0 %v1010, 2
      %v1039 = vpop.permute.xlu0 %1038
      %1040 = vrot.lane.b32.xlu0 %v1011, 2
      %v1041 = vpop.permute.xlu0 %1040
      %1042 = vrot.lane.b32.xlu0 %v1012, 2
      %v1043 = vpop.permute.xlu0 %1042
      %1044 = vrot.lane.b32.xlu0 %v1013, 2
      %v1045 = vpop.permute.xlu0 %1044
      %1046 = vrot.lane.b32.xlu0 %v1014, 2
      %v1047 = vpop.permute.xlu0 %1046
      %1048 = vrot.lane.b32.xlu0 %v1015, 2
      %v1049 = vpop.permute.xlu0 %1048
      %1050 = vrot.lane.b32.xlu0 %v1020, 2
      %v1051 = vpop.permute.xlu0 %1050
      %1052 = vrot.lane.b32.xlu0 %v1021, 2
      %v1053 = vpop.permute.xlu0 %1052
      %v1054 = vunpack.c.l.b16 %v559
      %v1055 = vunpack.c.l.b16 %v562
      %v1056 = vunpack.c.l.b16 %v566
      %v1057 = vunpack.c.l.b16 %v569
      %v1058 = vpack.c.b16 %v1055, %v1054
      %v1059 = vpack.c.b16 %v1057, %v1056
      %1060 = vrot.lane.b32.xlu0 %v1004, 4
      %v1061 = vpop.permute.xlu0 %1060
      %1062 = vrot.lane.b32.xlu0 %v1005, 4
      %v1063 = vpop.permute.xlu0 %1062
      %1064 = vrot.lane.b32.xlu0 %v1006, 4
      %v1065 = vpop.permute.xlu0 %1064
      %1066 = vrot.lane.b32.xlu0 %v1007, 4
      %v1067 = vpop.permute.xlu0 %1066
      %1068 = vrot.lane.b32.xlu0 %v1008, 4
      %v1069 = vpop.permute.xlu0 %1068
      %1070 = vrot.lane.b32.xlu0 %v1009, 4
      %v1071 = vpop.permute.xlu0 %1070
      %1072 = vrot.lane.b32.xlu0 %v1010, 4
      %v1073 = vpop.permute.xlu0 %1072
      %1074 = vrot.lane.b32.xlu0 %v1011, 4
      %v1075 = vpop.permute.xlu0 %1074
      %1076 = vrot.lane.b32.xlu0 %v1012, 4
      %v1077 = vpop.permute.xlu0 %1076
      %1078 = vrot.lane.b32.xlu0 %v1013, 4
      %v1079 = vpop.permute.xlu0 %1078
      %1080 = vrot.lane.b32.xlu0 %v1014, 4
      %v1081 = vpop.permute.xlu0 %1080
      %1082 = vrot.lane.b32.xlu0 %v1015, 4
      %v1083 = vpop.permute.xlu0 %1082
      %1084 = vrot.lane.b32.xlu0 %v1020, 4
      %v1085 = vpop.permute.xlu0 %1084
      %1086 = vrot.lane.b32.xlu0 %v1021, 4
      %v1087 = vpop.permute.xlu0 %1086
      %1088 = vrot.lane.b32.xlu0 %v1058, 4
      %v1089 = vpop.permute.xlu0 %1088
      %1090 = vrot.lane.b32.xlu0 %v1059, 4
      %v1091 = vpop.permute.xlu0 %1090
      %v1092 = vunpack.c.l.b16 %v573
      %v1093 = vunpack.c.l.b16 %v576
      %v1094 = vunpack.c.l.b16 %v580
      %v1095 = vunpack.c.l.b16 %v583
      %v1096 = vpack.c.b16 %v1093, %v1092
      %v1097 = vpack.c.b16 %v1095, %v1094
      %1098 = vrot.lane.b32.xlu0 %v1006, 6
      %v1099 = vpop.permute.xlu0 %1098
      %1100 = vrot.lane.b32.xlu0 %v1007, 6
      %v1101 = vpop.permute.xlu0 %1100
      %1102 = vrot.lane.b32.xlu0 %v1008, 6
      %v1103 = vpop.permute.xlu0 %1102
      %1104 = vrot.lane.b32.xlu0 %v1009, 6
      %v1105 = vpop.permute.xlu0 %1104
      %1106 = vrot.lane.b32.xlu0 %v1010, 6
      %v1107 = vpop.permute.xlu0 %1106
      %1108 = vrot.lane.b32.xlu0 %v1011, 6
      %v1109 = vpop.permute.xlu0 %1108
      %1110 = vrot.lane.b32.xlu0 %v1012, 6
      %v1111 = vpop.permute.xlu0 %1110
      %1112 = vrot.lane.b32.xlu0 %v1013, 6
      %v1113 = vpop.permute.xlu0 %1112
      %1114 = vrot.lane.b32.xlu0 %v1014, 6
      %v1115 = vpop.permute.xlu0 %1114
      %1116 = vrot.lane.b32.xlu0 %v1015, 6
      %v1117 = vpop.permute.xlu0 %1116
      %1118 = vrot.lane.b32.xlu0 %v1020, 6
      %v1119 = vpop.permute.xlu0 %1118
      %1120 = vrot.lane.b32.xlu0 %v1021, 6
      %v1121 = vpop.permute.xlu0 %1120
      %1122 = vrot.lane.b32.xlu0 %v1058, 6
      %v1123 = vpop.permute.xlu0 %1122
      %1124 = vrot.lane.b32.xlu0 %v1059, 6
      %v1125 = vpop.permute.xlu0 %1124
      %1126 = vrot.lane.b32.xlu0 %v1096, 6
      %v1127 = vpop.permute.xlu0 %1126
      %1128 = vrot.lane.b32.xlu0 %v1097, 6
      %v1129 = vpop.permute.xlu0 %1128
      %v1130 = vunpack.c.l.b16 %v587
      %v1131 = vunpack.c.l.b16 %v590
      %v1132 = vunpack.c.l.b16 %v594
      %v1133 = vunpack.c.l.b16 %v597
      %v1134 = vpack.c.b16 %v1131, %v1130
      %v1135 = vpack.c.b16 %v1133, %v1132
      %1136 = vrot.lane.b32.xlu0 %v1008, 8
      %v1137 = vpop.permute.xlu0 %1136
      %1138 = vrot.lane.b32.xlu0 %v1009, 8
      %v1139 = vpop.permute.xlu0 %1138
      %1140 = vrot.lane.b32.xlu0 %v1010, 8
      %v1141 = vpop.permute.xlu0 %1140
      %1142 = vrot.lane.b32.xlu0 %v1011, 8
      %v1143 = vpop.permute.xlu0 %1142
      %1144 = vrot.lane.b32.xlu0 %v1012, 8
      %v1145 = vpop.permute.xlu0 %1144
      %1146 = vrot.lane.b32.xlu0 %v1013, 8
      %v1147 = vpop.permute.xlu0 %1146
      %1148 = vrot.lane.b32.xlu0 %v1014, 8
      %v1149 = vpop.permute.xlu0 %1148
      %1150 = vrot.lane.b32.xlu0 %v1015, 8
      %v1151 = vpop.permute.xlu0 %1150
      %1152 = vrot.lane.b32.xlu0 %v1020, 8
      %v1153 = vpop.permute.xlu0 %1152
      %1154 = vrot.lane.b32.xlu0 %v1021, 8
      %v1155 = vpop.permute.xlu0 %1154
      %1156 = vrot.lane.b32.xlu0 %v1058, 8
      %v1157 = vpop.permute.xlu0 %1156
      %1158 = vrot.lane.b32.xlu0 %v1059, 8
      %v1159 = vpop.permute.xlu0 %1158
      %1160 = vrot.lane.b32.xlu0 %v1096, 8
      %v1161 = vpop.permute.xlu0 %1160
      %1162 = vrot.lane.b32.xlu0 %v1097, 8
      %v1163 = vpop.permute.xlu0 %1162
      %1164 = vrot.lane.b32.xlu0 %v1134, 8
      %v1165 = vpop.permute.xlu0 %1164
      %1166 = vrot.lane.b32.xlu0 %v1135, 8
      %v1167 = vpop.permute.xlu0 %1166
      %v1168 = vunpack.c.l.b16 %v601
      %v1169 = vunpack.c.l.b16 %v604
      %v1170 = vunpack.c.l.b16 %v608
      %v1171 = vunpack.c.l.b16 %v611
      %v1172 = vpack.c.b16 %v1169, %v1168
      %v1173 = vpack.c.b16 %v1171, %v1170
      %1174 = vrot.lane.b32.xlu0 %v1010, 10
      %v1175 = vpop.permute.xlu0 %1174
      %1176 = vrot.lane.b32.xlu0 %v1011, 10
      %v1177 = vpop.permute.xlu0 %1176
      %1178 = vrot.lane.b32.xlu0 %v1012, 10
      %v1179 = vpop.permute.xlu0 %1178
      %1180 = vrot.lane.b32.xlu0 %v1013, 10
      %v1181 = vpop.permute.xlu0 %1180
      %1182 = vrot.lane.b32.xlu0 %v1014, 10
      %v1183 = vpop.permute.xlu0 %1182
      %1184 = vrot.lane.b32.xlu0 %v1015, 10
      %v1185 = vpop.permute.xlu0 %1184
      %1186 = vrot.lane.b32.xlu0 %v1020, 10
      %v1187 = vpop.permute.xlu0 %1186
      %1188 = vrot.lane.b32.xlu0 %v1021, 10
      %v1189 = vpop.permute.xlu0 %1188
      %1190 = vrot.lane.b32.xlu0 %v1058, 10
      %v1191 = vpop.permute.xlu0 %1190
      %1192 = vrot.lane.b32.xlu0 %v1059, 10
      %v1193 = vpop.permute.xlu0 %1192
      %1194 = vrot.lane.b32.xlu0 %v1096, 10
      %v1195 = vpop.permute.xlu0 %1194
      %1196 = vrot.lane.b32.xlu0 %v1097, 10
      %v1197 = vpop.permute.xlu0 %1196
      %1198 = vrot.lane.b32.xlu0 %v1134, 10
      %v1199 = vpop.permute.xlu0 %1198
      %1200 = vrot.lane.b32.xlu0 %v1135, 10
      %v1201 = vpop.permute.xlu0 %1200
      %1202 = vrot.lane.b32.xlu0 %v1172, 10
      %v1203 = vpop.permute.xlu0 %1202
      %1204 = vrot.lane.b32.xlu0 %v1173, 10
      %v1205 = vpop.permute.xlu0 %1204
      %v1206 = vunpack.c.l.b16 %v615
      %v1207 = vunpack.c.l.b16 %v618
      %v1208 = vunpack.c.l.b16 %v622
      %v1209 = vunpack.c.l.b16 %v625
      %v1210 = vpack.c.b16 %v1207, %v1206
      %v1211 = vpack.c.b16 %v1209, %v1208
      %1212 = vrot.lane.b32.xlu0 %v1012, 12
      %v1213 = vpop.permute.xlu0 %1212
      %1214 = vrot.lane.b32.xlu0 %v1013, 12
      %v1215 = vpop.permute.xlu0 %1214
      %1216 = vrot.lane.b32.xlu0 %v1014, 12
      %v1217 = vpop.permute.xlu0 %1216
      %1218 = vrot.lane.b32.xlu0 %v1015, 12
      %v1219 = vpop.permute.xlu0 %1218
      %1220 = vrot.lane.b32.xlu0 %v1020, 12
      %v1221 = vpop.permute.xlu0 %1220
      %1222 = vrot.lane.b32.xlu0 %v1021, 12
      %v1223 = vpop.permute.xlu0 %1222
      %1224 = vrot.lane.b32.xlu0 %v1058, 12
      %v1225 = vpop.permute.xlu0 %1224
      %1226 = vrot.lane.b32.xlu0 %v1059, 12
      %v1227 = vpop.permute.xlu0 %1226
      %1228 = vrot.lane.b32.xlu0 %v1096, 12
      %v1229 = vpop.permute.xlu0 %1228
      %1230 = vrot.lane.b32.xlu0 %v1097, 12
      %v1231 = vpop.permute.xlu0 %1230
      %1232 = vrot.lane.b32.xlu0 %v1134, 12
      %v1233 = vpop.permute.xlu0 %1232
      %1234 = vrot.lane.b32.xlu0 %v1135, 12
      %v1235 = vpop.permute.xlu0 %1234
      %1236 = vrot.lane.b32.xlu0 %v1172, 12
      %v1237 = vpop.permute.xlu0 %1236
      %1238 = vrot.lane.b32.xlu0 %v1173, 12
      %v1239 = vpop.permute.xlu0 %1238
      %1240 = vrot.lane.b32.xlu0 %v1210, 12
      %v1241 = vpop.permute.xlu0 %1240
      %1242 = vrot.lane.b32.xlu0 %v1211, 12
      %v1243 = vpop.permute.xlu0 %1242
      %v1244 = vunpack.c.l.b16 %v261
      %v1245 = vunpack.c.l.b16 %v262
      %v1246 = vunpack.c.l.b16 %v265
      %v1247 = vunpack.c.l.b16 %v266
      %v1248 = vunpack.c.l.b16 %v269
      %v1249 = vunpack.c.l.b16 %v270
      %v1250 = vunpack.c.l.b16 %v273
      %v1251 = vunpack.c.l.b16 %v274
      %v1252 = vunpack.c.l.b16 %v277
      %v1253 = vunpack.c.l.b16 %v278
      %v1254 = vunpack.c.l.b16 %v281
      %v1255 = vunpack.c.l.b16 %v282
      %v1256 = vunpack.c.l.b16 %v285
      %v1257 = vunpack.c.l.b16 %v286
      %v1258 = vunpack.c.l.b16 %v289
      %v1259 = vunpack.c.l.b16 %v290
      %v1260 = vunpack.c.l.b16 %v293
      %v1261 = vunpack.c.l.b16 %v294
      %v1262 = vunpack.c.l.b16 %v297
      %v1263 = vunpack.c.l.b16 %v298
      %v1264 = vunpack.c.l.b16 %v301
      %v1265 = vunpack.c.l.b16 %v302
      %v1266 = vunpack.c.l.b16 %v305
      %v1267 = vunpack.c.l.b16 %v306
      %v1268 = vunpack.c.l.b16 %v309
      %v1269 = vunpack.c.l.b16 %v310
      %v1270 = vunpack.c.l.b16 %v313
      %v1271 = vunpack.c.l.b16 %v314
      %v1272 = vunpack.c.l.b16 %v317
      %v1273 = vunpack.c.l.b16 %v318
      %v1274 = vunpack.c.l.b16 %v321
      %v1275 = vunpack.c.l.b16 %v322
      %v1276 = vpack.c.b16 %v1245, %v1244
      %v1277 = vpack.c.b16 %v1247, %v1246
      %v1278 = vpack.c.b16 %v1249, %v1248
      %v1279 = vpack.c.b16 %v1251, %v1250
      %v1280 = vpack.c.b16 %v1253, %v1252
      %v1281 = vpack.c.b16 %v1255, %v1254
      %v1282 = vpack.c.b16 %v1257, %v1256
      %v1283 = vpack.c.b16 %v1259, %v1258
      %v1284 = vpack.c.b16 %v1261, %v1260
      %v1285 = vpack.c.b16 %v1263, %v1262
      %v1286 = vpack.c.b16 %v1265, %v1264
      %v1287 = vpack.c.b16 %v1267, %v1266
      %v1288 = vpack.c.b16 %v1269, %v1268
      %v1289 = vpack.c.b16 %v1271, %v1270
      %v1290 = vpack.c.b16 %v1273, %v1272
      %v1291 = vpack.c.b16 %v1275, %v1274
      %1292 = vrot.lane.b32.xlu0 %v1276, 12
      %v1293 = vpop.permute.xlu0 %1292
      %1294 = vrot.lane.b32.xlu0 %v1277, 12
      %v1295 = vpop.permute.xlu0 %1294
      %1296 = vrot.lane.b32.xlu0 %v1278, 12
      %v1297 = vpop.permute.xlu0 %1296
      %1298 = vrot.lane.b32.xlu0 %v1279, 12
      %v1299 = vpop.permute.xlu0 %1298
      %1300 = vrot.lane.b32.xlu0 %v1280, 12
      %v1301 = vpop.permute.xlu0 %1300
      %1302 = vrot.lane.b32.xlu0 %v1281, 12
      %v1303 = vpop.permute.xlu0 %1302
      %1304 = vrot.lane.b32.xlu0 %v1282, 12
      %v1305 = vpop.permute.xlu0 %1304
      %1306 = vrot.lane.b32.xlu0 %v1283, 12
      %v1307 = vpop.permute.xlu0 %1306
      %1308 = vrot.lane.b32.xlu0 %v1284, 12
      %v1309 = vpop.permute.xlu0 %1308
      %1310 = vrot.lane.b32.xlu0 %v1285, 12
      %v1311 = vpop.permute.xlu0 %1310
      %1312 = vrot.lane.b32.xlu0 %v1286, 12
      %v1313 = vpop.permute.xlu0 %1312
      %1314 = vrot.lane.b32.xlu0 %v1287, 12
      %v1315 = vpop.permute.xlu0 %1314
      %1316 = vrot.lane.b32.xlu0 %v1288, 12
      %v1317 = vpop.permute.xlu0 %1316
      %1318 = vrot.lane.b32.xlu0 %v1289, 12
      %v1319 = vpop.permute.xlu0 %1318
      %1320 = vrot.lane.b32.xlu0 %v1290, 12
      %v1321 = vpop.permute.xlu0 %1320
      %1322 = vrot.lane.b32.xlu0 %v1291, 12
      %v1323 = vpop.permute.xlu0 %1322
      %v1324 = vunpack.c.l.b16 %v632
      %v1325 = vunpack.c.l.b16 %v635
      %v1326 = vunpack.c.l.b16 %v639
      %v1327 = vunpack.c.l.b16 %v642
      %v1328 = vunpack.c.l.b16 %v646
      %v1329 = vunpack.c.l.b16 %v649
      %v1330 = vunpack.c.l.b16 %v653
      %v1331 = vunpack.c.l.b16 %v656
      %v1332 = vunpack.c.l.b16 %v660
      %v1333 = vunpack.c.l.b16 %v663
      %v1334 = vunpack.c.l.b16 %v667
      %v1335 = vunpack.c.l.b16 %v670
      %v1336 = vunpack.c.l.b16 %v674
      %v1337 = vunpack.c.l.b16 %v677
      %v1338 = vunpack.c.l.b16 %v681
      %v1339 = vunpack.c.l.b16 %v684
      %v1340 = vunpack.c.l.b16 %v688
      %v1341 = vunpack.c.l.b16 %v691
      %v1342 = vunpack.c.l.b16 %v695
      %v1343 = vunpack.c.l.b16 %v698
      %v1344 = vunpack.c.l.b16 %v702
      %v1345 = vunpack.c.l.b16 %v705
      %v1346 = vunpack.c.l.b16 %v709
      %v1347 = vunpack.c.l.b16 %v712
      %v1348 = vunpack.c.l.b16 %v716
      %v1349 = vunpack.c.l.b16 %v719
      %v1350 = vunpack.c.l.b16 %v723
      %v1351 = vunpack.c.l.b16 %v726
      %v1352 = vunpack.c.l.b16 %v730
      %v1353 = vunpack.c.l.b16 %v733
      %v1354 = vunpack.c.l.b16 %v737
      %v1355 = vunpack.c.l.b16 %v740
      %v1356 = vpack.c.b16 %v1325, %v1324
      %v1357 = vpack.c.b16 %v1327, %v1326
      %v1358 = vpack.c.b16 %v1329, %v1328
      %v1359 = vpack.c.b16 %v1331, %v1330
      %v1360 = vpack.c.b16 %v1333, %v1332
      %v1361 = vpack.c.b16 %v1335, %v1334
      %v1362 = vpack.c.b16 %v1337, %v1336
      %v1363 = vpack.c.b16 %v1339, %v1338
      %v1364 = vpack.c.b16 %v1341, %v1340
      %v1365 = vpack.c.b16 %v1343, %v1342
      %v1366 = vpack.c.b16 %v1345, %v1344
      %v1367 = vpack.c.b16 %v1347, %v1346
      %v1368 = vpack.c.b16 %v1349, %v1348
      %v1369 = vpack.c.b16 %v1351, %v1350
      %v1370 = vpack.c.b16 %v1353, %v1352
      %v1371 = vpack.c.b16 %v1355, %v1354
      %1372 = vrot.lane.b32.xlu0 %v1356, 14
      %v1373 = vpop.permute.xlu0 %1372
      %1374 = vrot.lane.b32.xlu0 %v1357, 14
      %v1375 = vpop.permute.xlu0 %1374
      %1376 = vrot.lane.b32.xlu0 %v1358, 14
      %v1377 = vpop.permute.xlu0 %1376
      %1378 = vrot.lane.b32.xlu0 %v1359, 14
      %v1379 = vpop.permute.xlu0 %1378
      %1380 = vrot.lane.b32.xlu0 %v1360, 14
      %v1381 = vpop.permute.xlu0 %1380
      %1382 = vrot.lane.b32.xlu0 %v1361, 14
      %v1383 = vpop.permute.xlu0 %1382
      %1384 = vrot.lane.b32.xlu0 %v1362, 14
      %v1385 = vpop.permute.xlu0 %1384
      %1386 = vrot.lane.b32.xlu0 %v1363, 14
      %v1387 = vpop.permute.xlu0 %1386
      %1388 = vrot.lane.b32.xlu0 %v1364, 14
      %v1389 = vpop.permute.xlu0 %1388
      %1390 = vrot.lane.b32.xlu0 %v1365, 14
      %v1391 = vpop.permute.xlu0 %1390
      %1392 = vrot.lane.b32.xlu0 %v1366, 14
      %v1393 = vpop.permute.xlu0 %1392
      %1394 = vrot.lane.b32.xlu0 %v1367, 14
      %v1395 = vpop.permute.xlu0 %1394
      %1396 = vrot.lane.b32.xlu0 %v1368, 14
      %v1397 = vpop.permute.xlu0 %1396
      %1398 = vrot.lane.b32.xlu0 %v1369, 14
      %v1399 = vpop.permute.xlu0 %1398
      %1400 = vrot.lane.b32.xlu0 %v1370, 14
      %v1401 = vpop.permute.xlu0 %1400
      %1402 = vrot.lane.b32.xlu0 %v1371, 14
      %v1403 = vpop.permute.xlu0 %1402
      %v1404 = vunpack.c.l.b16 %v747
      %v1405 = vunpack.c.l.b16 %v750
      %v1406 = vunpack.c.l.b16 %v754
      %v1407 = vunpack.c.l.b16 %v757
      %v1408 = vunpack.c.l.b16 %v761
      %v1409 = vunpack.c.l.b16 %v764
      %v1410 = vunpack.c.l.b16 %v768
      %v1411 = vunpack.c.l.b16 %v771
      %v1412 = vunpack.c.l.b16 %v775
      %v1413 = vunpack.c.l.b16 %v778
      %v1414 = vunpack.c.l.b16 %v782
      %v1415 = vunpack.c.l.b16 %v785
      %v1416 = vunpack.c.l.b16 %v789
      %v1417 = vunpack.c.l.b16 %v792
      %v1418 = vunpack.c.l.b16 %v796
      %v1419 = vunpack.c.l.b16 %v799
      %v1420 = vunpack.c.l.b16 %v803
      %v1421 = vunpack.c.l.b16 %v806
      %v1422 = vunpack.c.l.b16 %v810
      %v1423 = vunpack.c.l.b16 %v813
      %v1424 = vunpack.c.l.b16 %v817
      %v1425 = vunpack.c.l.b16 %v820
      %v1426 = vunpack.c.l.b16 %v824
      %v1427 = vunpack.c.l.b16 %v827
      %v1428 = vunpack.c.l.b16 %v831
      %v1429 = vunpack.c.l.b16 %v834
      %v1430 = vunpack.c.l.b16 %v838
      %v1431 = vunpack.c.l.b16 %v841
      %v1432 = vunpack.c.l.b16 %v845
      %v1433 = vunpack.c.l.b16 %v848
      %v1434 = vunpack.c.l.b16 %v852
      %v1435 = vunpack.c.l.b16 %v855
      %v1436 = vpack.c.b16 %v1405, %v1404
      %v1437 = vpack.c.b16 %v1407, %v1406
      %v1438 = vpack.c.b16 %v1409, %v1408
      %v1439 = vpack.c.b16 %v1411, %v1410
      %v1440 = vpack.c.b16 %v1413, %v1412
      %v1441 = vpack.c.b16 %v1415, %v1414
      %v1442 = vpack.c.b16 %v1417, %v1416
      %v1443 = vpack.c.b16 %v1419, %v1418
      %v1444 = vpack.c.b16 %v1421, %v1420
      %v1445 = vpack.c.b16 %v1423, %v1422
      %v1446 = vpack.c.b16 %v1425, %v1424
      %v1447 = vpack.c.b16 %v1427, %v1426
      %v1448 = vpack.c.b16 %v1429, %v1428
      %v1449 = vpack.c.b16 %v1431, %v1430
      %v1450 = vpack.c.b16 %v1433, %v1432
      %v1451 = vpack.c.b16 %v1435, %v1434
      %1452 = vrot.lane.b32.xlu0 %v1436, 16
      %v1453 = vpop.permute.xlu0 %1452
      %1454 = vrot.lane.b32.xlu0 %v1437, 16
      %v1455 = vpop.permute.xlu0 %1454
      %1456 = vrot.lane.b32.xlu0 %v1438, 16
      %v1457 = vpop.permute.xlu0 %1456
      %1458 = vrot.lane.b32.xlu0 %v1439, 16
      %v1459 = vpop.permute.xlu0 %1458
      %1460 = vrot.lane.b32.xlu0 %v1440, 16
      %v1461 = vpop.permute.xlu0 %1460
      %1462 = vrot.lane.b32.xlu0 %v1441, 16
      %v1463 = vpop.permute.xlu0 %1462
      %1464 = vrot.lane.b32.xlu0 %v1442, 16
      %v1465 = vpop.permute.xlu0 %1464
      %1466 = vrot.lane.b32.xlu0 %v1443, 16
      %v1467 = vpop.permute.xlu0 %1466
      %1468 = vrot.lane.b32.xlu0 %v1444, 16
      %v1469 = vpop.permute.xlu0 %1468
      %1470 = vrot.lane.b32.xlu0 %v1445, 16
      %v1471 = vpop.permute.xlu0 %1470
      %1472 = vrot.lane.b32.xlu0 %v1446, 16
      %v1473 = vpop.permute.xlu0 %1472
      %1474 = vrot.lane.b32.xlu0 %v1447, 16
      %v1475 = vpop.permute.xlu0 %1474
      %1476 = vrot.lane.b32.xlu0 %v1448, 16
      %v1477 = vpop.permute.xlu0 %1476
      %1478 = vrot.lane.b32.xlu0 %v1449, 16
      %v1479 = vpop.permute.xlu0 %1478
      %1480 = vrot.lane.b32.xlu0 %v1450, 16
      %v1481 = vpop.permute.xlu0 %1480
      %1482 = vrot.lane.b32.xlu0 %v1451, 16
      %v1483 = vpop.permute.xlu0 %1482
      %1484 = vrot.lane.b32.xlu0 %v1006, 18
      %v1485 = vpop.permute.xlu0 %1484
      %1486 = vrot.lane.b32.xlu0 %v1007, 18
      %v1487 = vpop.permute.xlu0 %1486
      %1488 = vrot.lane.b32.xlu0 %v1008, 18
      %v1489 = vpop.permute.xlu0 %1488
      %1490 = vrot.lane.b32.xlu0 %v1009, 18
      %v1491 = vpop.permute.xlu0 %1490
      %1492 = vrot.lane.b32.xlu0 %v1010, 18
      %v1493 = vpop.permute.xlu0 %1492
      %1494 = vrot.lane.b32.xlu0 %v1011, 18
      %v1495 = vpop.permute.xlu0 %1494
      %1496 = vrot.lane.b32.xlu0 %v1012, 18
      %v1497 = vpop.permute.xlu0 %1496
      %1498 = vrot.lane.b32.xlu0 %v1013, 18
      %v1499 = vpop.permute.xlu0 %1498
      %1500 = vrot.lane.b32.xlu0 %v1014, 18
      %v1501 = vpop.permute.xlu0 %1500
      %1502 = vrot.lane.b32.xlu0 %v1015, 18
      %v1503 = vpop.permute.xlu0 %1502
      %1504 = vrot.lane.b32.xlu0 %v1020, 18
      %v1505 = vpop.permute.xlu0 %1504
      %1506 = vrot.lane.b32.xlu0 %v1021, 18
      %v1507 = vpop.permute.xlu0 %1506
      %1508 = vrot.lane.b32.xlu0 %v1058, 18
      %v1509 = vpop.permute.xlu0 %1508
      %1510 = vrot.lane.b32.xlu0 %v1059, 18
      %v1511 = vpop.permute.xlu0 %1510
      %1512 = vrot.lane.b32.xlu0 %v1096, 18
      %v1513 = vpop.permute.xlu0 %1512
      %1514 = vrot.lane.b32.xlu0 %v1097, 18
      %v1515 = vpop.permute.xlu0 %1514
      %v1516 = vunpack.c.l.b16 %v263
      %v1517 = vunpack.c.l.b16 %v267
      %v1518 = vunpack.c.l.b16 %v271
      %v1519 = vunpack.c.l.b16 %v275
      %v1520 = vunpack.c.l.b16 %v279
      %v1521 = vunpack.c.l.b16 %v283
      %v1522 = vunpack.c.l.b16 %v287
      %v1523 = vunpack.c.l.b16 %v291
      %v1524 = vunpack.c.l.b16 %v295
      %v1525 = vunpack.c.l.b16 %v299
      %v1526 = vunpack.c.l.b16 %v303
      %v1527 = vunpack.c.l.b16 %v307
      %v1528 = vunpack.c.l.b16 %v311
      %v1529 = vunpack.c.l.b16 %v315
      %v1530 = vunpack.c.l.b16 %v319
      %v1531 = vunpack.c.l.b16 %v323
      %v1532 = vpack.c.b16 %v1516, %v1245
      %v1533 = vpack.c.b16 %v1517, %v1247
      %v1534 = vpack.c.b16 %v1518, %v1249
      %v1535 = vpack.c.b16 %v1519, %v1251
      %v1536 = vpack.c.b16 %v1520, %v1253
      %v1537 = vpack.c.b16 %v1521, %v1255
      %v1538 = vpack.c.b16 %v1522, %v1257
      %v1539 = vpack.c.b16 %v1523, %v1259
      %v1540 = vpack.c.b16 %v1524, %v1261
      %v1541 = vpack.c.b16 %v1525, %v1263
      %v1542 = vpack.c.b16 %v1526, %v1265
      %v1543 = vpack.c.b16 %v1527, %v1267
      %v1544 = vpack.c.b16 %v1528, %v1269
      %v1545 = vpack.c.b16 %v1529, %v1271
      %v1546 = vpack.c.b16 %v1530, %v1273
      %v1547 = vpack.c.b16 %v1531, %v1275
      %1548 = vrot.lane.b32.xlu0 %v1532, 20
      %v1549 = vpop.permute.xlu0 %1548
      %1550 = vrot.lane.b32.xlu0 %v1533, 20
      %v1551 = vpop.permute.xlu0 %1550
      %1552 = vrot.lane.b32.xlu0 %v1534, 20
      %v1553 = vpop.permute.xlu0 %1552
      %1554 = vrot.lane.b32.xlu0 %v1535, 20
      %v1555 = vpop.permute.xlu0 %1554
      %1556 = vrot.lane.b32.xlu0 %v1536, 20
      %v1557 = vpop.permute.xlu0 %1556
      %1558 = vrot.lane.b32.xlu0 %v1537, 20
      %v1559 = vpop.permute.xlu0 %1558
      %1560 = vrot.lane.b32.xlu0 %v1538, 20
      %v1561 = vpop.permute.xlu0 %1560
      %1562 = vrot.lane.b32.xlu0 %v1539, 20
      %v1563 = vpop.permute.xlu0 %1562
      %1564 = vrot.lane.b32.xlu0 %v1540, 20
      %v1565 = vpop.permute.xlu0 %1564
      %1566 = vrot.lane.b32.xlu0 %v1541, 20
      %v1567 = vpop.permute.xlu0 %1566
      %1568 = vrot.lane.b32.xlu0 %v1542, 20
      %v1569 = vpop.permute.xlu0 %1568
      %1570 = vrot.lane.b32.xlu0 %v1543, 20
      %v1571 = vpop.permute.xlu0 %1570
      %1572 = vrot.lane.b32.xlu0 %v1544, 20
      %v1573 = vpop.permute.xlu0 %1572
      %1574 = vrot.lane.b32.xlu0 %v1545, 20
      %v1575 = vpop.permute.xlu0 %1574
      %1576 = vrot.lane.b32.xlu0 %v1546, 20
      %v1577 = vpop.permute.xlu0 %1576
      %1578 = vrot.lane.b32.xlu0 %v1547, 20
      %v1579 = vpop.permute.xlu0 %1578
      %v1580 = vunpack.c.l.b16 %v874
      %v1581 = vunpack.c.l.b16 %v877
      %v1582 = vunpack.c.l.b16 %v880
      %v1583 = vunpack.c.l.b16 %v883
      %v1584 = vunpack.c.l.b16 %v886
      %v1585 = vunpack.c.l.b16 %v889
      %v1586 = vunpack.c.l.b16 %v892
      %v1587 = vunpack.c.l.b16 %v895
      %v1588 = vunpack.c.l.b16 %v898
      %v1589 = vunpack.c.l.b16 %v901
      %v1590 = vunpack.c.l.b16 %v904
      %v1591 = vunpack.c.l.b16 %v907
      %v1592 = vunpack.c.l.b16 %v910
      %v1593 = vunpack.c.l.b16 %v913
      %v1594 = vunpack.c.l.b16 %v916
      %v1595 = vunpack.c.l.b16 %v919
      %v1596 = vpack.c.b16 %v1580, %v1325
      %v1597 = vpack.c.b16 %v1581, %v1327
      %v1598 = vpack.c.b16 %v1582, %v1329
      %v1599 = vpack.c.b16 %v1583, %v1331
      %v1600 = vpack.c.b16 %v1584, %v1333
      %v1601 = vpack.c.b16 %v1585, %v1335
      %v1602 = vpack.c.b16 %v1586, %v1337
      %v1603 = vpack.c.b16 %v1587, %v1339
      %v1604 = vpack.c.b16 %v1588, %v1341
      %v1605 = vpack.c.b16 %v1589, %v1343
      %v1606 = vpack.c.b16 %v1590, %v1345
      %v1607 = vpack.c.b16 %v1591, %v1347
      %v1608 = vpack.c.b16 %v1592, %v1349
      %v1609 = vpack.c.b16 %v1593, %v1351
      %v1610 = vpack.c.b16 %v1594, %v1353
      %v1611 = vpack.c.b16 %v1595, %v1355
      %1612 = vrot.lane.b32.xlu0 %v1596, 22
      %v1613 = vpop.permute.xlu0 %1612
      %1614 = vrot.lane.b32.xlu0 %v1597, 22
      %v1615 = vpop.permute.xlu0 %1614
      %1616 = vrot.lane.b32.xlu0 %v1598, 22
      %v1617 = vpop.permute.xlu0 %1616
      %1618 = vrot.lane.b32.xlu0 %v1599, 22
      %v1619 = vpop.permute.xlu0 %1618
      %1620 = vrot.lane.b32.xlu0 %v1600, 22
      %v1621 = vpop.permute.xlu0 %1620
      %1622 = vrot.lane.b32.xlu0 %v1601, 22
      %v1623 = vpop.permute.xlu0 %1622
      %1624 = vrot.lane.b32.xlu0 %v1602, 22
      %v1625 = vpop.permute.xlu0 %1624
      %1626 = vrot.lane.b32.xlu0 %v1603, 22
      %v1627 = vpop.permute.xlu0 %1626
      %1628 = vrot.lane.b32.xlu0 %v1604, 22
      %v1629 = vpop.permute.xlu0 %1628
      %1630 = vrot.lane.b32.xlu0 %v1605, 22
      %v1631 = vpop.permute.xlu0 %1630
      %1632 = vrot.lane.b32.xlu0 %v1606, 22
      %v1633 = vpop.permute.xlu0 %1632
      %1634 = vrot.lane.b32.xlu0 %v1607, 22
      %v1635 = vpop.permute.xlu0 %1634
      %1636 = vrot.lane.b32.xlu0 %v1608, 22
      %v1637 = vpop.permute.xlu0 %1636
      %1638 = vrot.lane.b32.xlu0 %v1609, 22
      %v1639 = vpop.permute.xlu0 %1638
      %1640 = vrot.lane.b32.xlu0 %v1610, 22
      %v1641 = vpop.permute.xlu0 %1640
      %1642 = vrot.lane.b32.xlu0 %v1611, 22
      %v1643 = vpop.permute.xlu0 %1642
      %v1644 = vunpack.c.l.b16 %v922
      %v1645 = vunpack.c.l.b16 %v925
      %v1646 = vunpack.c.l.b16 %v928
      %v1647 = vunpack.c.l.b16 %v931
      %v1648 = vunpack.c.l.b16 %v934
      %v1649 = vunpack.c.l.b16 %v937
      %v1650 = vunpack.c.l.b16 %v940
      %v1651 = vunpack.c.l.b16 %v943
      %v1652 = vunpack.c.l.b16 %v946
      %v1653 = vunpack.c.l.b16 %v949
      %v1654 = vunpack.c.l.b16 %v952
      %v1655 = vunpack.c.l.b16 %v955
      %v1656 = vunpack.c.l.b16 %v958
      %v1657 = vunpack.c.l.b16 %v961
      %v1658 = vunpack.c.l.b16 %v964
      %v1659 = vunpack.c.l.b16 %v967
      %v1660 = vpack.c.b16 %v1644, %v1405
      %v1661 = vpack.c.b16 %v1645, %v1407
      %v1662 = vpack.c.b16 %v1646, %v1409
      %v1663 = vpack.c.b16 %v1647, %v1411
      %v1664 = vpack.c.b16 %v1648, %v1413
      %v1665 = vpack.c.b16 %v1649, %v1415
      %v1666 = vpack.c.b16 %v1650, %v1417
      %v1667 = vpack.c.b16 %v1651, %v1419
      %v1668 = vpack.c.b16 %v1652, %v1421
      %v1669 = vpack.c.b16 %v1653, %v1423
      %v1670 = vpack.c.b16 %v1654, %v1425
      %v1671 = vpack.c.b16 %v1655, %v1427
      %v1672 = vpack.c.b16 %v1656, %v1429
      %v1673 = vpack.c.b16 %v1657, %v1431
      %v1674 = vpack.c.b16 %v1658, %v1433
      %v1675 = vpack.c.b16 %v1659, %v1435
      %1676 = vrot.lane.b32.xlu0 %v1660, 24
      %v1677 = vpop.permute.xlu0 %1676
      %1678 = vrot.lane.b32.xlu0 %v1661, 24
      %v1679 = vpop.permute.xlu0 %1678
      %1680 = vrot.lane.b32.xlu0 %v1662, 24
      %v1681 = vpop.permute.xlu0 %1680
      %1682 = vrot.lane.b32.xlu0 %v1663, 24
      %v1683 = vpop.permute.xlu0 %1682
      %1684 = vrot.lane.b32.xlu0 %v1664, 24
      %v1685 = vpop.permute.xlu0 %1684
      %1686 = vrot.lane.b32.xlu0 %v1665, 24
      %v1687 = vpop.permute.xlu0 %1686
      %1688 = vrot.lane.b32.xlu0 %v1666, 24
      %v1689 = vpop.permute.xlu0 %1688
      %1690 = vrot.lane.b32.xlu0 %v1667, 24
      %v1691 = vpop.permute.xlu0 %1690
      %1692 = vrot.lane.b32.xlu0 %v1668, 24
      %v1693 = vpop.permute.xlu0 %1692
      %1694 = vrot.lane.b32.xlu0 %v1669, 24
      %v1695 = vpop.permute.xlu0 %1694
      %1696 = vrot.lane.b32.xlu0 %v1670, 24
      %v1697 = vpop.permute.xlu0 %1696
      %1698 = vrot.lane.b32.xlu0 %v1671, 24
      %v1699 = vpop.permute.xlu0 %1698
      %1700 = vrot.lane.b32.xlu0 %v1672, 24
      %v1701 = vpop.permute.xlu0 %1700
      %1702 = vrot.lane.b32.xlu0 %v1673, 24
      %v1703 = vpop.permute.xlu0 %1702
      %1704 = vrot.lane.b32.xlu0 %v1674, 24
      %v1705 = vpop.permute.xlu0 %1704
      %1706 = vrot.lane.b32.xlu0 %v1675, 24
      %v1707 = vpop.permute.xlu0 %1706
      %vm1708 = vcmask 15360
      %v1711 = vsel %vm1708, %v1000, %v1023
      %v1714 = vsel %vm1708, %v1001, %v1025
      %v1717 = vsel %vm1708, %v1002, %v1027
      %v1720 = vsel %vm1708, %v1003, %v1029
      %v1723 = vsel %vm1708, %v1004, %v1031
      %v1726 = vsel %vm1708, %v1005, %v1033
      %v1729 = vsel %vm1708, %v1006, %v1035
      %v1732 = vsel %vm1708, %v1007, %v1037
      %v1735 = vsel %vm1708, %v1008, %v1039
      %v1738 = vsel %vm1708, %v1009, %v1041
      %v1741 = vsel %vm1708, %v1010, %v1043
      %v1744 = vsel %vm1708, %v1011, %v1045
      %v1747 = vsel %vm1708, %v1012, %v1047
      %v1750 = vsel %vm1708, %v1013, %v1049
      %v1753 = vsel %vm1708, %v1014, %v1051
      %v1756 = vsel %vm1708, %v1015, %v1053
      %vm1757 = vcmask 31744
      %v1759 = vsel %vm1757, %v1711, %v1061
      %v1761 = vsel %vm1757, %v1714, %v1063
      %v1763 = vsel %vm1757, %v1717, %v1065
      %v1765 = vsel %vm1757, %v1720, %v1067
      %v1767 = vsel %vm1757, %v1723, %v1069
      %v1769 = vsel %vm1757, %v1726, %v1071
      %v1771 = vsel %vm1757, %v1729, %v1073
      %v1773 = vsel %vm1757, %v1732, %v1075
      %v1775 = vsel %vm1757, %v1735, %v1077
      %v1777 = vsel %vm1757, %v1738, %v1079
      %v1779 = vsel %vm1757, %v1741, %v1081
      %v1781 = vsel %vm1757, %v1744, %v1083
      %v1783 = vsel %vm1757, %v1747, %v1085
      %v1785 = vsel %vm1757, %v1750, %v1087
      %v1787 = vsel %vm1757, %v1753, %v1089
      %v1789 = vsel %vm1757, %v1756, %v1091
      %vm1790 = vcmask 48128
      %v1792 = vsel %vm1790, %v1759, %v1099
      %v1794 = vsel %vm1790, %v1761, %v1101
      %v1796 = vsel %vm1790, %v1763, %v1103
      %v1798 = vsel %vm1790, %v1765, %v1105
      %v1800 = vsel %vm1790, %v1767, %v1107
      %v1802 = vsel %vm1790, %v1769, %v1109
      %v1804 = vsel %vm1790, %v1771, %v1111
      %v1806 = vsel %vm1790, %v1773, %v1113
      %v1808 = vsel %vm1790, %v1775, %v1115
      %v1810 = vsel %vm1790, %v1777, %v1117
      %v1812 = vsel %vm1790, %v1779, %v1119
      %v1814 = vsel %vm1790, %v1781, %v1121
      %v1816 = vsel %vm1790, %v1783, %v1123
      %v1818 = vsel %vm1790, %v1785, %v1125
      %v1820 = vsel %vm1790, %v1787, %v1127
      %v1822 = vsel %vm1790, %v1789, %v1129
      %vm1823 = vcmask 64512
      %v1825 = vsel %vm1823, %v1792, %v1137
      %v1827 = vsel %vm1823, %v1794, %v1139
      %v1829 = vsel %vm1823, %v1796, %v1141
      %v1831 = vsel %vm1823, %v1798, %v1143
      %v1833 = vsel %vm1823, %v1800, %v1145
      %v1835 = vsel %vm1823, %v1802, %v1147
      %v1837 = vsel %vm1823, %v1804, %v1149
      %v1839 = vsel %vm1823, %v1806, %v1151
      %v1841 = vsel %vm1823, %v1808, %v1153
      %v1843 = vsel %vm1823, %v1810, %v1155
      %v1845 = vsel %vm1823, %v1812, %v1157
      %v1847 = vsel %vm1823, %v1814, %v1159
      %v1849 = vsel %vm1823, %v1816, %v1161
      %v1851 = vsel %vm1823, %v1818, %v1163
      %v1853 = vsel %vm1823, %v1820, %v1165
      %v1855 = vsel %vm1823, %v1822, %v1167
      %vm1856 = vcmask 80896
      %v1858 = vsel %vm1856, %v1825, %v1175
      %v1860 = vsel %vm1856, %v1827, %v1177
      %v1862 = vsel %vm1856, %v1829, %v1179
      %v1864 = vsel %vm1856, %v1831, %v1181
      %v1866 = vsel %vm1856, %v1833, %v1183
      %v1868 = vsel %vm1856, %v1835, %v1185
      %v1870 = vsel %vm1856, %v1837, %v1187
      %v1872 = vsel %vm1856, %v1839, %v1189
      %v1874 = vsel %vm1856, %v1841, %v1191
      %v1876 = vsel %vm1856, %v1843, %v1193
      %v1878 = vsel %vm1856, %v1845, %v1195
      %v1880 = vsel %vm1856, %v1847, %v1197
      %v1882 = vsel %vm1856, %v1849, %v1199
      %v1884 = vsel %vm1856, %v1851, %v1201
      %v1886 = vsel %vm1856, %v1853, %v1203
      %v1888 = vsel %vm1856, %v1855, %v1205
      %vm1889 = vcmask 97280
      %v1891 = vsel %vm1889, %v1858, %v1213
      %v1893 = vsel %vm1889, %v1860, %v1215
      %v1895 = vsel %vm1889, %v1862, %v1217
      %v1897 = vsel %vm1889, %v1864, %v1219
      %v1899 = vsel %vm1889, %v1866, %v1221
      %v1901 = vsel %vm1889, %v1868, %v1223
      %v1903 = vsel %vm1889, %v1870, %v1225
      %v1905 = vsel %vm1889, %v1872, %v1227
      %v1907 = vsel %vm1889, %v1874, %v1229
      %v1909 = vsel %vm1889, %v1876, %v1231
      %v1911 = vsel %vm1889, %v1878, %v1233
      %v1913 = vsel %vm1889, %v1880, %v1235
      %v1915 = vsel %vm1889, %v1882, %v1237
      %v1917 = vsel %vm1889, %v1884, %v1239
      %v1919 = vsel %vm1889, %v1886, %v1241
      %v1921 = vsel %vm1889, %v1888, %v1243
      %vm1922 = vcmask 113664
      %v1924 = vsel %vm1922, %v1891, %v1293
      %v1926 = vsel %vm1922, %v1893, %v1295
      %v1928 = vsel %vm1922, %v1895, %v1297
      %v1930 = vsel %vm1922, %v1897, %v1299
      %v1932 = vsel %vm1922, %v1899, %v1301
      %v1934 = vsel %vm1922, %v1901, %v1303
      %v1936 = vsel %vm1922, %v1903, %v1305
      %v1938 = vsel %vm1922, %v1905, %v1307
      %v1940 = vsel %vm1922, %v1907, %v1309
      %v1942 = vsel %vm1922, %v1909, %v1311
      %v1944 = vsel %vm1922, %v1911, %v1313
      %v1946 = vsel %vm1922, %v1913, %v1315
      %v1948 = vsel %vm1922, %v1915, %v1317
      %v1950 = vsel %vm1922, %v1917, %v1319
      %v1952 = vsel %vm1922, %v1919, %v1321
      %v1954 = vsel %vm1922, %v1921, %v1323
      %vm1955 = vcmask 130048
      %v1957 = vsel %vm1955, %v1924, %v1373
      %v1959 = vsel %vm1955, %v1926, %v1375
      %v1961 = vsel %vm1955, %v1928, %v1377
      %v1963 = vsel %vm1955, %v1930, %v1379
      %v1965 = vsel %vm1955, %v1932, %v1381
      %v1967 = vsel %vm1955, %v1934, %v1383
      %v1969 = vsel %vm1955, %v1936, %v1385
      %v1971 = vsel %vm1955, %v1938, %v1387
      %v1973 = vsel %vm1955, %v1940, %v1389
      %v1975 = vsel %vm1955, %v1942, %v1391
      %v1977 = vsel %vm1955, %v1944, %v1393
      %v1979 = vsel %vm1955, %v1946, %v1395
      %v1981 = vsel %vm1955, %v1948, %v1397
      %v1983 = vsel %vm1955, %v1950, %v1399
      %v1985 = vsel %vm1955, %v1952, %v1401
      %v1987 = vsel %vm1955, %v1954, %v1403
      %vm1988 = vcmask 146432
      %v1990 = vsel %vm1988, %v1957, %v1453
      %v1992 = vsel %vm1988, %v1959, %v1455
      %v1994 = vsel %vm1988, %v1961, %v1457
      %v1996 = vsel %vm1988, %v1963, %v1459
      %v1998 = vsel %vm1988, %v1965, %v1461
      %v2000 = vsel %vm1988, %v1967, %v1463
      %v2002 = vsel %vm1988, %v1969, %v1465
      %v2004 = vsel %vm1988, %v1971, %v1467
      %v2006 = vsel %vm1988, %v1973, %v1469
      %v2008 = vsel %vm1988, %v1975, %v1471
      %v2010 = vsel %vm1988, %v1977, %v1473
      %v2012 = vsel %vm1988, %v1979, %v1475
      %v2014 = vsel %vm1988, %v1981, %v1477
      %v2016 = vsel %vm1988, %v1983, %v1479
      %v2018 = vsel %vm1988, %v1985, %v1481
      %v2020 = vsel %vm1988, %v1987, %v1483
      %vm2021 = vcmask 162816
      %v2023 = vsel %vm2021, %v1990, %v1485
      %v2025 = vsel %vm2021, %v1992, %v1487
      %v2027 = vsel %vm2021, %v1994, %v1489
      %v2029 = vsel %vm2021, %v1996, %v1491
      %v2031 = vsel %vm2021, %v1998, %v1493
      %v2033 = vsel %vm2021, %v2000, %v1495
      %v2035 = vsel %vm2021, %v2002, %v1497
      %v2037 = vsel %vm2021, %v2004, %v1499
      %v2039 = vsel %vm2021, %v2006, %v1501
      %v2041 = vsel %vm2021, %v2008, %v1503
      %v2043 = vsel %vm2021, %v2010, %v1505
      %v2045 = vsel %vm2021, %v2012, %v1507
      %v2047 = vsel %vm2021, %v2014, %v1509
      %v2049 = vsel %vm2021, %v2016, %v1511
      %v2051 = vsel %vm2021, %v2018, %v1513
      %v2053 = vsel %vm2021, %v2020, %v1515
      %vm2054 = vcmask 179200
      %v2056 = vsel %vm2054, %v2023, %v1549
      %v2058 = vsel %vm2054, %v2025, %v1551
      %v2060 = vsel %vm2054, %v2027, %v1553
      %v2062 = vsel %vm2054, %v2029, %v1555
      %v2064 = vsel %vm2054, %v2031, %v1557
      %v2066 = vsel %vm2054, %v2033, %v1559
      %v2068 = vsel %vm2054, %v2035, %v1561
      %v2070 = vsel %vm2054, %v2037, %v1563
      %v2072 = vsel %vm2054, %v2039, %v1565
      %v2074 = vsel %vm2054, %v2041, %v1567
      %v2076 = vsel %vm2054, %v2043, %v1569
      %v2078 = vsel %vm2054, %v2045, %v1571
      %v2080 = vsel %vm2054, %v2047, %v1573
      %v2082 = vsel %vm2054, %v2049, %v1575
      %v2084 = vsel %vm2054, %v2051, %v1577
      %v2086 = vsel %vm2054, %v2053, %v1579
      %vm2087 = vcmask 195584
      %v2089 = vsel %vm2087, %v2056, %v1613
      %v2091 = vsel %vm2087, %v2058, %v1615
      %v2093 = vsel %vm2087, %v2060, %v1617
      %v2095 = vsel %vm2087, %v2062, %v1619
      %v2097 = vsel %vm2087, %v2064, %v1621
      %v2099 = vsel %vm2087, %v2066, %v1623
      %v2101 = vsel %vm2087, %v2068, %v1625
      %v2103 = vsel %vm2087, %v2070, %v1627
      %v2105 = vsel %vm2087, %v2072, %v1629
      %v2107 = vsel %vm2087, %v2074, %v1631
      %v2109 = vsel %vm2087, %v2076, %v1633
      %v2111 = vsel %vm2087, %v2078, %v1635
      %v2113 = vsel %vm2087, %v2080, %v1637
      %v2115 = vsel %vm2087, %v2082, %v1639
      %v2117 = vsel %vm2087, %v2084, %v1641
      %v2119 = vsel %vm2087, %v2086, %v1643
      %vm2120 = vcmask 211968
      %v2122 = vsel %vm2120, %v2089, %v1677
      %v2124 = vsel %vm2120, %v2091, %v1679
      %v2126 = vsel %vm2120, %v2093, %v1681
      %v2128 = vsel %vm2120, %v2095, %v1683
      %v2130 = vsel %vm2120, %v2097, %v1685
      %v2132 = vsel %vm2120, %v2099, %v1687
      %v2134 = vsel %vm2120, %v2101, %v1689
      %v2136 = vsel %vm2120, %v2103, %v1691
      %v2138 = vsel %vm2120, %v2105, %v1693
      %v2140 = vsel %vm2120, %v2107, %v1695
      %v2142 = vsel %vm2120, %v2109, %v1697
      %v2144 = vsel %vm2120, %v2111, %v1699
      %v2146 = vsel %vm2120, %v2113, %v1701
      %v2148 = vsel %vm2120, %v2115, %v1703
      %v2150 = vsel %vm2120, %v2117, %v1705
      %v2152 = vsel %vm2120, %v2119, %v1707
      %v2153 = vld [vmem:[%s1] sm:$0xf]
      %v2154 = vld [vmem:[%s1 + $0x4] sm:$0xf]
      %v2155 = vld [vmem:[%s1 + $0x8] sm:$0xf]
      %v2156 = vld [vmem:[%s1 + $0xc] sm:$0x3]
      %v2157 = vld [vmem:[%s2] sm:$0x1]
      %v2159 = vlaneseq
      %v2160 = vshrl.u32 %v2159, 7
      %v2161 = vsub.s32 0, %v2160
      %v2162 = vrot.slane %v2157, %v2161
      %v2168 = vunpack.c.l.b16 %v2153
      %v2169 = vunpack.c.l.b16 %v2154
      %v2170 = vunpack.c.l.b16 %v2155
      %v2171 = vunpack.c.l.b16 %v2156
      %v2172 = vpack.c.b16 %v2169, %v2168
      %v2173 = vpack.c.b16 %v2171, %v2170
      %vm2175 = vcmask 228352
      %v2176 = vsel %vm2175, %v2122, 0
      %v2178 = vsel %vm2175, %v2124, 0
      %v2180 = vsel %vm2175, %v2126, 0
      %v2182 = vsel %vm2175, %v2128, 0
      %v2184 = vsel %vm2175, %v2130, 0
      %v2186 = vsel %vm2175, %v2132, 0
      %v2188 = vsel %vm2175, %v2134, 0
      %v2190 = vsel %vm2175, %v2136, 0
      %v2192 = vsel %vm2175, %v2138, 0
      %v2194 = vsel %vm2175, %v2140, 0
      %v2196 = vsel %vm2175, %v2142, 0
      %v2198 = vsel %vm2175, %v2144, 0
      %v2200 = vsel %vm2175, %v2146, 0
      %v2202 = vsel %vm2175, %v2148, 0
      %v2204 = vsel %vm2175, %v2150, 0
      %v2206 = vsel %vm2175, %v2152, 0
      %vm2208 = vcmask 1045504
      %v2210 = vsel %vm2208, %v2173, 0
      %2212 = vmatprep.subr.bf16.mxu0 0
      %2213 = vmatpush1.bf16.msra.mxu0 %v2172
      %2214 = vmatprep.subr.bf16.mxu0 0
      %2215 = vmatpush1.bf16.msra.mxu0 %v2210
      %2216 = vmatprep.subr.bf16.mxu0 0
      %2217 = vmatpush1.bf16.msra.mxu0 0
      %2218 = vmatprep.subr.bf16.mxu0 0
      %2219 = vmatpush1.bf16.msra.mxu0 0
      %2220 = vmatprep.subr.bf16.mxu0 0
      %2221 = vmatpush1.bf16.msra.mxu0 0
      %2222 = vmatprep.subr.bf16.mxu0 0
      %2223 = vmatpush1.bf16.msra.mxu0 0
      %2224 = vmatprep.subr.bf16.mxu0 0
      %2225 = vmatpush1.bf16.msra.mxu0 0
      %2226 = vmatprep.subr.bf16.mxu0 0
      %2227 = vmatpush1.bf16.msra.mxu0 0
      %2228 = vmatprep.subr.bf16.mxu0 0
      %2229 = vmatpush1.bf16.msra.mxu0 0
      %2230 = vmatprep.subr.bf16.mxu0 0
      %2231 = vmatpush1.bf16.msra.mxu0 0
      %2232 = vmatprep.subr.bf16.mxu0 0
      %2233 = vmatpush1.bf16.msra.mxu0 0
      %2234 = vmatprep.subr.bf16.mxu0 0
      %2235 = vmatpush1.bf16.msra.mxu0 0
      %2236 = vmatprep.subr.bf16.mxu0 0
      %2237 = vmatpush1.bf16.msra.mxu0 0
      %2238 = vmatprep.subr.bf16.mxu0 0
      %2239 = vmatpush1.bf16.msra.mxu0 0
      %2240 = vmatprep.subr.bf16.mxu0 0
      %2241 = vmatpush1.bf16.msra.mxu0 0
      %2242 = vmatprep.subr.bf16.mxu0 0
      %2243 = vmatpush1.bf16.msra.mxu0 0
      %2244 = vmatprep.mubr.bf16.mxu0 0
      %2245 = vmatmul.mubr.bf16.gmra.mrb[0].mxu0 %v2176
      %v2246 = vpop.f32.mrb[0].mxu0
      %v2247 = vadd.f32 %v2162, %v2246
      %v2248 = vpop.f32.mrb[0].mxu0
      %v2249 = vpop.f32.mrb[0].mxu0
      %v2250 = vadd.f32 %v2162, %v2249
      %v2251 = vpop.f32.mrb[0].mxu0
      %2252 = vmatprep.mubr.bf16.mxu0 0
      %2253 = vmatmul.mubr.bf16.gmra.mrb[0].mxu0 %v2178
      %v2254 = vpop.f32.mrb[0].mxu0
      %v2255 = vadd.f32 %v2162, %v2254
      %v2256 = vpop.f32.mrb[0].mxu0
      %v2257 = vpop.f32.mrb[0].mxu0
      %v2258 = vadd.f32 %v2162, %v2257
      %v2259 = vpop.f32.mrb[0].mxu0
      %2260 = vmatprep.mubr.bf16.mxu0 0
      %2261 = vmatmul.mubr.bf16.gmra.mrb[0].mxu0 %v2180
      %v2262 = vpop.f32.mrb[0].mxu0
      %v2263 = vadd.f32 %v2162, %v2262
      %v2264 = vpop.f32.mrb[0].mxu0
      %v2265 = vpop.f32.mrb[0].mxu0
      %v2266 = vadd.f32 %v2162, %v2265
      %v2267 = vpop.f32.mrb[0].mxu0
      %2268 = vmatprep.mubr.bf16.mxu0 0
      %2269 = vmatmul.mubr.bf16.gmra.mrb[0].mxu0 %v2182
      %v2270 = vpop.f32.mrb[0].mxu0
      %v2271 = vadd.f32 %v2162, %v2270
      %v2272 = vpop.f32.mrb[0].mxu0
      %v2273 = vpop.f32.mrb[0].mxu0
      %v2274 = vadd.f32 %v2162, %v2273
      %v2275 = vpop.f32.mrb[0].mxu0
      %2276 = vmatprep.mubr.bf16.mxu0 0
      %2277 = vmatmul.mubr.bf16.gmra.mrb[0].mxu0 %v2184
      %v2278 = vpop.f32.mrb[0].mxu0
      %v2279 = vadd.f32 %v2162, %v2278
      %v2280 = vpop.f32.mrb[0].mxu0
      %v2281 = vpop.f32.mrb[0].mxu0
      %v2282 = vadd.f32 %v2162, %v2281
      %v2283 = vpop.f32.mrb[0].mxu0
      %2284 = vmatprep.mubr.bf16.mxu0 0
      %2285 = vmatmul.mubr.bf16.gmra.mrb[0].mxu0 %v2186
      %v2286 = vpop.f32.mrb[0].mxu0
      %v2287 = vadd.f32 %v2162, %v2286
      %v2288 = vpop.f32.mrb[0].mxu0
      %v2289 = vpop.f32.mrb[0].mxu0
      %v2290 = vadd.f32 %v2162, %v2289
      %v2291 = vpop.f32.mrb[0].mxu0
      %2292 = vmatprep.mubr.bf16.mxu0 0
      %2293 = vmatmul.mubr.bf16.gmra.mrb[0].mxu0 %v2188
      %v2294 = vpop.f32.mrb[0].mxu0
      %v2295 = vadd.f32 %v2162, %v2294
      %v2296 = vpop.f32.mrb[0].mxu0
      %v2297 = vpop.f32.mrb[0].mxu0
      %v2298 = vadd.f32 %v2162, %v2297
      %v2299 = vpop.f32.mrb[0].mxu0
      %2300 = vmatprep.mubr.bf16.mxu0 0
      %2301 = vmatmul.mubr.bf16.gmra.mrb[0].mxu0 %v2190
      %v2302 = vpop.f32.mrb[0].mxu0
      %v2303 = vadd.f32 %v2162, %v2302
      %v2304 = vpop.f32.mrb[0].mxu0
      %v2305 = vpop.f32.mrb[0].mxu0
      %v2306 = vadd.f32 %v2162, %v2305
      %v2307 = vpop.f32.mrb[0].mxu0
      %2308 = vmatprep.mubr.bf16.mxu0 0
      %2309 = vmatmul.mubr.bf16.gmra.mrb[0].mxu0 %v2192
      %v2310 = vpop.f32.mrb[0].mxu0
      %v2311 = vadd.f32 %v2162, %v2310
      %v2312 = vpop.f32.mrb[0].mxu0
      %v2313 = vpop.f32.mrb[0].mxu0
      %v2314 = vadd.f32 %v2162, %v2313
      %v2315 = vpop.f32.mrb[0].mxu0
      %2316 = vmatprep.mubr.bf16.mxu0 0
      %2317 = vmatmul.mubr.bf16.gmra.mrb[0].mxu0 %v2194
      %v2318 = vpop.f32.mrb[0].mxu0
      %v2319 = vadd.f32 %v2162, %v2318
      %v2320 = vpop.f32.mrb[0].mxu0
      %v2321 = vpop.f32.mrb[0].mxu0
      %v2322 = vadd.f32 %v2162, %v2321
      %v2323 = vpop.f32.mrb[0].mxu0
      %2324 = vmatprep.mubr.bf16.mxu0 0
      %2325 = vmatmul.mubr.bf16.gmra.mrb[0].mxu0 %v2196
      %v2326 = vpop.f32.mrb[0].mxu0
      %v2327 = vadd.f32 %v2162, %v2326
      %v2328 = vpop.f32.mrb[0].mxu0
      %v2329 = vpop.f32.mrb[0].mxu0
      %v2330 = vadd.f32 %v2162, %v2329
      %v2331 = vpop.f32.mrb[0].mxu0
      %2332 = vmatprep.mubr.bf16.mxu0 0
      %2333 = vmatmul.mubr.bf16.gmra.mrb[0].mxu0 %v2198
      %v2334 = vpop.f32.mrb[0].mxu0
      %v2335 = vadd.f32 %v2162, %v2334
      %v2336 = vpop.f32.mrb[0].mxu0
      %v2337 = vpop.f32.mrb[0].mxu0
      %v2338 = vadd.f32 %v2162, %v2337
      %v2339 = vpop.f32.mrb[0].mxu0
      %2340 = vmatprep.mubr.bf16.mxu0 0
      %2341 = vmatmul.mubr.bf16.gmra.mrb[0].mxu0 %v2200
      %v2342 = vpop.f32.mrb[0].mxu0
      %v2343 = vadd.f32 %v2162, %v2342
      %v2344 = vpop.f32.mrb[0].mxu0
      %v2345 = vpop.f32.mrb[0].mxu0
      %v2346 = vadd.f32 %v2162, %v2345
      %v2347 = vpop.f32.mrb[0].mxu0
      %2348 = vmatprep.mubr.bf16.mxu0 0
      %2349 = vmatmul.mubr.bf16.gmra.mrb[0].mxu0 %v2202
      %v2350 = vpop.f32.mrb[0].mxu0
      %v2351 = vadd.f32 %v2162, %v2350
      %v2352 = vpop.f32.mrb[0].mxu0
      %v2353 = vpop.f32.mrb[0].mxu0
      %v2354 = vadd.f32 %v2162, %v2353
      %v2355 = vpop.f32.mrb[0].mxu0
      %2356 = vmatprep.mubr.bf16.mxu0 0
      %2357 = vmatmul.mubr.bf16.gmra.mrb[0].mxu0 %v2204
      %v2358 = vpop.f32.mrb[0].mxu0
      %v2359 = vadd.f32 %v2162, %v2358
      %v2360 = vpop.f32.mrb[0].mxu0
      %v2361 = vpop.f32.mrb[0].mxu0
      %v2362 = vadd.f32 %v2162, %v2361
      %v2363 = vpop.f32.mrb[0].mxu0
      %2364 = vmatprep.mubr.bf16.mxu0 0
      %2365 = vmatmul.mubr.bf16.gmra.mrb[0].mxu0 %v2206
      %v2366 = vpop.f32.mrb[0].mxu0
      %v2367 = vadd.f32 %v2162, %v2366
      %v2368 = vpop.f32.mrb[0].mxu0
      %v2369 = vpop.f32.mrb[0].mxu0
      %v2370 = vadd.f32 %v2162, %v2369
      %v2371 = vpop.f32.mrb[0].mxu0
      %2372 = vdwg.mxu0
      %v2373 = vmax.f32 %v2247, 0.0
      %v2374 = vmax.f32 %v2250, 0.0
      %v2375 = vmax.f32 %v2255, 0.0
      %v2376 = vmax.f32 %v2258, 0.0
      %v2377 = vmax.f32 %v2263, 0.0
      %v2378 = vmax.f32 %v2266, 0.0
      %v2379 = vmax.f32 %v2271, 0.0
      %v2380 = vmax.f32 %v2274, 0.0
      %v2381 = vmax.f32 %v2279, 0.0
      %v2382 = vmax.f32 %v2282, 0.0
      %v2383 = vmax.f32 %v2287, 0.0
      %v2384 = vmax.f32 %v2290, 0.0
      %v2385 = vmax.f32 %v2295, 0.0
      %v2386 = vmax.f32 %v2298, 0.0
      %v2387 = vmax.f32 %v2303, 0.0
      %v2388 = vmax.f32 %v2306, 0.0
      %v2389 = vmax.f32 %v2311, 0.0
      %v2390 = vmax.f32 %v2314, 0.0
      %v2391 = vmax.f32 %v2319, 0.0
      %v2392 = vmax.f32 %v2322, 0.0
      %v2393 = vmax.f32 %v2327, 0.0
      %v2394 = vmax.f32 %v2330, 0.0
      %v2395 = vmax.f32 %v2335, 0.0
      %v2396 = vmax.f32 %v2338, 0.0
      %v2397 = vmax.f32 %v2343, 0.0
      %v2398 = vmax.f32 %v2346, 0.0
      %v2399 = vmax.f32 %v2351, 0.0
      %v2400 = vmax.f32 %v2354, 0.0
      %v2401 = vmax.f32 %v2359, 0.0
      %v2402 = vmax.f32 %v2362, 0.0
      %v2403 = vmax.f32 %v2367, 0.0
      %v2404 = vmax.f32 %v2370, 0.0
      %v2405 = vpack.c.bf16 %v2374, %v2373
      %v2406 = vpack.c.bf16 %v2376, %v2375
      %v2407 = vpack.c.bf16 %v2378, %v2377
      %v2408 = vpack.c.bf16 %v2380, %v2379
      %v2409 = vpack.c.bf16 %v2382, %v2381
      %v2410 = vpack.c.bf16 %v2384, %v2383
      %v2411 = vpack.c.bf16 %v2386, %v2385
      %v2412 = vpack.c.bf16 %v2388, %v2387
      %v2413 = vpack.c.bf16 %v2390, %v2389
      %v2414 = vpack.c.bf16 %v2392, %v2391
      %v2415 = vpack.c.bf16 %v2394, %v2393
      %v2416 = vpack.c.bf16 %v2396, %v2395
      %v2417 = vpack.c.bf16 %v2398, %v2397
      %v2418 = vpack.c.bf16 %v2400, %v2399
      %v2419 = vpack.c.bf16 %v2402, %v2401
      %v2420 = vpack.c.bf16 %v2404, %v2403
      %v2437 = vunpack.c.l.b16 %v2405
      %v2438 = vunpack.c.h.b16 %v2405
      %v2439 = vunpack.c.l.b16 %v2406
      %v2440 = vunpack.c.h.b16 %v2406
      %v2441 = vunpack.c.l.b16 %v2407
      %v2442 = vunpack.c.h.b16 %v2407
      %v2443 = vunpack.c.l.b16 %v2408
      %v2444 = vunpack.c.h.b16 %v2408
      %v2445 = vunpack.c.l.b16 %v2409
      %v2446 = vunpack.c.h.b16 %v2409
      %v2447 = vunpack.c.l.b16 %v2410
      %v2448 = vunpack.c.h.b16 %v2410
      %v2449 = vunpack.c.l.b16 %v2411
      %v2450 = vunpack.c.h.b16 %v2411
      %v2451 = vunpack.c.l.b16 %v2412
      %v2452 = vunpack.c.h.b16 %v2412
      %v2453 = vunpack.c.l.b16 %v2413
      %v2454 = vunpack.c.h.b16 %v2413
      %v2455 = vunpack.c.l.b16 %v2414
      %v2456 = vunpack.c.h.b16 %v2414
      %v2457 = vunpack.c.l.b16 %v2415
      %v2458 = vunpack.c.h.b16 %v2415
      %v2459 = vunpack.c.l.b16 %v2416
      %v2460 = vunpack.c.h.b16 %v2416
      %v2461 = vunpack.c.l.b16 %v2417
      %v2462 = vunpack.c.h.b16 %v2417
      %v2463 = vunpack.c.l.b16 %v2418
      %v2464 = vunpack.c.h.b16 %v2418
      %v2465 = vunpack.c.l.b16 %v2419
      %v2466 = vunpack.c.h.b16 %v2419
      %v2467 = vunpack.c.l.b16 %v2420
      %v2468 = vunpack.c.h.b16 %v2420
      %v2469 = vpack.c.b16 %v2437, %v2437
      %v2470 = vpack.c.b16 %v2438, %v2438
      %v2471 = vpack.c.b16 %v2439, %v2439
      %v2472 = vpack.c.b16 %v2440, %v2440
      %v2473 = vpack.c.b16 %v2441, %v2441
      %v2474 = vpack.c.b16 %v2442, %v2442
      %v2475 = vpack.c.b16 %v2443, %v2443
      %v2476 = vpack.c.b16 %v2444, %v2444
      %v2477 = vpack.c.b16 %v2445, %v2445
      %v2478 = vpack.c.b16 %v2446, %v2446
      %v2479 = vpack.c.b16 %v2447, %v2447
      %v2480 = vpack.c.b16 %v2448, %v2448
      %v2481 = vpack.c.b16 %v2449, %v2449
      %v2482 = vpack.c.b16 %v2450, %v2450
      %v2483 = vpack.c.b16 %v2451, %v2451
      %v2484 = vpack.c.b16 %v2452, %v2452
      %v2485 = vpack.c.b16 %v2453, %v2453
      %v2486 = vpack.c.b16 %v2454, %v2454
      %v2487 = vpack.c.b16 %v2455, %v2455
      %v2488 = vpack.c.b16 %v2456, %v2456
      %v2489 = vpack.c.b16 %v2457, %v2457
      %v2490 = vpack.c.b16 %v2458, %v2458
      %v2491 = vpack.c.b16 %v2459, %v2459
      %v2492 = vpack.c.b16 %v2460, %v2460
      %v2493 = vpack.c.b16 %v2461, %v2461
      %v2494 = vpack.c.b16 %v2462, %v2462
      %v2495 = vpack.c.b16 %v2463, %v2463
      %v2496 = vpack.c.b16 %v2464, %v2464
      %v2497 = vpack.c.b16 %v2465, %v2465
      %v2498 = vpack.c.b16 %v2466, %v2466
      %v2499 = vpack.c.b16 %v2467, %v2467
      %v2500 = vpack.c.b16 %v2468, %v2468
      %vm2533 = vcmask 27648
      %2534 = vst.msk [vmem:[%s233] sm:$0xf] %vm2533, %v2469
      %2535 = vst.msk [vmem:[%s233 + $0x4] sm:$0xf] %vm2533, %v2470
      %2536 = vst.msk [vmem:[%s233 + $0x8] sm:$0xf] %vm2533, %v2471
      %2537 = vst.msk [vmem:[%s233 + $0xc] sm:$0xf] %vm2533, %v2472
      %2538 = vst.msk [vmem:[%s233 + $0x10] sm:$0xf] %vm2533, %v2473
      %2539 = vst.msk [vmem:[%s233 + $0x14] sm:$0xf] %vm2533, %v2474
      %2540 = vst.msk [vmem:[%s233 + $0x18] sm:$0xf] %vm2533, %v2475
      %2541 = vst.msk [vmem:[%s233 + $0x1c] sm:$0xf] %vm2533, %v2476
      %2542 = vst.msk [vmem:[%s233 + $0x20] sm:$0xf] %vm2533, %v2477
      %2543 = vst.msk [vmem:[%s233 + $0x24] sm:$0xf] %vm2533, %v2478
      %2544 = vst.msk [vmem:[%s233 + $0x28] sm:$0xf] %vm2533, %v2479
      %2545 = vst.msk [vmem:[%s233 + $0x2c] sm:$0xf] %vm2533, %v2480
      %2546 = vst.msk [vmem:[%s233 + $0x30] sm:$0xf] %vm2533, %v2481
      %2547 = vst.msk [vmem:[%s233 + $0x34] sm:$0xf] %vm2533, %v2482
      %2548 = vst.msk [vmem:[%s233 + $0x38] sm:$0xf] %vm2533, %v2483
      %2549 = vst.msk [vmem:[%s233 + $0x3c] sm:$0xf] %vm2533, %v2484
      %2550 = vst.msk [vmem:[%s233 + $0x40] sm:$0xf] %vm2533, %v2485
      %2551 = vst.msk [vmem:[%s233 + $0x44] sm:$0xf] %vm2533, %v2486
      %2552 = vst.msk [vmem:[%s233 + $0x48] sm:$0xf] %vm2533, %v2487
      %2553 = vst.msk [vmem:[%s233 + $0x4c] sm:$0xf] %vm2533, %v2488
      %2554 = vst.msk [vmem:[%s233 + $0x50] sm:$0xf] %vm2533, %v2489
      %2555 = vst.msk [vmem:[%s233 + $0x54] sm:$0xf] %vm2533, %v2490
      %2556 = vst.msk [vmem:[%s233 + $0x58] sm:$0xf] %vm2533, %v2491
      %2557 = vst.msk [vmem:[%s233 + $0x5c] sm:$0xf] %vm2533, %v2492
      %2558 = vst.msk [vmem:[%s233 + $0x60] sm:$0xf] %vm2533, %v2493
      %2559 = vst.msk [vmem:[%s233 + $0x64] sm:$0xf] %vm2533, %v2494
      %2560 = vst.msk [vmem:[%s233 + $0x68] sm:$0xf] %vm2533, %v2495
      %2561 = vst.msk [vmem:[%s233 + $0x6c] sm:$0xf] %vm2533, %v2496
      %2562 = vst.msk [vmem:[%s233 + $0x70] sm:$0xf] %vm2533, %v2497
      %2563 = vst.msk [vmem:[%s233 + $0x74] sm:$0xf] %vm2533, %v2498
      %2564 = vst.msk [vmem:[%s233 + $0x78] sm:$0xf] %vm2533, %v2499
      %2565 = vst.msk [vmem:[%s233 + $0x7c] sm:$0xf] %vm2533, %v2500
      %v2566 = vsel %vm1757, %v2373, 0.0
      %v2567 = vsel %vm1757, %v2374, 0.0
      %v2568 = vadd.f32 %v2566, %v2567
      %v2569 = vsel %vm1757, %v2375, 0.0
      %v2570 = vadd.f32 %v2568, %v2569
      %v2571 = vsel %vm1757, %v2376, 0.0
      %v2572 = vadd.f32 %v2570, %v2571
      %v2573 = vsel %vm1757, %v2377, 0.0
      %v2574 = vadd.f32 %v2572, %v2573
      %v2575 = vsel %vm1757, %v2378, 0.0
      %v2576 = vadd.f32 %v2574, %v2575
      %v2577 = vsel %vm1757, %v2379, 0.0
      %v2578 = vadd.f32 %v2576, %v2577
      %v2579 = vsel %vm1757, %v2380, 0.0
      %v2580 = vadd.f32 %v2578, %v2579
      %v2581 = vsel %vm1757, %v2381, 0.0
      %v2582 = vadd.f32 %v2580, %v2581
      %v2583 = vsel %vm1757, %v2382, 0.0
      %v2584 = vadd.f32 %v2582, %v2583
      %v2585 = vsel %vm1757, %v2383, 0.0
      %v2586 = vadd.f32 %v2584, %v2585
      %v2587 = vsel %vm1757, %v2384, 0.0
      %v2588 = vadd.f32 %v2586, %v2587
      %v2589 = vsel %vm1757, %v2385, 0.0
      %v2590 = vadd.f32 %v2588, %v2589
      %v2591 = vsel %vm1757, %v2386, 0.0
      %v2592 = vadd.f32 %v2590, %v2591
      %v2593 = vsel %vm1757, %v2387, 0.0
      %v2594 = vadd.f32 %v2592, %v2593
      %v2595 = vsel %vm1757, %v2388, 0.0
      %v2596 = vadd.f32 %v2594, %v2595
      %v2597 = vsel %vm1757, %v2389, 0.0
      %v2598 = vadd.f32 %v2596, %v2597
      %v2599 = vsel %vm1757, %v2390, 0.0
      %v2600 = vadd.f32 %v2598, %v2599
      %v2601 = vsel %vm1757, %v2391, 0.0
      %v2602 = vadd.f32 %v2600, %v2601
      %v2603 = vsel %vm1757, %v2392, 0.0
      %v2604 = vadd.f32 %v2602, %v2603
      %v2605 = vsel %vm1757, %v2393, 0.0
      %v2606 = vadd.f32 %v2604, %v2605
      %v2607 = vsel %vm1757, %v2394, 0.0
      %v2608 = vadd.f32 %v2606, %v2607
      %v2609 = vsel %vm1757, %v2395, 0.0
      %v2610 = vadd.f32 %v2608, %v2609
      %v2611 = vsel %vm1757, %v2396, 0.0
      %v2612 = vadd.f32 %v2610, %v2611
      %v2613 = vsel %vm1757, %v2397, 0.0
      %v2614 = vadd.f32 %v2612, %v2613
      %v2615 = vsel %vm1757, %v2398, 0.0
      %v2616 = vadd.f32 %v2614, %v2615
      %v2617 = vsel %vm1757, %v2399, 0.0
      %v2618 = vadd.f32 %v2616, %v2617
      %v2619 = vsel %vm1757, %v2400, 0.0
      %v2620 = vadd.f32 %v2618, %v2619
      %v2621 = vsel %vm1757, %v2401, 0.0
      %v2622 = vadd.f32 %v2620, %v2621
      %v2623 = vsel %vm1757, %v2402, 0.0
      %v2624 = vadd.f32 %v2622, %v2623
      %v2625 = vsel %vm1757, %v2403, 0.0
      %v2626 = vadd.f32 %v2624, %v2625
      %v2627 = vsel %vm1757, %v2404, 0.0
      %v2628 = vadd.f32 %v2626, %v2627
      %v2629 = vrot.slane %v2628, 4
      %v2630 = vadd.f32 %v2628, %v2629
      %v2631 = vrot.slane %v2630, 2
      %v2632 = vadd.f32 %v2630, %v2631
      %v2633 = vrot.slane %v2632, 1
      %v2634 = vadd.f32 %v2632, %v2633
      %v2635 = vsel %vm1757, %v2373, -inf
      %v2636 = vsel %vm1757, %v2374, -inf
      %v2637 = vsel %vm1757, %v2375, -inf
      %v2638 = vsel %vm1757, %v2376, -inf
      %v2639 = vsel %vm1757, %v2377, -inf
      %v2640 = vmax.f32 %v2635, %v2639
      %v2641 = vsel %vm1757, %v2378, -inf
      %v2642 = vmax.f32 %v2636, %v2641
      %v2643 = vsel %vm1757, %v2379, -inf
      %v2644 = vmax.f32 %v2637, %v2643
      %v2645 = vsel %vm1757, %v2380, -inf
      %v2646 = vmax.f32 %v2638, %v2645
      %v2647 = vsel %vm1757, %v2381, -inf
      %v2648 = vmax.f32 %v2640, %v2647
      %v2649 = vsel %vm1757, %v2382, -inf
      %v2650 = vmax.f32 %v2642, %v2649
      %v2651 = vsel %vm1757, %v2383, -inf
      %v2652 = vmax.f32 %v2644, %v2651
      %v2653 = vsel %vm1757, %v2384, -inf
      %v2654 = vmax.f32 %v2646, %v2653
      %v2655 = vsel %vm1757, %v2385, -inf
      %v2656 = vmax.f32 %v2648, %v2655
      %v2657 = vsel %vm1757, %v2386, -inf
      %v2658 = vmax.f32 %v2650, %v2657
      %v2659 = vsel %vm1757, %v2387, -inf
      %v2660 = vmax.f32 %v2652, %v2659
      %v2661 = vsel %vm1757, %v2388, -inf
      %v2662 = vmax.f32 %v2654, %v2661
      %v2663 = vsel %vm1757, %v2389, -inf
      %v2664 = vmax.f32 %v2656, %v2663
      %v2665 = vsel %vm1757, %v2390, -inf
      %v2666 = vmax.f32 %v2658, %v2665
      %v2667 = vsel %vm1757, %v2391, -inf
      %v2668 = vmax.f32 %v2660, %v2667
      %v2669 = vsel %vm1757, %v2392, -inf
      %v2670 = vmax.f32 %v2662, %v2669
      %v2671 = vsel %vm1757, %v2393, -inf
      %v2672 = vmax.f32 %v2664, %v2671
      %v2673 = vsel %vm1757, %v2394, -inf
      %v2674 = vmax.f32 %v2666, %v2673
      %v2675 = vsel %vm1757, %v2395, -inf
      %v2676 = vmax.f32 %v2668, %v2675
      %v2677 = vsel %vm1757, %v2396, -inf
      %v2678 = vmax.f32 %v2670, %v2677
      %v2679 = vsel %vm1757, %v2397, -inf
      %v2680 = vmax.f32 %v2672, %v2679
      %v2681 = vsel %vm1757, %v2398, -inf
      %v2682 = vmax.f32 %v2674, %v2681
      %v2683 = vsel %vm1757, %v2399, -inf
      %v2684 = vmax.f32 %v2676, %v2683
      %v2685 = vsel %vm1757, %v2400, -inf
      %v2686 = vmax.f32 %v2678, %v2685
      %v2687 = vsel %vm1757, %v2401, -inf
      %v2688 = vmax.f32 %v2680, %v2687
      %v2689 = vsel %vm1757, %v2402, -inf
      %v2690 = vmax.f32 %v2682, %v2689
      %v2691 = vsel %vm1757, %v2403, -inf
      %v2692 = vmax.f32 %v2684, %v2691
      %v2693 = vsel %vm1757, %v2404, -inf
      %v2694 = vmax.f32 %v2686, %v2693
      %v2695 = vmax.f32 %v2688, %v2690
      %v2696 = vmax.f32 %v2692, %v2694
      %v2697 = vmax.f32 %v2695, %v2696
      %v2698 = vrot.slane %v2697, 4
      %v2699 = vmax.f32 %v2697, %v2698
      %v2700 = vrot.slane %v2699, 2
      %v2701 = vmax.f32 %v2699, %v2700
      %v2702 = vrot.slane %v2701, 1
      %v2703 = vmax.f32 %v2701, %v2702
      %vm2704 = vcmask 1040384
      %v2705 = vsel %vm2704, %v2634, %v2703
      %vm2706 = vcmask 25600
      %2707 = vst.msk [vmem:[%s241] sm:$0x3] %vm2706, %v2705
      %s2708 = smul.u32 16, %s21
      %p2709 = scmp.lt.s32.totalorder %s20, 1
      %s2710 = scalar_select %p2709, %s20, 1
      %p2711 = scmp.lt.s32.totalorder %s2708, 15
      %s2712 = scalar_select %p2711, %s2708, 15
      %s2713 = smul.addr %s2712, 2
      %s2714 = smul.addr %s2710, 32
      %s2715 = sadd.s32 %s2713, %s2714
      %s2716 = smul.addr %s2715, 4
      %s2717 = scalar_lea.vmem %s3, %s2716
      %p2718 = scmp.lt.s32.totalorder %s20, 1
      %s2719 = scalar_select %p2718, %s20, 1
      %p2720 = scmp.lt.s32.totalorder %s21, 0
      %s2721 = scalar_select %p2720, %s21, 0
      %s2722 = sadd.s32 %s2721, %s2719
      %s2723 = smul.addr %s2722, 2
      %s2724 = scalar_lea.vmem %s4, %s2723
      // Predicated region
      $region33: #{unet_conv2_xx_forward.6} parent=31 // pred_check
        %p2725 = pneg %p116
      $region34: #{unet_conv2_xx_forward.6} parent=31 // pred_check_branch
        %2727 = sbr.rel (%p2725) target = $region36
      $region35: #{unet_conv2_xx_forward.6} parent=31 // pred_region
        %s2728 = smul.u32 16, %s21
      $region36: #{unet_conv2_xx_forward.6} parent=31 // pred_fallthru
        _
      // Predicated region
      $region37: #{unet_conv2_xx_forward.6} parent=31 // pred_check
        %p2729 = pneg %p144
      $region38: #{unet_conv2_xx_forward.6} parent=31 // pred_check_branch
        %2731 = sbr.rel (%p2729) target = $region40
      $region39: #{unet_conv2_xx_forward.6} parent=31 // pred_region
        _
      $region40: #{unet_conv2_xx_forward.6} parent=31 // pred_fallthru
        _
    $region32: #{unet_conv2_xx_forward.6} parent=5 // pred_fallthru
      _
    %p2732 = scmp.le.s32.totalorder 2, %s11
    // Predicated region
    $region41: #{unet_conv2_xx_forward.6} parent=5 // pred_check
      %p2733 = pneg %p2732
    $region42: #{unet_conv2_xx_forward.6} parent=5 // pred_check_branch
      %2735 = sbr.rel (%p2733) target = $region44
    $region43: #{unet_conv2_xx_forward.6} parent=5 // pred_region
      %s2736 = ssub.s32 %s11, 2
      // Predicated region
      $region45: #{unet_conv2_xx_forward.6} parent=43 // pred_check
        %p2737 = pneg %p122
      $region46: #{unet_conv2_xx_forward.6} parent=43 // pred_check_branch
        %2739 = sbr.rel (%p2737) target = $region48
      $region47: #{unet_conv2_xx_forward.6} parent=43 // pred_region
        %s2740 = smul.u32 16, %s23
        %p2741 = scmp.lt.s32.totalorder %s22, 1
        %s2742 = scalar_select %p2741, %s22, 1
        %p2743 = scmp.lt.s32.totalorder %s2740, 15
        %s2744 = scalar_select %p2743, %s2740, 15
        %s2745 = smul.addr %s2744, 2
        %s2746 = smul.addr %s2742, 32
        %s2747 = sadd.s32 %s2745, %s2746
        %s2748 = smul.addr %s2747, 4
        %s2749 = scalar_lea.vmem %s3, %s2748
      $region48: #{unet_conv2_xx_forward.6} parent=43 // pred_fallthru
        _
      // Predicated region
      $region49: #{unet_conv2_xx_forward.6} parent=43 // pred_check
        %p2750 = pneg %p150
      $region50: #{unet_conv2_xx_forward.6} parent=43 // pred_check_branch
        %2752 = sbr.rel (%p2750) target = $region52
      $region51: #{unet_conv2_xx_forward.6} parent=43 // pred_region
        %p2753 = scmp.lt.s32.totalorder %s22, 1
        %s2754 = scalar_select %p2753, %s22, 1
        %p2755 = scmp.lt.s32.totalorder %s23, 0
        %s2756 = scalar_select %p2755, %s23, 0
        %s2757 = sadd.s32 %s2756, %s2754
        %s2758 = smul.addr %s2757, 2
        %s2759 = scalar_lea.vmem %s4, %s2758
      $region52: #{unet_conv2_xx_forward.6} parent=43 // pred_fallthru
        _
    $region44: #{unet_conv2_xx_forward.6} parent=5 // pred_fallthru
      _
  $region6: #{unet_conv2_xx_forward.6} parent=0 // loop_footer
    %s15 = sadd.s32 1, %s11
  $region7: #{unet_conv2_xx_forward.6} parent=0 // loop_footer_branch
    %10 = sbr.rel target = $region3
  $region8: #{unet_conv2_xx_forward.6} parent=0 // loop_exit
    _

// kernel: unet_conv2_xx_forward.5
$region0: #{unet_conv2_xx_forward.5}
  #allocation0 [shape = 'u32[]', space=smem, size = 0x4, offset = 0x4, fixed_abs, tag = 'smem constant byte address 0x4 - core index']
  #allocation1 [shape = 'u32[144,128]{1,0:T(1,128)}', space=vmem, size = 0x12000, scoped, tag = 'internal scratch']
  %s0 = inlined_call_operand.vmem [shape: bf16[2,20,20,8], index: 0, kind: input, shape index: {}]
  %s1 = inlined_call_operand.vmem [shape: bf16[136,8], index: 1, kind: input, shape index: {}]
  %s2 = inlined_call_operand.vmem [shape: f32[1,8], index: 2, kind: input, shape index: {}]
  %s3 = inlined_call_operand.vmem [shape: bf16[2,16,16,4], index: 3, kind: output, shape index: {0}]
  %s4 = inlined_call_operand.vmem [shape: bf16[2,16,16,4], index: 4, kind: output, shape index: {1}]
  %s5 = inlined_call_operand.vmem [shape: f32[2,1,2,4], index: 5, kind: output, shape index: {2}]
  %6 = xla_tuple %s3, %s4, %s5
  %s7 = sld [smem:[#allocation0]]
  $region61: #{unet_conv2_xx_forward.5} parent=0
    _
  %s9 = ssub.s32 1, %s7
  %s10 = scalar_select 0, %s9, %s7
  loop: start=0, step=1, limit=4
  $region2: #{unet_conv2_xx_forward.5} parent=0 // loop_pre_header
    _
  $region3: #{unet_conv2_xx_forward.5} parent=0 // loop_header
    %s12 = sphi 0, %s16
    %p13 = scmp.ge.s32.totalorder %s12, 4
    %s19 = sphi 0, %s31
    %s20 = sphi 0, %s27
    %s21 = sphi 0, %s19
    %s22 = sphi 0, %s20
    %s23 = sphi 0, %s21
    %s24 = sphi 0, %s22
    %s34 = sphi 0, %s36
    %s37 = sphi 0, %s34
    %s38 = sphi 0, %s37
    %s54 = sphi 0, %s38
    %s58 = sphi 0, %s58
    %s60 = sphi 0, %s58
    %s61 = sphi 0, %s60
    %s75 = sphi 0, %s61
    %s79 = sphi 0, %s79
    %s81 = sphi 0, %s79
    %s82 = sphi 0, %s81
    %s96 = sphi 0, %s82
    %s104 = sphi 0, %s106
    %s107 = sphi 0, %s104
    %s108 = sphi 0, %s107
    %s124 = sphi 0, %s108
    %s132 = sphi 0, %s134
    %s135 = sphi 0, %s132
    %s136 = sphi 0, %s135
    %s152 = sphi 0, %s136
    %s160 = sphi 0, %s162
    %s163 = sphi 0, %s160
    %s164 = sphi 0, %s163
    %s180 = sphi 0, %s164
  $region4: #{unet_conv2_xx_forward.5} parent=0 // loop_header_branch
    %15 = sbr.rel (%p13) target = $region8
  $region5: #{unet_conv2_xx_forward.5} parent=0 // loop_body
    %s17 = ssub.s32 %s12, 1
    %s18 = ssub.s32 %s12, 2
    %s25 = sadd.s32 1, %s20
    %p26 = scmp.ge.s32.totalorder %s25, 1
    %s27 = scalar_select %p26, 0, %s25
    %s28 = sadd.s32 1, %s19
    %s29 = scalar_select %p26, %s28, %s19
    %p30 = scmp.ge.s32.totalorder %s29, 2
    %s31 = scalar_select %p30, 0, %s29
    %s32 = ssub.s32 %s19, %s31
    %p33 = scmp.eq.s32.totalorder %s32, 0
    %s35 = sadd.s32 %s34, 1
    %s36 = scalar_select %p33, %s34, %s35
    %p39 = pneg %p33
    %p40 = scmp.eq.s32.totalorder %s12, 1
    %p41 = por %p39, %p40
    %p42 = scmp.ne.s32.totalorder %s34, %s37
    %p43 = scmp.eq.s32.totalorder %s12, 0
    %p44 = por %p42, %p43
    %p45 = scmp.ne.s32.totalorder %s34, %s37
    %p46 = scmp.eq.s32.totalorder %s17, 1
    %p47 = por %p45, %p46
    %p48 = scmp.ne.s32.totalorder %s37, %s38
    %p49 = scmp.eq.s32.totalorder %s17, 0
    %p50 = por %p48, %p49
    %p51 = scmp.ne.s32.totalorder %s37, %s38
    %p52 = scmp.eq.s32.totalorder %s18, 1
    %p53 = por %p51, %p52
    %p55 = scmp.ne.s32.totalorder %s38, %s54
    %p56 = scmp.eq.s32.totalorder %s18, 0
    %p57 = por %p55, %p56
    %s59 = sadd.s32 %s58, 1
    %p62 = scmp.eq.s32.totalorder %s12, 1
    %p63 = scmp.ne.s32.totalorder %s58, %s60
    %p64 = scmp.eq.s32.totalorder %s12, 0
    %p65 = por %p63, %p64
    %p66 = scmp.ne.s32.totalorder %s58, %s60
    %p67 = scmp.eq.s32.totalorder %s17, 1
    %p68 = por %p66, %p67
    %p69 = scmp.ne.s32.totalorder %s60, %s61
    %p70 = scmp.eq.s32.totalorder %s17, 0
    %p71 = por %p69, %p70
    %p72 = scmp.ne.s32.totalorder %s60, %s61
    %p73 = scmp.eq.s32.totalorder %s18, 1
    %p74 = por %p72, %p73
    %p76 = scmp.ne.s32.totalorder %s61, %s75
    %p77 = scmp.eq.s32.totalorder %s18, 0
    %p78 = por %p76, %p77
    %s80 = sadd.s32 %s79, 1
    %p83 = scmp.eq.s32.totalorder %s12, 1
    %p84 = scmp.ne.s32.totalorder %s79, %s81
    %p85 = scmp.eq.s32.totalorder %s12, 0
    %p86 = por %p84, %p85
    %p87 = scmp.ne.s32.totalorder %s79, %s81
    %p88 = scmp.eq.s32.totalorder %s17, 1
    %p89 = por %p87, %p88
    %p90 = scmp.ne.s32.totalorder %s81, %s82
    %p91 = scmp.eq.s32.totalorder %s17, 0
    %p92 = por %p90, %p91
    %p93 = scmp.ne.s32.totalorder %s81, %s82
    %p94 = scmp.eq.s32.totalorder %s18, 1
    %p95 = por %p93, %p94
    %p97 = scmp.ne.s32.totalorder %s82, %s96
    %p98 = scmp.eq.s32.totalorder %s18, 0
    %p99 = por %p97, %p98
    %s100 = ssub.s32 %s19, %s31
    %s101 = ssub.s32 %s20, %s27
    %s102 = sor.u32 %s100, %s101
    %p103 = scmp.eq.s32.totalorder %s102, 0
    %s105 = sadd.s32 %s104, 1
    %s106 = scalar_select %p103, %s104, %s105
    %p109 = pneg %p103
    %p110 = scmp.eq.s32.totalorder %s12, 1
    %p111 = por %p109, %p110
    %p112 = scmp.ne.s32.totalorder %s104, %s107
    %p113 = scmp.eq.s32.totalorder %s12, 0
    %p114 = por %p112, %p113
    %p115 = scmp.ne.s32.totalorder %s104, %s107
    %p116 = scmp.eq.s32.totalorder %s17, 1
    %p117 = por %p115, %p116
    %p118 = scmp.ne.s32.totalorder %s107, %s108
    %p119 = scmp.eq.s32.totalorder %s17, 0
    %p120 = por %p118, %p119
    %p121 = scmp.ne.s32.totalorder %s107, %s108
    %p122 = scmp.eq.s32.totalorder %s18, 1
    %p123 = por %p121, %p122
    %p125 = scmp.ne.s32.totalorder %s108, %s124
    %p126 = scmp.eq.s32.totalorder %s18, 0
    %p127 = por %p125, %p126
    %s128 = ssub.s32 %s19, %s31
    %s129 = ssub.s32 %s20, %s27
    %s130 = sor.u32 %s128, %s129
    %p131 = scmp.eq.s32.totalorder %s130, 0
    %s133 = sadd.s32 %s132, 1
    %s134 = scalar_select %p131, %s132, %s133
    %p137 = pneg %p131
    %p138 = scmp.eq.s32.totalorder %s12, 1
    %p139 = por %p137, %p138
    %p140 = scmp.ne.s32.totalorder %s132, %s135
    %p141 = scmp.eq.s32.totalorder %s12, 0
    %p142 = por %p140, %p141
    %p143 = scmp.ne.s32.totalorder %s132, %s135
    %p144 = scmp.eq.s32.totalorder %s17, 1
    %p145 = por %p143, %p144
    %p146 = scmp.ne.s32.totalorder %s135, %s136
    %p147 = scmp.eq.s32.totalorder %s17, 0
    %p148 = por %p146, %p147
    %p149 = scmp.ne.s32.totalorder %s135, %s136
    %p150 = scmp.eq.s32.totalorder %s18, 1
    %p151 = por %p149, %p150
    %p153 = scmp.ne.s32.totalorder %s136, %s152
    %p154 = scmp.eq.s32.totalorder %s18, 0
    %p155 = por %p153, %p154
    %s156 = ssub.s32 %s19, %s31
    %s157 = ssub.s32 %s20, %s27
    %s158 = sor.u32 %s156, %s157
    %p159 = scmp.eq.s32.totalorder %s158, 0
    %s161 = sadd.s32 %s160, 1
    %s162 = scalar_select %p159, %s160, %s161
    %p165 = pneg %p159
    %p166 = scmp.eq.s32.totalorder %s12, 1
    %p167 = por %p165, %p166
    %p168 = scmp.ne.s32.totalorder %s160, %s163
    %p169 = scmp.eq.s32.totalorder %s12, 0
    %p170 = por %p168, %p169
    %p171 = scmp.ne.s32.totalorder %s160, %s163
    %p172 = scmp.eq.s32.totalorder %s17, 1
    %p173 = por %p171, %p172
    %p174 = scmp.ne.s32.totalorder %s163, %s164
    %p175 = scmp.eq.s32.totalorder %s17, 0
    %p176 = por %p174, %p175
    %p177 = scmp.ne.s32.totalorder %s163, %s164
    %p178 = scmp.eq.s32.totalorder %s18, 1
    %p179 = por %p177, %p178
    %p181 = scmp.ne.s32.totalorder %s164, %s180
    %p182 = scmp.eq.s32.totalorder %s18, 0
    %p183 = por %p181, %p182
    %p184 = scmp.le.s32.totalorder 1, %s12
    %p185 = scmp.lt.s32.totalorder %s12, 3
    %p186 = pnand %p184, %p185
    %p187 = pneg %p186
    // Predicated region
    $region9: #{unet_conv2_xx_forward.5} parent=5 // pred_check
      _
    $region10: #{unet_conv2_xx_forward.5} parent=5 // pred_check_branch
      %189 = sbr.rel (%p186) target = $region12
    $region11: #{unet_conv2_xx_forward.5} parent=5 // pred_region
      %s190 = ssub.s32 %s12, 1
      // Predicated region
      $region13: #{unet_conv2_xx_forward.5} parent=11 // pred_check
        %p191 = pneg %p71
      $region14: #{unet_conv2_xx_forward.5} parent=11 // pred_check_branch
        %193 = sbr.rel (%p191) target = $region16
      $region15: #{unet_conv2_xx_forward.5} parent=11 // pred_region
        _
      $region16: #{unet_conv2_xx_forward.5} parent=11 // pred_fallthru
        _
      // Predicated region
      $region17: #{unet_conv2_xx_forward.5} parent=11 // pred_check
        %p194 = pneg %p92
      $region18: #{unet_conv2_xx_forward.5} parent=11 // pred_check_branch
        %196 = sbr.rel (%p194) target = $region20
      $region19: #{unet_conv2_xx_forward.5} parent=11 // pred_region
        _
      $region20: #{unet_conv2_xx_forward.5} parent=11 // pred_fallthru
        _
    $region12: #{unet_conv2_xx_forward.5} parent=5 // pred_fallthru
      _
    %p197 = scmp.lt.s32.totalorder %s12, 2
    // Predicated region
    $region21: #{unet_conv2_xx_forward.5} parent=5 // pred_check
      %p198 = pneg %p197
    $region22: #{unet_conv2_xx_forward.5} parent=5 // pred_check_branch
      %200 = sbr.rel (%p198) target = $region24
    $region23: #{unet_conv2_xx_forward.5} parent=5 // pred_region
      // Predicated region
      $region25: #{unet_conv2_xx_forward.5} parent=23 // pred_check
        %p201 = pneg %p44
      $region26: #{unet_conv2_xx_forward.5} parent=23 // pred_check_branch
        %203 = sbr.rel (%p201) target = $region28
      $region27: #{unet_conv2_xx_forward.5} parent=23 // pred_region
        %p204 = scmp.lt.s32.totalorder %s19, 1
        %s205 = scalar_select %p204, %s19, 1
        %s206 = smul.addr %s205, 60
        %s207 = smul.addr %s206, 4
        %s208 = scalar_lea.vmem %s0, %s207
      $region28: #{unet_conv2_xx_forward.5} parent=23 // pred_fallthru
        _
    $region24: #{unet_conv2_xx_forward.5} parent=5 // pred_fallthru
      _
    %p209 = scmp.le.s32.totalorder 1, %s12
    %p210 = scmp.lt.s32.totalorder %s12, 3
    %p211 = pnand %p209, %p210
    %p212 = pneg %p211
    // Predicated region
    $region29: #{unet_conv2_xx_forward.5} parent=5 // pred_check
      _
    $region30: #{unet_conv2_xx_forward.5} parent=5 // pred_check_branch
      %214 = sbr.rel (%p211) target = $region32
    $region31: #{unet_conv2_xx_forward.5} parent=5 // pred_region
      %s215 = ssub.s32 %s12, 1
      %p216 = scmp.lt.s32.totalorder %s21, 1
      %s217 = scalar_select %p216, %s21, 1
      %s218 = smul.addr %s217, 60
      %s219 = smul.addr %s218, 4
      %s220 = scalar_lea.vmem %s0, %s219
      %p221 = pneg %p50
      %p222 = pneg %p47
      %p223 = pneg %p71
      %p224 = pneg %p68
      %p225 = pneg %p92
      %p226 = pneg %p89
      %p227 = pneg %p120
      %p228 = pneg %p117
      %s229 = smul.u32 16, %s22
      %p230 = scmp.lt.s32.totalorder %s21, 1
      %s231 = scalar_select %p230, %s21, 1
      %p232 = scmp.lt.s32.totalorder %s229, 15
      %s233 = scalar_select %p232, %s229, 15
      %s234 = smul.addr %s233, 2
      %s235 = smul.addr %s231, 32
      %s236 = sadd.s32 %s234, %s235
      %s237 = smul.addr %s236, 4
      %s238 = scalar_lea.vmem %s3, %s237
      %p239 = pneg %p148
      %p240 = pneg %p145
      %s241 = smul.u32 16, %s22
      %p242 = scmp.lt.s32.totalorder %s21, 1
      %s243 = scalar_select %p242, %s21, 1
      %p244 = scmp.lt.s32.totalorder %s241, 15
      %s245 = scalar_select %p244, %s241, 15
      %s246 = smul.addr %s245, 2
      %s247 = smul.addr %s243, 32
      %s248 = sadd.s32 %s246, %s247
      %s249 = smul.addr %s248, 4
      %s250 = scalar_lea.vmem %s4, %s249
      %p251 = pneg %p176
      %p252 = pneg %p173
      %p253 = scmp.lt.s32.totalorder %s21, 1
      %s254 = scalar_select %p253, %s21, 1
      %p255 = scmp.lt.s32.totalorder %s22, 0
      %s256 = scalar_select %p255, %s22, 0
      %s257 = sadd.s32 %s256, %s254
      %s258 = smul.addr %s257, 2
      %s259 = scalar_lea.vmem %s5, %s258
      %p260 = scmp.lt.s32.totalorder %s21, 1
      %s261 = scalar_select %p260, %s21, 1
      %s262 = smul.addr %s261, 60
      %s263 = smul.addr %s262, 4
      %s264 = scalar_lea.vmem %s0, %s263
      %s265 = smul.u32 16, %s22
      %p266 = scmp.lt.s32.totalorder %s21, 1
      %s267 = scalar_select %p266, %s21, 1
      %p268 = scmp.lt.s32.totalorder %s265, 15
      %s269 = scalar_select %p268, %s265, 15
      %s270 = smul.addr %s269, 2
      %s271 = smul.addr %s267, 32
      %s272 = sadd.s32 %s270, %s271
      %s273 = smul.addr %s272, 4
      %s274 = scalar_lea.vmem %s3, %s273
      %s275 = smul.u32 16, %s22
      %s276 = smul.u32 16, %s22
      %p277 = scmp.lt.s32.totalorder %s21, 1
      %s278 = scalar_select %p277, %s21, 1
      %p279 = scmp.lt.s32.totalorder %s276, 15
      %s280 = scalar_select %p279, %s276, 15
      %s281 = smul.addr %s280, 2
      %s282 = smul.addr %s278, 32
      %s283 = sadd.s32 %s281, %s282
      %s284 = smul.addr %s283, 4
      %s285 = scalar_lea.vmem %s4, %s284
      %s286 = smul.u32 16, %s22
      %p287 = scmp.lt.s32.totalorder %s21, 1
      %s288 = scalar_select %p287, %s21, 1
      %p289 = scmp.lt.s32.totalorder %s22, 0
      %s290 = scalar_select %p289, %s22, 0
      %s291 = sadd.s32 %s290, %s288
      %s292 = smul.addr %s291, 2
      %s293 = scalar_lea.vmem %s5, %s292
      %v295 = vld [vmem:[%s264] sm:$0xf]
      %v296 = vld [vmem:[%s264 + $0x4] sm:$0xf]
      %v297 = vld [vmem:[%s264 + $0x8] sm:$0x3]
      %v298 = vld [vmem:[%s264 + $0xc] sm:$0xf]
      %v299 = vld [vmem:[%s264 + $0x10] sm:$0xf]
      %v300 = vld [vmem:[%s264 + $0x14] sm:$0x3]
      %v301 = vld [vmem:[%s264 + $0x18] sm:$0xf]
      %v302 = vld [vmem:[%s264 + $0x1c] sm:$0xf]
      %v303 = vld [vmem:[%s264 + $0x20] sm:$0x3]
      %v304 = vld [vmem:[%s264 + $0x24] sm:$0xf]
      %v305 = vld [vmem:[%s264 + $0x28] sm:$0xf]
      %v306 = vld [vmem:[%s264 + $0x2c] sm:$0x3]
      %v307 = vld [vmem:[%s264 + $0x30] sm:$0xf]
      %v308 = vld [vmem:[%s264 + $0x34] sm:$0xf]
      %v309 = vld [vmem:[%s264 + $0x38] sm:$0x3]
      %v310 = vld [vmem:[%s264 + $0x3c] sm:$0xf]
      %v311 = vld [vmem:[%s264 + $0x40] sm:$0xf]
      %v312 = vld [vmem:[%s264 + $0x44] sm:$0x3]
      %v313 = vld [vmem:[%s264 + $0x48] sm:$0xf]
      %v314 = vld [vmem:[%s264 + $0x4c] sm:$0xf]
      %v315 = vld [vmem:[%s264 + $0x50] sm:$0x3]
      %v316 = vld [vmem:[%s264 + $0x54] sm:$0xf]
      %v317 = vld [vmem:[%s264 + $0x58] sm:$0xf]
      %v318 = vld [vmem:[%s264 + $0x5c] sm:$0x3]
      %v319 = vld [vmem:[%s264 + $0x60] sm:$0xf]
      %v320 = vld [vmem:[%s264 + $0x64] sm:$0xf]
      %v321 = vld [vmem:[%s264 + $0x68] sm:$0x3]
      %v322 = vld [vmem:[%s264 + $0x6c] sm:$0xf]
      %v323 = vld [vmem:[%s264 + $0x70] sm:$0xf]
      %v324 = vld [vmem:[%s264 + $0x74] sm:$0x3]
      %v325 = vld [vmem:[%s264 + $0x78] sm:$0xf]
      %v326 = vld [vmem:[%s264 + $0x7c] sm:$0xf]
      %v327 = vld [vmem:[%s264 + $0x80] sm:$0x3]
      %v328 = vld [vmem:[%s264 + $0x84] sm:$0xf]
      %v329 = vld [vmem:[%s264 + $0x88] sm:$0xf]
      %v330 = vld [vmem:[%s264 + $0x8c] sm:$0x3]
      %v331 = vld [vmem:[%s264 + $0x90] sm:$0xf]
      %v332 = vld [vmem:[%s264 + $0x94] sm:$0xf]
      %v333 = vld [vmem:[%s264 + $0x98] sm:$0x3]
      %v334 = vld [vmem:[%s264 + $0x9c] sm:$0xf]
      %v335 = vld [vmem:[%s264 + $0xa0] sm:$0xf]
      %v336 = vld [vmem:[%s264 + $0xa4] sm:$0x3]
      %v337 = vld [vmem:[%s264 + $0xa8] sm:$0xf]
      %v338 = vld [vmem:[%s264 + $0xac] sm:$0xf]
      %v339 = vld [vmem:[%s264 + $0xb0] sm:$0x3]
      %v340 = vld [vmem:[%s264 + $0xb4] sm:$0xf]
      %v341 = vld [vmem:[%s264 + $0xb8] sm:$0xf]
      %v342 = vld [vmem:[%s264 + $0xbc] sm:$0x3]
      %v343 = vld [vmem:[%s264 + $0xc0] sm:$0xf]
      %v344 = vld [vmem:[%s264 + $0xc4] sm:$0xf]
      %v345 = vld [vmem:[%s264 + $0xc8] sm:$0x3]
      %v346 = vld [vmem:[%s264 + $0xcc] sm:$0xf]
      %v347 = vld [vmem:[%s264 + $0xd0] sm:$0xf]
      %v348 = vld [vmem:[%s264 + $0xd4] sm:$0x3]
      %v349 = vld [vmem:[%s264 + $0xd8] sm:$0xf]
      %v350 = vld [vmem:[%s264 + $0xdc] sm:$0xf]
      %v351 = vld [vmem:[%s264 + $0xe0] sm:$0x3]
      %v352 = vld [vmem:[%s264 + $0xe4] sm:$0xf]
      %v353 = vld [vmem:[%s264 + $0xe8] sm:$0xf]
      %v354 = vld [vmem:[%s264 + $0xec] sm:$0x3]
      %vm355 = vsmask.f32 3328
      %vm356 = vsmask.f32 7440
      %vm357 = vmor %vm355, %vm356
      %v359 = vshrl.u32 %v298, 16
      %v361 = vrot.slane %v359, 4
      %v362 = vshll.u32 %v298, 16
      %v364 = vrot.slane %v362, 5
      %v365 = vor.u32 %v361, %v364
      %v366 = vrot.slane %v365, 4
      %v368 = vshll.u32 %v299, 16
      %v370 = vrot.slane %v368, 5
      %v371 = vsel %vm357, %v366, %v370
      %v372 = vshrl.u32 %v299, 16
      %v374 = vrot.slane %v372, 4
      %v375 = vor.u32 %v374, %v370
      %v376 = vrot.slane %v375, 4
      %v378 = vshll.u32 %v300, 16
      %v380 = vrot.slane %v378, 5
      %v381 = vsel %vm357, %v376, %v380
      %v383 = vshrl.u32 %v301, 16
      %v385 = vrot.slane %v383, 4
      %v386 = vshll.u32 %v301, 16
      %v388 = vrot.slane %v386, 5
      %v389 = vor.u32 %v385, %v388
      %v390 = vrot.slane %v389, 4
      %v392 = vshll.u32 %v302, 16
      %v394 = vrot.slane %v392, 5
      %v395 = vsel %vm357, %v390, %v394
      %v396 = vshrl.u32 %v302, 16
      %v398 = vrot.slane %v396, 4
      %v399 = vor.u32 %v398, %v394
      %v400 = vrot.slane %v399, 4
      %v402 = vshll.u32 %v303, 16
      %v404 = vrot.slane %v402, 5
      %v405 = vsel %vm357, %v400, %v404
      %v407 = vshrl.u32 %v304, 16
      %v409 = vrot.slane %v407, 4
      %v410 = vshll.u32 %v304, 16
      %v412 = vrot.slane %v410, 5
      %v413 = vor.u32 %v409, %v412
      %v414 = vrot.slane %v413, 4
      %v416 = vshll.u32 %v305, 16
      %v418 = vrot.slane %v416, 5
      %v419 = vsel %vm357, %v414, %v418
      %v420 = vshrl.u32 %v305, 16
      %v422 = vrot.slane %v420, 4
      %v423 = vor.u32 %v422, %v418
      %v424 = vrot.slane %v423, 4
      %v426 = vshll.u32 %v306, 16
      %v428 = vrot.slane %v426, 5
      %v429 = vsel %vm357, %v424, %v428
      %v431 = vshrl.u32 %v307, 16
      %v433 = vrot.slane %v431, 4
      %v434 = vshll.u32 %v307, 16
      %v436 = vrot.slane %v434, 5
      %v437 = vor.u32 %v433, %v436
      %v438 = vrot.slane %v437, 4
      %v440 = vshll.u32 %v308, 16
      %v442 = vrot.slane %v440, 5
      %v443 = vsel %vm357, %v438, %v442
      %v444 = vshrl.u32 %v308, 16
      %v446 = vrot.slane %v444, 4
      %v447 = vor.u32 %v446, %v442
      %v448 = vrot.slane %v447, 4
      %v450 = vshll.u32 %v309, 16
      %v452 = vrot.slane %v450, 5
      %v453 = vsel %vm357, %v448, %v452
      %v455 = vshrl.u32 %v310, 16
      %v457 = vrot.slane %v455, 4
      %v458 = vshll.u32 %v310, 16
      %v460 = vrot.slane %v458, 5
      %v461 = vor.u32 %v457, %v460
      %v462 = vrot.slane %v461, 4
      %v464 = vshll.u32 %v311, 16
      %v466 = vrot.slane %v464, 5
      %v467 = vsel %vm357, %v462, %v466
      %v468 = vshrl.u32 %v311, 16
      %v470 = vrot.slane %v468, 4
      %v471 = vor.u32 %v470, %v466
      %v472 = vrot.slane %v471, 4
      %v474 = vshll.u32 %v312, 16
      %v476 = vrot.slane %v474, 5
      %v477 = vsel %vm357, %v472, %v476
      %v479 = vshrl.u32 %v313, 16
      %v481 = vrot.slane %v479, 4
      %v482 = vshll.u32 %v313, 16
      %v484 = vrot.slane %v482, 5
      %v485 = vor.u32 %v481, %v484
      %v486 = vrot.slane %v485, 4
      %v488 = vshll.u32 %v314, 16
      %v490 = vrot.slane %v488, 5
      %v491 = vsel %vm357, %v486, %v490
      %v492 = vshrl.u32 %v314, 16
      %v494 = vrot.slane %v492, 4
      %v495 = vor.u32 %v494, %v490
      %v496 = vrot.slane %v495, 4
      %v498 = vshll.u32 %v315, 16
      %v500 = vrot.slane %v498, 5
      %v501 = vsel %vm357, %v496, %v500
      %v503 = vshrl.u32 %v316, 16
      %v505 = vrot.slane %v503, 4
      %v506 = vshll.u32 %v316, 16
      %v508 = vrot.slane %v506, 5
      %v509 = vor.u32 %v505, %v508
      %v510 = vrot.slane %v509, 4
      %v512 = vshll.u32 %v317, 16
      %v514 = vrot.slane %v512, 5
      %v515 = vsel %vm357, %v510, %v514
      %v516 = vshrl.u32 %v317, 16
      %v518 = vrot.slane %v516, 4
      %v519 = vor.u32 %v518, %v514
      %v520 = vrot.slane %v519, 4
      %v522 = vshll.u32 %v318, 16
      %v524 = vrot.slane %v522, 5
      %v525 = vsel %vm357, %v520, %v524
      %v527 = vshrl.u32 %v319, 16
      %v529 = vrot.slane %v527, 4
      %v530 = vshll.u32 %v319, 16
      %v532 = vrot.slane %v530, 5
      %v533 = vor.u32 %v529, %v532
      %v534 = vrot.slane %v533, 4
      %v536 = vshll.u32 %v320, 16
      %v538 = vrot.slane %v536, 5
      %v539 = vsel %vm357, %v534, %v538
      %v540 = vshrl.u32 %v320, 16
      %v542 = vrot.slane %v540, 4
      %v543 = vor.u32 %v542, %v538
      %v544 = vrot.slane %v543, 4
      %v546 = vshll.u32 %v321, 16
      %v548 = vrot.slane %v546, 5
      %v549 = vsel %vm357, %v544, %v548
      %v551 = vshrl.u32 %v322, 16
      %v553 = vrot.slane %v551, 4
      %v554 = vshll.u32 %v322, 16
      %v556 = vrot.slane %v554, 5
      %v557 = vor.u32 %v553, %v556
      %v558 = vrot.slane %v557, 4
      %v560 = vshll.u32 %v323, 16
      %v562 = vrot.slane %v560, 5
      %v563 = vsel %vm357, %v558, %v562
      %v564 = vshrl.u32 %v323, 16
      %v566 = vrot.slane %v564, 4
      %v567 = vor.u32 %v566, %v562
      %v568 = vrot.slane %v567, 4
      %v570 = vshll.u32 %v324, 16
      %v572 = vrot.slane %v570, 5
      %v573 = vsel %vm357, %v568, %v572
      %v575 = vshrl.u32 %v325, 16
      %v577 = vrot.slane %v575, 4
      %v578 = vshll.u32 %v325, 16
      %v580 = vrot.slane %v578, 5
      %v581 = vor.u32 %v577, %v580
      %v582 = vrot.slane %v581, 4
      %v584 = vshll.u32 %v326, 16
      %v586 = vrot.slane %v584, 5
      %v587 = vsel %vm357, %v582, %v586
      %v588 = vshrl.u32 %v326, 16
      %v590 = vrot.slane %v588, 4
      %v591 = vor.u32 %v590, %v586
      %v592 = vrot.slane %v591, 4
      %v594 = vshll.u32 %v327, 16
      %v596 = vrot.slane %v594, 5
      %v597 = vsel %vm357, %v592, %v596
      %v599 = vshrl.u32 %v328, 16
      %v601 = vrot.slane %v599, 4
      %v602 = vshll.u32 %v328, 16
      %v604 = vrot.slane %v602, 5
      %v605 = vor.u32 %v601, %v604
      %v606 = vrot.slane %v605, 4
      %v608 = vshll.u32 %v329, 16
      %v610 = vrot.slane %v608, 5
      %v611 = vsel %vm357, %v606, %v610
      %v612 = vshrl.u32 %v329, 16
      %v614 = vrot.slane %v612, 4
      %v615 = vor.u32 %v614, %v610
      %v616 = vrot.slane %v615, 4
      %v618 = vshll.u32 %v330, 16
      %v620 = vrot.slane %v618, 5
      %v621 = vsel %vm357, %v616, %v620
      %v623 = vshrl.u32 %v331, 16
      %v625 = vrot.slane %v623, 4
      %v626 = vshll.u32 %v331, 16
      %v628 = vrot.slane %v626, 5
      %v629 = vor.u32 %v625, %v628
      %v630 = vrot.slane %v629, 4
      %v632 = vshll.u32 %v332, 16
      %v634 = vrot.slane %v632, 5
      %v635 = vsel %vm357, %v630, %v634
      %v636 = vshrl.u32 %v332, 16
      %v638 = vrot.slane %v636, 4
      %v639 = vor.u32 %v638, %v634
      %v640 = vrot.slane %v639, 4
      %v642 = vshll.u32 %v333, 16
      %v644 = vrot.slane %v642, 5
      %v645 = vsel %vm357, %v640, %v644
      %v647 = vshrl.u32 %v334, 16
      %v649 = vrot.slane %v647, 4
      %v650 = vshll.u32 %v334, 16
      %v652 = vrot.slane %v650, 5
      %v653 = vor.u32 %v649, %v652
      %v654 = vrot.slane %v653, 4
      %v656 = vshll.u32 %v335, 16
      %v658 = vrot.slane %v656, 5
      %v659 = vsel %vm357, %v654, %v658
      %v660 = vshrl.u32 %v335, 16
      %v662 = vrot.slane %v660, 4
      %v663 = vor.u32 %v662, %v658
      %v664 = vrot.slane %v663, 4
      %v666 = vshll.u32 %v336, 16
      %v668 = vrot.slane %v666, 5
      %v669 = vsel %vm357, %v664, %v668
      %v671 = vshrl.u32 %v337, 16
      %v673 = vrot.slane %v671, 4
      %v674 = vshll.u32 %v337, 16
      %v676 = vrot.slane %v674, 5
      %v677 = vor.u32 %v673, %v676
      %v678 = vrot.slane %v677, 4
      %v680 = vshll.u32 %v338, 16
      %v682 = vrot.slane %v680, 5
      %v683 = vsel %vm357, %v678, %v682
      %v684 = vshrl.u32 %v338, 16
      %v686 = vrot.slane %v684, 4
      %v687 = vor.u32 %v686, %v682
      %v688 = vrot.slane %v687, 4
      %v690 = vshll.u32 %v339, 16
      %v692 = vrot.slane %v690, 5
      %v693 = vsel %vm357, %v688, %v692
      %v695 = vshrl.u32 %v340, 16
      %v697 = vrot.slane %v695, 4
      %v698 = vshll.u32 %v340, 16
      %v700 = vrot.slane %v698, 5
      %v701 = vor.u32 %v697, %v700
      %v702 = vrot.slane %v701, 4
      %v704 = vshll.u32 %v341, 16
      %v706 = vrot.slane %v704, 5
      %v707 = vsel %vm357, %v702, %v706
      %v708 = vshrl.u32 %v341, 16
      %v710 = vrot.slane %v708, 4
      %v711 = vor.u32 %v710, %v706
      %v712 = vrot.slane %v711, 4
      %v714 = vshll.u32 %v342, 16
      %v716 = vrot.slane %v714, 5
      %v717 = vsel %vm357, %v712, %v716
      %v719 = vshrl.u32 %v343, 16
      %v721 = vrot.slane %v719, 4
      %v722 = vshll.u32 %v343, 16
      %v724 = vrot.slane %v722, 5
      %v725 = vor.u32 %v721, %v724
      %v726 = vrot.slane %v725, 4
      %v728 = vshll.u32 %v344, 16
      %v730 = vrot.slane %v728, 5
      %v731 = vsel %vm357, %v726, %v730
      %v732 = vshrl.u32 %v344, 16
      %v734 = vrot.slane %v732, 4
      %v735 = vor.u32 %v734, %v730
      %v736 = vrot.slane %v735, 4
      %v738 = vshll.u32 %v345, 16
      %v740 = vrot.slane %v738, 5
      %v741 = vsel %vm357, %v736, %v740
      %v743 = vshrl.u32 %v346, 16
      %v745 = vrot.slane %v743, 4
      %v746 = vshll.u32 %v346, 16
      %v748 = vrot.slane %v746, 5
      %v749 = vor.u32 %v745, %v748
      %v750 = vrot.slane %v749, 4
      %v752 = vshll.u32 %v347, 16
      %v754 = vrot.slane %v752, 5
      %v755 = vsel %vm357, %v750, %v754
      %v756 = vshrl.u32 %v347, 16
      %v758 = vrot.slane %v756, 4
      %v759 = vor.u32 %v758, %v754
      %v760 = vrot.slane %v759, 4
      %v762 = vshll.u32 %v348, 16
      %v764 = vrot.slane %v762, 5
      %v765 = vsel %vm357, %v760, %v764
      %v767 = vshrl.u32 %v349, 16
      %v769 = vrot.slane %v767, 4
      %v770 = vshll.u32 %v349, 16
      %v772 = vrot.slane %v770, 5
      %v773 = vor.u32 %v769, %v772
      %v774 = vrot.slane %v773, 4
      %v776 = vshll.u32 %v350, 16
      %v778 = vrot.slane %v776, 5
      %v779 = vsel %vm357, %v774, %v778
      %v780 = vshrl.u32 %v350, 16
      %v782 = vrot.slane %v780, 4
      %v783 = vor.u32 %v782, %v778
      %v784 = vrot.slane %v783, 4
      %v786 = vshll.u32 %v351, 16
      %v788 = vrot.slane %v786, 5
      %v789 = vsel %vm357, %v784, %v788
      %vm850 = vcmask 1042432
      %vm851 = vcmask 1046532
      %vm852 = vmor %vm850, %vm851
      %v853 = vrot.slane %v295, 5
      %v854 = vrot.slane %v853, 4
      %v855 = vrot.slane %v296, 5
      %v856 = vsel %vm852, %v854, %v855
      %v857 = vrot.slane %v855, 4
      %v858 = vrot.slane %v297, 5
      %v859 = vsel %vm852, %v857, %v858
      %v860 = vrot.slane %v298, 5
      %v861 = vrot.slane %v860, 4
      %v862 = vrot.slane %v299, 5
      %v863 = vsel %vm852, %v861, %v862
      %v864 = vrot.slane %v862, 4
      %v865 = vrot.slane %v300, 5
      %v866 = vsel %vm852, %v864, %v865
      %v867 = vrot.slane %v301, 5
      %v868 = vrot.slane %v867, 4
      %v869 = vrot.slane %v302, 5
      %v870 = vsel %vm852, %v868, %v869
      %v871 = vrot.slane %v869, 4
      %v872 = vrot.slane %v303, 5
      %v873 = vsel %vm852, %v871, %v872
      %v874 = vrot.slane %v304, 5
      %v875 = vrot.slane %v874, 4
      %v876 = vrot.slane %v305, 5
      %v877 = vsel %vm852, %v875, %v876
      %v878 = vrot.slane %v876, 4
      %v879 = vrot.slane %v306, 5
      %v880 = vsel %vm852, %v878, %v879
      %v881 = vrot.slane %v307, 5
      %v882 = vrot.slane %v881, 4
      %v883 = vrot.slane %v308, 5
      %v884 = vsel %vm852, %v882, %v883
      %v885 = vrot.slane %v883, 4
      %v886 = vrot.slane %v309, 5
      %v887 = vsel %vm852, %v885, %v886
      %v888 = vrot.slane %v310, 5
      %v889 = vrot.slane %v888, 4
      %v890 = vrot.slane %v311, 5
      %v891 = vsel %vm852, %v889, %v890
      %v892 = vrot.slane %v890, 4
      %v893 = vrot.slane %v312, 5
      %v894 = vsel %vm852, %v892, %v893
      %v895 = vrot.slane %v313, 5
      %v896 = vrot.slane %v895, 4
      %v897 = vrot.slane %v314, 5
      %v898 = vsel %vm852, %v896, %v897
      %v899 = vrot.slane %v897, 4
      %v900 = vrot.slane %v315, 5
      %v901 = vsel %vm852, %v899, %v900
      %v902 = vrot.slane %v316, 5
      %v903 = vrot.slane %v902, 4
      %v904 = vrot.slane %v317, 5
      %v905 = vsel %vm852, %v903, %v904
      %v906 = vrot.slane %v904, 4
      %v907 = vrot.slane %v318, 5
      %v908 = vsel %vm852, %v906, %v907
      %v909 = vrot.slane %v319, 5
      %v910 = vrot.slane %v909, 4
      %v911 = vrot.slane %v320, 5
      %v912 = vsel %vm852, %v910, %v911
      %v913 = vrot.slane %v911, 4
      %v914 = vrot.slane %v321, 5
      %v915 = vsel %vm852, %v913, %v914
      %v916 = vrot.slane %v322, 5
      %v917 = vrot.slane %v916, 4
      %v918 = vrot.slane %v323, 5
      %v919 = vsel %vm852, %v917, %v918
      %v920 = vrot.slane %v918, 4
      %v921 = vrot.slane %v324, 5
      %v922 = vsel %vm852, %v920, %v921
      %v923 = vrot.slane %v325, 5
      %v924 = vrot.slane %v923, 4
      %v925 = vrot.slane %v326, 5
      %v926 = vsel %vm852, %v924, %v925
      %v927 = vrot.slane %v925, 4
      %v928 = vrot.slane %v327, 5
      %v929 = vsel %vm852, %v927, %v928
      %v930 = vrot.slane %v328, 5
      %v931 = vrot.slane %v930, 4
      %v932 = vrot.slane %v329, 5
      %v933 = vsel %vm852, %v931, %v932
      %v934 = vrot.slane %v932, 4
      %v935 = vrot.slane %v330, 5
      %v936 = vsel %vm852, %v934, %v935
      %v937 = vrot.slane %v331, 5
      %v938 = vrot.slane %v937, 4
      %v939 = vrot.slane %v332, 5
      %v940 = vsel %vm852, %v938, %v939
      %v941 = vrot.slane %v939, 4
      %v942 = vrot.slane %v333, 5
      %v943 = vsel %vm852, %v941, %v942
      %v944 = vrot.slane %v334, 5
      %v945 = vrot.slane %v944, 4
      %v946 = vrot.slane %v335, 5
      %v947 = vsel %vm852, %v945, %v946
      %v948 = vrot.slane %v946, 4
      %v949 = vrot.slane %v336, 5
      %v950 = vsel %vm852, %v948, %v949
      %v951 = vrot.slane %v337, 5
      %v952 = vrot.slane %v951, 4
      %v953 = vrot.slane %v338, 5
      %v954 = vsel %vm852, %v952, %v953
      %v955 = vrot.slane %v953, 4
      %v956 = vrot.slane %v339, 5
      %v957 = vsel %vm852, %v955, %v956
      %v958 = vrot.slane %v340, 5
      %v959 = vrot.slane %v958, 4
      %v960 = vrot.slane %v341, 5
      %v961 = vsel %vm852, %v959, %v960
      %v962 = vrot.slane %v960, 4
      %v963 = vrot.slane %v342, 5
      %v964 = vsel %vm852, %v962, %v963
      %v965 = vrot.slane %v343, 5
      %v966 = vrot.slane %v965, 4
      %v967 = vrot.slane %v344, 5
      %v968 = vsel %vm852, %v966, %v967
      %v969 = vrot.slane %v967, 4
      %v970 = vrot.slane %v345, 5
      %v971 = vsel %vm852, %v969, %v970
      %v972 = vrot.slane %v346, 5
      %v973 = vrot.slane %v972, 4
      %v974 = vrot.slane %v347, 5
      %v975 = vsel %vm852, %v973, %v974
      %v976 = vrot.slane %v974, 4
      %v977 = vrot.slane %v348, 5
      %v978 = vsel %vm852, %v976, %v977
      %v979 = vrot.slane %v349, 5
      %v980 = vrot.slane %v979, 4
      %v981 = vrot.slane %v350, 5
      %v982 = vsel %vm852, %v980, %v981
      %v983 = vrot.slane %v981, 4
      %v984 = vrot.slane %v351, 5
      %v985 = vsel %vm852, %v983, %v984
      %v986 = vrot.slane %v352, 5
      %v987 = vrot.slane %v986, 4
      %v988 = vrot.slane %v353, 5
      %v989 = vsel %vm852, %v987, %v988
      %v990 = vrot.slane %v988, 4
      %v991 = vrot.slane %v354, 5
      %v992 = vsel %vm852, %v990, %v991
      %vm993 = vsmask.f32 2304
      %vm994 = vsmask.f32 6416
      %vm995 = vmor %vm993, %vm994
      %v996 = vrot.slane %v359, 5
      %v997 = vrot.slane %v362, 6
      %v998 = vor.u32 %v996, %v997
      %v999 = vrot.slane %v998, 4
      %v1000 = vrot.slane %v372, 5
      %v1001 = vrot.slane %v368, 6
      %v1002 = vor.u32 %v1000, %v1001
      %v1003 = vsel %vm995, %v999, %v1002
      %v1004 = vrot.slane %v1002, 4
      %v1005 = vshrl.u32 %v300, 16
      %v1007 = vrot.slane %v1005, 5
      %v1008 = vrot.slane %v378, 6
      %v1009 = vor.u32 %v1007, %v1008
      %v1010 = vsel %vm995, %v1004, %v1009
      %v1011 = vrot.slane %v383, 5
      %v1012 = vrot.slane %v386, 6
      %v1013 = vor.u32 %v1011, %v1012
      %v1014 = vrot.slane %v1013, 4
      %v1015 = vrot.slane %v396, 5
      %v1016 = vrot.slane %v392, 6
      %v1017 = vor.u32 %v1015, %v1016
      %v1018 = vsel %vm995, %v1014, %v1017
      %v1019 = vrot.slane %v1017, 4
      %v1020 = vshrl.u32 %v303, 16
      %v1022 = vrot.slane %v1020, 5
      %v1023 = vrot.slane %v402, 6
      %v1024 = vor.u32 %v1022, %v1023
      %v1025 = vsel %vm995, %v1019, %v1024
      %v1026 = vrot.slane %v407, 5
      %v1027 = vrot.slane %v410, 6
      %v1028 = vor.u32 %v1026, %v1027
      %v1029 = vrot.slane %v1028, 4
      %v1030 = vrot.slane %v420, 5
      %v1031 = vrot.slane %v416, 6
      %v1032 = vor.u32 %v1030, %v1031
      %v1033 = vsel %vm995, %v1029, %v1032
      %v1034 = vrot.slane %v1032, 4
      %v1035 = vshrl.u32 %v306, 16
      %v1037 = vrot.slane %v1035, 5
      %v1038 = vrot.slane %v426, 6
      %v1039 = vor.u32 %v1037, %v1038
      %v1040 = vsel %vm995, %v1034, %v1039
      %v1041 = vrot.slane %v431, 5
      %v1042 = vrot.slane %v434, 6
      %v1043 = vor.u32 %v1041, %v1042
      %v1044 = vrot.slane %v1043, 4
      %v1045 = vrot.slane %v444, 5
      %v1046 = vrot.slane %v440, 6
      %v1047 = vor.u32 %v1045, %v1046
      %v1048 = vsel %vm995, %v1044, %v1047
      %v1049 = vrot.slane %v1047, 4
      %v1050 = vshrl.u32 %v309, 16
      %v1052 = vrot.slane %v1050, 5
      %v1053 = vrot.slane %v450, 6
      %v1054 = vor.u32 %v1052, %v1053
      %v1055 = vsel %vm995, %v1049, %v1054
      %v1056 = vrot.slane %v455, 5
      %v1057 = vrot.slane %v458, 6
      %v1058 = vor.u32 %v1056, %v1057
      %v1059 = vrot.slane %v1058, 4
      %v1060 = vrot.slane %v468, 5
      %v1061 = vrot.slane %v464, 6
      %v1062 = vor.u32 %v1060, %v1061
      %v1063 = vsel %vm995, %v1059, %v1062
      %v1064 = vrot.slane %v1062, 4
      %v1065 = vshrl.u32 %v312, 16
      %v1067 = vrot.slane %v1065, 5
      %v1068 = vrot.slane %v474, 6
      %v1069 = vor.u32 %v1067, %v1068
      %v1070 = vsel %vm995, %v1064, %v1069
      %v1071 = vrot.slane %v479, 5
      %v1072 = vrot.slane %v482, 6
      %v1073 = vor.u32 %v1071, %v1072
      %v1074 = vrot.slane %v1073, 4
      %v1075 = vrot.slane %v492, 5
      %v1076 = vrot.slane %v488, 6
      %v1077 = vor.u32 %v1075, %v1076
      %v1078 = vsel %vm995, %v1074, %v1077
      %v1079 = vrot.slane %v1077, 4
      %v1080 = vshrl.u32 %v315, 16
      %v1082 = vrot.slane %v1080, 5
      %v1083 = vrot.slane %v498, 6
      %v1084 = vor.u32 %v1082, %v1083
      %v1085 = vsel %vm995, %v1079, %v1084
      %v1086 = vrot.slane %v503, 5
      %v1087 = vrot.slane %v506, 6
      %v1088 = vor.u32 %v1086, %v1087
      %v1089 = vrot.slane %v1088, 4
      %v1090 = vrot.slane %v516, 5
      %v1091 = vrot.slane %v512, 6
      %v1092 = vor.u32 %v1090, %v1091
      %v1093 = vsel %vm995, %v1089, %v1092
      %v1094 = vrot.slane %v1092, 4
      %v1095 = vshrl.u32 %v318, 16
      %v1097 = vrot.slane %v1095, 5
      %v1098 = vrot.slane %v522, 6
      %v1099 = vor.u32 %v1097, %v1098
      %v1100 = vsel %vm995, %v1094, %v1099
      %v1101 = vrot.slane %v527, 5
      %v1102 = vrot.slane %v530, 6
      %v1103 = vor.u32 %v1101, %v1102
      %v1104 = vrot.slane %v1103, 4
      %v1105 = vrot.slane %v540, 5
      %v1106 = vrot.slane %v536, 6
      %v1107 = vor.u32 %v1105, %v1106
      %v1108 = vsel %vm995, %v1104, %v1107
      %v1109 = vrot.slane %v1107, 4
      %v1110 = vshrl.u32 %v321, 16
      %v1112 = vrot.slane %v1110, 5
      %v1113 = vrot.slane %v546, 6
      %v1114 = vor.u32 %v1112, %v1113
      %v1115 = vsel %vm995, %v1109, %v1114
      %v1116 = vrot.slane %v551, 5
      %v1117 = vrot.slane %v554, 6
      %v1118 = vor.u32 %v1116, %v1117
      %v1119 = vrot.slane %v1118, 4
      %v1120 = vrot.slane %v564, 5
      %v1121 = vrot.slane %v560, 6
      %v1122 = vor.u32 %v1120, %v1121
      %v1123 = vsel %vm995, %v1119, %v1122
      %v1124 = vrot.slane %v1122, 4
      %v1125 = vshrl.u32 %v324, 16
      %v1127 = vrot.slane %v1125, 5
      %v1128 = vrot.slane %v570, 6
      %v1129 = vor.u32 %v1127, %v1128
      %v1130 = vsel %vm995, %v1124, %v1129
      %v1131 = vrot.slane %v575, 5
      %v1132 = vrot.slane %v578, 6
      %v1133 = vor.u32 %v1131, %v1132
      %v1134 = vrot.slane %v1133, 4
      %v1135 = vrot.slane %v588, 5
      %v1136 = vrot.slane %v584, 6
      %v1137 = vor.u32 %v1135, %v1136
      %v1138 = vsel %vm995, %v1134, %v1137
      %v1139 = vrot.slane %v1137, 4
      %v1140 = vshrl.u32 %v327, 16
      %v1142 = vrot.slane %v1140, 5
      %v1143 = vrot.slane %v594, 6
      %v1144 = vor.u32 %v1142, %v1143
      %v1145 = vsel %vm995, %v1139, %v1144
      %v1146 = vrot.slane %v599, 5
      %v1147 = vrot.slane %v602, 6
      %v1148 = vor.u32 %v1146, %v1147
      %v1149 = vrot.slane %v1148, 4
      %v1150 = vrot.slane %v612, 5
      %v1151 = vrot.slane %v608, 6
      %v1152 = vor.u32 %v1150, %v1151
      %v1153 = vsel %vm995, %v1149, %v1152
      %v1154 = vrot.slane %v1152, 4
      %v1155 = vshrl.u32 %v330, 16
      %v1157 = vrot.slane %v1155, 5
      %v1158 = vrot.slane %v618, 6
      %v1159 = vor.u32 %v1157, %v1158
      %v1160 = vsel %vm995, %v1154, %v1159
      %v1161 = vrot.slane %v623, 5
      %v1162 = vrot.slane %v626, 6
      %v1163 = vor.u32 %v1161, %v1162
      %v1164 = vrot.slane %v1163, 4
      %v1165 = vrot.slane %v636, 5
      %v1166 = vrot.slane %v632, 6
      %v1167 = vor.u32 %v1165, %v1166
      %v1168 = vsel %vm995, %v1164, %v1167
      %v1169 = vrot.slane %v1167, 4
      %v1170 = vshrl.u32 %v333, 16
      %v1172 = vrot.slane %v1170, 5
      %v1173 = vrot.slane %v642, 6
      %v1174 = vor.u32 %v1172, %v1173
      %v1175 = vsel %vm995, %v1169, %v1174
      %v1176 = vrot.slane %v647, 5
      %v1177 = vrot.slane %v650, 6
      %v1178 = vor.u32 %v1176, %v1177
      %v1179 = vrot.slane %v1178, 4
      %v1180 = vrot.slane %v660, 5
      %v1181 = vrot.slane %v656, 6
      %v1182 = vor.u32 %v1180, %v1181
      %v1183 = vsel %vm995, %v1179, %v1182
      %v1184 = vrot.slane %v1182, 4
      %v1185 = vshrl.u32 %v336, 16
      %v1187 = vrot.slane %v1185, 5
      %v1188 = vrot.slane %v666, 6
      %v1189 = vor.u32 %v1187, %v1188
      %v1190 = vsel %vm995, %v1184, %v1189
      %v1191 = vrot.slane %v671, 5
      %v1192 = vrot.slane %v674, 6
      %v1193 = vor.u32 %v1191, %v1192
      %v1194 = vrot.slane %v1193, 4
      %v1195 = vrot.slane %v684, 5
      %v1196 = vrot.slane %v680, 6
      %v1197 = vor.u32 %v1195, %v1196
      %v1198 = vsel %vm995, %v1194, %v1197
      %v1199 = vrot.slane %v1197, 4
      %v1200 = vshrl.u32 %v339, 16
      %v1202 = vrot.slane %v1200, 5
      %v1203 = vrot.slane %v690, 6
      %v1204 = vor.u32 %v1202, %v1203
      %v1205 = vsel %vm995, %v1199, %v1204
      %v1206 = vrot.slane %v695, 5
      %v1207 = vrot.slane %v698, 6
      %v1208 = vor.u32 %v1206, %v1207
      %v1209 = vrot.slane %v1208, 4
      %v1210 = vrot.slane %v708, 5
      %v1211 = vrot.slane %v704, 6
      %v1212 = vor.u32 %v1210, %v1211
      %v1213 = vsel %vm995, %v1209, %v1212
      %v1214 = vrot.slane %v1212, 4
      %v1215 = vshrl.u32 %v342, 16
      %v1217 = vrot.slane %v1215, 5
      %v1218 = vrot.slane %v714, 6
      %v1219 = vor.u32 %v1217, %v1218
      %v1220 = vsel %vm995, %v1214, %v1219
      %v1221 = vrot.slane %v719, 5
      %v1222 = vrot.slane %v722, 6
      %v1223 = vor.u32 %v1221, %v1222
      %v1224 = vrot.slane %v1223, 4
      %v1225 = vrot.slane %v732, 5
      %v1226 = vrot.slane %v728, 6
      %v1227 = vor.u32 %v1225, %v1226
      %v1228 = vsel %vm995, %v1224, %v1227
      %v1229 = vrot.slane %v1227, 4
      %v1230 = vshrl.u32 %v345, 16
      %v1232 = vrot.slane %v1230, 5
      %v1233 = vrot.slane %v738, 6
      %v1234 = vor.u32 %v1232, %v1233
      %v1235 = vsel %vm995, %v1229, %v1234
      %v1236 = vrot.slane %v743, 5
      %v1237 = vrot.slane %v746, 6
      %v1238 = vor.u32 %v1236, %v1237
      %v1239 = vrot.slane %v1238, 4
      %v1240 = vrot.slane %v756, 5
      %v1241 = vrot.slane %v752, 6
      %v1242 = vor.u32 %v1240, %v1241
      %v1243 = vsel %vm995, %v1239, %v1242
      %v1244 = vrot.slane %v1242, 4
      %v1245 = vshrl.u32 %v348, 16
      %v1247 = vrot.slane %v1245, 5
      %v1248 = vrot.slane %v762, 6
      %v1249 = vor.u32 %v1247, %v1248
      %v1250 = vsel %vm995, %v1244, %v1249
      %v1251 = vrot.slane %v767, 5
      %v1252 = vrot.slane %v770, 6
      %v1253 = vor.u32 %v1251, %v1252
      %v1254 = vrot.slane %v1253, 4
      %v1255 = vrot.slane %v780, 5
      %v1256 = vrot.slane %v776, 6
      %v1257 = vor.u32 %v1255, %v1256
      %v1258 = vsel %vm995, %v1254, %v1257
      %v1259 = vrot.slane %v1257, 4
      %v1260 = vshrl.u32 %v351, 16
      %v1262 = vrot.slane %v1260, 5
      %v1263 = vrot.slane %v786, 6
      %v1264 = vor.u32 %v1262, %v1263
      %v1265 = vsel %vm995, %v1259, %v1264
      %vm1266 = vcmask 1041408
      %vm1267 = vcmask 1045508
      %vm1268 = vmor %vm1266, %vm1267
      %v1269 = vrot.slane %v295, 6
      %v1270 = vrot.slane %v1269, 4
      %v1271 = vrot.slane %v296, 6
      %v1272 = vsel %vm1268, %v1270, %v1271
      %v1273 = vrot.slane %v1271, 4
      %v1274 = vrot.slane %v297, 6
      %v1275 = vsel %vm1268, %v1273, %v1274
      %v1276 = vrot.slane %v298, 6
      %v1277 = vrot.slane %v1276, 4
      %v1278 = vrot.slane %v299, 6
      %v1279 = vsel %vm1268, %v1277, %v1278
      %v1280 = vrot.slane %v1278, 4
      %v1281 = vrot.slane %v300, 6
      %v1282 = vsel %vm1268, %v1280, %v1281
      %v1283 = vrot.slane %v301, 6
      %v1284 = vrot.slane %v1283, 4
      %v1285 = vrot.slane %v302, 6
      %v1286 = vsel %vm1268, %v1284, %v1285
      %v1287 = vrot.slane %v1285, 4
      %v1288 = vrot.slane %v303, 6
      %v1289 = vsel %vm1268, %v1287, %v1288
      %v1290 = vrot.slane %v304, 6
      %v1291 = vrot.slane %v1290, 4
      %v1292 = vrot.slane %v305, 6
      %v1293 = vsel %vm1268, %v1291, %v1292
      %v1294 = vrot.slane %v1292, 4
      %v1295 = vrot.slane %v306, 6
      %v1296 = vsel %vm1268, %v1294, %v1295
      %v1297 = vrot.slane %v307, 6
      %v1298 = vrot.slane %v1297, 4
      %v1299 = vrot.slane %v308, 6
      %v1300 = vsel %vm1268, %v1298, %v1299
      %v1301 = vrot.slane %v1299, 4
      %v1302 = vrot.slane %v309, 6
      %v1303 = vsel %vm1268, %v1301, %v1302
      %v1304 = vrot.slane %v310, 6
      %v1305 = vrot.slane %v1304, 4
      %v1306 = vrot.slane %v311, 6
      %v1307 = vsel %vm1268, %v1305, %v1306
      %v1308 = vrot.slane %v1306, 4
      %v1309 = vrot.slane %v312, 6
      %v1310 = vsel %vm1268, %v1308, %v1309
      %v1311 = vrot.slane %v313, 6
      %v1312 = vrot.slane %v1311, 4
      %v1313 = vrot.slane %v314, 6
      %v1314 = vsel %vm1268, %v1312, %v1313
      %v1315 = vrot.slane %v1313, 4
      %v1316 = vrot.slane %v315, 6
      %v1317 = vsel %vm1268, %v1315, %v1316
      %v1318 = vrot.slane %v316, 6
      %v1319 = vrot.slane %v1318, 4
      %v1320 = vrot.slane %v317, 6
      %v1321 = vsel %vm1268, %v1319, %v1320
      %v1322 = vrot.slane %v1320, 4
      %v1323 = vrot.slane %v318, 6
      %v1324 = vsel %vm1268, %v1322, %v1323
      %v1325 = vrot.slane %v319, 6
      %v1326 = vrot.slane %v1325, 4
      %v1327 = vrot.slane %v320, 6
      %v1328 = vsel %vm1268, %v1326, %v1327
      %v1329 = vrot.slane %v1327, 4
      %v1330 = vrot.slane %v321, 6
      %v1331 = vsel %vm1268, %v1329, %v1330
      %v1332 = vrot.slane %v322, 6
      %v1333 = vrot.slane %v1332, 4
      %v1334 = vrot.slane %v323, 6
      %v1335 = vsel %vm1268, %v1333, %v1334
      %v1336 = vrot.slane %v1334, 4
      %v1337 = vrot.slane %v324, 6
      %v1338 = vsel %vm1268, %v1336, %v1337
      %v1339 = vrot.slane %v325, 6
      %v1340 = vrot.slane %v1339, 4
      %v1341 = vrot.slane %v326, 6
      %v1342 = vsel %vm1268, %v1340, %v1341
      %v1343 = vrot.slane %v1341, 4
      %v1344 = vrot.slane %v327, 6
      %v1345 = vsel %vm1268, %v1343, %v1344
      %v1346 = vrot.slane %v328, 6
      %v1347 = vrot.slane %v1346, 4
      %v1348 = vrot.slane %v329, 6
      %v1349 = vsel %vm1268, %v1347, %v1348
      %v1350 = vrot.slane %v1348, 4
      %v1351 = vrot.slane %v330, 6
      %v1352 = vsel %vm1268, %v1350, %v1351
      %v1353 = vrot.slane %v331, 6
      %v1354 = vrot.slane %v1353, 4
      %v1355 = vrot.slane %v332, 6
      %v1356 = vsel %vm1268, %v1354, %v1355
      %v1357 = vrot.slane %v1355, 4
      %v1358 = vrot.slane %v333, 6
      %v1359 = vsel %vm1268, %v1357, %v1358
      %v1360 = vrot.slane %v334, 6
      %v1361 = vrot.slane %v1360, 4
      %v1362 = vrot.slane %v335, 6
      %v1363 = vsel %vm1268, %v1361, %v1362
      %v1364 = vrot.slane %v1362, 4
      %v1365 = vrot.slane %v336, 6
      %v1366 = vsel %vm1268, %v1364, %v1365
      %v1367 = vrot.slane %v337, 6
      %v1368 = vrot.slane %v1367, 4
      %v1369 = vrot.slane %v338, 6
      %v1370 = vsel %vm1268, %v1368, %v1369
      %v1371 = vrot.slane %v1369, 4
      %v1372 = vrot.slane %v339, 6
      %v1373 = vsel %vm1268, %v1371, %v1372
      %v1374 = vrot.slane %v340, 6
      %v1375 = vrot.slane %v1374, 4
      %v1376 = vrot.slane %v341, 6
      %v1377 = vsel %vm1268, %v1375, %v1376
      %v1378 = vrot.slane %v1376, 4
      %v1379 = vrot.slane %v342, 6
      %v1380 = vsel %vm1268, %v1378, %v1379
      %v1381 = vrot.slane %v343, 6
      %v1382 = vrot.slane %v1381, 4
      %v1383 = vrot.slane %v344, 6
      %v1384 = vsel %vm1268, %v1382, %v1383
      %v1385 = vrot.slane %v1383, 4
      %v1386 = vrot.slane %v345, 6
      %v1387 = vsel %vm1268, %v1385, %v1386
      %v1388 = vrot.slane %v346, 6
      %v1389 = vrot.slane %v1388, 4
      %v1390 = vrot.slane %v347, 6
      %v1391 = vsel %vm1268, %v1389, %v1390
      %v1392 = vrot.slane %v1390, 4
      %v1393 = vrot.slane %v348, 6
      %v1394 = vsel %vm1268, %v1392, %v1393
      %v1395 = vrot.slane %v349, 6
      %v1396 = vrot.slane %v1395, 4
      %v1397 = vrot.slane %v350, 6
      %v1398 = vsel %vm1268, %v1396, %v1397
      %v1399 = vrot.slane %v1397, 4
      %v1400 = vrot.slane %v351, 6
      %v1401 = vsel %vm1268, %v1399, %v1400
      %v1402 = vrot.slane %v352, 6
      %v1403 = vrot.slane %v1402, 4
      %v1404 = vrot.slane %v353, 6
      %v1405 = vsel %vm1268, %v1403, %v1404
      %v1406 = vrot.slane %v1404, 4
      %v1407 = vrot.slane %v354, 6
      %v1408 = vsel %vm1268, %v1406, %v1407
      %v1409 = vunpack.c.l.b16 %v295
      %v1410 = vunpack.c.l.b16 %v296
      %v1411 = vunpack.c.l.b16 %v298
      %v1412 = vunpack.c.l.b16 %v299
      %v1413 = vunpack.c.l.b16 %v301
      %v1414 = vunpack.c.l.b16 %v302
      %v1415 = vunpack.c.l.b16 %v304
      %v1416 = vunpack.c.l.b16 %v305
      %v1417 = vunpack.c.l.b16 %v307
      %v1418 = vunpack.c.l.b16 %v308
      %v1419 = vunpack.c.l.b16 %v310
      %v1420 = vunpack.c.l.b16 %v311
      %v1421 = vunpack.c.l.b16 %v313
      %v1422 = vunpack.c.l.b16 %v314
      %v1423 = vunpack.c.l.b16 %v316
      %v1424 = vunpack.c.l.b16 %v317
      %v1425 = vunpack.c.l.b16 %v319
      %v1426 = vunpack.c.l.b16 %v320
      %v1427 = vunpack.c.l.b16 %v322
      %v1428 = vunpack.c.l.b16 %v323
      %v1429 = vunpack.c.l.b16 %v325
      %v1430 = vunpack.c.l.b16 %v326
      %v1431 = vunpack.c.l.b16 %v328
      %v1432 = vunpack.c.l.b16 %v329
      %v1433 = vunpack.c.l.b16 %v331
      %v1434 = vunpack.c.l.b16 %v332
      %v1435 = vunpack.c.l.b16 %v334
      %v1436 = vunpack.c.l.b16 %v335
      %v1437 = vunpack.c.l.b16 %v337
      %v1438 = vunpack.c.l.b16 %v338
      %v1439 = vunpack.c.l.b16 %v340
      %v1440 = vunpack.c.l.b16 %v341
      %v1441 = vpack.c.b16 %v1410, %v1409
      %v1442 = vpack.c.b16 %v1412, %v1411
      %v1443 = vpack.c.b16 %v1414, %v1413
      %v1444 = vpack.c.b16 %v1416, %v1415
      %v1445 = vpack.c.b16 %v1418, %v1417
      %v1446 = vpack.c.b16 %v1420, %v1419
      %v1447 = vpack.c.b16 %v1422, %v1421
      %v1448 = vpack.c.b16 %v1424, %v1423
      %v1449 = vpack.c.b16 %v1426, %v1425
      %v1450 = vpack.c.b16 %v1428, %v1427
      %v1451 = vpack.c.b16 %v1430, %v1429
      %v1452 = vpack.c.b16 %v1432, %v1431
      %v1453 = vpack.c.b16 %v1434, %v1433
      %v1454 = vpack.c.b16 %v1436, %v1435
      %v1455 = vpack.c.b16 %v1438, %v1437
      %v1456 = vpack.c.b16 %v1440, %v1439
      %v1457 = vunpack.c.l.b16 %v856
      %v1458 = vunpack.c.l.b16 %v859
      %v1459 = vunpack.c.l.b16 %v863
      %v1460 = vunpack.c.l.b16 %v866
      %v1461 = vunpack.c.l.b16 %v870
      %v1462 = vunpack.c.l.b16 %v873
      %v1463 = vunpack.c.l.b16 %v877
      %v1464 = vunpack.c.l.b16 %v880
      %v1465 = vunpack.c.l.b16 %v884
      %v1466 = vunpack.c.l.b16 %v887
      %v1467 = vunpack.c.l.b16 %v891
      %v1468 = vunpack.c.l.b16 %v894
      %v1469 = vunpack.c.l.b16 %v898
      %v1470 = vunpack.c.l.b16 %v901
      %v1471 = vunpack.c.l.b16 %v905
      %v1472 = vunpack.c.l.b16 %v908
      %v1473 = vunpack.c.l.b16 %v912
      %v1474 = vunpack.c.l.b16 %v915
      %v1475 = vunpack.c.l.b16 %v919
      %v1476 = vunpack.c.l.b16 %v922
      %v1477 = vunpack.c.l.b16 %v926
      %v1478 = vunpack.c.l.b16 %v929
      %v1479 = vunpack.c.l.b16 %v933
      %v1480 = vunpack.c.l.b16 %v936
      %v1481 = vunpack.c.l.b16 %v940
      %v1482 = vunpack.c.l.b16 %v943
      %v1483 = vunpack.c.l.b16 %v947
      %v1484 = vunpack.c.l.b16 %v950
      %v1485 = vunpack.c.l.b16 %v954
      %v1486 = vunpack.c.l.b16 %v957
      %v1487 = vunpack.c.l.b16 %v961
      %v1488 = vunpack.c.l.b16 %v964
      %v1489 = vpack.c.b16 %v1458, %v1457
      %v1490 = vpack.c.b16 %v1460, %v1459
      %v1491 = vpack.c.b16 %v1462, %v1461
      %v1492 = vpack.c.b16 %v1464, %v1463
      %v1493 = vpack.c.b16 %v1466, %v1465
      %v1494 = vpack.c.b16 %v1468, %v1467
      %v1495 = vpack.c.b16 %v1470, %v1469
      %v1496 = vpack.c.b16 %v1472, %v1471
      %v1497 = vpack.c.b16 %v1474, %v1473
      %v1498 = vpack.c.b16 %v1476, %v1475
      %v1499 = vpack.c.b16 %v1478, %v1477
      %v1500 = vpack.c.b16 %v1480, %v1479
      %v1501 = vpack.c.b16 %v1482, %v1481
      %v1502 = vpack.c.b16 %v1484, %v1483
      %v1503 = vpack.c.b16 %v1486, %v1485
      %v1504 = vpack.c.b16 %v1488, %v1487
      %1505 = vrot.lane.b32.xlu0 %v1489, 8
      %v1506 = vpop.permute.xlu0 %1505
      %1507 = vrot.lane.b32.xlu0 %v1490, 8
      %v1508 = vpop.permute.xlu0 %1507
      %1509 = vrot.lane.b32.xlu0 %v1491, 8
      %v1510 = vpop.permute.xlu0 %1509
      %1511 = vrot.lane.b32.xlu0 %v1492, 8
      %v1512 = vpop.permute.xlu0 %1511
      %1513 = vrot.lane.b32.xlu0 %v1493, 8
      %v1514 = vpop.permute.xlu0 %1513
      %1515 = vrot.lane.b32.xlu0 %v1494, 8
      %v1516 = vpop.permute.xlu0 %1515
      %1517 = vrot.lane.b32.xlu0 %v1495, 8
      %v1518 = vpop.permute.xlu0 %1517
      %1519 = vrot.lane.b32.xlu0 %v1496, 8
      %v1520 = vpop.permute.xlu0 %1519
      %1521 = vrot.lane.b32.xlu0 %v1497, 8
      %v1522 = vpop.permute.xlu0 %1521
      %1523 = vrot.lane.b32.xlu0 %v1498, 8
      %v1524 = vpop.permute.xlu0 %1523
      %1525 = vrot.lane.b32.xlu0 %v1499, 8
      %v1526 = vpop.permute.xlu0 %1525
      %1527 = vrot.lane.b32.xlu0 %v1500, 8
      %v1528 = vpop.permute.xlu0 %1527
      %1529 = vrot.lane.b32.xlu0 %v1501, 8
      %v1530 = vpop.permute.xlu0 %1529
      %1531 = vrot.lane.b32.xlu0 %v1502, 8
      %v1532 = vpop.permute.xlu0 %1531
      %1533 = vrot.lane.b32.xlu0 %v1503, 8
      %v1534 = vpop.permute.xlu0 %1533
      %1535 = vrot.lane.b32.xlu0 %v1504, 8
      %v1536 = vpop.permute.xlu0 %1535
      %v1537 = vunpack.c.l.b16 %v1272
      %v1538 = vunpack.c.l.b16 %v1275
      %v1539 = vunpack.c.l.b16 %v1279
      %v1540 = vunpack.c.l.b16 %v1282
      %v1541 = vunpack.c.l.b16 %v1286
      %v1542 = vunpack.c.l.b16 %v1289
      %v1543 = vunpack.c.l.b16 %v1293
      %v1544 = vunpack.c.l.b16 %v1296
      %v1545 = vunpack.c.l.b16 %v1300
      %v1546 = vunpack.c.l.b16 %v1303
      %v1547 = vunpack.c.l.b16 %v1307
      %v1548 = vunpack.c.l.b16 %v1310
      %v1549 = vunpack.c.l.b16 %v1314
      %v1550 = vunpack.c.l.b16 %v1317
      %v1551 = vunpack.c.l.b16 %v1321
      %v1552 = vunpack.c.l.b16 %v1324
      %v1553 = vunpack.c.l.b16 %v1328
      %v1554 = vunpack.c.l.b16 %v1331
      %v1555 = vunpack.c.l.b16 %v1335
      %v1556 = vunpack.c.l.b16 %v1338
      %v1557 = vunpack.c.l.b16 %v1342
      %v1558 = vunpack.c.l.b16 %v1345
      %v1559 = vunpack.c.l.b16 %v1349
      %v1560 = vunpack.c.l.b16 %v1352
      %v1561 = vunpack.c.l.b16 %v1356
      %v1562 = vunpack.c.l.b16 %v1359
      %v1563 = vunpack.c.l.b16 %v1363
      %v1564 = vunpack.c.l.b16 %v1366
      %v1565 = vunpack.c.l.b16 %v1370
      %v1566 = vunpack.c.l.b16 %v1373
      %v1567 = vunpack.c.l.b16 %v1377
      %v1568 = vunpack.c.l.b16 %v1380
      %v1569 = vpack.c.b16 %v1538, %v1537
      %v1570 = vpack.c.b16 %v1540, %v1539
      %v1571 = vpack.c.b16 %v1542, %v1541
      %v1572 = vpack.c.b16 %v1544, %v1543
      %v1573 = vpack.c.b16 %v1546, %v1545
      %v1574 = vpack.c.b16 %v1548, %v1547
      %v1575 = vpack.c.b16 %v1550, %v1549
      %v1576 = vpack.c.b16 %v1552, %v1551
      %v1577 = vpack.c.b16 %v1554, %v1553
      %v1578 = vpack.c.b16 %v1556, %v1555
      %v1579 = vpack.c.b16 %v1558, %v1557
      %v1580 = vpack.c.b16 %v1560, %v1559
      %v1581 = vpack.c.b16 %v1562, %v1561
      %v1582 = vpack.c.b16 %v1564, %v1563
      %v1583 = vpack.c.b16 %v1566, %v1565
      %v1584 = vpack.c.b16 %v1568, %v1567
      %1585 = vrot.lane.b32.xlu0 %v1569, 16
      %v1586 = vpop.permute.xlu0 %1585
      %1587 = vrot.lane.b32.xlu0 %v1570, 16
      %v1588 = vpop.permute.xlu0 %1587
      %1589 = vrot.lane.b32.xlu0 %v1571, 16
      %v1590 = vpop.permute.xlu0 %1589
      %1591 = vrot.lane.b32.xlu0 %v1572, 16
      %v1592 = vpop.permute.xlu0 %1591
      %1593 = vrot.lane.b32.xlu0 %v1573, 16
      %v1594 = vpop.permute.xlu0 %1593
      %1595 = vrot.lane.b32.xlu0 %v1574, 16
      %v1596 = vpop.permute.xlu0 %1595
      %1597 = vrot.lane.b32.xlu0 %v1575, 16
      %v1598 = vpop.permute.xlu0 %1597
      %1599 = vrot.lane.b32.xlu0 %v1576, 16
      %v1600 = vpop.permute.xlu0 %1599
      %1601 = vrot.lane.b32.xlu0 %v1577, 16
      %v1602 = vpop.permute.xlu0 %1601
      %1603 = vrot.lane.b32.xlu0 %v1578, 16
      %v1604 = vpop.permute.xlu0 %1603
      %1605 = vrot.lane.b32.xlu0 %v1579, 16
      %v1606 = vpop.permute.xlu0 %1605
      %1607 = vrot.lane.b32.xlu0 %v1580, 16
      %v1608 = vpop.permute.xlu0 %1607
      %1609 = vrot.lane.b32.xlu0 %v1581, 16
      %v1610 = vpop.permute.xlu0 %1609
      %1611 = vrot.lane.b32.xlu0 %v1582, 16
      %v1612 = vpop.permute.xlu0 %1611
      %1613 = vrot.lane.b32.xlu0 %v1583, 16
      %v1614 = vpop.permute.xlu0 %1613
      %1615 = vrot.lane.b32.xlu0 %v1584, 16
      %v1616 = vpop.permute.xlu0 %1615
      %v1617 = vunpack.c.l.b16 %v371
      %v1618 = vunpack.c.l.b16 %v381
      %v1619 = vunpack.c.l.b16 %v395
      %v1620 = vunpack.c.l.b16 %v405
      %v1621 = vunpack.c.l.b16 %v419
      %v1622 = vunpack.c.l.b16 %v429
      %v1623 = vunpack.c.l.b16 %v443
      %v1624 = vunpack.c.l.b16 %v453
      %v1625 = vunpack.c.l.b16 %v467
      %v1626 = vunpack.c.l.b16 %v477
      %v1627 = vunpack.c.l.b16 %v491
      %v1628 = vunpack.c.l.b16 %v501
      %v1629 = vunpack.c.l.b16 %v515
      %v1630 = vunpack.c.l.b16 %v525
      %v1631 = vunpack.c.l.b16 %v539
      %v1632 = vunpack.c.l.b16 %v549
      %v1633 = vunpack.c.l.b16 %v563
      %v1634 = vunpack.c.l.b16 %v573
      %v1635 = vunpack.c.l.b16 %v587
      %v1636 = vunpack.c.l.b16 %v597
      %v1637 = vunpack.c.l.b16 %v611
      %v1638 = vunpack.c.l.b16 %v621
      %v1639 = vunpack.c.l.b16 %v635
      %v1640 = vunpack.c.l.b16 %v645
      %v1641 = vunpack.c.l.b16 %v659
      %v1642 = vunpack.c.l.b16 %v669
      %v1643 = vunpack.c.l.b16 %v683
      %v1644 = vunpack.c.l.b16 %v693
      %v1645 = vunpack.c.l.b16 %v707
      %v1646 = vunpack.c.l.b16 %v717
      %v1647 = vunpack.c.l.b16 %v731
      %v1648 = vunpack.c.l.b16 %v741
      %v1649 = vpack.c.b16 %v1618, %v1617
      %v1650 = vpack.c.b16 %v1620, %v1619
      %v1651 = vpack.c.b16 %v1622, %v1621
      %v1652 = vpack.c.b16 %v1624, %v1623
      %v1653 = vpack.c.b16 %v1626, %v1625
      %v1654 = vpack.c.b16 %v1628, %v1627
      %v1655 = vpack.c.b16 %v1630, %v1629
      %v1656 = vpack.c.b16 %v1632, %v1631
      %v1657 = vpack.c.b16 %v1634, %v1633
      %v1658 = vpack.c.b16 %v1636, %v1635
      %v1659 = vpack.c.b16 %v1638, %v1637
      %v1660 = vpack.c.b16 %v1640, %v1639
      %v1661 = vpack.c.b16 %v1642, %v1641
      %v1662 = vpack.c.b16 %v1644, %v1643
      %v1663 = vpack.c.b16 %v1646, %v1645
      %v1664 = vpack.c.b16 %v1648, %v1647
      %1665 = vrot.lane.b32.xlu0 %v1649, 24
      %v1666 = vpop.permute.xlu0 %1665
      %1667 = vrot.lane.b32.xlu0 %v1650, 24
      %v1668 = vpop.permute.xlu0 %1667
      %1669 = vrot.lane.b32.xlu0 %v1651, 24
      %v1670 = vpop.permute.xlu0 %1669
      %1671 = vrot.lane.b32.xlu0 %v1652, 24
      %v1672 = vpop.permute.xlu0 %1671
      %1673 = vrot.lane.b32.xlu0 %v1653, 24
      %v1674 = vpop.permute.xlu0 %1673
      %1675 = vrot.lane.b32.xlu0 %v1654, 24
      %v1676 = vpop.permute.xlu0 %1675
      %1677 = vrot.lane.b32.xlu0 %v1655, 24
      %v1678 = vpop.permute.xlu0 %1677
      %1679 = vrot.lane.b32.xlu0 %v1656, 24
      %v1680 = vpop.permute.xlu0 %1679
      %1681 = vrot.lane.b32.xlu0 %v1657, 24
      %v1682 = vpop.permute.xlu0 %1681
      %1683 = vrot.lane.b32.xlu0 %v1658, 24
      %v1684 = vpop.permute.xlu0 %1683
      %1685 = vrot.lane.b32.xlu0 %v1659, 24
      %v1686 = vpop.permute.xlu0 %1685
      %1687 = vrot.lane.b32.xlu0 %v1660, 24
      %v1688 = vpop.permute.xlu0 %1687
      %1689 = vrot.lane.b32.xlu0 %v1661, 24
      %v1690 = vpop.permute.xlu0 %1689
      %1691 = vrot.lane.b32.xlu0 %v1662, 24
      %v1692 = vpop.permute.xlu0 %1691
      %1693 = vrot.lane.b32.xlu0 %v1663, 24
      %v1694 = vpop.permute.xlu0 %1693
      %1695 = vrot.lane.b32.xlu0 %v1664, 24
      %v1696 = vpop.permute.xlu0 %1695
      %v1697 = vunpack.c.l.b16 %v968
      %v1698 = vunpack.c.l.b16 %v971
      %v1699 = vpack.c.b16 %v1698, %v1697
      %1700 = vrot.lane.b32.xlu0 %v1490, 32
      %v1701 = vpop.permute.xlu0 %1700
      %1702 = vrot.lane.b32.xlu0 %v1491, 32
      %v1703 = vpop.permute.xlu0 %1702
      %1704 = vrot.lane.b32.xlu0 %v1492, 32
      %v1705 = vpop.permute.xlu0 %1704
      %1706 = vrot.lane.b32.xlu0 %v1493, 32
      %v1707 = vpop.permute.xlu0 %1706
      %1708 = vrot.lane.b32.xlu0 %v1494, 32
      %v1709 = vpop.permute.xlu0 %1708
      %1710 = vrot.lane.b32.xlu0 %v1495, 32
      %v1711 = vpop.permute.xlu0 %1710
      %1712 = vrot.lane.b32.xlu0 %v1496, 32
      %v1713 = vpop.permute.xlu0 %1712
      %1714 = vrot.lane.b32.xlu0 %v1497, 32
      %v1715 = vpop.permute.xlu0 %1714
      %1716 = vrot.lane.b32.xlu0 %v1498, 32
      %v1717 = vpop.permute.xlu0 %1716
      %1718 = vrot.lane.b32.xlu0 %v1499, 32
      %v1719 = vpop.permute.xlu0 %1718
      %1720 = vrot.lane.b32.xlu0 %v1500, 32
      %v1721 = vpop.permute.xlu0 %1720
      %1722 = vrot.lane.b32.xlu0 %v1501, 32
      %v1723 = vpop.permute.xlu0 %1722
      %1724 = vrot.lane.b32.xlu0 %v1502, 32
      %v1725 = vpop.permute.xlu0 %1724
      %1726 = vrot.lane.b32.xlu0 %v1503, 32
      %v1727 = vpop.permute.xlu0 %1726
      %1728 = vrot.lane.b32.xlu0 %v1504, 32
      %v1729 = vpop.permute.xlu0 %1728
      %1730 = vrot.lane.b32.xlu0 %v1699, 32
      %v1731 = vpop.permute.xlu0 %1730
      %v1732 = vunpack.c.l.b16 %v1003
      %v1733 = vunpack.c.l.b16 %v1010
      %v1734 = vunpack.c.l.b16 %v1018
      %v1735 = vunpack.c.l.b16 %v1025
      %v1736 = vunpack.c.l.b16 %v1033
      %v1737 = vunpack.c.l.b16 %v1040
      %v1738 = vunpack.c.l.b16 %v1048
      %v1739 = vunpack.c.l.b16 %v1055
      %v1740 = vunpack.c.l.b16 %v1063
      %v1741 = vunpack.c.l.b16 %v1070
      %v1742 = vunpack.c.l.b16 %v1078
      %v1743 = vunpack.c.l.b16 %v1085
      %v1744 = vunpack.c.l.b16 %v1093
      %v1745 = vunpack.c.l.b16 %v1100
      %v1746 = vunpack.c.l.b16 %v1108
      %v1747 = vunpack.c.l.b16 %v1115
      %v1748 = vunpack.c.l.b16 %v1123
      %v1749 = vunpack.c.l.b16 %v1130
      %v1750 = vunpack.c.l.b16 %v1138
      %v1751 = vunpack.c.l.b16 %v1145
      %v1752 = vunpack.c.l.b16 %v1153
      %v1753 = vunpack.c.l.b16 %v1160
      %v1754 = vunpack.c.l.b16 %v1168
      %v1755 = vunpack.c.l.b16 %v1175
      %v1756 = vunpack.c.l.b16 %v1183
      %v1757 = vunpack.c.l.b16 %v1190
      %v1758 = vunpack.c.l.b16 %v1198
      %v1759 = vunpack.c.l.b16 %v1205
      %v1760 = vunpack.c.l.b16 %v1213
      %v1761 = vunpack.c.l.b16 %v1220
      %v1762 = vunpack.c.l.b16 %v1228
      %v1763 = vunpack.c.l.b16 %v1235
      %v1764 = vpack.c.b16 %v1733, %v1732
      %v1765 = vpack.c.b16 %v1735, %v1734
      %v1766 = vpack.c.b16 %v1737, %v1736
      %v1767 = vpack.c.b16 %v1739, %v1738
      %v1768 = vpack.c.b16 %v1741, %v1740
      %v1769 = vpack.c.b16 %v1743, %v1742
      %v1770 = vpack.c.b16 %v1745, %v1744
      %v1771 = vpack.c.b16 %v1747, %v1746
      %v1772 = vpack.c.b16 %v1749, %v1748
      %v1773 = vpack.c.b16 %v1751, %v1750
      %v1774 = vpack.c.b16 %v1753, %v1752
      %v1775 = vpack.c.b16 %v1755, %v1754
      %v1776 = vpack.c.b16 %v1757, %v1756
      %v1777 = vpack.c.b16 %v1759, %v1758
      %v1778 = vpack.c.b16 %v1761, %v1760
      %v1779 = vpack.c.b16 %v1763, %v1762
      %1780 = vrot.lane.b32.xlu0 %v1764, 40
      %v1781 = vpop.permute.xlu0 %1780
      %1782 = vrot.lane.b32.xlu0 %v1765, 40
      %v1783 = vpop.permute.xlu0 %1782
      %1784 = vrot.lane.b32.xlu0 %v1766, 40
      %v1785 = vpop.permute.xlu0 %1784
      %1786 = vrot.lane.b32.xlu0 %v1767, 40
      %v1787 = vpop.permute.xlu0 %1786
      %1788 = vrot.lane.b32.xlu0 %v1768, 40
      %v1789 = vpop.permute.xlu0 %1788
      %1790 = vrot.lane.b32.xlu0 %v1769, 40
      %v1791 = vpop.permute.xlu0 %1790
      %1792 = vrot.lane.b32.xlu0 %v1770, 40
      %v1793 = vpop.permute.xlu0 %1792
      %1794 = vrot.lane.b32.xlu0 %v1771, 40
      %v1795 = vpop.permute.xlu0 %1794
      %1796 = vrot.lane.b32.xlu0 %v1772, 40
      %v1797 = vpop.permute.xlu0 %1796
      %1798 = vrot.lane.b32.xlu0 %v1773, 40
      %v1799 = vpop.permute.xlu0 %1798
      %1800 = vrot.lane.b32.xlu0 %v1774, 40
      %v1801 = vpop.permute.xlu0 %1800
      %1802 = vrot.lane.b32.xlu0 %v1775, 40
      %v1803 = vpop.permute.xlu0 %1802
      %1804 = vrot.lane.b32.xlu0 %v1776, 40
      %v1805 = vpop.permute.xlu0 %1804
      %1806 = vrot.lane.b32.xlu0 %v1777, 40
      %v1807 = vpop.permute.xlu0 %1806
      %1808 = vrot.lane.b32.xlu0 %v1778, 40
      %v1809 = vpop.permute.xlu0 %1808
      %1810 = vrot.lane.b32.xlu0 %v1779, 40
      %v1811 = vpop.permute.xlu0 %1810
      %v1812 = vunpack.c.l.b16 %v343
      %v1813 = vunpack.c.l.b16 %v344
      %v1814 = vunpack.c.l.b16 %v346
      %v1815 = vunpack.c.l.b16 %v347
      %v1816 = vpack.c.b16 %v1813, %v1812
      %v1817 = vpack.c.b16 %v1815, %v1814
      %1818 = vrot.lane.b32.xlu0 %v1443, 48
      %v1819 = vpop.permute.xlu0 %1818
      %1820 = vrot.lane.b32.xlu0 %v1444, 48
      %v1821 = vpop.permute.xlu0 %1820
      %1822 = vrot.lane.b32.xlu0 %v1445, 48
      %v1823 = vpop.permute.xlu0 %1822
      %1824 = vrot.lane.b32.xlu0 %v1446, 48
      %v1825 = vpop.permute.xlu0 %1824
      %1826 = vrot.lane.b32.xlu0 %v1447, 48
      %v1827 = vpop.permute.xlu0 %1826
      %1828 = vrot.lane.b32.xlu0 %v1448, 48
      %v1829 = vpop.permute.xlu0 %1828
      %1830 = vrot.lane.b32.xlu0 %v1449, 48
      %v1831 = vpop.permute.xlu0 %1830
      %1832 = vrot.lane.b32.xlu0 %v1450, 48
      %v1833 = vpop.permute.xlu0 %1832
      %1834 = vrot.lane.b32.xlu0 %v1451, 48
      %v1835 = vpop.permute.xlu0 %1834
      %1836 = vrot.lane.b32.xlu0 %v1452, 48
      %v1837 = vpop.permute.xlu0 %1836
      %1838 = vrot.lane.b32.xlu0 %v1453, 48
      %v1839 = vpop.permute.xlu0 %1838
      %1840 = vrot.lane.b32.xlu0 %v1454, 48
      %v1841 = vpop.permute.xlu0 %1840
      %1842 = vrot.lane.b32.xlu0 %v1455, 48
      %v1843 = vpop.permute.xlu0 %1842
      %1844 = vrot.lane.b32.xlu0 %v1456, 48
      %v1845 = vpop.permute.xlu0 %1844
      %1846 = vrot.lane.b32.xlu0 %v1816, 48
      %v1847 = vpop.permute.xlu0 %1846
      %1848 = vrot.lane.b32.xlu0 %v1817, 48
      %v1849 = vpop.permute.xlu0 %1848
      %v1850 = vunpack.c.l.b16 %v755
      %v1851 = vunpack.c.l.b16 %v765
      %v1852 = vpack.c.b16 %v1851, %v1850
      %1853 = vrot.lane.b32.xlu0 %v1650, 56
      %v1854 = vpop.permute.xlu0 %1853
      %1855 = vrot.lane.b32.xlu0 %v1651, 56
      %v1856 = vpop.permute.xlu0 %1855
      %1857 = vrot.lane.b32.xlu0 %v1652, 56
      %v1858 = vpop.permute.xlu0 %1857
      %1859 = vrot.lane.b32.xlu0 %v1653, 56
      %v1860 = vpop.permute.xlu0 %1859
      %1861 = vrot.lane.b32.xlu0 %v1654, 56
      %v1862 = vpop.permute.xlu0 %1861
      %1863 = vrot.lane.b32.xlu0 %v1655, 56
      %v1864 = vpop.permute.xlu0 %1863
      %1865 = vrot.lane.b32.xlu0 %v1656, 56
      %v1866 = vpop.permute.xlu0 %1865
      %1867 = vrot.lane.b32.xlu0 %v1657, 56
      %v1868 = vpop.permute.xlu0 %1867
      %1869 = vrot.lane.b32.xlu0 %v1658, 56
      %v1870 = vpop.permute.xlu0 %1869
      %1871 = vrot.lane.b32.xlu0 %v1659, 56
      %v1872 = vpop.permute.xlu0 %1871
      %1873 = vrot.lane.b32.xlu0 %v1660, 56
      %v1874 = vpop.permute.xlu0 %1873
      %1875 = vrot.lane.b32.xlu0 %v1661, 56
      %v1876 = vpop.permute.xlu0 %1875
      %1877 = vrot.lane.b32.xlu0 %v1662, 56
      %v1878 = vpop.permute.xlu0 %1877
      %1879 = vrot.lane.b32.xlu0 %v1663, 56
      %v1880 = vpop.permute.xlu0 %1879
      %1881 = vrot.lane.b32.xlu0 %v1664, 56
      %v1882 = vpop.permute.xlu0 %1881
      %1883 = vrot.lane.b32.xlu0 %v1852, 56
      %v1884 = vpop.permute.xlu0 %1883
      %v1885 = vunpack.c.l.b16 %v975
      %v1886 = vunpack.c.l.b16 %v978
      %v1887 = vpack.c.b16 %v1886, %v1885
      %1888 = vrot.lane.b32.xlu0 %v1491, 64
      %v1889 = vpop.permute.xlu0 %1888
      %1890 = vrot.lane.b32.xlu0 %v1492, 64
      %v1891 = vpop.permute.xlu0 %1890
      %1892 = vrot.lane.b32.xlu0 %v1493, 64
      %v1893 = vpop.permute.xlu0 %1892
      %1894 = vrot.lane.b32.xlu0 %v1494, 64
      %v1895 = vpop.permute.xlu0 %1894
      %1896 = vrot.lane.b32.xlu0 %v1495, 64
      %v1897 = vpop.permute.xlu0 %1896
      %1898 = vrot.lane.b32.xlu0 %v1496, 64
      %v1899 = vpop.permute.xlu0 %1898
      %1900 = vrot.lane.b32.xlu0 %v1497, 64
      %v1901 = vpop.permute.xlu0 %1900
      %1902 = vrot.lane.b32.xlu0 %v1498, 64
      %v1903 = vpop.permute.xlu0 %1902
      %1904 = vrot.lane.b32.xlu0 %v1499, 64
      %v1905 = vpop.permute.xlu0 %1904
      %1906 = vrot.lane.b32.xlu0 %v1500, 64
      %v1907 = vpop.permute.xlu0 %1906
      %1908 = vrot.lane.b32.xlu0 %v1501, 64
      %v1909 = vpop.permute.xlu0 %1908
      %1910 = vrot.lane.b32.xlu0 %v1502, 64
      %v1911 = vpop.permute.xlu0 %1910
      %1912 = vrot.lane.b32.xlu0 %v1503, 64
      %v1913 = vpop.permute.xlu0 %1912
      %1914 = vrot.lane.b32.xlu0 %v1504, 64
      %v1915 = vpop.permute.xlu0 %1914
      %1916 = vrot.lane.b32.xlu0 %v1699, 64
      %v1917 = vpop.permute.xlu0 %1916
      %1918 = vrot.lane.b32.xlu0 %v1887, 64
      %v1919 = vpop.permute.xlu0 %1918
      %v1920 = vunpack.c.l.b16 %v1243
      %v1921 = vunpack.c.l.b16 %v1250
      %v1922 = vpack.c.b16 %v1921, %v1920
      %1923 = vrot.lane.b32.xlu0 %v1765, 72
      %v1924 = vpop.permute.xlu0 %1923
      %1925 = vrot.lane.b32.xlu0 %v1766, 72
      %v1926 = vpop.permute.xlu0 %1925
      %1927 = vrot.lane.b32.xlu0 %v1767, 72
      %v1928 = vpop.permute.xlu0 %1927
      %1929 = vrot.lane.b32.xlu0 %v1768, 72
      %v1930 = vpop.permute.xlu0 %1929
      %1931 = vrot.lane.b32.xlu0 %v1769, 72
      %v1932 = vpop.permute.xlu0 %1931
      %1933 = vrot.lane.b32.xlu0 %v1770, 72
      %v1934 = vpop.permute.xlu0 %1933
      %1935 = vrot.lane.b32.xlu0 %v1771, 72
      %v1936 = vpop.permute.xlu0 %1935
      %1937 = vrot.lane.b32.xlu0 %v1772, 72
      %v1938 = vpop.permute.xlu0 %1937
      %1939 = vrot.lane.b32.xlu0 %v1773, 72
      %v1940 = vpop.permute.xlu0 %1939
      %1941 = vrot.lane.b32.xlu0 %v1774, 72
      %v1942 = vpop.permute.xlu0 %1941
      %1943 = vrot.lane.b32.xlu0 %v1775, 72
      %v1944 = vpop.permute.xlu0 %1943
      %1945 = vrot.lane.b32.xlu0 %v1776, 72
      %v1946 = vpop.permute.xlu0 %1945
      %1947 = vrot.lane.b32.xlu0 %v1777, 72
      %v1948 = vpop.permute.xlu0 %1947
      %1949 = vrot.lane.b32.xlu0 %v1778, 72
      %v1950 = vpop.permute.xlu0 %1949
      %1951 = vrot.lane.b32.xlu0 %v1779, 72
      %v1952 = vpop.permute.xlu0 %1951
      %1953 = vrot.lane.b32.xlu0 %v1922, 72
      %v1954 = vpop.permute.xlu0 %1953
      %v1955 = vunpack.c.l.b16 %v1384
      %v1956 = vunpack.c.l.b16 %v1387
      %v1957 = vunpack.c.l.b16 %v1391
      %v1958 = vunpack.c.l.b16 %v1394
      %v1959 = vpack.c.b16 %v1956, %v1955
      %v1960 = vpack.c.b16 %v1958, %v1957
      %1961 = vrot.lane.b32.xlu0 %v1571, 80
      %v1962 = vpop.permute.xlu0 %1961
      %1963 = vrot.lane.b32.xlu0 %v1572, 80
      %v1964 = vpop.permute.xlu0 %1963
      %1965 = vrot.lane.b32.xlu0 %v1573, 80
      %v1966 = vpop.permute.xlu0 %1965
      %1967 = vrot.lane.b32.xlu0 %v1574, 80
      %v1968 = vpop.permute.xlu0 %1967
      %1969 = vrot.lane.b32.xlu0 %v1575, 80
      %v1970 = vpop.permute.xlu0 %1969
      %1971 = vrot.lane.b32.xlu0 %v1576, 80
      %v1972 = vpop.permute.xlu0 %1971
      %1973 = vrot.lane.b32.xlu0 %v1577, 80
      %v1974 = vpop.permute.xlu0 %1973
      %1975 = vrot.lane.b32.xlu0 %v1578, 80
      %v1976 = vpop.permute.xlu0 %1975
      %1977 = vrot.lane.b32.xlu0 %v1579, 80
      %v1978 = vpop.permute.xlu0 %1977
      %1979 = vrot.lane.b32.xlu0 %v1580, 80
      %v1980 = vpop.permute.xlu0 %1979
      %1981 = vrot.lane.b32.xlu0 %v1581, 80
      %v1982 = vpop.permute.xlu0 %1981
      %1983 = vrot.lane.b32.xlu0 %v1582, 80
      %v1984 = vpop.permute.xlu0 %1983
      %1985 = vrot.lane.b32.xlu0 %v1583, 80
      %v1986 = vpop.permute.xlu0 %1985
      %1987 = vrot.lane.b32.xlu0 %v1584, 80
      %v1988 = vpop.permute.xlu0 %1987
      %1989 = vrot.lane.b32.xlu0 %v1959, 80
      %v1990 = vpop.permute.xlu0 %1989
      %1991 = vrot.lane.b32.xlu0 %v1960, 80
      %v1992 = vpop.permute.xlu0 %1991
      %v1993 = vunpack.c.l.b16 %v779
      %v1994 = vunpack.c.l.b16 %v789
      %v1995 = vpack.c.b16 %v1994, %v1993
      %1996 = vrot.lane.b32.xlu0 %v1651, 88
      %v1997 = vpop.permute.xlu0 %1996
      %1998 = vrot.lane.b32.xlu0 %v1652, 88
      %v1999 = vpop.permute.xlu0 %1998
      %2000 = vrot.lane.b32.xlu0 %v1653, 88
      %v2001 = vpop.permute.xlu0 %2000
      %2002 = vrot.lane.b32.xlu0 %v1654, 88
      %v2003 = vpop.permute.xlu0 %2002
      %2004 = vrot.lane.b32.xlu0 %v1655, 88
      %v2005 = vpop.permute.xlu0 %2004
      %2006 = vrot.lane.b32.xlu0 %v1656, 88
      %v2007 = vpop.permute.xlu0 %2006
      %2008 = vrot.lane.b32.xlu0 %v1657, 88
      %v2009 = vpop.permute.xlu0 %2008
      %2010 = vrot.lane.b32.xlu0 %v1658, 88
      %v2011 = vpop.permute.xlu0 %2010
      %2012 = vrot.lane.b32.xlu0 %v1659, 88
      %v2013 = vpop.permute.xlu0 %2012
      %2014 = vrot.lane.b32.xlu0 %v1660, 88
      %v2015 = vpop.permute.xlu0 %2014
      %2016 = vrot.lane.b32.xlu0 %v1661, 88
      %v2017 = vpop.permute.xlu0 %2016
      %2018 = vrot.lane.b32.xlu0 %v1662, 88
      %v2019 = vpop.permute.xlu0 %2018
      %2020 = vrot.lane.b32.xlu0 %v1663, 88
      %v2021 = vpop.permute.xlu0 %2020
      %2022 = vrot.lane.b32.xlu0 %v1664, 88
      %v2023 = vpop.permute.xlu0 %2022
      %2024 = vrot.lane.b32.xlu0 %v1852, 88
      %v2025 = vpop.permute.xlu0 %2024
      %2026 = vrot.lane.b32.xlu0 %v1995, 88
      %v2027 = vpop.permute.xlu0 %2026
      %v2028 = vunpack.c.l.b16 %v982
      %v2029 = vunpack.c.l.b16 %v985
      %v2030 = vpack.c.b16 %v2029, %v2028
      %2031 = vrot.lane.b32.xlu0 %v1492, 96
      %v2032 = vpop.permute.xlu0 %2031
      %2033 = vrot.lane.b32.xlu0 %v1493, 96
      %v2034 = vpop.permute.xlu0 %2033
      %2035 = vrot.lane.b32.xlu0 %v1494, 96
      %v2036 = vpop.permute.xlu0 %2035
      %2037 = vrot.lane.b32.xlu0 %v1495, 96
      %v2038 = vpop.permute.xlu0 %2037
      %2039 = vrot.lane.b32.xlu0 %v1496, 96
      %v2040 = vpop.permute.xlu0 %2039
      %2041 = vrot.lane.b32.xlu0 %v1497, 96
      %v2042 = vpop.permute.xlu0 %2041
      %2043 = vrot.lane.b32.xlu0 %v1498, 96
      %v2044 = vpop.permute.xlu0 %2043
      %2045 = vrot.lane.b32.xlu0 %v1499, 96
      %v2046 = vpop.permute.xlu0 %2045
      %2047 = vrot.lane.b32.xlu0 %v1500, 96
      %v2048 = vpop.permute.xlu0 %2047
      %2049 = vrot.lane.b32.xlu0 %v1501, 96
      %v2050 = vpop.permute.xlu0 %2049
      %2051 = vrot.lane.b32.xlu0 %v1502, 96
      %v2052 = vpop.permute.xlu0 %2051
      %2053 = vrot.lane.b32.xlu0 %v1503, 96
      %v2054 = vpop.permute.xlu0 %2053
      %2055 = vrot.lane.b32.xlu0 %v1504, 96
      %v2056 = vpop.permute.xlu0 %2055
      %2057 = vrot.lane.b32.xlu0 %v1699, 96
      %v2058 = vpop.permute.xlu0 %2057
      %2059 = vrot.lane.b32.xlu0 %v1887, 96
      %v2060 = vpop.permute.xlu0 %2059
      %2061 = vrot.lane.b32.xlu0 %v2030, 96
      %v2062 = vpop.permute.xlu0 %2061
      %v2063 = vunpack.c.l.b16 %v1258
      %v2064 = vunpack.c.l.b16 %v1265
      %v2065 = vpack.c.b16 %v2064, %v2063
      %2066 = vrot.lane.b32.xlu0 %v1766, 104
      %v2067 = vpop.permute.xlu0 %2066
      %2068 = vrot.lane.b32.xlu0 %v1767, 104
      %v2069 = vpop.permute.xlu0 %2068
      %2070 = vrot.lane.b32.xlu0 %v1768, 104
      %v2071 = vpop.permute.xlu0 %2070
      %2072 = vrot.lane.b32.xlu0 %v1769, 104
      %v2073 = vpop.permute.xlu0 %2072
      %2074 = vrot.lane.b32.xlu0 %v1770, 104
      %v2075 = vpop.permute.xlu0 %2074
      %2076 = vrot.lane.b32.xlu0 %v1771, 104
      %v2077 = vpop.permute.xlu0 %2076
      %2078 = vrot.lane.b32.xlu0 %v1772, 104
      %v2079 = vpop.permute.xlu0 %2078
      %2080 = vrot.lane.b32.xlu0 %v1773, 104
      %v2081 = vpop.permute.xlu0 %2080
      %2082 = vrot.lane.b32.xlu0 %v1774, 104
      %v2083 = vpop.permute.xlu0 %2082
      %2084 = vrot.lane.b32.xlu0 %v1775, 104
      %v2085 = vpop.permute.xlu0 %2084
      %2086 = vrot.lane.b32.xlu0 %v1776, 104
      %v2087 = vpop.permute.xlu0 %2086
      %2088 = vrot.lane.b32.xlu0 %v1777, 104
      %v2089 = vpop.permute.xlu0 %2088
      %2090 = vrot.lane.b32.xlu0 %v1778, 104
      %v2091 = vpop.permute.xlu0 %2090
      %2092 = vrot.lane.b32.xlu0 %v1779, 104
      %v2093 = vpop.permute.xlu0 %2092
      %2094 = vrot.lane.b32.xlu0 %v1922, 104
      %v2095 = vpop.permute.xlu0 %2094
      %2096 = vrot.lane.b32.xlu0 %v2065, 104
      %v2097 = vpop.permute.xlu0 %2096
      %v2098 = vunpack.c.l.b16 %v349
      %v2099 = vunpack.c.l.b16 %v350
      %v2100 = vunpack.c.l.b16 %v352
      %v2101 = vunpack.c.l.b16 %v353
      %v2102 = vpack.c.b16 %v2099, %v2098
      %v2103 = vpack.c.b16 %v2101, %v2100
      %2104 = vrot.lane.b32.xlu0 %v1445, 112
      %v2105 = vpop.permute.xlu0 %2104
      %2106 = vrot.lane.b32.xlu0 %v1446, 112
      %v2107 = vpop.permute.xlu0 %2106
      %2108 = vrot.lane.b32.xlu0 %v1447, 112
      %v2109 = vpop.permute.xlu0 %2108
      %2110 = vrot.lane.b32.xlu0 %v1448, 112
      %v2111 = vpop.permute.xlu0 %2110
      %2112 = vrot.lane.b32.xlu0 %v1449, 112
      %v2113 = vpop.permute.xlu0 %2112
      %2114 = vrot.lane.b32.xlu0 %v1450, 112
      %v2115 = vpop.permute.xlu0 %2114
      %2116 = vrot.lane.b32.xlu0 %v1451, 112
      %v2117 = vpop.permute.xlu0 %2116
      %2118 = vrot.lane.b32.xlu0 %v1452, 112
      %v2119 = vpop.permute.xlu0 %2118
      %2120 = vrot.lane.b32.xlu0 %v1453, 112
      %v2121 = vpop.permute.xlu0 %2120
      %2122 = vrot.lane.b32.xlu0 %v1454, 112
      %v2123 = vpop.permute.xlu0 %2122
      %2124 = vrot.lane.b32.xlu0 %v1455, 112
      %v2125 = vpop.permute.xlu0 %2124
      %2126 = vrot.lane.b32.xlu0 %v1456, 112
      %v2127 = vpop.permute.xlu0 %2126
      %2128 = vrot.lane.b32.xlu0 %v1816, 112
      %v2129 = vpop.permute.xlu0 %2128
      %2130 = vrot.lane.b32.xlu0 %v1817, 112
      %v2131 = vpop.permute.xlu0 %2130
      %2132 = vrot.lane.b32.xlu0 %v2102, 112
      %v2133 = vpop.permute.xlu0 %2132
      %2134 = vrot.lane.b32.xlu0 %v2103, 112
      %v2135 = vpop.permute.xlu0 %2134
      %v2136 = vunpack.c.l.b16 %v989
      %v2137 = vunpack.c.l.b16 %v992
      %v2138 = vpack.c.b16 %v2137, %v2136
      %2139 = vrot.lane.b32.xlu0 %v1493, 120
      %v2140 = vpop.permute.xlu0 %2139
      %2141 = vrot.lane.b32.xlu0 %v1494, 120
      %v2142 = vpop.permute.xlu0 %2141
      %2143 = vrot.lane.b32.xlu0 %v1495, 120
      %v2144 = vpop.permute.xlu0 %2143
      %2145 = vrot.lane.b32.xlu0 %v1496, 120
      %v2146 = vpop.permute.xlu0 %2145
      %2147 = vrot.lane.b32.xlu0 %v1497, 120
      %v2148 = vpop.permute.xlu0 %2147
      %2149 = vrot.lane.b32.xlu0 %v1498, 120
      %v2150 = vpop.permute.xlu0 %2149
      %2151 = vrot.lane.b32.xlu0 %v1499, 120
      %v2152 = vpop.permute.xlu0 %2151
      %2153 = vrot.lane.b32.xlu0 %v1500, 120
      %v2154 = vpop.permute.xlu0 %2153
      %2155 = vrot.lane.b32.xlu0 %v1501, 120
      %v2156 = vpop.permute.xlu0 %2155
      %2157 = vrot.lane.b32.xlu0 %v1502, 120
      %v2158 = vpop.permute.xlu0 %2157
      %2159 = vrot.lane.b32.xlu0 %v1503, 120
      %v2160 = vpop.permute.xlu0 %2159
      %2161 = vrot.lane.b32.xlu0 %v1504, 120
      %v2162 = vpop.permute.xlu0 %2161
      %2163 = vrot.lane.b32.xlu0 %v1699, 120
      %v2164 = vpop.permute.xlu0 %2163
      %2165 = vrot.lane.b32.xlu0 %v1887, 120
      %v2166 = vpop.permute.xlu0 %2165
      %2167 = vrot.lane.b32.xlu0 %v2030, 120
      %v2168 = vpop.permute.xlu0 %2167
      %2169 = vrot.lane.b32.xlu0 %v2138, 120
      %v2170 = vpop.permute.xlu0 %2169
      %vm2171 = vcmask 64512
      %v2174 = vsel %vm2171, %v1441, %v1506
      %v2177 = vsel %vm2171, %v1442, %v1508
      %v2180 = vsel %vm2171, %v1443, %v1510
      %v2183 = vsel %vm2171, %v1444, %v1512
      %v2186 = vsel %vm2171, %v1445, %v1514
      %v2189 = vsel %vm2171, %v1446, %v1516
      %v2192 = vsel %vm2171, %v1447, %v1518
      %v2195 = vsel %vm2171, %v1448, %v1520
      %v2198 = vsel %vm2171, %v1449, %v1522
      %v2201 = vsel %vm2171, %v1450, %v1524
      %v2204 = vsel %vm2171, %v1451, %v1526
      %v2207 = vsel %vm2171, %v1452, %v1528
      %v2210 = vsel %vm2171, %v1453, %v1530
      %v2213 = vsel %vm2171, %v1454, %v1532
      %v2216 = vsel %vm2171, %v1455, %v1534
      %v2219 = vsel %vm2171, %v1456, %v1536
      %vm2220 = vcmask 130048
      %v2222 = vsel %vm2220, %v2174, %v1586
      %v2224 = vsel %vm2220, %v2177, %v1588
      %v2226 = vsel %vm2220, %v2180, %v1590
      %v2228 = vsel %vm2220, %v2183, %v1592
      %v2230 = vsel %vm2220, %v2186, %v1594
      %v2232 = vsel %vm2220, %v2189, %v1596
      %v2234 = vsel %vm2220, %v2192, %v1598
      %v2236 = vsel %vm2220, %v2195, %v1600
      %v2238 = vsel %vm2220, %v2198, %v1602
      %v2240 = vsel %vm2220, %v2201, %v1604
      %v2242 = vsel %vm2220, %v2204, %v1606
      %v2244 = vsel %vm2220, %v2207, %v1608
      %v2246 = vsel %vm2220, %v2210, %v1610
      %v2248 = vsel %vm2220, %v2213, %v1612
      %v2250 = vsel %vm2220, %v2216, %v1614
      %v2252 = vsel %vm2220, %v2219, %v1616
      %vm2253 = vcmask 195584
      %v2255 = vsel %vm2253, %v2222, %v1666
      %v2257 = vsel %vm2253, %v2224, %v1668
      %v2259 = vsel %vm2253, %v2226, %v1670
      %v2261 = vsel %vm2253, %v2228, %v1672
      %v2263 = vsel %vm2253, %v2230, %v1674
      %v2265 = vsel %vm2253, %v2232, %v1676
      %v2267 = vsel %vm2253, %v2234, %v1678
      %v2269 = vsel %vm2253, %v2236, %v1680
      %v2271 = vsel %vm2253, %v2238, %v1682
      %v2273 = vsel %vm2253, %v2240, %v1684
      %v2275 = vsel %vm2253, %v2242, %v1686
      %v2277 = vsel %vm2253, %v2244, %v1688
      %v2279 = vsel %vm2253, %v2246, %v1690
      %v2281 = vsel %vm2253, %v2248, %v1692
      %v2283 = vsel %vm2253, %v2250, %v1694
      %v2285 = vsel %vm2253, %v2252, %v1696
      %vm2286 = vcmask 261120
      %v2288 = vsel %vm2286, %v2255, %v1701
      %v2290 = vsel %vm2286, %v2257, %v1703
      %v2292 = vsel %vm2286, %v2259, %v1705
      %v2294 = vsel %vm2286, %v2261, %v1707
      %v2296 = vsel %vm2286, %v2263, %v1709
      %v2298 = vsel %vm2286, %v2265, %v1711
      %v2300 = vsel %vm2286, %v2267, %v1713
      %v2302 = vsel %vm2286, %v2269, %v1715
      %v2304 = vsel %vm2286, %v2271, %v1717
      %v2306 = vsel %vm2286, %v2273, %v1719
      %v2308 = vsel %vm2286, %v2275, %v1721
      %v2310 = vsel %vm2286, %v2277, %v1723
      %v2312 = vsel %vm2286, %v2279, %v1725
      %v2314 = vsel %vm2286, %v2281, %v1727
      %v2316 = vsel %vm2286, %v2283, %v1729
      %v2318 = vsel %vm2286, %v2285, %v1731
      %vm2319 = vcmask 326656
      %v2321 = vsel %vm2319, %v2288, %v1781
      %v2323 = vsel %vm2319, %v2290, %v1783
      %v2325 = vsel %vm2319, %v2292, %v1785
      %v2327 = vsel %vm2319, %v2294, %v1787
      %v2329 = vsel %vm2319, %v2296, %v1789
      %v2331 = vsel %vm2319, %v2298, %v1791
      %v2333 = vsel %vm2319, %v2300, %v1793
      %v2335 = vsel %vm2319, %v2302, %v1795
      %v2337 = vsel %vm2319, %v2304, %v1797
      %v2339 = vsel %vm2319, %v2306, %v1799
      %v2341 = vsel %vm2319, %v2308, %v1801
      %v2343 = vsel %vm2319, %v2310, %v1803
      %v2345 = vsel %vm2319, %v2312, %v1805
      %v2347 = vsel %vm2319, %v2314, %v1807
      %v2349 = vsel %vm2319, %v2316, %v1809
      %v2351 = vsel %vm2319, %v2318, %v1811
      %vm2352 = vcmask 392192
      %v2354 = vsel %vm2352, %v2321, %v1819
      %v2356 = vsel %vm2352, %v2323, %v1821
      %v2358 = vsel %vm2352, %v2325, %v1823
      %v2360 = vsel %vm2352, %v2327, %v1825
      %v2362 = vsel %vm2352, %v2329, %v1827
      %v2364 = vsel %vm2352, %v2331, %v1829
      %v2366 = vsel %vm2352, %v2333, %v1831
      %v2368 = vsel %vm2352, %v2335, %v1833
      %v2370 = vsel %vm2352, %v2337, %v1835
      %v2372 = vsel %vm2352, %v2339, %v1837
      %v2374 = vsel %vm2352, %v2341, %v1839
      %v2376 = vsel %vm2352, %v2343, %v1841
      %v2378 = vsel %vm2352, %v2345, %v1843
      %v2380 = vsel %vm2352, %v2347, %v1845
      %v2382 = vsel %vm2352, %v2349, %v1847
      %v2384 = vsel %vm2352, %v2351, %v1849
      %vm2385 = vcmask 457728
      %v2387 = vsel %vm2385, %v2354, %v1854
      %v2389 = vsel %vm2385, %v2356, %v1856
      %v2391 = vsel %vm2385, %v2358, %v1858
      %v2393 = vsel %vm2385, %v2360, %v1860
      %v2395 = vsel %vm2385, %v2362, %v1862
      %v2397 = vsel %vm2385, %v2364, %v1864
      %v2399 = vsel %vm2385, %v2366, %v1866
      %v2401 = vsel %vm2385, %v2368, %v1868
      %v2403 = vsel %vm2385, %v2370, %v1870
      %v2405 = vsel %vm2385, %v2372, %v1872
      %v2407 = vsel %vm2385, %v2374, %v1874
      %v2409 = vsel %vm2385, %v2376, %v1876
      %v2411 = vsel %vm2385, %v2378, %v1878
      %v2413 = vsel %vm2385, %v2380, %v1880
      %v2415 = vsel %vm2385, %v2382, %v1882
      %v2417 = vsel %vm2385, %v2384, %v1884
      %vm2418 = vcmask 523264
      %v2420 = vsel %vm2418, %v2387, %v1889
      %v2422 = vsel %vm2418, %v2389, %v1891
      %v2424 = vsel %vm2418, %v2391, %v1893
      %v2426 = vsel %vm2418, %v2393, %v1895
      %v2428 = vsel %vm2418, %v2395, %v1897
      %v2430 = vsel %vm2418, %v2397, %v1899
      %v2432 = vsel %vm2418, %v2399, %v1901
      %v2434 = vsel %vm2418, %v2401, %v1903
      %v2436 = vsel %vm2418, %v2403, %v1905
      %v2438 = vsel %vm2418, %v2405, %v1907
      %v2440 = vsel %vm2418, %v2407, %v1909
      %v2442 = vsel %vm2418, %v2409, %v1911
      %v2444 = vsel %vm2418, %v2411, %v1913
      %v2446 = vsel %vm2418, %v2413, %v1915
      %v2448 = vsel %vm2418, %v2415, %v1917
      %v2450 = vsel %vm2418, %v2417, %v1919
      %vm2451 = vcmask 588800
      %v2453 = vsel %vm2451, %v2420, %v1924
      %v2455 = vsel %vm2451, %v2422, %v1926
      %v2457 = vsel %vm2451, %v2424, %v1928
      %v2459 = vsel %vm2451, %v2426, %v1930
      %v2461 = vsel %vm2451, %v2428, %v1932
      %v2463 = vsel %vm2451, %v2430, %v1934
      %v2465 = vsel %vm2451, %v2432, %v1936
      %v2467 = vsel %vm2451, %v2434, %v1938
      %v2469 = vsel %vm2451, %v2436, %v1940
      %v2471 = vsel %vm2451, %v2438, %v1942
      %v2473 = vsel %vm2451, %v2440, %v1944
      %v2475 = vsel %vm2451, %v2442, %v1946
      %v2477 = vsel %vm2451, %v2444, %v1948
      %v2479 = vsel %vm2451, %v2446, %v1950
      %v2481 = vsel %vm2451, %v2448, %v1952
      %v2483 = vsel %vm2451, %v2450, %v1954
      %vm2484 = vcmask 654336
      %v2486 = vsel %vm2484, %v2453, %v1962
      %v2488 = vsel %vm2484, %v2455, %v1964
      %v2490 = vsel %vm2484, %v2457, %v1966
      %v2492 = vsel %vm2484, %v2459, %v1968
      %v2494 = vsel %vm2484, %v2461, %v1970
      %v2496 = vsel %vm2484, %v2463, %v1972
      %v2498 = vsel %vm2484, %v2465, %v1974
      %v2500 = vsel %vm2484, %v2467, %v1976
      %v2502 = vsel %vm2484, %v2469, %v1978
      %v2504 = vsel %vm2484, %v2471, %v1980
      %v2506 = vsel %vm2484, %v2473, %v1982
      %v2508 = vsel %vm2484, %v2475, %v1984
      %v2510 = vsel %vm2484, %v2477, %v1986
      %v2512 = vsel %vm2484, %v2479, %v1988
      %v2514 = vsel %vm2484, %v2481, %v1990
      %v2516 = vsel %vm2484, %v2483, %v1992
      %vm2517 = vcmask 719872
      %v2519 = vsel %vm2517, %v2486, %v1997
      %v2521 = vsel %vm2517, %v2488, %v1999
      %v2523 = vsel %vm2517, %v2490, %v2001
      %v2525 = vsel %vm2517, %v2492, %v2003
      %v2527 = vsel %vm2517, %v2494, %v2005
      %v2529 = vsel %vm2517, %v2496, %v2007
      %v2531 = vsel %vm2517, %v2498, %v2009
      %v2533 = vsel %vm2517, %v2500, %v2011
      %v2535 = vsel %vm2517, %v2502, %v2013
      %v2537 = vsel %vm2517, %v2504, %v2015
      %v2539 = vsel %vm2517, %v2506, %v2017
      %v2541 = vsel %vm2517, %v2508, %v2019
      %v2543 = vsel %vm2517, %v2510, %v2021
      %v2545 = vsel %vm2517, %v2512, %v2023
      %v2547 = vsel %vm2517, %v2514, %v2025
      %v2549 = vsel %vm2517, %v2516, %v2027
      %vm2550 = vcmask 785408
      %v2552 = vsel %vm2550, %v2519, %v2032
      %v2554 = vsel %vm2550, %v2521, %v2034
      %v2556 = vsel %vm2550, %v2523, %v2036
      %v2558 = vsel %vm2550, %v2525, %v2038
      %v2560 = vsel %vm2550, %v2527, %v2040
      %v2562 = vsel %vm2550, %v2529, %v2042
      %v2564 = vsel %vm2550, %v2531, %v2044
      %v2566 = vsel %vm2550, %v2533, %v2046
      %v2568 = vsel %vm2550, %v2535, %v2048
      %v2570 = vsel %vm2550, %v2537, %v2050
      %v2572 = vsel %vm2550, %v2539, %v2052
      %v2574 = vsel %vm2550, %v2541, %v2054
      %v2576 = vsel %vm2550, %v2543, %v2056
      %v2578 = vsel %vm2550, %v2545, %v2058
      %v2580 = vsel %vm2550, %v2547, %v2060
      %v2582 = vsel %vm2550, %v2549, %v2062
      %vm2583 = vcmask 850944
      %v2585 = vsel %vm2583, %v2552, %v2067
      %v2587 = vsel %vm2583, %v2554, %v2069
      %v2589 = vsel %vm2583, %v2556, %v2071
      %v2591 = vsel %vm2583, %v2558, %v2073
      %v2593 = vsel %vm2583, %v2560, %v2075
      %v2595 = vsel %vm2583, %v2562, %v2077
      %v2597 = vsel %vm2583, %v2564, %v2079
      %v2599 = vsel %vm2583, %v2566, %v2081
      %v2601 = vsel %vm2583, %v2568, %v2083
      %v2603 = vsel %vm2583, %v2570, %v2085
      %v2605 = vsel %vm2583, %v2572, %v2087
      %v2607 = vsel %vm2583, %v2574, %v2089
      %v2609 = vsel %vm2583, %v2576, %v2091
      %v2611 = vsel %vm2583, %v2578, %v2093
      %v2613 = vsel %vm2583, %v2580, %v2095
      %v2615 = vsel %vm2583, %v2582, %v2097
      %vm2616 = vcmask 916480
      %v2618 = vsel %vm2616, %v2585, %v2105
      %v2620 = vsel %vm2616, %v2587, %v2107
      %v2622 = vsel %vm2616, %v2589, %v2109
      %v2624 = vsel %vm2616, %v2591, %v2111
      %v2626 = vsel %vm2616, %v2593, %v2113
      %v2628 = vsel %vm2616, %v2595, %v2115
      %v2630 = vsel %vm2616, %v2597, %v2117
      %v2632 = vsel %vm2616, %v2599, %v2119
      %v2634 = vsel %vm2616, %v2601, %v2121
      %v2636 = vsel %vm2616, %v2603, %v2123
      %v2638 = vsel %vm2616, %v2605, %v2125
      %v2640 = vsel %vm2616, %v2607, %v2127
      %v2642 = vsel %vm2616, %v2609, %v2129
      %v2644 = vsel %vm2616, %v2611, %v2131
      %v2646 = vsel %vm2616, %v2613, %v2133
      %v2648 = vsel %vm2616, %v2615, %v2135
      %vm2649 = vcmask 982016
      %v2651 = vsel %vm2649, %v2618, %v2140
      %v2654 = vsel %vm2649, %v2620, %v2142
      %v2657 = vsel %vm2649, %v2622, %v2144
      %v2660 = vsel %vm2649, %v2624, %v2146
      %v2663 = vsel %vm2649, %v2626, %v2148
      %v2666 = vsel %vm2649, %v2628, %v2150
      %v2669 = vsel %vm2649, %v2630, %v2152
      %v2672 = vsel %vm2649, %v2632, %v2154
      %v2675 = vsel %vm2649, %v2634, %v2156
      %v2678 = vsel %vm2649, %v2636, %v2158
      %v2681 = vsel %vm2649, %v2638, %v2160
      %v2684 = vsel %vm2649, %v2640, %v2162
      %v2687 = vsel %vm2649, %v2642, %v2164
      %v2690 = vsel %vm2649, %v2644, %v2166
      %v2693 = vsel %vm2649, %v2646, %v2168
      %v2696 = vsel %vm2649, %v2648, %v2170
      %v2698 = vunpack.c.l.b16 %v1398
      %v2699 = vunpack.c.l.b16 %v1401
      %v2700 = vunpack.c.l.b16 %v1405
      %v2701 = vunpack.c.l.b16 %v1408
      %v2702 = vpack.c.b16 %v2699, %v2698
      %v2703 = vpack.c.b16 %v2701, %v2700
      %v2704 = vld [vmem:[%s1] sm:$0xf]
      %v2705 = vld [vmem:[%s1 + $0x4] sm:$0xf]
      %v2706 = vld [vmem:[%s1 + $0x8] sm:$0xf]
      %v2707 = vld [vmem:[%s1 + $0xc] sm:$0xf]
      %v2708 = vld [vmem:[%s1 + $0x10] sm:$0xf]
      %v2709 = vld [vmem:[%s1 + $0x14] sm:$0xf]
      %v2710 = vld [vmem:[%s1 + $0x18] sm:$0xf]
      %v2711 = vld [vmem:[%s1 + $0x1c] sm:$0xf]
      %v2712 = vld [vmem:[%s1 + $0x20] sm:$0xf]
      %v2713 = vld [vmem:[%s1 + $0x24] sm:$0xf]
      %v2714 = vld [vmem:[%s1 + $0x28] sm:$0xf]
      %v2715 = vld [vmem:[%s1 + $0x2c] sm:$0xf]
      %v2716 = vld [vmem:[%s1 + $0x30] sm:$0xf]
      %v2717 = vld [vmem:[%s1 + $0x34] sm:$0xf]
      %v2718 = vld [vmem:[%s1 + $0x38] sm:$0xf]
      %v2719 = vld [vmem:[%s1 + $0x3c] sm:$0xf]
      %v2720 = vld [vmem:[%s1 + $0x40] sm:$0xf]
      %v2721 = vld [vmem:[%s2] sm:$0x1]
      %v2723 = vlaneseq
      %v2724 = vshrl.u32 %v2723, 7
      %v2725 = vsub.s32 0, %v2724
      %v2726 = vrot.slane %v2721, %v2725
      %v2745 = vunpack.c.l.b16 %v2704
      %v2746 = vunpack.c.l.b16 %v2705
      %v2747 = vunpack.c.l.b16 %v2706
      %v2748 = vunpack.c.l.b16 %v2707
      %v2749 = vunpack.c.l.b16 %v2708
      %v2750 = vunpack.c.l.b16 %v2709
      %v2751 = vunpack.c.l.b16 %v2710
      %v2752 = vunpack.c.l.b16 %v2711
      %v2753 = vunpack.c.l.b16 %v2712
      %v2754 = vunpack.c.l.b16 %v2713
      %v2755 = vunpack.c.l.b16 %v2714
      %v2756 = vunpack.c.l.b16 %v2715
      %v2757 = vunpack.c.l.b16 %v2716
      %v2758 = vunpack.c.l.b16 %v2717
      %v2759 = vunpack.c.l.b16 %v2718
      %v2760 = vunpack.c.l.b16 %v2719
      %v2761 = vunpack.c.l.b16 %v2720
      %v2762 = vpack.c.b16 %v2746, %v2745
      %v2763 = vpack.c.b16 %v2748, %v2747
      %v2764 = vpack.c.b16 %v2750, %v2749
      %v2765 = vpack.c.b16 %v2752, %v2751
      %v2766 = vpack.c.b16 %v2754, %v2753
      %v2767 = vpack.c.b16 %v2756, %v2755
      %v2768 = vpack.c.b16 %v2758, %v2757
      %v2769 = vpack.c.b16 %v2760, %v2759
      %v2770 = vpack.c.b16 %v2761, %v2761
      %v2780 = vsel %vm2171, %v1573, 0
      %v2783 = vsel %vm2171, %v1574, 0
      %v2786 = vsel %vm2171, %v1575, 0
      %v2789 = vsel %vm2171, %v1576, 0
      %v2792 = vsel %vm2171, %v1577, 0
      %v2795 = vsel %vm2171, %v1578, 0
      %v2798 = vsel %vm2171, %v1579, 0
      %v2801 = vsel %vm2171, %v1580, 0
      %v2804 = vsel %vm2171, %v1581, 0
      %v2807 = vsel %vm2171, %v1582, 0
      %v2810 = vsel %vm2171, %v1583, 0
      %v2813 = vsel %vm2171, %v1584, 0
      %v2816 = vsel %vm2171, %v1959, 0
      %v2819 = vsel %vm2171, %v1960, 0
      %v2822 = vsel %vm2171, %v2702, 0
      %v2825 = vsel %vm2171, %v2703, 0
      %vm2827 = vcmask 1043456
      %v2829 = vsel %vm2827, %v2770, 0
      %2831 = vmatprep.subr.bf16.mxu0 0
      %2832 = vmatpush1.bf16.msra.mxu0 %v2762
      %2833 = vmatprep.subr.bf16.mxu0 0
      %2834 = vmatpush1.bf16.msra.mxu0 %v2763
      %2835 = vmatprep.subr.bf16.mxu0 0
      %2836 = vmatpush1.bf16.msra.mxu0 %v2764
      %2837 = vmatprep.subr.bf16.mxu0 0
      %2838 = vmatpush1.bf16.msra.mxu0 %v2765
      %2839 = vmatprep.subr.bf16.mxu0 0
      %2840 = vmatpush1.bf16.msra.mxu0 %v2766
      %2841 = vmatprep.subr.bf16.mxu0 0
      %2842 = vmatpush1.bf16.msra.mxu0 %v2767
      %2843 = vmatprep.subr.bf16.mxu0 0
      %2844 = vmatpush1.bf16.msra.mxu0 %v2768
      %2845 = vmatprep.subr.bf16.mxu0 0
      %2846 = vmatpush1.bf16.msra.mxu0 %v2769
      %2847 = vmatprep.subr.bf16.mxu0 0
      %2848 = vmatpush1.bf16.msra.mxu0 %v2829
      %2849 = vmatprep.subr.bf16.mxu0 0
      %2850 = vmatpush1.bf16.msra.mxu0 0
      %2851 = vmatprep.subr.bf16.mxu0 0
      %2852 = vmatpush1.bf16.msra.mxu0 0
      %2853 = vmatprep.subr.bf16.mxu0 0
      %2854 = vmatpush1.bf16.msra.mxu0 0
      %2855 = vmatprep.subr.bf16.mxu0 0
      %2856 = vmatpush1.bf16.msra.mxu0 0
      %2857 = vmatprep.subr.bf16.mxu0 0
      %2858 = vmatpush1.bf16.msra.mxu0 0
      %2859 = vmatprep.subr.bf16.mxu0 0
      %2860 = vmatpush1.bf16.msra.mxu0 0
      %2861 = vmatprep.subr.bf16.mxu0 0
      %2862 = vmatpush1.bf16.msra.mxu0 0
      %2863 = vmatprep.mubr.bf16.mxu0 %v2780
      %2864 = vmatmul.mubr.bf16.gmra.mrb[0].mxu0 %v2651
      %v2865 = vpop.f32.mrb[0].mxu0
      %v2866 = vadd.f32 %v2726, %v2865
      %v2867 = vpop.f32.mrb[0].mxu0
      %v2868 = vpop.f32.mrb[0].mxu0
      %v2869 = vadd.f32 %v2726, %v2868
      %v2870 = vpop.f32.mrb[0].mxu0
      %2871 = vmatprep.mubr.bf16.mxu0 %v2783
      %2872 = vmatmul.mubr.bf16.gmra.mrb[0].mxu0 %v2654
      %v2873 = vpop.f32.mrb[0].mxu0
      %v2874 = vadd.f32 %v2726, %v2873
      %v2875 = vpop.f32.mrb[0].mxu0
      %v2876 = vpop.f32.mrb[0].mxu0
      %v2877 = vadd.f32 %v2726, %v2876
      %v2878 = vpop.f32.mrb[0].mxu0
      %2879 = vmatprep.mubr.bf16.mxu0 %v2786
      %2880 = vmatmul.mubr.bf16.gmra.mrb[0].mxu0 %v2657
      %v2881 = vpop.f32.mrb[0].mxu0
      %v2882 = vadd.f32 %v2726, %v2881
      %v2883 = vpop.f32.mrb[0].mxu0
      %v2884 = vpop.f32.mrb[0].mxu0
      %v2885 = vadd.f32 %v2726, %v2884
      %v2886 = vpop.f32.mrb[0].mxu0
      %2887 = vmatprep.mubr.bf16.mxu0 %v2789
      %2888 = vmatmul.mubr.bf16.gmra.mrb[0].mxu0 %v2660
      %v2889 = vpop.f32.mrb[0].mxu0
      %v2890 = vadd.f32 %v2726, %v2889
      %v2891 = vpop.f32.mrb[0].mxu0
      %v2892 = vpop.f32.mrb[0].mxu0
      %v2893 = vadd.f32 %v2726, %v2892
      %v2894 = vpop.f32.mrb[0].mxu0
      %2895 = vmatprep.mubr.bf16.mxu0 %v2792
      %2896 = vmatmul.mubr.bf16.gmra.mrb[0].mxu0 %v2663
      %v2897 = vpop.f32.mrb[0].mxu0
      %v2898 = vadd.f32 %v2726, %v2897
      %v2899 = vpop.f32.mrb[0].mxu0
      %v2900 = vpop.f32.mrb[0].mxu0
      %v2901 = vadd.f32 %v2726, %v2900
      %v2902 = vpop.f32.mrb[0].mxu0
      %2903 = vmatprep.mubr.bf16.mxu0 %v2795
      %2904 = vmatmul.mubr.bf16.gmra.mrb[0].mxu0 %v2666
      %v2905 = vpop.f32.mrb[0].mxu0
      %v2906 = vadd.f32 %v2726, %v2905
      %v2907 = vpop.f32.mrb[0].mxu0
      %v2908 = vpop.f32.mrb[0].mxu0
      %v2909 = vadd.f32 %v2726, %v2908
      %v2910 = vpop.f32.mrb[0].mxu0
      %2911 = vmatprep.mubr.bf16.mxu0 %v2798
      %2912 = vmatmul.mubr.bf16.gmra.mrb[0].mxu0 %v2669
      %v2913 = vpop.f32.mrb[0].mxu0
      %v2914 = vadd.f32 %v2726, %v2913
      %v2915 = vpop.f32.mrb[0].mxu0
      %v2916 = vpop.f32.mrb[0].mxu0
      %v2917 = vadd.f32 %v2726, %v2916
      %v2918 = vpop.f32.mrb[0].mxu0
      %2919 = vmatprep.mubr.bf16.mxu0 %v2801
      %2920 = vmatmul.mubr.bf16.gmra.mrb[0].mxu0 %v2672
      %v2921 = vpop.f32.mrb[0].mxu0
      %v2922 = vadd.f32 %v2726, %v2921
      %v2923 = vpop.f32.mrb[0].mxu0
      %v2924 = vpop.f32.mrb[0].mxu0
      %v2925 = vadd.f32 %v2726, %v2924
      %v2926 = vpop.f32.mrb[0].mxu0
      %2927 = vmatprep.mubr.bf16.mxu0 %v2804
      %2928 = vmatmul.mubr.bf16.gmra.mrb[0].mxu0 %v2675
      %v2929 = vpop.f32.mrb[0].mxu0
      %v2930 = vadd.f32 %v2726, %v2929
      %v2931 = vpop.f32.mrb[0].mxu0
      %v2932 = vpop.f32.mrb[0].mxu0
      %v2933 = vadd.f32 %v2726, %v2932
      %v2934 = vpop.f32.mrb[0].mxu0
      %2935 = vmatprep.mubr.bf16.mxu0 %v2807
      %2936 = vmatmul.mubr.bf16.gmra.mrb[0].mxu0 %v2678
      %v2937 = vpop.f32.mrb[0].mxu0
      %v2938 = vadd.f32 %v2726, %v2937
      %v2939 = vpop.f32.mrb[0].mxu0
      %v2940 = vpop.f32.mrb[0].mxu0
      %v2941 = vadd.f32 %v2726, %v2940
      %v2942 = vpop.f32.mrb[0].mxu0
      %2943 = vmatprep.mubr.bf16.mxu0 %v2810
      %2944 = vmatmul.mubr.bf16.gmra.mrb[0].mxu0 %v2681
      %v2945 = vpop.f32.mrb[0].mxu0
      %v2946 = vadd.f32 %v2726, %v2945
      %v2947 = vpop.f32.mrb[0].mxu0
      %v2948 = vpop.f32.mrb[0].mxu0
      %v2949 = vadd.f32 %v2726, %v2948
      %v2950 = vpop.f32.mrb[0].mxu0
      %2951 = vmatprep.mubr.bf16.mxu0 %v2813
      %2952 = vmatmul.mubr.bf16.gmra.mrb[0].mxu0 %v2684
      %v2953 = vpop.f32.mrb[0].mxu0
      %v2954 = vadd.f32 %v2726, %v2953
      %v2955 = vpop.f32.mrb[0].mxu0
      %v2956 = vpop.f32.mrb[0].mxu0
      %v2957 = vadd.f32 %v2726, %v2956
      %v2958 = vpop.f32.mrb[0].mxu0
      %2959 = vmatprep.mubr.bf16.mxu0 %v2816
      %2960 = vmatmul.mubr.bf16.gmra.mrb[0].mxu0 %v2687
      %v2961 = vpop.f32.mrb[0].mxu0
      %v2962 = vadd.f32 %v2726, %v2961
      %v2963 = vpop.f32.mrb[0].mxu0
      %v2964 = vpop.f32.mrb[0].mxu0
      %v2965 = vadd.f32 %v2726, %v2964
      %v2966 = vpop.f32.mrb[0].mxu0
      %2967 = vmatprep.mubr.bf16.mxu0 %v2819
      %2968 = vmatmul.mubr.bf16.gmra.mrb[0].mxu0 %v2690
      %v2969 = vpop.f32.mrb[0].mxu0
      %v2970 = vadd.f32 %v2726, %v2969
      %v2971 = vpop.f32.mrb[0].mxu0
      %v2972 = vpop.f32.mrb[0].mxu0
      %v2973 = vadd.f32 %v2726, %v2972
      %v2974 = vpop.f32.mrb[0].mxu0
      %2975 = vmatprep.mubr.bf16.mxu0 %v2822
      %2976 = vmatmul.mubr.bf16.gmra.mrb[0].mxu0 %v2693
      %v2977 = vpop.f32.mrb[0].mxu0
      %v2978 = vadd.f32 %v2726, %v2977
      %v2979 = vpop.f32.mrb[0].mxu0
      %v2980 = vpop.f32.mrb[0].mxu0
      %v2981 = vadd.f32 %v2726, %v2980
      %v2982 = vpop.f32.mrb[0].mxu0
      %2983 = vmatprep.mubr.bf16.mxu0 %v2825
      %2984 = vmatmul.mubr.bf16.gmra.mrb[0].mxu0 %v2696
      %v2985 = vpop.f32.mrb[0].mxu0
      %v2986 = vadd.f32 %v2726, %v2985
      %v2987 = vpop.f32.mrb[0].mxu0
      %v2988 = vpop.f32.mrb[0].mxu0
      %v2989 = vadd.f32 %v2726, %v2988
      %v2990 = vpop.f32.mrb[0].mxu0
      %2991 = vdwg.mxu0
      %v2992 = vmax.f32 %v2866, 0.0
      %v2993 = vmax.f32 %v2869, 0.0
      %v2994 = vmax.f32 %v2874, 0.0
      %v2995 = vmax.f32 %v2877, 0.0
      %v2996 = vmax.f32 %v2882, 0.0
      %v2997 = vmax.f32 %v2885, 0.0
      %v2998 = vmax.f32 %v2890, 0.0
      %v2999 = vmax.f32 %v2893, 0.0
      %v3000 = vmax.f32 %v2898, 0.0
      %v3001 = vmax.f32 %v2901, 0.0
      %v3002 = vmax.f32 %v2906, 0.0
      %v3003 = vmax.f32 %v2909, 0.0
      %v3004 = vmax.f32 %v2914, 0.0
      %v3005 = vmax.f32 %v2917, 0.0
      %v3006 = vmax.f32 %v2922, 0.0
      %v3007 = vmax.f32 %v2925, 0.0
      %v3008 = vmax.f32 %v2930, 0.0
      %v3009 = vmax.f32 %v2933, 0.0
      %v3010 = vmax.f32 %v2938, 0.0
      %v3011 = vmax.f32 %v2941, 0.0
      %v3012 = vmax.f32 %v2946, 0.0
      %v3013 = vmax.f32 %v2949, 0.0
      %v3014 = vmax.f32 %v2954, 0.0
      %v3015 = vmax.f32 %v2957, 0.0
      %v3016 = vmax.f32 %v2962, 0.0
      %v3017 = vmax.f32 %v2965, 0.0
      %v3018 = vmax.f32 %v2970, 0.0
      %v3019 = vmax.f32 %v2973, 0.0
      %v3020 = vmax.f32 %v2978, 0.0
      %v3021 = vmax.f32 %v2981, 0.0
      %v3022 = vmax.f32 %v2986, 0.0
      %v3023 = vmax.f32 %v2989, 0.0
      %v3024 = vpack.c.bf16 %v2993, %v2992
      %v3025 = vpack.c.bf16 %v2995, %v2994
      %v3026 = vpack.c.bf16 %v2997, %v2996
      %v3027 = vpack.c.bf16 %v2999, %v2998
      %v3028 = vpack.c.bf16 %v3001, %v3000
      %v3029 = vpack.c.bf16 %v3003, %v3002
      %v3030 = vpack.c.bf16 %v3005, %v3004
      %v3031 = vpack.c.bf16 %v3007, %v3006
      %v3032 = vpack.c.bf16 %v3009, %v3008
      %v3033 = vpack.c.bf16 %v3011, %v3010
      %v3034 = vpack.c.bf16 %v3013, %v3012
      %v3035 = vpack.c.bf16 %v3015, %v3014
      %v3036 = vpack.c.bf16 %v3017, %v3016
      %v3037 = vpack.c.bf16 %v3019, %v3018
      %v3038 = vpack.c.bf16 %v3021, %v3020
      %v3039 = vpack.c.bf16 %v3023, %v3022
      %v3056 = vunpack.c.l.b16 %v3024
      %v3057 = vunpack.c.h.b16 %v3024
      %v3058 = vunpack.c.l.b16 %v3025
      %v3059 = vunpack.c.h.b16 %v3025
      %v3060 = vunpack.c.l.b16 %v3026
      %v3061 = vunpack.c.h.b16 %v3026
      %v3062 = vunpack.c.l.b16 %v3027
      %v3063 = vunpack.c.h.b16 %v3027
      %v3064 = vunpack.c.l.b16 %v3028
      %v3065 = vunpack.c.h.b16 %v3028
      %v3066 = vunpack.c.l.b16 %v3029
      %v3067 = vunpack.c.h.b16 %v3029
      %v3068 = vunpack.c.l.b16 %v3030
      %v3069 = vunpack.c.h.b16 %v3030
      %v3070 = vunpack.c.l.b16 %v3031
      %v3071 = vunpack.c.h.b16 %v3031
      %v3072 = vunpack.c.l.b16 %v3032
      %v3073 = vunpack.c.h.b16 %v3032
      %v3074 = vunpack.c.l.b16 %v3033
      %v3075 = vunpack.c.h.b16 %v3033
      %v3076 = vunpack.c.l.b16 %v3034
      %v3077 = vunpack.c.h.b16 %v3034
      %v3078 = vunpack.c.l.b16 %v3035
      %v3079 = vunpack.c.h.b16 %v3035
      %v3080 = vunpack.c.l.b16 %v3036
      %v3081 = vunpack.c.h.b16 %v3036
      %v3082 = vunpack.c.l.b16 %v3037
      %v3083 = vunpack.c.h.b16 %v3037
      %v3084 = vunpack.c.l.b16 %v3038
      %v3085 = vunpack.c.h.b16 %v3038
      %v3086 = vunpack.c.l.b16 %v3039
      %v3087 = vunpack.c.h.b16 %v3039
      %v3088 = vpack.c.b16 %v3056, %v3056
      %v3089 = vpack.c.b16 %v3057, %v3057
      %v3090 = vpack.c.b16 %v3058, %v3058
      %v3091 = vpack.c.b16 %v3059, %v3059
      %v3092 = vpack.c.b16 %v3060, %v3060
      %v3093 = vpack.c.b16 %v3061, %v3061
      %v3094 = vpack.c.b16 %v3062, %v3062
      %v3095 = vpack.c.b16 %v3063, %v3063
      %v3096 = vpack.c.b16 %v3064, %v3064
      %v3097 = vpack.c.b16 %v3065, %v3065
      %v3098 = vpack.c.b16 %v3066, %v3066
      %v3099 = vpack.c.b16 %v3067, %v3067
      %v3100 = vpack.c.b16 %v3068, %v3068
      %v3101 = vpack.c.b16 %v3069, %v3069
      %v3102 = vpack.c.b16 %v3070, %v3070
      %v3103 = vpack.c.b16 %v3071, %v3071
      %v3104 = vpack.c.b16 %v3072, %v3072
      %v3105 = vpack.c.b16 %v3073, %v3073
      %v3106 = vpack.c.b16 %v3074, %v3074
      %v3107 = vpack.c.b16 %v3075, %v3075
      %v3108 = vpack.c.b16 %v3076, %v3076
      %v3109 = vpack.c.b16 %v3077, %v3077
      %v3110 = vpack.c.b16 %v3078, %v3078
      %v3111 = vpack.c.b16 %v3079, %v3079
      %v3112 = vpack.c.b16 %v3080, %v3080
      %v3113 = vpack.c.b16 %v3081, %v3081
      %v3114 = vpack.c.b16 %v3082, %v3082
      %v3115 = vpack.c.b16 %v3083, %v3083
      %v3116 = vpack.c.b16 %v3084, %v3084
      %v3117 = vpack.c.b16 %v3085, %v3085
      %v3118 = vpack.c.b16 %v3086, %v3086
      %v3119 = vpack.c.b16 %v3087, %v3087
      %vm3152 = vcmask 27648
      %3153 = vst.msk [vmem:[%s274] sm:$0xf] %vm3152, %v3088
      %3154 = vst.msk [vmem:[%s274 + $0x4] sm:$0xf] %vm3152, %v3089
      %3155 = vst.msk [vmem:[%s274 + $0x8] sm:$0xf] %vm3152, %v3090
      %3156 = vst.msk [vmem:[%s274 + $0xc] sm:$0xf] %vm3152, %v3091
      %3157 = vst.msk [vmem:[%s274 + $0x10] sm:$0xf] %vm3152, %v3092
      %3158 = vst.msk [vmem:[%s274 + $0x14] sm:$0xf] %vm3152, %v3093
      %3159 = vst.msk [vmem:[%s274 + $0x18] sm:$0xf] %vm3152, %v3094
      %3160 = vst.msk [vmem:[%s274 + $0x1c] sm:$0xf] %vm3152, %v3095
      %3161 = vst.msk [vmem:[%s274 + $0x20] sm:$0xf] %vm3152, %v3096
      %3162 = vst.msk [vmem:[%s274 + $0x24] sm:$0xf] %vm3152, %v3097
      %3163 = vst.msk [vmem:[%s274 + $0x28] sm:$0xf] %vm3152, %v3098
      %3164 = vst.msk [vmem:[%s274 + $0x2c] sm:$0xf] %vm3152, %v3099
      %3165 = vst.msk [vmem:[%s274 + $0x30] sm:$0xf] %vm3152, %v3100
      %3166 = vst.msk [vmem:[%s274 + $0x34] sm:$0xf] %vm3152, %v3101
      %3167 = vst.msk [vmem:[%s274 + $0x38] sm:$0xf] %vm3152, %v3102
      %3168 = vst.msk [vmem:[%s274 + $0x3c] sm:$0xf] %vm3152, %v3103
      %3169 = vst.msk [vmem:[%s274 + $0x40] sm:$0xf] %vm3152, %v3104
      %3170 = vst.msk [vmem:[%s274 + $0x44] sm:$0xf] %vm3152, %v3105
      %3171 = vst.msk [vmem:[%s274 + $0x48] sm:$0xf] %vm3152, %v3106
      %3172 = vst.msk [vmem:[%s274 + $0x4c] sm:$0xf] %vm3152, %v3107
      %3173 = vst.msk [vmem:[%s274 + $0x50] sm:$0xf] %vm3152, %v3108
      %3174 = vst.msk [vmem:[%s274 + $0x54] sm:$0xf] %vm3152, %v3109
      %3175 = vst.msk [vmem:[%s274 + $0x58] sm:$0xf] %vm3152, %v3110
      %3176 = vst.msk [vmem:[%s274 + $0x5c] sm:$0xf] %vm3152, %v3111
      %3177 = vst.msk [vmem:[%s274 + $0x60] sm:$0xf] %vm3152, %v3112
      %3178 = vst.msk [vmem:[%s274 + $0x64] sm:$0xf] %vm3152, %v3113
      %3179 = vst.msk [vmem:[%s274 + $0x68] sm:$0xf] %vm3152, %v3114
      %3180 = vst.msk [vmem:[%s274 + $0x6c] sm:$0xf] %vm3152, %v3115
      %3181 = vst.msk [vmem:[%s274 + $0x70] sm:$0xf] %vm3152, %v3116
      %3182 = vst.msk [vmem:[%s274 + $0x74] sm:$0xf] %vm3152, %v3117
      %3183 = vst.msk [vmem:[%s274 + $0x78] sm:$0xf] %vm3152, %v3118
      %3184 = vst.msk [vmem:[%s274 + $0x7c] sm:$0xf] %vm3152, %v3119
      %3185 = vrot.lane.b32.xlu0 %v3088, 124
      %v3186 = vpop.permute.xlu0 %3185
      %3187 = vrot.lane.b32.xlu0 %v3089, 124
      %v3188 = vpop.permute.xlu0 %3187
      %3189 = vrot.lane.b32.xlu0 %v3090, 124
      %v3190 = vpop.permute.xlu0 %3189
      %3191 = vrot.lane.b32.xlu0 %v3091, 124
      %v3192 = vpop.permute.xlu0 %3191
      %3193 = vrot.lane.b32.xlu0 %v3092, 124
      %v3194 = vpop.permute.xlu0 %3193
      %3195 = vrot.lane.b32.xlu0 %v3093, 124
      %v3196 = vpop.permute.xlu0 %3195
      %3197 = vrot.lane.b32.xlu0 %v3094, 124
      %v3198 = vpop.permute.xlu0 %3197
      %3199 = vrot.lane.b32.xlu0 %v3095, 124
      %v3200 = vpop.permute.xlu0 %3199
      %3201 = vrot.lane.b32.xlu0 %v3096, 124
      %v3202 = vpop.permute.xlu0 %3201
      %3203 = vrot.lane.b32.xlu0 %v3097, 124
      %v3204 = vpop.permute.xlu0 %3203
      %3205 = vrot.lane.b32.xlu0 %v3098, 124
      %v3206 = vpop.permute.xlu0 %3205
      %3207 = vrot.lane.b32.xlu0 %v3099, 124
      %v3208 = vpop.permute.xlu0 %3207
      %3209 = vrot.lane.b32.xlu0 %v3100, 124
      %v3210 = vpop.permute.xlu0 %3209
      %3211 = vrot.lane.b32.xlu0 %v3101, 124
      %v3212 = vpop.permute.xlu0 %3211
      %3213 = vrot.lane.b32.xlu0 %v3102, 124
      %v3214 = vpop.permute.xlu0 %3213
      %3215 = vrot.lane.b32.xlu0 %v3103, 124
      %v3216 = vpop.permute.xlu0 %3215
      %3217 = vrot.lane.b32.xlu0 %v3104, 124
      %v3218 = vpop.permute.xlu0 %3217
      %3219 = vrot.lane.b32.xlu0 %v3105, 124
      %v3220 = vpop.permute.xlu0 %3219
      %3221 = vrot.lane.b32.xlu0 %v3106, 124
      %v3222 = vpop.permute.xlu0 %3221
      %3223 = vrot.lane.b32.xlu0 %v3107, 124
      %v3224 = vpop.permute.xlu0 %3223
      %3225 = vrot.lane.b32.xlu0 %v3108, 124
      %v3226 = vpop.permute.xlu0 %3225
      %3227 = vrot.lane.b32.xlu0 %v3109, 124
      %v3228 = vpop.permute.xlu0 %3227
      %3229 = vrot.lane.b32.xlu0 %v3110, 124
      %v3230 = vpop.permute.xlu0 %3229
      %3231 = vrot.lane.b32.xlu0 %v3111, 124
      %v3232 = vpop.permute.xlu0 %3231
      %3233 = vrot.lane.b32.xlu0 %v3112, 124
      %v3234 = vpop.permute.xlu0 %3233
      %3235 = vrot.lane.b32.xlu0 %v3113, 124
      %v3236 = vpop.permute.xlu0 %3235
      %3237 = vrot.lane.b32.xlu0 %v3114, 124
      %v3238 = vpop.permute.xlu0 %3237
      %3239 = vrot.lane.b32.xlu0 %v3115, 124
      %v3240 = vpop.permute.xlu0 %3239
      %3241 = vrot.lane.b32.xlu0 %v3116, 124
      %v3242 = vpop.permute.xlu0 %3241
      %3243 = vrot.lane.b32.xlu0 %v3117, 124
      %v3244 = vpop.permute.xlu0 %3243
      %3245 = vrot.lane.b32.xlu0 %v3118, 124
      %v3246 = vpop.permute.xlu0 %3245
      %3247 = vrot.lane.b32.xlu0 %v3119, 124
      %v3248 = vpop.permute.xlu0 %3247
      %3281 = vst.msk [vmem:[%s285] sm:$0xf] %vm3152, %v3186
      %3282 = vst.msk [vmem:[%s285 + $0x4] sm:$0xf] %vm3152, %v3188
      %3283 = vst.msk [vmem:[%s285 + $0x8] sm:$0xf] %vm3152, %v3190
      %3284 = vst.msk [vmem:[%s285 + $0xc] sm:$0xf] %vm3152, %v3192
      %3285 = vst.msk [vmem:[%s285 + $0x10] sm:$0xf] %vm3152, %v3194
      %3286 = vst.msk [vmem:[%s285 + $0x14] sm:$0xf] %vm3152, %v3196
      %3287 = vst.msk [vmem:[%s285 + $0x18] sm:$0xf] %vm3152, %v3198
      %3288 = vst.msk [vmem:[%s285 + $0x1c] sm:$0xf] %vm3152, %v3200
      %3289 = vst.msk [vmem:[%s285 + $0x20] sm:$0xf] %vm3152, %v3202
      %3290 = vst.msk [vmem:[%s285 + $0x24] sm:$0xf] %vm3152, %v3204
      %3291 = vst.msk [vmem:[%s285 + $0x28] sm:$0xf] %vm3152, %v3206
      %3292 = vst.msk [vmem:[%s285 + $0x2c] sm:$0xf] %vm3152, %v3208
      %3293 = vst.msk [vmem:[%s285 + $0x30] sm:$0xf] %vm3152, %v3210
      %3294 = vst.msk [vmem:[%s285 + $0x34] sm:$0xf] %vm3152, %v3212
      %3295 = vst.msk [vmem:[%s285 + $0x38] sm:$0xf] %vm3152, %v3214
      %3296 = vst.msk [vmem:[%s285 + $0x3c] sm:$0xf] %vm3152, %v3216
      %3297 = vst.msk [vmem:[%s285 + $0x40] sm:$0xf] %vm3152, %v3218
      %3298 = vst.msk [vmem:[%s285 + $0x44] sm:$0xf] %vm3152, %v3220
      %3299 = vst.msk [vmem:[%s285 + $0x48] sm:$0xf] %vm3152, %v3222
      %3300 = vst.msk [vmem:[%s285 + $0x4c] sm:$0xf] %vm3152, %v3224
      %3301 = vst.msk [vmem:[%s285 + $0x50] sm:$0xf] %vm3152, %v3226
      %3302 = vst.msk [vmem:[%s285 + $0x54] sm:$0xf] %vm3152, %v3228
      %3303 = vst.msk [vmem:[%s285 + $0x58] sm:$0xf] %vm3152, %v3230
      %3304 = vst.msk [vmem:[%s285 + $0x5c] sm:$0xf] %vm3152, %v3232
      %3305 = vst.msk [vmem:[%s285 + $0x60] sm:$0xf] %vm3152, %v3234
      %3306 = vst.msk [vmem:[%s285 + $0x64] sm:$0xf] %vm3152, %v3236
      %3307 = vst.msk [vmem:[%s285 + $0x68] sm:$0xf] %vm3152, %v3238
      %3308 = vst.msk [vmem:[%s285 + $0x6c] sm:$0xf] %vm3152, %v3240
      %3309 = vst.msk [vmem:[%s285 + $0x70] sm:$0xf] %vm3152, %v3242
      %3310 = vst.msk [vmem:[%s285 + $0x74] sm:$0xf] %vm3152, %v3244
      %3311 = vst.msk [vmem:[%s285 + $0x78] sm:$0xf] %vm3152, %v3246
      %3312 = vst.msk [vmem:[%s285 + $0x7c] sm:$0xf] %vm3152, %v3248
      %vm3313 = vcmask 31744
      %v3314 = vsel %vm3313, %v2992, 0.0
      %v3315 = vsel %vm3313, %v2993, 0.0
      %v3316 = vadd.f32 %v3314, %v3315
      %v3317 = vsel %vm3313, %v2994, 0.0
      %v3318 = vadd.f32 %v3316, %v3317
      %v3319 = vsel %vm3313, %v2995, 0.0
      %v3320 = vadd.f32 %v3318, %v3319
      %v3321 = vsel %vm3313, %v2996, 0.0
      %v3322 = vadd.f32 %v3320, %v3321
      %v3323 = vsel %vm3313, %v2997, 0.0
      %v3324 = vadd.f32 %v3322, %v3323
      %v3325 = vsel %vm3313, %v2998, 0.0
      %v3326 = vadd.f32 %v3324, %v3325
      %v3327 = vsel %vm3313, %v2999, 0.0
      %v3328 = vadd.f32 %v3326, %v3327
      %v3329 = vsel %vm3313, %v3000, 0.0
      %v3330 = vadd.f32 %v3328, %v3329
      %v3331 = vsel %vm3313, %v3001, 0.0
      %v3332 = vadd.f32 %v3330, %v3331
      %v3333 = vsel %vm3313, %v3002, 0.0
      %v3334 = vadd.f32 %v3332, %v3333
      %v3335 = vsel %vm3313, %v3003, 0.0
      %v3336 = vadd.f32 %v3334, %v3335
      %v3337 = vsel %vm3313, %v3004, 0.0
      %v3338 = vadd.f32 %v3336, %v3337
      %v3339 = vsel %vm3313, %v3005, 0.0
      %v3340 = vadd.f32 %v3338, %v3339
      %v3341 = vsel %vm3313, %v3006, 0.0
      %v3342 = vadd.f32 %v3340, %v3341
      %v3343 = vsel %vm3313, %v3007, 0.0
      %v3344 = vadd.f32 %v3342, %v3343
      %v3345 = vsel %vm3313, %v3008, 0.0
      %v3346 = vadd.f32 %v3344, %v3345
      %v3347 = vsel %vm3313, %v3009, 0.0
      %v3348 = vadd.f32 %v3346, %v3347
      %v3349 = vsel %vm3313, %v3010, 0.0
      %v3350 = vadd.f32 %v3348, %v3349
      %v3351 = vsel %vm3313, %v3011, 0.0
      %v3352 = vadd.f32 %v3350, %v3351
      %v3353 = vsel %vm3313, %v3012, 0.0
      %v3354 = vadd.f32 %v3352, %v3353
      %v3355 = vsel %vm3313, %v3013, 0.0
      %v3356 = vadd.f32 %v3354, %v3355
      %v3357 = vsel %vm3313, %v3014, 0.0
      %v3358 = vadd.f32 %v3356, %v3357
      %v3359 = vsel %vm3313, %v3015, 0.0
      %v3360 = vadd.f32 %v3358, %v3359
      %v3361 = vsel %vm3313, %v3016, 0.0
      %v3362 = vadd.f32 %v3360, %v3361
      %v3363 = vsel %vm3313, %v3017, 0.0
      %v3364 = vadd.f32 %v3362, %v3363
      %v3365 = vsel %vm3313, %v3018, 0.0
      %v3366 = vadd.f32 %v3364, %v3365
      %v3367 = vsel %vm3313, %v3019, 0.0
      %v3368 = vadd.f32 %v3366, %v3367
      %v3369 = vsel %vm3313, %v3020, 0.0
      %v3370 = vadd.f32 %v3368, %v3369
      %v3371 = vsel %vm3313, %v3021, 0.0
      %v3372 = vadd.f32 %v3370, %v3371
      %v3373 = vsel %vm3313, %v3022, 0.0
      %v3374 = vadd.f32 %v3372, %v3373
      %v3375 = vsel %vm3313, %v3023, 0.0
      %v3376 = vadd.f32 %v3374, %v3375
      %v3377 = vrot.slane %v3376, 4
      %v3378 = vadd.f32 %v3376, %v3377
      %v3379 = vrot.slane %v3378, 2
      %v3380 = vadd.f32 %v3378, %v3379
      %v3381 = vrot.slane %v3380, 1
      %v3382 = vadd.f32 %v3380, %v3381
      %v3383 = vsel %vm3313, %v2992, -inf
      %v3384 = vsel %vm3313, %v2993, -inf
      %v3385 = vsel %vm3313, %v2994, -inf
      %v3386 = vsel %vm3313, %v2995, -inf
      %v3387 = vsel %vm3313, %v2996, -inf
      %v3388 = vmax.f32 %v3383, %v3387
      %v3389 = vsel %vm3313, %v2997, -inf
      %v3390 = vmax.f32 %v3384, %v3389
      %v3391 = vsel %vm3313, %v2998, -inf
      %v3392 = vmax.f32 %v3385, %v3391
      %v3393 = vsel %vm3313, %v2999, -inf
      %v3394 = vmax.f32 %v3386, %v3393
      %v3395 = vsel %vm3313, %v3000, -inf
      %v3396 = vmax.f32 %v3388, %v3395
      %v3397 = vsel %vm3313, %v3001, -inf
      %v3398 = vmax.f32 %v3390, %v3397
      %v3399 = vsel %vm3313, %v3002, -inf
      %v3400 = vmax.f32 %v3392, %v3399
      %v3401 = vsel %vm3313, %v3003, -inf
      %v3402 = vmax.f32 %v3394, %v3401
      %v3403 = vsel %vm3313, %v3004, -inf
      %v3404 = vmax.f32 %v3396, %v3403
      %v3405 = vsel %vm3313, %v3005, -inf
      %v3406 = vmax.f32 %v3398, %v3405
      %v3407 = vsel %vm3313, %v3006, -inf
      %v3408 = vmax.f32 %v3400, %v3407
      %v3409 = vsel %vm3313, %v3007, -inf
      %v3410 = vmax.f32 %v3402, %v3409
      %v3411 = vsel %vm3313, %v3008, -inf
      %v3412 = vmax.f32 %v3404, %v3411
      %v3413 = vsel %vm3313, %v3009, -inf
      %v3414 = vmax.f32 %v3406, %v3413
      %v3415 = vsel %vm3313, %v3010, -inf
      %v3416 = vmax.f32 %v3408, %v3415
      %v3417 = vsel %vm3313, %v3011, -inf
      %v3418 = vmax.f32 %v3410, %v3417
      %v3419 = vsel %vm3313, %v3012, -inf
      %v3420 = vmax.f32 %v3412, %v3419
      %v3421 = vsel %vm3313, %v3013, -inf
      %v3422 = vmax.f32 %v3414, %v3421
      %v3423 = vsel %vm3313, %v3014, -inf
      %v3424 = vmax.f32 %v3416, %v3423
      %v3425 = vsel %vm3313, %v3015, -inf
      %v3426 = vmax.f32 %v3418, %v3425
      %v3427 = vsel %vm3313, %v3016, -inf
      %v3428 = vmax.f32 %v3420, %v3427
      %v3429 = vsel %vm3313, %v3017, -inf
      %v3430 = vmax.f32 %v3422, %v3429
      %v3431 = vsel %vm3313, %v3018, -inf
      %v3432 = vmax.f32 %v3424, %v3431
      %v3433 = vsel %vm3313, %v3019, -inf
      %v3434 = vmax.f32 %v3426, %v3433
      %v3435 = vsel %vm3313, %v3020, -inf
      %v3436 = vmax.f32 %v3428, %v3435
      %v3437 = vsel %vm3313, %v3021, -inf
      %v3438 = vmax.f32 %v3430, %v3437
      %v3439 = vsel %vm3313, %v3022, -inf
      %v3440 = vmax.f32 %v3432, %v3439
      %v3441 = vsel %vm3313, %v3023, -inf
      %v3442 = vmax.f32 %v3434, %v3441
      %v3443 = vmax.f32 %v3436, %v3438
      %v3444 = vmax.f32 %v3440, %v3442
      %v3445 = vmax.f32 %v3443, %v3444
      %v3446 = vrot.slane %v3445, 4
      %v3447 = vmax.f32 %v3445, %v3446
      %v3448 = vrot.slane %v3447, 2
      %v3449 = vmax.f32 %v3447, %v3448
      %v3450 = vrot.slane %v3449, 1
      %v3451 = vmax.f32 %v3449, %v3450
      %vm3452 = vcmask 1040384
      %v3453 = vsel %vm3452, %v3382, %v3451
      %vm3454 = vcmask 25600
      %3455 = vst.msk [vmem:[%s293] sm:$0x3] %vm3454, %v3453
      %s3456 = smul.u32 16, %s22
      %p3457 = scmp.lt.s32.totalorder %s21, 1
      %s3458 = scalar_select %p3457, %s21, 1
      %p3459 = scmp.lt.s32.totalorder %s3456, 15
      %s3460 = scalar_select %p3459, %s3456, 15
      %s3461 = smul.addr %s3460, 2
      %s3462 = smul.addr %s3458, 32
      %s3463 = sadd.s32 %s3461, %s3462
      %s3464 = smul.addr %s3463, 4
      %s3465 = scalar_lea.vmem %s3, %s3464
      %s3466 = smul.u32 16, %s22
      %p3467 = scmp.lt.s32.totalorder %s21, 1
      %s3468 = scalar_select %p3467, %s21, 1
      %p3469 = scmp.lt.s32.totalorder %s3466, 15
      %s3470 = scalar_select %p3469, %s3466, 15
      %s3471 = smul.addr %s3470, 2
      %s3472 = smul.addr %s3468, 32
      %s3473 = sadd.s32 %s3471, %s3472
      %s3474 = smul.addr %s3473, 4
      %s3475 = scalar_lea.vmem %s4, %s3474
      %p3476 = scmp.lt.s32.totalorder %s21, 1
      %s3477 = scalar_select %p3476, %s21, 1
      %p3478 = scmp.lt.s32.totalorder %s22, 0
      %s3479 = scalar_select %p3478, %s22, 0
      %s3480 = sadd.s32 %s3479, %s3477
      %s3481 = smul.addr %s3480, 2
      %s3482 = scalar_lea.vmem %s5, %s3481
      // Predicated region
      $region33: #{unet_conv2_xx_forward.5} parent=31 // pred_check
        %p3483 = pneg %p117
      $region34: #{unet_conv2_xx_forward.5} parent=31 // pred_check_branch
        %3485 = sbr.rel (%p3483) target = $region36
      $region35: #{unet_conv2_xx_forward.5} parent=31 // pred_region
        %s3486 = smul.u32 16, %s22
      $region36: #{unet_conv2_xx_forward.5} parent=31 // pred_fallthru
        _
      // Predicated region
      $region37: #{unet_conv2_xx_forward.5} parent=31 // pred_check
        %p3487 = pneg %p145
      $region38: #{unet_conv2_xx_forward.5} parent=31 // pred_check_branch
        %3489 = sbr.rel (%p3487) target = $region40
      $region39: #{unet_conv2_xx_forward.5} parent=31 // pred_region
        %s3490 = smul.u32 16, %s22
      $region40: #{unet_conv2_xx_forward.5} parent=31 // pred_fallthru
        _
      // Predicated region
      $region41: #{unet_conv2_xx_forward.5} parent=31 // pred_check
        %p3491 = pneg %p173
      $region42: #{unet_conv2_xx_forward.5} parent=31 // pred_check_branch
        %3493 = sbr.rel (%p3491) target = $region44
      $region43: #{unet_conv2_xx_forward.5} parent=31 // pred_region
        _
      $region44: #{unet_conv2_xx_forward.5} parent=31 // pred_fallthru
        _
    $region32: #{unet_conv2_xx_forward.5} parent=5 // pred_fallthru
      _
    %p3494 = scmp.le.s32.totalorder 2, %s12
    // Predicated region
    $region45: #{unet_conv2_xx_forward.5} parent=5 // pred_check
      %p3495 = pneg %p3494
    $region46: #{unet_conv2_xx_forward.5} parent=5 // pred_check_branch
      %3497 = sbr.rel (%p3495) target = $region48
    $region47: #{unet_conv2_xx_forward.5} parent=5 // pred_region
      %s3498 = ssub.s32 %s12, 2
      // Predicated region
      $region49: #{unet_conv2_xx_forward.5} parent=47 // pred_check
        %p3499 = pneg %p123
      $region50: #{unet_conv2_xx_forward.5} parent=47 // pred_check_branch
        %3501 = sbr.rel (%p3499) target = $region52
      $region51: #{unet_conv2_xx_forward.5} parent=47 // pred_region
        %s3502 = smul.u32 16, %s24
        %p3503 = scmp.lt.s32.totalorder %s23, 1
        %s3504 = scalar_select %p3503, %s23, 1
        %p3505 = scmp.lt.s32.totalorder %s3502, 15
        %s3506 = scalar_select %p3505, %s3502, 15
        %s3507 = smul.addr %s3506, 2
        %s3508 = smul.addr %s3504, 32
        %s3509 = sadd.s32 %s3507, %s3508
        %s3510 = smul.addr %s3509, 4
        %s3511 = scalar_lea.vmem %s3, %s3510
      $region52: #{unet_conv2_xx_forward.5} parent=47 // pred_fallthru
        _
      // Predicated region
      $region53: #{unet_conv2_xx_forward.5} parent=47 // pred_check
        %p3512 = pneg %p151
      $region54: #{unet_conv2_xx_forward.5} parent=47 // pred_check_branch
        %3514 = sbr.rel (%p3512) target = $region56
      $region55: #{unet_conv2_xx_forward.5} parent=47 // pred_region
        %s3515 = smul.u32 16, %s24
        %p3516 = scmp.lt.s32.totalorder %s23, 1
        %s3517 = scalar_select %p3516, %s23, 1
        %p3518 = scmp.lt.s32.totalorder %s3515, 15
        %s3519 = scalar_select %p3518, %s3515, 15
        %s3520 = smul.addr %s3519, 2
        %s3521 = smul.addr %s3517, 32
        %s3522 = sadd.s32 %s3520, %s3521
        %s3523 = smul.addr %s3522, 4
        %s3524 = scalar_lea.vmem %s4, %s3523
      $region56: #{unet_conv2_xx_forward.5} parent=47 // pred_fallthru
        _
      // Predicated region
      $region57: #{unet_conv2_xx_forward.5} parent=47 // pred_check
        %p3525 = pneg %p179
      $region58: #{unet_conv2_xx_forward.5} parent=47 // pred_check_branch
        %3527 = sbr.rel (%p3525) target = $region60
      $region59: #{unet_conv2_xx_forward.5} parent=47 // pred_region
        %p3528 = scmp.lt.s32.totalorder %s23, 1
        %s3529 = scalar_select %p3528, %s23, 1
        %p3530 = scmp.lt.s32.totalorder %s24, 0
        %s3531 = scalar_select %p3530, %s24, 0
        %s3532 = sadd.s32 %s3531, %s3529
        %s3533 = smul.addr %s3532, 2
        %s3534 = scalar_lea.vmem %s5, %s3533
      $region60: #{unet_conv2_xx_forward.5} parent=47 // pred_fallthru
        _
    $region48: #{unet_conv2_xx_forward.5} parent=5 // pred_fallthru
      _
  $region6: #{unet_conv2_xx_forward.5} parent=0 // loop_footer
    %s16 = sadd.s32 1, %s12
  $region7: #{unet_conv2_xx_forward.5} parent=0 // loop_footer_branch
    %11 = sbr.rel target = $region3
  $region8: #{unet_conv2_xx_forward.5} parent=0 // loop_exit
    _

</llo_original>
